<compile_context>
chip_gen: v6e
topology: v6e:2x2x1
jax: 0.10.0
libtpu: 0.0.40
codegen_flags: <defaults>
</compile_context>

<pallas_src>
import math
import functools

import numpy as np
import jax
import jax.numpy as jnp
from jax import lax
from jax.experimental import pallas as pl
from jax.experimental.pallas import tpu as pltpu

LANE = 128  # TPU vreg lane width; 8 windows of 16 tokens are packed per lane group.


# ----------------------------------------------------------------------------
# Static tables (trace-time numpy; become jaxpr constants)
# ----------------------------------------------------------------------------
def _build_tables(H, W, window_size, lane=LANE):
    """Permutation matrix P (slots x pixels) and the in-group block-diagonal score mask.

    Slots are ordered: plain-partition windows, then shifted (zero-padded) partition windows,
    then all-zero padding windows up to a multiple of (lane // N) windows.  P[s, p] = 1 iff
    slot s holds real pixel p; zero-pad slots and padding windows are all-zero rows.
    Each pixel appears in exactly two slots (one per branch), so  out = acc @ P  realizes the
    x1 + x2 recombination of the torch module.
    """
    wh, ww = window_size
    ph, pw = wh // 2, ww // 2
    N = wh * ww
    assert H % wh == 0 and W % ww == 0, "H, W must be multiples of the window size"
    assert (H + 2 * ph) % wh == 0 and (W + 2 * pw) % ww == 0
    assert N <= lane and lane % N == 0, "window token count must divide 128"
    wpg = lane // N  # windows packed per 128-lane group

    def slots(Hs, Ws, oy, ox):
        nwh, nww = Hs // wh, Ws // ww
        r = np.arange(nwh).reshape(-1, 1, 1, 1)
        c = np.arange(nww).reshape(1, -1, 1, 1)
        i = np.arange(wh).reshape(1, 1, -1, 1)
        j = np.arange(ww).reshape(1, 1, 1, -1)
        y = r * wh + i + oy
        x = c * ww + j + ox
        ok = (y >= 0) & (y < H) & (x >= 0) & (x < W)
        pix = np.where(ok, y * W + x, 0)
        return pix.reshape(-1), ok.reshape(-1)

    pix1, ok1 = slots(H, W, 0, 0)                          # plain partition
    pix2, ok2 = slots(H + 2 * ph, W + 2 * pw, -ph, -pw)    # shifted (zero-padded) partition
    pix = np.concatenate([pix1, pix2])
    ok = np.concatenate([ok1, ok2])

    S = pix.size // N
    S_pad = ((S + wpg - 1) // wpg) * wpg
    P = np.zeros((S_pad * N, H * W), np.float32)
    rows = np.arange(S * N)
    P[rows[ok], pix[ok]] = 1.0
    assert (P.sum(axis=0) == 2.0).all()                    # each pixel: one plain + one shifted slot

    # Additive mask inside one 128-token lane group: 0 within a window, -1e30 across windows.
    t = np.arange(lane) // N
    bmask = np.where(t[:, None] == t[None, :], 0.0, -1e30).astype(np.float32)

    groups = (S_pad * N) // lane
    return P, bmask, groups


# ----------------------------------------------------------------------------
# Fused Pallas kernel: qkv conv + gather + both window attentions + head conv + scatter
# ----------------------------------------------------------------------------
def _owmha_kernel(x_ref, pmat_ref, bmask_ref, wqkv_ref, bqkv_ref, whead_ref, bhead_ref,
                  out_ref, *, num_heads, head_dim, groups, lane=LANE):
    D = head_dim
    E = num_heads * D
    scale = 1.0 / math.sqrt(D)
    f32 = jnp.float32

    x = x_ref[0]              # (Cin, HW)       channel-major, lane-dense
    pmat = pmat_ref[...]      # (groups*lane, HW)  constant 0/1 slot<-pixel matrix
    bmask = bmask_ref[...]    # (lane, lane)    additive block-diagonal mask
    whead = whead_ref[...]    # (Cout, E)

    # Fused 1x1 qkv conv for all heads/parts (channel-major).
    qkv = jnp.dot(wqkv_ref[...], x, preferred_element_type=f32) + bqkv_ref[...]   # (3E, HW)

    # Gather pixels into window-slot order AND flip to token-major in one NT matmul on the MXU.
    # Zero-pad slots of the shifted branch and unused padding windows become exact zero rows,
    # reproducing torch's post-conv F.pad(..., value=0).
    qkv_s = lax.dot_general(pmat, qkv, (((1,), (1,)), ((), ())),
                            preferred_element_type=f32)                            # (G*lane, 3E)

    q_all = qkv_s[:, 0:E] * scale          # fold 1/sqrt(D) into q once
    k_all = qkv_s[:, E:2 * E]
    v_all = qkv_s[:, 2 * E:3 * E]

    group_out = []
    for g in range(groups):                # static unroll: groups of 8 windows (128 tokens)
        rows = slice(g * lane, (g + 1) * lane)
        acc_g = None
        for h in range(num_heads):
            cols = slice(h * D, (h + 1) * D)
            qg = q_all[rows, cols]         # (lane, D)
            kg = k_all[rows, cols]
            vg = v_all[rows, cols]

            # Lane-dense scores for 8 windows at once (NT matmul), cross-window pairs masked.
            s = lax.dot_general(qg, kg, (((1,), (1,)), ((), ())),
                                preferred_element_type=f32) + bmask                # (lane, lane)
            m = jnp.max(s, axis=-1, keepdims=True)
            p = jnp.exp(s - m)
            l = jnp.sum(p, axis=-1, keepdims=True)
            o = lax.dot_general(p, vg, (((1,), (0,)), ((), ())),
                                preferred_element_type=f32)                        # (lane, D)
            o = o * pl.reciprocal(l, approx=False)   # approx=True is a drop-in (looser tol)

            # Per-head slice of the head 1x1 conv; NT flips to channel-major (Cout, lane).
            c = lax.dot_general(whead[:, cols], o, (((1,), (1,)), ((), ())),
                                preferred_element_type=f32)
            acc_g = c if acc_g is None else acc_g + c
        group_out.append(acc_g)

    acc = jnp.concatenate(group_out, axis=1)                                       # (Cout, G*lane)

    # Scatter window-slot outputs back to pixels: each pixel sums its plain-branch and
    # shifted-branch slot (== head_proj(x1 + x2) by linearity); head bias added once.
    out = lax.dot_general(acc, pmat, (((1,), (0,)), ((), ())),
                          preferred_element_type=f32) + bhead_ref[...]             # (Cout, HW)
    out_ref[0] = out.astype(out_ref.dtype)


# ----------------------------------------------------------------------------
# Wrapper (same semantics as OverlapWindowMHA2d.forward with attn_mask=None)
# ----------------------------------------------------------------------------
def overlap_window_mha2d(x, params, *, num_heads, qkv_dim, window_size):
    B, Cin, H, W = x.shape
    E = num_heads * qkv_dim
    Cout = params["head_w"].shape[0]
    HW = H * W

    P_np, bmask_np, groups = _build_tables(H, W, window_size)
    pmat = jnp.asarray(P_np)                       # (groups*128, HW)
    bmask = jnp.asarray(bmask_np)                  # (128, 128)

    # Channel-major token view of the NCHW input: a free reshape, no transpose.
    x_cm = x.reshape(B, Cin, HW)
    wqkv = params["qkv_w"].reshape(3 * E, Cin)
    bqkv = params["qkv_b"].reshape(3 * E, 1)
    whead = params["head_w"].reshape(Cout, E)
    bhead = params["head_b"].reshape(Cout, 1)

    kernel = functools.partial(_owmha_kernel, num_heads=num_heads, head_dim=qkv_dim,
                               groups=groups)

    out = pl.pallas_call(
        kernel,
        out_shape=jax.ShapeDtypeStruct((B, Cout, HW), x.dtype),
        grid=(B,),
        in_specs=[
            pl.BlockSpec((1, Cin, HW), lambda b: (b, 0, 0)),          # per-batch image (lane-dense)
            pl.BlockSpec((groups * LANE, HW), lambda b: (0, 0)),      # resident permutation matrix
            pl.BlockSpec((LANE, LANE), lambda b: (0, 0)),             # resident block-diag mask
            pl.BlockSpec((3 * E, Cin), lambda b: (0, 0)),             # resident W_qkv
            pl.BlockSpec((3 * E, 1), lambda b: (0, 0)),               # resident b_qkv
            pl.BlockSpec((Cout, E), lambda b: (0, 0)),                # resident W_head
            pl.BlockSpec((Cout, 1), lambda b: (0, 0)),                # resident b_head
        ],
        out_specs=pl.BlockSpec((1, Cout, HW), lambda b: (b, 0, 0)),   # lane-dense output block
        compiler_params=pltpu.CompilerParams(dimension_semantics=("parallel",)),
    )(x_cm, pmat, bmask, wqkv, bqkv, whead, bhead)

    return out.reshape(B, Cout, H, W)              # back to NCHW: free reshape


# ----------------------------------------------------------------------------
# Pure-JAX reference (mirrors the torch module op-by-op) for a correctness check
# ----------------------------------------------------------------------------
def _ref_conv1x1(x, w, b):
    return jnp.einsum("bchw,oc->bohw", x, w) + b[None, :, None, None]


def _bchw_to_bnc(x, window_size):
    B, C, H, W = x.shape
    wh, ww = window_size
    x = x.reshape(B, C, H // wh, wh, W // ww, ww)
    x = jnp.transpose(x, (0, 2, 4, 3, 5, 1))
    return x.reshape(B * (H // wh) * (W // ww), wh * ww, C)


def _bnc_to_bchw(x, out_shape, window_size):
    B, C, H, W = out_shape
    wh, ww = window_size
    x = x.reshape(B, H // wh, W // ww, wh, ww, C)
    x = jnp.transpose(x, (0, 5, 1, 3, 2, 4))
    return x.reshape(B, C, H, W)


def _ref_window_mha(qkv, num_heads, qkv_dim, window_size):
    B, _, H, W = qkv.shape
    E = num_heads * qkv_dim
    bnc = _bchw_to_bnc(qkv, window_size)
    Bn, N, _ = bnc.shape
    q, k, v = jnp.split(bnc, 3, axis=-1)
    q = jnp.transpose(q.reshape(Bn, N, num_heads, qkv_dim), (0, 2, 1, 3))
    k = jnp.transpose(k.reshape(Bn, N, num_heads, qkv_dim), (0, 2, 1, 3))
    v = jnp.transpose(v.reshape(Bn, N, num_heads, qkv_dim), (0, 2, 1, 3))
    s = jnp.einsum("bhqd,bhkd->bhqk", q, k) / math.sqrt(qkv_dim)
    p = jax.nn.softmax(s, axis=-1)
    o = jnp.einsum("bhqk,bhkd->bhqd", p, v)
    o = jnp.transpose(o, (0, 2, 1, 3)).reshape(Bn, N, E)
    return _bnc_to_bchw(o, (B, E, H, W), window_size)


def _ref_forward(x, params, *, num_heads, qkv_dim, window_size):
    B, C, H, W = x.shape
    ph, pw = window_size[0] // 2, window_size[1] // 2
    qkv = _ref_conv1x1(x, params["qkv_w"], params["qkv_b"])
    x1 = _ref_window_mha(qkv, num_heads, qkv_dim, window_size)
    qkv_pad = jnp.pad(qkv, ((0, 0), (0, 0), (ph, ph), (pw, pw)))
    x2 = _ref_window_mha(qkv_pad, num_heads, qkv_dim, window_size)
    x2 = x2[:, :, ph:ph + H, pw:pw + W]
    return _ref_conv1x1(x1 + x2, params["head_w"], params["head_b"])


# ----------------------------------------------------------------------------
# main
# ----------------------------------------------------------------------------
if __name__ == "__main__":
    # Matches OverlapWindowMHA2d(in_channels=4, num_heads=2, window_size=(4, 4)).
    B, in_channels, H, W = 2, 4, 16, 16
    num_heads = 2
    window_size = (4, 4)
    qkv_dim = in_channels // num_heads          # 2
    E = num_heads * qkv_dim                     # 4

    key = jax.random.PRNGKey(0)
    kx, kqw, kqb, khw, khb = jax.random.split(key, 5)

    params = {
        "qkv_w": 0.1 * jax.random.normal(kqw, (3 * E, in_channels), dtype=jnp.float32),
        "qkv_b": 0.1 * jax.random.normal(kqb, (3 * E,), dtype=jnp.float32),
        "head_w": 0.1 * jax.random.normal(khw, (in_channels, E), dtype=jnp.float32),
        "head_b": 0.1 * jax.random.normal(khb, (in_channels,), dtype=jnp.float32),
    }

    x = jax.random.normal(kx, (B, in_channels, H, W), dtype=jnp.float32)

    fwd = jax.jit(
        functools.partial(
            overlap_window_mha2d,
            num_heads=num_heads,
            qkv_dim=qkv_dim,
            window_size=window_size,
        )
    )
    out = jax.block_until_ready(fwd(x, params))

    assert out.shape == (B, in_channels, H, W), out.shape

    ref = _ref_forward(
        x, params, num_heads=num_heads, qkv_dim=qkv_dim, window_size=window_size
    )
    # 2e-3 keeps the check robust to the MXU's f32 matmul pass configuration (the reference
    # einsums and the in-kernel dots may use different pass counts); with full-precision f32
    # matmuls the observed error is ~1e-6.
    max_err = float(jnp.abs(out - ref).max())
    assert jnp.allclose(out, ref, atol=2e-3, rtol=2e-3), max_err

    print("KERNEL_OK")
</pallas_src>

<mosaic_0001>
module attributes {stable_mosaic.version = 11 : i64} {
  func.func @_owmha_kernel(%arg0: i32, %arg1: memref<1x4x256xf32, #tpu.memory_space<vmem>>, %arg2: memref<768x256xf32, #tpu.memory_space<vmem>>, %arg3: memref<128x128xf32, #tpu.memory_space<vmem>>, %arg4: memref<12x4xf32, #tpu.memory_space<vmem>>, %arg5: memref<12x1xf32, #tpu.memory_space<vmem>>, %arg6: memref<4x4xf32, #tpu.memory_space<vmem>>, %arg7: memref<4x1xf32, #tpu.memory_space<vmem>>, %arg8: memref<1x4x256xf32, #tpu.memory_space<vmem>>) attributes {dimension_semantics = [#tpu.dimension_semantics<parallel>], iteration_bounds = array<i64: 2>, scalar_prefetch = 0 : i64, scratch_operands = 0 : i64, tpu.core_type = #tpu.core_type<tc>, window_params = [{transform_indices = @transform_0, window_bounds = array<i64: 1, 4, 256>}, {pipeline_mode = #tpu.pipeline_mode<synchronous>, transform_indices = @transform_1, window_bounds = array<i64: 768, 256>}, {pipeline_mode = #tpu.pipeline_mode<synchronous>, transform_indices = @transform_2, window_bounds = array<i64: 128, 128>}, {pipeline_mode = #tpu.pipeline_mode<synchronous>, transform_indices = @transform_3, window_bounds = array<i64: 12, 4>}, {pipeline_mode = #tpu.pipeline_mode<synchronous>, transform_indices = @transform_4, window_bounds = array<i64: 12, 1>}, {pipeline_mode = #tpu.pipeline_mode<synchronous>, transform_indices = @transform_5, window_bounds = array<i64: 4, 4>}, {pipeline_mode = #tpu.pipeline_mode<synchronous>, transform_indices = @transform_6, window_bounds = array<i64: 4, 1>}, {transform_indices = @transform_7, window_bounds = array<i64: 1, 4, 256>}]} {
    %c0 = arith.constant 0 : index
    %c0_0 = arith.constant 0 : index
    %c0_1 = arith.constant 0 : index
    %0 = vector.load %arg1[%c0, %c0_0, %c0_1] : memref<1x4x256xf32, #tpu.memory_space<vmem>>, vector<1x4x256xf32>
    %1 = vector.shape_cast %0 : vector<1x4x256xf32> to vector<4x256xf32>
    %c0_2 = arith.constant 0 : index
    %c0_3 = arith.constant 0 : index
    %2 = vector.load %arg2[%c0_2, %c0_3] : memref<768x256xf32, #tpu.memory_space<vmem>>, vector<768x256xf32>
    %c0_4 = arith.constant 0 : index
    %c0_5 = arith.constant 0 : index
    %3 = vector.load %arg3[%c0_4, %c0_5] : memref<128x128xf32, #tpu.memory_space<vmem>>, vector<128x128xf32>
    %c0_6 = arith.constant 0 : index
    %c0_7 = arith.constant 0 : index
    %4 = vector.load %arg6[%c0_6, %c0_7] : memref<4x4xf32, #tpu.memory_space<vmem>>, vector<4x4xf32>
    %c0_8 = arith.constant 0 : index
    %c0_9 = arith.constant 0 : index
    %5 = vector.load %arg4[%c0_8, %c0_9] : memref<12x4xf32, #tpu.memory_space<vmem>>, vector<12x4xf32>
    %cst = arith.constant dense<0.000000e+00> : vector<12x256xf32>
    %6 = tpu.matmul %5, %1, %cst {dimension_numbers = #tpu.dot_dimension_numbers<[1], [0], [0], [1], [0, 0, 1, 1], [], []>} : vector<12x4xf32>, vector<4x256xf32>, vector<12x256xf32> -> vector<12x256xf32>
    %c0_10 = arith.constant 0 : index
    %c0_11 = arith.constant 0 : index
    %7 = vector.load %arg5[%c0_10, %c0_11] : memref<12x1xf32, #tpu.memory_space<vmem>>, vector<12x1xf32>
    %8 = vector.broadcast %7 : vector<12x1xf32> to vector<12x256xf32>
    %9 = arith.addf %6, %8 : vector<12x256xf32>
    %cst_12 = arith.constant dense<0.000000e+00> : vector<768x12xf32>
    %10 = tpu.matmul %2, %9, %cst_12 {dimension_numbers = #tpu.dot_dimension_numbers<[1], [1], [0], [0], [0, 0, 1, 0], [], []>} : vector<768x256xf32>, vector<12x256xf32>, vector<768x12xf32> -> vector<768x12xf32>
    %11 = vector.extract_strided_slice %10 {offsets = [0, 0], sizes = [768, 4], strides = [1, 1]} : vector<768x12xf32> to vector<768x4xf32>
    %cst_13 = arith.constant 0.707106769 : f32
    %12 = vector.broadcast %cst_13 : f32 to vector<768x4xf32>
    %13 = arith.mulf %11, %12 : vector<768x4xf32>
    %14 = vector.extract_strided_slice %10 {offsets = [0, 4], sizes = [768, 4], strides = [1, 1]} : vector<768x12xf32> to vector<768x4xf32>
    %15 = vector.extract_strided_slice %10 {offsets = [0, 8], sizes = [768, 4], strides = [1, 1]} : vector<768x12xf32> to vector<768x4xf32>
    %16 = vector.extract_strided_slice %13 {offsets = [0, 0], sizes = [128, 2], strides = [1, 1]} : vector<768x4xf32> to vector<128x2xf32>
    %17 = vector.extract_strided_slice %14 {offsets = [0, 0], sizes = [128, 2], strides = [1, 1]} : vector<768x4xf32> to vector<128x2xf32>
    %18 = vector.extract_strided_slice %15 {offsets = [0, 0], sizes = [128, 2], strides = [1, 1]} : vector<768x4xf32> to vector<128x2xf32>
    %cst_14 = arith.constant dense<0.000000e+00> : vector<128x128xf32>
    %19 = tpu.matmul %16, %17, %cst_14 {dimension_numbers = #tpu.dot_dimension_numbers<[1], [1], [0], [0], [0, 0, 1, 0], [], []>} : vector<128x2xf32>, vector<128x2xf32>, vector<128x128xf32> -> vector<128x128xf32>
    %20 = arith.addf %19, %3 : vector<128x128xf32>
    %cst_15 = arith.constant dense<0xFF800000> : vector<128xf32>
    %21 = vector.multi_reduction <maximumf>, %20, %cst_15 [1] : vector<128x128xf32> to vector<128xf32>
    %22 = vector.shape_cast %21 : vector<128xf32> to vector<128x1xf32>
    %23 = vector.broadcast %22 : vector<128x1xf32> to vector<128x128xf32>
    %24 = arith.subf %20, %23 : vector<128x128xf32>
    %25 = math.exp %24 : vector<128x128xf32>
    %cst_16 = arith.constant dense<0.000000e+00> : vector<128xf32>
    %26 = vector.multi_reduction <add>, %25, %cst_16 [1] : vector<128x128xf32> to vector<128xf32>
    %27 = vector.shape_cast %26 : vector<128xf32> to vector<128x1xf32>
    %cst_17 = arith.constant dense<0.000000e+00> : vector<128x2xf32>
    %28 = tpu.matmul %25, %18, %cst_17 {dimension_numbers = #tpu.dot_dimension_numbers<[1], [0], [0], [1], [0, 0, 1, 1], [], []>} : vector<128x128xf32>, vector<128x2xf32>, vector<128x2xf32> -> vector<128x2xf32>
    %29 = tpu.reciprocal %27 : vector<128x1xf32> -> vector<128x1xf32>
    %30 = vector.broadcast %29 : vector<128x1xf32> to vector<128x2xf32>
    %31 = arith.mulf %28, %30 : vector<128x2xf32>
    %32 = vector.extract_strided_slice %4 {offsets = [0, 0], sizes = [4, 2], strides = [1, 1]} : vector<4x4xf32> to vector<4x2xf32>
    %cst_18 = arith.constant dense<0.000000e+00> : vector<4x128xf32>
    %33 = tpu.matmul %32, %31, %cst_18 {dimension_numbers = #tpu.dot_dimension_numbers<[1], [1], [0], [0], [0, 0, 1, 0], [], []>} : vector<4x2xf32>, vector<128x2xf32>, vector<4x128xf32> -> vector<4x128xf32>
    %34 = vector.extract_strided_slice %13 {offsets = [0, 2], sizes = [128, 2], strides = [1, 1]} : vector<768x4xf32> to vector<128x2xf32>
    %35 = vector.extract_strided_slice %14 {offsets = [0, 2], sizes = [128, 2], strides = [1, 1]} : vector<768x4xf32> to vector<128x2xf32>
    %36 = vector.extract_strided_slice %15 {offsets = [0, 2], sizes = [128, 2], strides = [1, 1]} : vector<768x4xf32> to vector<128x2xf32>
    %cst_19 = arith.constant dense<0.000000e+00> : vector<128x128xf32>
    %37 = tpu.matmul %34, %35, %cst_19 {dimension_numbers = #tpu.dot_dimension_numbers<[1], [1], [0], [0], [0, 0, 1, 0], [], []>} : vector<128x2xf32>, vector<128x2xf32>, vector<128x128xf32> -> vector<128x128xf32>
    %38 = arith.addf %37, %3 : vector<128x128xf32>
    %cst_20 = arith.constant dense<0xFF800000> : vector<128xf32>
    %39 = vector.multi_reduction <maximumf>, %38, %cst_20 [1] : vector<128x128xf32> to vector<128xf32>
    %40 = vector.shape_cast %39 : vector<128xf32> to vector<128x1xf32>
    %41 = vector.broadcast %40 : vector<128x1xf32> to vector<128x128xf32>
    %42 = arith.subf %38, %41 : vector<128x128xf32>
    %43 = math.exp %42 : vector<128x128xf32>
    %cst_21 = arith.constant dense<0.000000e+00> : vector<128xf32>
    %44 = vector.multi_reduction <add>, %43, %cst_21 [1] : vector<128x128xf32> to vector<128xf32>
    %45 = vector.shape_cast %44 : vector<128xf32> to vector<128x1xf32>
    %cst_22 = arith.constant dense<0.000000e+00> : vector<128x2xf32>
    %46 = tpu.matmul %43, %36, %cst_22 {dimension_numbers = #tpu.dot_dimension_numbers<[1], [0], [0], [1], [0, 0, 1, 1], [], []>} : vector<128x128xf32>, vector<128x2xf32>, vector<128x2xf32> -> vector<128x2xf32>
    %47 = tpu.reciprocal %45 : vector<128x1xf32> -> vector<128x1xf32>
    %48 = vector.broadcast %47 : vector<128x1xf32> to vector<128x2xf32>
    %49 = arith.mulf %46, %48 : vector<128x2xf32>
    %50 = vector.extract_strided_slice %4 {offsets = [0, 2], sizes = [4, 2], strides = [1, 1]} : vector<4x4xf32> to vector<4x2xf32>
    %cst_23 = arith.constant dense<0.000000e+00> : vector<4x128xf32>
    %51 = tpu.matmul %50, %49, %cst_23 {dimension_numbers = #tpu.dot_dimension_numbers<[1], [1], [0], [0], [0, 0, 1, 0], [], []>} : vector<4x2xf32>, vector<128x2xf32>, vector<4x128xf32> -> vector<4x128xf32>
    %52 = arith.addf %33, %51 : vector<4x128xf32>
    %53 = vector.extract_strided_slice %13 {offsets = [128, 0], sizes = [128, 2], strides = [1, 1]} : vector<768x4xf32> to vector<128x2xf32>
    %54 = vector.extract_strided_slice %14 {offsets = [128, 0], sizes = [128, 2], strides = [1, 1]} : vector<768x4xf32> to vector<128x2xf32>
    %55 = vector.extract_strided_slice %15 {offsets = [128, 0], sizes = [128, 2], strides = [1, 1]} : vector<768x4xf32> to vector<128x2xf32>
    %cst_24 = arith.constant dense<0.000000e+00> : vector<128x128xf32>
    %56 = tpu.matmul %53, %54, %cst_24 {dimension_numbers = #tpu.dot_dimension_numbers<[1], [1], [0], [0], [0, 0, 1, 0], [], []>} : vector<128x2xf32>, vector<128x2xf32>, vector<128x128xf32> -> vector<128x128xf32>
    %57 = arith.addf %56, %3 : vector<128x128xf32>
    %cst_25 = arith.constant dense<0xFF800000> : vector<128xf32>
    %58 = vector.multi_reduction <maximumf>, %57, %cst_25 [1] : vector<128x128xf32> to vector<128xf32>
    %59 = vector.shape_cast %58 : vector<128xf32> to vector<128x1xf32>
    %60 = vector.broadcast %59 : vector<128x1xf32> to vector<128x128xf32>
    %61 = arith.subf %57, %60 : vector<128x128xf32>
    %62 = math.exp %61 : vector<128x128xf32>
    %cst_26 = arith.constant dense<0.000000e+00> : vector<128xf32>
    %63 = vector.multi_reduction <add>, %62, %cst_26 [1] : vector<128x128xf32> to vector<128xf32>
    %64 = vector.shape_cast %63 : vector<128xf32> to vector<128x1xf32>
    %cst_27 = arith.constant dense<0.000000e+00> : vector<128x2xf32>
    %65 = tpu.matmul %62, %55, %cst_27 {dimension_numbers = #tpu.dot_dimension_numbers<[1], [0], [0], [1], [0, 0, 1, 1], [], []>} : vector<128x128xf32>, vector<128x2xf32>, vector<128x2xf32> -> vector<128x2xf32>
    %66 = tpu.reciprocal %64 : vector<128x1xf32> -> vector<128x1xf32>
    %67 = vector.broadcast %66 : vector<128x1xf32> to vector<128x2xf32>
    %68 = arith.mulf %65, %67 : vector<128x2xf32>
    %69 = vector.extract_strided_slice %4 {offsets = [0, 0], sizes = [4, 2], strides = [1, 1]} : vector<4x4xf32> to vector<4x2xf32>
    %cst_28 = arith.constant dense<0.000000e+00> : vector<4x128xf32>
    %70 = tpu.matmul %69, %68, %cst_28 {dimension_numbers = #tpu.dot_dimension_numbers<[1], [1], [0], [0], [0, 0, 1, 0], [], []>} : vector<4x2xf32>, vector<128x2xf32>, vector<4x128xf32> -> vector<4x128xf32>
    %71 = vector.extract_strided_slice %13 {offsets = [128, 2], sizes = [128, 2], strides = [1, 1]} : vector<768x4xf32> to vector<128x2xf32>
    %72 = vector.extract_strided_slice %14 {offsets = [128, 2], sizes = [128, 2], strides = [1, 1]} : vector<768x4xf32> to vector<128x2xf32>
    %73 = vector.extract_strided_slice %15 {offsets = [128, 2], sizes = [128, 2], strides = [1, 1]} : vector<768x4xf32> to vector<128x2xf32>
    %cst_29 = arith.constant dense<0.000000e+00> : vector<128x128xf32>
    %74 = tpu.matmul %71, %72, %cst_29 {dimension_numbers = #tpu.dot_dimension_numbers<[1], [1], [0], [0], [0, 0, 1, 0], [], []>} : vector<128x2xf32>, vector<128x2xf32>, vector<128x128xf32> -> vector<128x128xf32>
    %75 = arith.addf %74, %3 : vector<128x128xf32>
    %cst_30 = arith.constant dense<0xFF800000> : vector<128xf32>
    %76 = vector.multi_reduction <maximumf>, %75, %cst_30 [1] : vector<128x128xf32> to vector<128xf32>
    %77 = vector.shape_cast %76 : vector<128xf32> to vector<128x1xf32>
    %78 = vector.broadcast %77 : vector<128x1xf32> to vector<128x128xf32>
    %79 = arith.subf %75, %78 : vector<128x128xf32>
    %80 = math.exp %79 : vector<128x128xf32>
    %cst_31 = arith.constant dense<0.000000e+00> : vector<128xf32>
    %81 = vector.multi_reduction <add>, %80, %cst_31 [1] : vector<128x128xf32> to vector<128xf32>
    %82 = vector.shape_cast %81 : vector<128xf32> to vector<128x1xf32>
    %cst_32 = arith.constant dense<0.000000e+00> : vector<128x2xf32>
    %83 = tpu.matmul %80, %73, %cst_32 {dimension_numbers = #tpu.dot_dimension_numbers<[1], [0], [0], [1], [0, 0, 1, 1], [], []>} : vector<128x128xf32>, vector<128x2xf32>, vector<128x2xf32> -> vector<128x2xf32>
    %84 = tpu.reciprocal %82 : vector<128x1xf32> -> vector<128x1xf32>
    %85 = vector.broadcast %84 : vector<128x1xf32> to vector<128x2xf32>
    %86 = arith.mulf %83, %85 : vector<128x2xf32>
    %87 = vector.extract_strided_slice %4 {offsets = [0, 2], sizes = [4, 2], strides = [1, 1]} : vector<4x4xf32> to vector<4x2xf32>
    %cst_33 = arith.constant dense<0.000000e+00> : vector<4x128xf32>
    %88 = tpu.matmul %87, %86, %cst_33 {dimension_numbers = #tpu.dot_dimension_numbers<[1], [1], [0], [0], [0, 0, 1, 0], [], []>} : vector<4x2xf32>, vector<128x2xf32>, vector<4x128xf32> -> vector<4x128xf32>
    %89 = arith.addf %70, %88 : vector<4x128xf32>
    %90 = vector.extract_strided_slice %13 {offsets = [256, 0], sizes = [128, 2], strides = [1, 1]} : vector<768x4xf32> to vector<128x2xf32>
    %91 = vector.extract_strided_slice %14 {offsets = [256, 0], sizes = [128, 2], strides = [1, 1]} : vector<768x4xf32> to vector<128x2xf32>
    %92 = vector.extract_strided_slice %15 {offsets = [256, 0], sizes = [128, 2], strides = [1, 1]} : vector<768x4xf32> to vector<128x2xf32>
    %cst_34 = arith.constant dense<0.000000e+00> : vector<128x128xf32>
    %93 = tpu.matmul %90, %91, %cst_34 {dimension_numbers = #tpu.dot_dimension_numbers<[1], [1], [0], [0], [0, 0, 1, 0], [], []>} : vector<128x2xf32>, vector<128x2xf32>, vector<128x128xf32> -> vector<128x128xf32>
    %94 = arith.addf %93, %3 : vector<128x128xf32>
    %cst_35 = arith.constant dense<0xFF800000> : vector<128xf32>
    %95 = vector.multi_reduction <maximumf>, %94, %cst_35 [1] : vector<128x128xf32> to vector<128xf32>
    %96 = vector.shape_cast %95 : vector<128xf32> to vector<128x1xf32>
    %97 = vector.broadcast %96 : vector<128x1xf32> to vector<128x128xf32>
    %98 = arith.subf %94, %97 : vector<128x128xf32>
    %99 = math.exp %98 : vector<128x128xf32>
    %cst_36 = arith.constant dense<0.000000e+00> : vector<128xf32>
    %100 = vector.multi_reduction <add>, %99, %cst_36 [1] : vector<128x128xf32> to vector<128xf32>
    %101 = vector.shape_cast %100 : vector<128xf32> to vector<128x1xf32>
    %cst_37 = arith.constant dense<0.000000e+00> : vector<128x2xf32>
    %102 = tpu.matmul %99, %92, %cst_37 {dimension_numbers = #tpu.dot_dimension_numbers<[1], [0], [0], [1], [0, 0, 1, 1], [], []>} : vector<128x128xf32>, vector<128x2xf32>, vector<128x2xf32> -> vector<128x2xf32>
    %103 = tpu.reciprocal %101 : vector<128x1xf32> -> vector<128x1xf32>
    %104 = vector.broadcast %103 : vector<128x1xf32> to vector<128x2xf32>
    %105 = arith.mulf %102, %104 : vector<128x2xf32>
    %106 = vector.extract_strided_slice %4 {offsets = [0, 0], sizes = [4, 2], strides = [1, 1]} : vector<4x4xf32> to vector<4x2xf32>
    %cst_38 = arith.constant dense<0.000000e+00> : vector<4x128xf32>
    %107 = tpu.matmul %106, %105, %cst_38 {dimension_numbers = #tpu.dot_dimension_numbers<[1], [1], [0], [0], [0, 0, 1, 0], [], []>} : vector<4x2xf32>, vector<128x2xf32>, vector<4x128xf32> -> vector<4x128xf32>
    %108 = vector.extract_strided_slice %13 {offsets = [256, 2], sizes = [128, 2], strides = [1, 1]} : vector<768x4xf32> to vector<128x2xf32>
    %109 = vector.extract_strided_slice %14 {offsets = [256, 2], sizes = [128, 2], strides = [1, 1]} : vector<768x4xf32> to vector<128x2xf32>
    %110 = vector.extract_strided_slice %15 {offsets = [256, 2], sizes = [128, 2], strides = [1, 1]} : vector<768x4xf32> to vector<128x2xf32>
    %cst_39 = arith.constant dense<0.000000e+00> : vector<128x128xf32>
    %111 = tpu.matmul %108, %109, %cst_39 {dimension_numbers = #tpu.dot_dimension_numbers<[1], [1], [0], [0], [0, 0, 1, 0], [], []>} : vector<128x2xf32>, vector<128x2xf32>, vector<128x128xf32> -> vector<128x128xf32>
    %112 = arith.addf %111, %3 : vector<128x128xf32>
    %cst_40 = arith.constant dense<0xFF800000> : vector<128xf32>
    %113 = vector.multi_reduction <maximumf>, %112, %cst_40 [1] : vector<128x128xf32> to vector<128xf32>
    %114 = vector.shape_cast %113 : vector<128xf32> to vector<128x1xf32>
    %115 = vector.broadcast %114 : vector<128x1xf32> to vector<128x128xf32>
    %116 = arith.subf %112, %115 : vector<128x128xf32>
    %117 = math.exp %116 : vector<128x128xf32>
    %cst_41 = arith.constant dense<0.000000e+00> : vector<128xf32>
    %118 = vector.multi_reduction <add>, %117, %cst_41 [1] : vector<128x128xf32> to vector<128xf32>
    %119 = vector.shape_cast %118 : vector<128xf32> to vector<128x1xf32>
    %cst_42 = arith.constant dense<0.000000e+00> : vector<128x2xf32>
    %120 = tpu.matmul %117, %110, %cst_42 {dimension_numbers = #tpu.dot_dimension_numbers<[1], [0], [0], [1], [0, 0, 1, 1], [], []>} : vector<128x128xf32>, vector<128x2xf32>, vector<128x2xf32> -> vector<128x2xf32>
    %121 = tpu.reciprocal %119 : vector<128x1xf32> -> vector<128x1xf32>
    %122 = vector.broadcast %121 : vector<128x1xf32> to vector<128x2xf32>
    %123 = arith.mulf %120, %122 : vector<128x2xf32>
    %124 = vector.extract_strided_slice %4 {offsets = [0, 2], sizes = [4, 2], strides = [1, 1]} : vector<4x4xf32> to vector<4x2xf32>
    %cst_43 = arith.constant dense<0.000000e+00> : vector<4x128xf32>
    %125 = tpu.matmul %124, %123, %cst_43 {dimension_numbers = #tpu.dot_dimension_numbers<[1], [1], [0], [0], [0, 0, 1, 0], [], []>} : vector<4x2xf32>, vector<128x2xf32>, vector<4x128xf32> -> vector<4x128xf32>
    %126 = arith.addf %107, %125 : vector<4x128xf32>
    %127 = vector.extract_strided_slice %13 {offsets = [384, 0], sizes = [128, 2], strides = [1, 1]} : vector<768x4xf32> to vector<128x2xf32>
    %128 = vector.extract_strided_slice %14 {offsets = [384, 0], sizes = [128, 2], strides = [1, 1]} : vector<768x4xf32> to vector<128x2xf32>
    %129 = vector.extract_strided_slice %15 {offsets = [384, 0], sizes = [128, 2], strides = [1, 1]} : vector<768x4xf32> to vector<128x2xf32>
    %cst_44 = arith.constant dense<0.000000e+00> : vector<128x128xf32>
    %130 = tpu.matmul %127, %128, %cst_44 {dimension_numbers = #tpu.dot_dimension_numbers<[1], [1], [0], [0], [0, 0, 1, 0], [], []>} : vector<128x2xf32>, vector<128x2xf32>, vector<128x128xf32> -> vector<128x128xf32>
    %131 = arith.addf %130, %3 : vector<128x128xf32>
    %cst_45 = arith.constant dense<0xFF800000> : vector<128xf32>
    %132 = vector.multi_reduction <maximumf>, %131, %cst_45 [1] : vector<128x128xf32> to vector<128xf32>
    %133 = vector.shape_cast %132 : vector<128xf32> to vector<128x1xf32>
    %134 = vector.broadcast %133 : vector<128x1xf32> to vector<128x128xf32>
    %135 = arith.subf %131, %134 : vector<128x128xf32>
    %136 = math.exp %135 : vector<128x128xf32>
    %cst_46 = arith.constant dense<0.000000e+00> : vector<128xf32>
    %137 = vector.multi_reduction <add>, %136, %cst_46 [1] : vector<128x128xf32> to vector<128xf32>
    %138 = vector.shape_cast %137 : vector<128xf32> to vector<128x1xf32>
    %cst_47 = arith.constant dense<0.000000e+00> : vector<128x2xf32>
    %139 = tpu.matmul %136, %129, %cst_47 {dimension_numbers = #tpu.dot_dimension_numbers<[1], [0], [0], [1], [0, 0, 1, 1], [], []>} : vector<128x128xf32>, vector<128x2xf32>, vector<128x2xf32> -> vector<128x2xf32>
    %140 = tpu.reciprocal %138 : vector<128x1xf32> -> vector<128x1xf32>
    %141 = vector.broadcast %140 : vector<128x1xf32> to vector<128x2xf32>
    %142 = arith.mulf %139, %141 : vector<128x2xf32>
    %143 = vector.extract_strided_slice %4 {offsets = [0, 0], sizes = [4, 2], strides = [1, 1]} : vector<4x4xf32> to vector<4x2xf32>
    %cst_48 = arith.constant dense<0.000000e+00> : vector<4x128xf32>
    %144 = tpu.matmul %143, %142, %cst_48 {dimension_numbers = #tpu.dot_dimension_numbers<[1], [1], [0], [0], [0, 0, 1, 0], [], []>} : vector<4x2xf32>, vector<128x2xf32>, vector<4x128xf32> -> vector<4x128xf32>
    %145 = vector.extract_strided_slice %13 {offsets = [384, 2], sizes = [128, 2], strides = [1, 1]} : vector<768x4xf32> to vector<128x2xf32>
    %146 = vector.extract_strided_slice %14 {offsets = [384, 2], sizes = [128, 2], strides = [1, 1]} : vector<768x4xf32> to vector<128x2xf32>
    %147 = vector.extract_strided_slice %15 {offsets = [384, 2], sizes = [128, 2], strides = [1, 1]} : vector<768x4xf32> to vector<128x2xf32>
    %cst_49 = arith.constant dense<0.000000e+00> : vector<128x128xf32>
    %148 = tpu.matmul %145, %146, %cst_49 {dimension_numbers = #tpu.dot_dimension_numbers<[1], [1], [0], [0], [0, 0, 1, 0], [], []>} : vector<128x2xf32>, vector<128x2xf32>, vector<128x128xf32> -> vector<128x128xf32>
    %149 = arith.addf %148, %3 : vector<128x128xf32>
    %cst_50 = arith.constant dense<0xFF800000> : vector<128xf32>
    %150 = vector.multi_reduction <maximumf>, %149, %cst_50 [1] : vector<128x128xf32> to vector<128xf32>
    %151 = vector.shape_cast %150 : vector<128xf32> to vector<128x1xf32>
    %152 = vector.broadcast %151 : vector<128x1xf32> to vector<128x128xf32>
    %153 = arith.subf %149, %152 : vector<128x128xf32>
    %154 = math.exp %153 : vector<128x128xf32>
    %cst_51 = arith.constant dense<0.000000e+00> : vector<128xf32>
    %155 = vector.multi_reduction <add>, %154, %cst_51 [1] : vector<128x128xf32> to vector<128xf32>
    %156 = vector.shape_cast %155 : vector<128xf32> to vector<128x1xf32>
    %cst_52 = arith.constant dense<0.000000e+00> : vector<128x2xf32>
    %157 = tpu.matmul %154, %147, %cst_52 {dimension_numbers = #tpu.dot_dimension_numbers<[1], [0], [0], [1], [0, 0, 1, 1], [], []>} : vector<128x128xf32>, vector<128x2xf32>, vector<128x2xf32> -> vector<128x2xf32>
    %158 = tpu.reciprocal %156 : vector<128x1xf32> -> vector<128x1xf32>
    %159 = vector.broadcast %158 : vector<128x1xf32> to vector<128x2xf32>
    %160 = arith.mulf %157, %159 : vector<128x2xf32>
    %161 = vector.extract_strided_slice %4 {offsets = [0, 2], sizes = [4, 2], strides = [1, 1]} : vector<4x4xf32> to vector<4x2xf32>
    %cst_53 = arith.constant dense<0.000000e+00> : vector<4x128xf32>
    %162 = tpu.matmul %161, %160, %cst_53 {dimension_numbers = #tpu.dot_dimension_numbers<[1], [1], [0], [0], [0, 0, 1, 0], [], []>} : vector<4x2xf32>, vector<128x2xf32>, vector<4x128xf32> -> vector<4x128xf32>
    %163 = arith.addf %144, %162 : vector<4x128xf32>
    %164 = vector.extract_strided_slice %13 {offsets = [512, 0], sizes = [128, 2], strides = [1, 1]} : vector<768x4xf32> to vector<128x2xf32>
    %165 = vector.extract_strided_slice %14 {offsets = [512, 0], sizes = [128, 2], strides = [1, 1]} : vector<768x4xf32> to vector<128x2xf32>
    %166 = vector.extract_strided_slice %15 {offsets = [512, 0], sizes = [128, 2], strides = [1, 1]} : vector<768x4xf32> to vector<128x2xf32>
    %cst_54 = arith.constant dense<0.000000e+00> : vector<128x128xf32>
    %167 = tpu.matmul %164, %165, %cst_54 {dimension_numbers = #tpu.dot_dimension_numbers<[1], [1], [0], [0], [0, 0, 1, 0], [], []>} : vector<128x2xf32>, vector<128x2xf32>, vector<128x128xf32> -> vector<128x128xf32>
    %168 = arith.addf %167, %3 : vector<128x128xf32>
    %cst_55 = arith.constant dense<0xFF800000> : vector<128xf32>
    %169 = vector.multi_reduction <maximumf>, %168, %cst_55 [1] : vector<128x128xf32> to vector<128xf32>
    %170 = vector.shape_cast %169 : vector<128xf32> to vector<128x1xf32>
    %171 = vector.broadcast %170 : vector<128x1xf32> to vector<128x128xf32>
    %172 = arith.subf %168, %171 : vector<128x128xf32>
    %173 = math.exp %172 : vector<128x128xf32>
    %cst_56 = arith.constant dense<0.000000e+00> : vector<128xf32>
    %174 = vector.multi_reduction <add>, %173, %cst_56 [1] : vector<128x128xf32> to vector<128xf32>
    %175 = vector.shape_cast %174 : vector<128xf32> to vector<128x1xf32>
    %cst_57 = arith.constant dense<0.000000e+00> : vector<128x2xf32>
    %176 = tpu.matmul %173, %166, %cst_57 {dimension_numbers = #tpu.dot_dimension_numbers<[1], [0], [0], [1], [0, 0, 1, 1], [], []>} : vector<128x128xf32>, vector<128x2xf32>, vector<128x2xf32> -> vector<128x2xf32>
    %177 = tpu.reciprocal %175 : vector<128x1xf32> -> vector<128x1xf32>
    %178 = vector.broadcast %177 : vector<128x1xf32> to vector<128x2xf32>
    %179 = arith.mulf %176, %178 : vector<128x2xf32>
    %180 = vector.extract_strided_slice %4 {offsets = [0, 0], sizes = [4, 2], strides = [1, 1]} : vector<4x4xf32> to vector<4x2xf32>
    %cst_58 = arith.constant dense<0.000000e+00> : vector<4x128xf32>
    %181 = tpu.matmul %180, %179, %cst_58 {dimension_numbers = #tpu.dot_dimension_numbers<[1], [1], [0], [0], [0, 0, 1, 0], [], []>} : vector<4x2xf32>, vector<128x2xf32>, vector<4x128xf32> -> vector<4x128xf32>
    %182 = vector.extract_strided_slice %13 {offsets = [512, 2], sizes = [128, 2], strides = [1, 1]} : vector<768x4xf32> to vector<128x2xf32>
    %183 = vector.extract_strided_slice %14 {offsets = [512, 2], sizes = [128, 2], strides = [1, 1]} : vector<768x4xf32> to vector<128x2xf32>
    %184 = vector.extract_strided_slice %15 {offsets = [512, 2], sizes = [128, 2], strides = [1, 1]} : vector<768x4xf32> to vector<128x2xf32>
    %cst_59 = arith.constant dense<0.000000e+00> : vector<128x128xf32>
    %185 = tpu.matmul %182, %183, %cst_59 {dimension_numbers = #tpu.dot_dimension_numbers<[1], [1], [0], [0], [0, 0, 1, 0], [], []>} : vector<128x2xf32>, vector<128x2xf32>, vector<128x128xf32> -> vector<128x128xf32>
    %186 = arith.addf %185, %3 : vector<128x128xf32>
    %cst_60 = arith.constant dense<0xFF800000> : vector<128xf32>
    %187 = vector.multi_reduction <maximumf>, %186, %cst_60 [1] : vector<128x128xf32> to vector<128xf32>
    %188 = vector.shape_cast %187 : vector<128xf32> to vector<128x1xf32>
    %189 = vector.broadcast %188 : vector<128x1xf32> to vector<128x128xf32>
    %190 = arith.subf %186, %189 : vector<128x128xf32>
    %191 = math.exp %190 : vector<128x128xf32>
    %cst_61 = arith.constant dense<0.000000e+00> : vector<128xf32>
    %192 = vector.multi_reduction <add>, %191, %cst_61 [1] : vector<128x128xf32> to vector<128xf32>
    %193 = vector.shape_cast %192 : vector<128xf32> to vector<128x1xf32>
    %cst_62 = arith.constant dense<0.000000e+00> : vector<128x2xf32>
    %194 = tpu.matmul %191, %184, %cst_62 {dimension_numbers = #tpu.dot_dimension_numbers<[1], [0], [0], [1], [0, 0, 1, 1], [], []>} : vector<128x128xf32>, vector<128x2xf32>, vector<128x2xf32> -> vector<128x2xf32>
    %195 = tpu.reciprocal %193 : vector<128x1xf32> -> vector<128x1xf32>
    %196 = vector.broadcast %195 : vector<128x1xf32> to vector<128x2xf32>
    %197 = arith.mulf %194, %196 : vector<128x2xf32>
    %198 = vector.extract_strided_slice %4 {offsets = [0, 2], sizes = [4, 2], strides = [1, 1]} : vector<4x4xf32> to vector<4x2xf32>
    %cst_63 = arith.constant dense<0.000000e+00> : vector<4x128xf32>
    %199 = tpu.matmul %198, %197, %cst_63 {dimension_numbers = #tpu.dot_dimension_numbers<[1], [1], [0], [0], [0, 0, 1, 0], [], []>} : vector<4x2xf32>, vector<128x2xf32>, vector<4x128xf32> -> vector<4x128xf32>
    %200 = arith.addf %181, %199 : vector<4x128xf32>
    %201 = vector.extract_strided_slice %13 {offsets = [640, 0], sizes = [128, 2], strides = [1, 1]} : vector<768x4xf32> to vector<128x2xf32>
    %202 = vector.extract_strided_slice %14 {offsets = [640, 0], sizes = [128, 2], strides = [1, 1]} : vector<768x4xf32> to vector<128x2xf32>
    %203 = vector.extract_strided_slice %15 {offsets = [640, 0], sizes = [128, 2], strides = [1, 1]} : vector<768x4xf32> to vector<128x2xf32>
    %cst_64 = arith.constant dense<0.000000e+00> : vector<128x128xf32>
    %204 = tpu.matmul %201, %202, %cst_64 {dimension_numbers = #tpu.dot_dimension_numbers<[1], [1], [0], [0], [0, 0, 1, 0], [], []>} : vector<128x2xf32>, vector<128x2xf32>, vector<128x128xf32> -> vector<128x128xf32>
    %205 = arith.addf %204, %3 : vector<128x128xf32>
    %cst_65 = arith.constant dense<0xFF800000> : vector<128xf32>
    %206 = vector.multi_reduction <maximumf>, %205, %cst_65 [1] : vector<128x128xf32> to vector<128xf32>
    %207 = vector.shape_cast %206 : vector<128xf32> to vector<128x1xf32>
    %208 = vector.broadcast %207 : vector<128x1xf32> to vector<128x128xf32>
    %209 = arith.subf %205, %208 : vector<128x128xf32>
    %210 = math.exp %209 : vector<128x128xf32>
    %cst_66 = arith.constant dense<0.000000e+00> : vector<128xf32>
    %211 = vector.multi_reduction <add>, %210, %cst_66 [1] : vector<128x128xf32> to vector<128xf32>
    %212 = vector.shape_cast %211 : vector<128xf32> to vector<128x1xf32>
    %cst_67 = arith.constant dense<0.000000e+00> : vector<128x2xf32>
    %213 = tpu.matmul %210, %203, %cst_67 {dimension_numbers = #tpu.dot_dimension_numbers<[1], [0], [0], [1], [0, 0, 1, 1], [], []>} : vector<128x128xf32>, vector<128x2xf32>, vector<128x2xf32> -> vector<128x2xf32>
    %214 = tpu.reciprocal %212 : vector<128x1xf32> -> vector<128x1xf32>
    %215 = vector.broadcast %214 : vector<128x1xf32> to vector<128x2xf32>
    %216 = arith.mulf %213, %215 : vector<128x2xf32>
    %217 = vector.extract_strided_slice %4 {offsets = [0, 0], sizes = [4, 2], strides = [1, 1]} : vector<4x4xf32> to vector<4x2xf32>
    %cst_68 = arith.constant dense<0.000000e+00> : vector<4x128xf32>
    %218 = tpu.matmul %217, %216, %cst_68 {dimension_numbers = #tpu.dot_dimension_numbers<[1], [1], [0], [0], [0, 0, 1, 0], [], []>} : vector<4x2xf32>, vector<128x2xf32>, vector<4x128xf32> -> vector<4x128xf32>
    %219 = vector.extract_strided_slice %13 {offsets = [640, 2], sizes = [128, 2], strides = [1, 1]} : vector<768x4xf32> to vector<128x2xf32>
    %220 = vector.extract_strided_slice %14 {offsets = [640, 2], sizes = [128, 2], strides = [1, 1]} : vector<768x4xf32> to vector<128x2xf32>
    %221 = vector.extract_strided_slice %15 {offsets = [640, 2], sizes = [128, 2], strides = [1, 1]} : vector<768x4xf32> to vector<128x2xf32>
    %cst_69 = arith.constant dense<0.000000e+00> : vector<128x128xf32>
    %222 = tpu.matmul %219, %220, %cst_69 {dimension_numbers = #tpu.dot_dimension_numbers<[1], [1], [0], [0], [0, 0, 1, 0], [], []>} : vector<128x2xf32>, vector<128x2xf32>, vector<128x128xf32> -> vector<128x128xf32>
    %223 = arith.addf %222, %3 : vector<128x128xf32>
    %cst_70 = arith.constant dense<0xFF800000> : vector<128xf32>
    %224 = vector.multi_reduction <maximumf>, %223, %cst_70 [1] : vector<128x128xf32> to vector<128xf32>
    %225 = vector.shape_cast %224 : vector<128xf32> to vector<128x1xf32>
    %226 = vector.broadcast %225 : vector<128x1xf32> to vector<128x128xf32>
    %227 = arith.subf %223, %226 : vector<128x128xf32>
    %228 = math.exp %227 : vector<128x128xf32>
    %cst_71 = arith.constant dense<0.000000e+00> : vector<128xf32>
    %229 = vector.multi_reduction <add>, %228, %cst_71 [1] : vector<128x128xf32> to vector<128xf32>
    %230 = vector.shape_cast %229 : vector<128xf32> to vector<128x1xf32>
    %cst_72 = arith.constant dense<0.000000e+00> : vector<128x2xf32>
    %231 = tpu.matmul %228, %221, %cst_72 {dimension_numbers = #tpu.dot_dimension_numbers<[1], [0], [0], [1], [0, 0, 1, 1], [], []>} : vector<128x128xf32>, vector<128x2xf32>, vector<128x2xf32> -> vector<128x2xf32>
    %232 = tpu.reciprocal %230 : vector<128x1xf32> -> vector<128x1xf32>
    %233 = vector.broadcast %232 : vector<128x1xf32> to vector<128x2xf32>
    %234 = arith.mulf %231, %233 : vector<128x2xf32>
    %235 = vector.extract_strided_slice %4 {offsets = [0, 2], sizes = [4, 2], strides = [1, 1]} : vector<4x4xf32> to vector<4x2xf32>
    %cst_73 = arith.constant dense<0.000000e+00> : vector<4x128xf32>
    %236 = tpu.matmul %235, %234, %cst_73 {dimension_numbers = #tpu.dot_dimension_numbers<[1], [1], [0], [0], [0, 0, 1, 0], [], []>} : vector<4x2xf32>, vector<128x2xf32>, vector<4x128xf32> -> vector<4x128xf32>
    %237 = arith.addf %218, %236 : vector<4x128xf32>
    %238 = tpu.concatenate %52, %89, %126, %163, %200, %237 in 1 : vector<4x128xf32>, vector<4x128xf32>, vector<4x128xf32>, vector<4x128xf32>, vector<4x128xf32>, vector<4x128xf32> -> vector<4x768xf32>
    %cst_74 = arith.constant dense<0.000000e+00> : vector<4x256xf32>
    %239 = tpu.matmul %238, %2, %cst_74 {dimension_numbers = #tpu.dot_dimension_numbers<[1], [0], [0], [1], [0, 0, 1, 1], [], []>} : vector<4x768xf32>, vector<768x256xf32>, vector<4x256xf32> -> vector<4x256xf32>
    %c0_75 = arith.constant 0 : index
    %c0_76 = arith.constant 0 : index
    %240 = vector.load %arg7[%c0_75, %c0_76] : memref<4x1xf32, #tpu.memory_space<vmem>>, vector<4x1xf32>
    %241 = vector.broadcast %240 : vector<4x1xf32> to vector<4x256xf32>
    %242 = arith.addf %239, %241 : vector<4x256xf32>
    %c0_77 = arith.constant 0 : index
    %c0_78 = arith.constant 0 : index
    %c0_79 = arith.constant 0 : index
    %243 = vector.load %arg8[%c0_77, %c0_78, %c0_79] : memref<1x4x256xf32, #tpu.memory_space<vmem>>, vector<1x4x256xf32>
    %244 = vector.shape_cast %243 : vector<1x4x256xf32> to vector<4x256xf32>
    %245 = vector.shape_cast %242 : vector<4x256xf32> to vector<1x4x256xf32>
    tpu.vector_store %arg8[%c0_77, %c0_78, %c0_79], %245 {strides = array<i32>} : memref<1x4x256xf32, #tpu.memory_space<vmem>>, vector<1x4x256xf32>,
    return
  }
  func.func @transform_0(%arg0: i32) -> (i32, i32, i32) {
    %c0_i32 = arith.constant 0 : i32
    %c0_i32_0 = arith.constant 0 : i32
    %c0_i32_1 = arith.constant 0 : i32
    return %arg0, %c0_i32, %c0_i32_0 : i32, i32, i32
  }
  func.func @transform_1(%arg0: i32) -> (i32, i32) {
    %c0_i32 = arith.constant 0 : i32
    %c0_i32_0 = arith.constant 0 : i32
    %c0_i32_1 = arith.constant 0 : i32
    return %c0_i32, %c0_i32_0 : i32, i32
  }
  func.func @transform_2(%arg0: i32) -> (i32, i32) {
    %c0_i32 = arith.constant 0 : i32
    %c0_i32_0 = arith.constant 0 : i32
    %c0_i32_1 = arith.constant 0 : i32
    return %c0_i32, %c0_i32_0 : i32, i32
  }
  func.func @transform_3(%arg0: i32) -> (i32, i32) {
    %c0_i32 = arith.constant 0 : i32
    %c0_i32_0 = arith.constant 0 : i32
    %c0_i32_1 = arith.constant 0 : i32
    return %c0_i32, %c0_i32_0 : i32, i32
  }
  func.func @transform_4(%arg0: i32) -> (i32, i32) {
    %c0_i32 = arith.constant 0 : i32
    %c0_i32_0 = arith.constant 0 : i32
    %c0_i32_1 = arith.constant 0 : i32
    return %c0_i32, %c0_i32_0 : i32, i32
  }
  func.func @transform_5(%arg0: i32) -> (i32, i32) {
    %c0_i32 = arith.constant 0 : i32
    %c0_i32_0 = arith.constant 0 : i32
    %c0_i32_1 = arith.constant 0 : i32
    return %c0_i32, %c0_i32_0 : i32, i32
  }
  func.func @transform_6(%arg0: i32) -> (i32, i32) {
    %c0_i32 = arith.constant 0 : i32
    %c0_i32_0 = arith.constant 0 : i32
    %c0_i32_1 = arith.constant 0 : i32
    return %c0_i32, %c0_i32_0 : i32, i32
  }
  func.func @transform_7(%arg0: i32) -> (i32, i32, i32) {
    %c0_i32 = arith.constant 0 : i32
    %c0_i32_0 = arith.constant 0 : i32
    %c0_i32_1 = arith.constant 0 : i32
    return %arg0, %c0_i32, %c0_i32_0 : i32, i32, i32
  }
}

</mosaic_0001>

<llo_original>
// kernel: overlap_window_mha2d.1
$region0: #{overlap_window_mha2d.1}
  #allocation0 [shape = 'u32[]', space=smem, size = 0x4, offset = 0x4, fixed_abs, tag = 'smem constant byte address 0x4 - core index']
  #allocation1 [shape = 'u32[144,128]{1,0:T(1,128)}', space=vmem, size = 0x12000, scoped, tag = 'internal scratch']
  %s0 = inlined_call_operand.vmem [shape: f32[2,4,256], index: 0, kind: input, shape index: {}]
  %s1 = inlined_call_operand.hbm [shape: f32[768,256], index: 1, kind: input, shape index: {}]
  %s2 = inlined_call_operand.vmem [shape: f32[128,128], index: 2, kind: input, shape index: {}]
  %s3 = inlined_call_operand.vmem [shape: f32[12,4], index: 3, kind: input, shape index: {}]
  %s4 = inlined_call_operand.vmem [shape: f32[12,1], index: 4, kind: input, shape index: {}]
  %s5 = inlined_call_operand.vmem [shape: f32[4,4], index: 5, kind: input, shape index: {}]
  %s6 = inlined_call_operand.vmem [shape: f32[4,1], index: 6, kind: input, shape index: {}]
  %s7 = inlined_call_operand.vmem [shape: f32[2,4,256], index: 7, kind: output, shape index: {}]
  %s8 = sld [smem:[#allocation0]]
  $region65: #{overlap_window_mha2d.1} parent=0
    _
  %s10 = ssub.s32 1, %s8
  %s11 = scalar_select 0, %s10, %s8
  $region1: #{overlap_window_mha2d.1} parent=0
    #allocation2 [shape = 'u8[786432]{0}', space=vmem, size = 0xc0000, scoped, tag = 'input window, operand 1, single buffered']
    #allocation3 [shape = 's32[2]{0}', space=sflag, size = 0x8, scoped, tag = 'scoped memory for overlap_window_mha2d.1']
    %12 = vsyncpa [#allocation3], 0
    loop: start=0, step=1, limit=4
    $region2: #{overlap_window_mha2d.1} parent=1 // loop_pre_header
      _
    $region3: #{overlap_window_mha2d.1} parent=1 // loop_header
      %s14 = sphi 0, %s18
      %p15 = scmp.ge.s32.totalorder %s14, 4
      %s24 = sphi 0, %s26
      %s27 = sphi 0, %s24
      %s28 = sphi 0, %s27
      %s44 = sphi 0, %s28
      %s48 = sphi 0, %s48
      %s50 = sphi 0, %s48
      %s51 = sphi 0, %s50
      %s65 = sphi 0, %s51
      %s69 = sphi 0, %s69
      %s71 = sphi 0, %s69
      %s72 = sphi 0, %s71
      %s86 = sphi 0, %s72
      %s90 = sphi 0, %s90
      %s92 = sphi 0, %s90
      %s93 = sphi 0, %s92
      %s107 = sphi 0, %s93
      %s111 = sphi 0, %s111
      %s113 = sphi 0, %s111
      %s114 = sphi 0, %s113
      %s128 = sphi 0, %s114
      %s132 = sphi 0, %s132
      %s134 = sphi 0, %s132
      %s135 = sphi 0, %s134
      %s149 = sphi 0, %s135
      %s153 = sphi 0, %s153
      %s155 = sphi 0, %s153
      %s156 = sphi 0, %s155
      %s170 = sphi 0, %s156
      %s176 = sphi 0, %s178
      %s179 = sphi 0, %s176
      %s180 = sphi 0, %s179
      %s196 = sphi 0, %s180
    $region4: #{overlap_window_mha2d.1} parent=1 // loop_header_branch
      %17 = sbr.rel (%p15) target = $region8
    $region5: #{overlap_window_mha2d.1} parent=1 // loop_body
      %s19 = ssub.s32 %s14, 1
      %s20 = ssub.s32 %s14, 2
      %s21 = sadd.s32 %s14, 1
      %s22 = ssub.s32 %s14, %s21
      %p23 = scmp.eq.s32.totalorder %s22, 0
      %s25 = sadd.s32 %s24, 1
      %s26 = scalar_select %p23, %s24, %s25
      %p29 = pneg %p23
      %p30 = scmp.eq.s32.totalorder %s14, 1
      %p31 = por %p29, %p30
      %p32 = scmp.ne.s32.totalorder %s24, %s27
      %p33 = scmp.eq.s32.totalorder %s14, 0
      %p34 = por %p32, %p33
      %p35 = scmp.ne.s32.totalorder %s24, %s27
      %p36 = scmp.eq.s32.totalorder %s19, 1
      %p37 = por %p35, %p36
      %p38 = scmp.ne.s32.totalorder %s27, %s28
      %p39 = scmp.eq.s32.totalorder %s19, 0
      %p40 = por %p38, %p39
      %p41 = scmp.ne.s32.totalorder %s27, %s28
      %p42 = scmp.eq.s32.totalorder %s20, 1
      %p43 = por %p41, %p42
      %p45 = scmp.ne.s32.totalorder %s28, %s44
      %p46 = scmp.eq.s32.totalorder %s20, 0
      %p47 = por %p45, %p46
      %s49 = sadd.s32 %s48, 1
      %p52 = scmp.eq.s32.totalorder %s14, 1
      %p53 = scmp.ne.s32.totalorder %s48, %s50
      %p54 = scmp.eq.s32.totalorder %s14, 0
      %p55 = por %p53, %p54
      %p56 = scmp.ne.s32.totalorder %s48, %s50
      %p57 = scmp.eq.s32.totalorder %s19, 1
      %p58 = por %p56, %p57
      %p59 = scmp.ne.s32.totalorder %s50, %s51
      %p60 = scmp.eq.s32.totalorder %s19, 0
      %p61 = por %p59, %p60
      %p62 = scmp.ne.s32.totalorder %s50, %s51
      %p63 = scmp.eq.s32.totalorder %s20, 1
      %p64 = por %p62, %p63
      %p66 = scmp.ne.s32.totalorder %s51, %s65
      %p67 = scmp.eq.s32.totalorder %s20, 0
      %p68 = por %p66, %p67
      %s70 = sadd.s32 %s69, 1
      %p73 = scmp.eq.s32.totalorder %s14, 1
      %p74 = scmp.ne.s32.totalorder %s69, %s71
      %p75 = scmp.eq.s32.totalorder %s14, 0
      %p76 = por %p74, %p75
      %p77 = scmp.ne.s32.totalorder %s69, %s71
      %p78 = scmp.eq.s32.totalorder %s19, 1
      %p79 = por %p77, %p78
      %p80 = scmp.ne.s32.totalorder %s71, %s72
      %p81 = scmp.eq.s32.totalorder %s19, 0
      %p82 = por %p80, %p81
      %p83 = scmp.ne.s32.totalorder %s71, %s72
      %p84 = scmp.eq.s32.totalorder %s20, 1
      %p85 = por %p83, %p84
      %p87 = scmp.ne.s32.totalorder %s72, %s86
      %p88 = scmp.eq.s32.totalorder %s20, 0
      %p89 = por %p87, %p88
      %s91 = sadd.s32 %s90, 1
      %p94 = scmp.eq.s32.totalorder %s14, 1
      %p95 = scmp.ne.s32.totalorder %s90, %s92
      %p96 = scmp.eq.s32.totalorder %s14, 0
      %p97 = por %p95, %p96
      %p98 = scmp.ne.s32.totalorder %s90, %s92
      %p99 = scmp.eq.s32.totalorder %s19, 1
      %p100 = por %p98, %p99
      %p101 = scmp.ne.s32.totalorder %s92, %s93
      %p102 = scmp.eq.s32.totalorder %s19, 0
      %p103 = por %p101, %p102
      %p104 = scmp.ne.s32.totalorder %s92, %s93
      %p105 = scmp.eq.s32.totalorder %s20, 1
      %p106 = por %p104, %p105
      %p108 = scmp.ne.s32.totalorder %s93, %s107
      %p109 = scmp.eq.s32.totalorder %s20, 0
      %p110 = por %p108, %p109
      %s112 = sadd.s32 %s111, 1
      %p115 = scmp.eq.s32.totalorder %s14, 1
      %p116 = scmp.ne.s32.totalorder %s111, %s113
      %p117 = scmp.eq.s32.totalorder %s14, 0
      %p118 = por %p116, %p117
      %p119 = scmp.ne.s32.totalorder %s111, %s113
      %p120 = scmp.eq.s32.totalorder %s19, 1
      %p121 = por %p119, %p120
      %p122 = scmp.ne.s32.totalorder %s113, %s114
      %p123 = scmp.eq.s32.totalorder %s19, 0
      %p124 = por %p122, %p123
      %p125 = scmp.ne.s32.totalorder %s113, %s114
      %p126 = scmp.eq.s32.totalorder %s20, 1
      %p127 = por %p125, %p126
      %p129 = scmp.ne.s32.totalorder %s114, %s128
      %p130 = scmp.eq.s32.totalorder %s20, 0
      %p131 = por %p129, %p130
      %s133 = sadd.s32 %s132, 1
      %p136 = scmp.eq.s32.totalorder %s14, 1
      %p137 = scmp.ne.s32.totalorder %s132, %s134
      %p138 = scmp.eq.s32.totalorder %s14, 0
      %p139 = por %p137, %p138
      %p140 = scmp.ne.s32.totalorder %s132, %s134
      %p141 = scmp.eq.s32.totalorder %s19, 1
      %p142 = por %p140, %p141
      %p143 = scmp.ne.s32.totalorder %s134, %s135
      %p144 = scmp.eq.s32.totalorder %s19, 0
      %p145 = por %p143, %p144
      %p146 = scmp.ne.s32.totalorder %s134, %s135
      %p147 = scmp.eq.s32.totalorder %s20, 1
      %p148 = por %p146, %p147
      %p150 = scmp.ne.s32.totalorder %s135, %s149
      %p151 = scmp.eq.s32.totalorder %s20, 0
      %p152 = por %p150, %p151
      %s154 = sadd.s32 %s153, 1
      %p157 = scmp.eq.s32.totalorder %s14, 1
      %p158 = scmp.ne.s32.totalorder %s153, %s155
      %p159 = scmp.eq.s32.totalorder %s14, 0
      %p160 = por %p158, %p159
      %p161 = scmp.ne.s32.totalorder %s153, %s155
      %p162 = scmp.eq.s32.totalorder %s19, 1
      %p163 = por %p161, %p162
      %p164 = scmp.ne.s32.totalorder %s155, %s156
      %p165 = scmp.eq.s32.totalorder %s19, 0
      %p166 = por %p164, %p165
      %p167 = scmp.ne.s32.totalorder %s155, %s156
      %p168 = scmp.eq.s32.totalorder %s20, 1
      %p169 = por %p167, %p168
      %p171 = scmp.ne.s32.totalorder %s156, %s170
      %p172 = scmp.eq.s32.totalorder %s20, 0
      %p173 = por %p171, %p172
      %s174 = ssub.s32 %s14, %s21
      %p175 = scmp.eq.s32.totalorder %s174, 0
      %s177 = sadd.s32 %s176, 1
      %s178 = scalar_select %p175, %s176, %s177
      %p181 = pneg %p175
      %p182 = scmp.eq.s32.totalorder %s14, 1
      %p183 = por %p181, %p182
      %p184 = scmp.ne.s32.totalorder %s176, %s179
      %p185 = scmp.eq.s32.totalorder %s14, 0
      %p186 = por %p184, %p185
      %p187 = scmp.ne.s32.totalorder %s176, %s179
      %p188 = scmp.eq.s32.totalorder %s19, 1
      %p189 = por %p187, %p188
      %p190 = scmp.ne.s32.totalorder %s179, %s180
      %p191 = scmp.eq.s32.totalorder %s19, 0
      %p192 = por %p190, %p191
      %p193 = scmp.ne.s32.totalorder %s179, %s180
      %p194 = scmp.eq.s32.totalorder %s20, 1
      %p195 = por %p193, %p194
      %p197 = scmp.ne.s32.totalorder %s180, %s196
      %p198 = scmp.eq.s32.totalorder %s20, 0
      %p199 = por %p197, %p198
      %p200 = scmp.le.s32.totalorder 1, %s14
      %p201 = scmp.lt.s32.totalorder %s14, 3
      %p202 = pnand %p200, %p201
      %p203 = pneg %p202
      // Predicated region
      $region9: #{overlap_window_mha2d.1} parent=5 // pred_check
        _
      $region10: #{overlap_window_mha2d.1} parent=5 // pred_check_branch
        %205 = sbr.rel (%p202) target = $region12
      $region11: #{overlap_window_mha2d.1} parent=5 // pred_region
        %s206 = ssub.s32 %s14, 1
        // Predicated region
        $region13: #{overlap_window_mha2d.1} parent=11 // pred_check
          %p207 = pneg %p61
        $region14: #{overlap_window_mha2d.1} parent=11 // pred_check_branch
          %209 = sbr.rel (%p207) target = $region16
        $region15: #{overlap_window_mha2d.1} parent=11 // pred_region
          %s211 = ssub.s32 24576, 24576
          %212 = vsyncadd [#allocation3], %s211
          %s213 = sshll.u32 [#allocation2], 4
          %s214 = int_to_ptr.vmem [resolvable:$true] %s213
          %219 = dma.hbm_to_vmem [thread:$0]  %s1, 24576, %s214, [#allocation3], 256, 256, 16
        $region16: #{overlap_window_mha2d.1} parent=11 // pred_fallthru
          _
        // Predicated region
        $region17: #{overlap_window_mha2d.1} parent=11 // pred_check
          %p220 = pneg %p82
        $region18: #{overlap_window_mha2d.1} parent=11 // pred_check_branch
          %222 = sbr.rel (%p220) target = $region20
        $region19: #{overlap_window_mha2d.1} parent=11 // pred_region
          _
        $region20: #{overlap_window_mha2d.1} parent=11 // pred_fallthru
          _
        // Predicated region
        $region21: #{overlap_window_mha2d.1} parent=11 // pred_check
          %p223 = pneg %p103
        $region22: #{overlap_window_mha2d.1} parent=11 // pred_check_branch
          %225 = sbr.rel (%p223) target = $region24
        $region23: #{overlap_window_mha2d.1} parent=11 // pred_region
          _
        $region24: #{overlap_window_mha2d.1} parent=11 // pred_fallthru
          _
        // Predicated region
        $region25: #{overlap_window_mha2d.1} parent=11 // pred_check
          %p226 = pneg %p124
        $region26: #{overlap_window_mha2d.1} parent=11 // pred_check_branch
          %228 = sbr.rel (%p226) target = $region28
        $region27: #{overlap_window_mha2d.1} parent=11 // pred_region
          _
        $region28: #{overlap_window_mha2d.1} parent=11 // pred_fallthru
          _
        // Predicated region
        $region29: #{overlap_window_mha2d.1} parent=11 // pred_check
          %p229 = pneg %p145
        $region30: #{overlap_window_mha2d.1} parent=11 // pred_check_branch
          %231 = sbr.rel (%p229) target = $region32
        $region31: #{overlap_window_mha2d.1} parent=11 // pred_region
          _
        $region32: #{overlap_window_mha2d.1} parent=11 // pred_fallthru
          _
        // Predicated region
        $region33: #{overlap_window_mha2d.1} parent=11 // pred_check
          %p232 = pneg %p166
        $region34: #{overlap_window_mha2d.1} parent=11 // pred_check_branch
          %234 = sbr.rel (%p232) target = $region36
        $region35: #{overlap_window_mha2d.1} parent=11 // pred_region
          _
        $region36: #{overlap_window_mha2d.1} parent=11 // pred_fallthru
          _
      $region12: #{overlap_window_mha2d.1} parent=5 // pred_fallthru
        _
      %p235 = scmp.lt.s32.totalorder %s14, 2
      // Predicated region
      $region37: #{overlap_window_mha2d.1} parent=5 // pred_check
        %p236 = pneg %p235
      $region38: #{overlap_window_mha2d.1} parent=5 // pred_check_branch
        %238 = sbr.rel (%p236) target = $region40
      $region39: #{overlap_window_mha2d.1} parent=5 // pred_region
        // Predicated region
        $region41: #{overlap_window_mha2d.1} parent=39 // pred_check
          %p239 = pneg %p34
        $region42: #{overlap_window_mha2d.1} parent=39 // pred_check_branch
          %241 = sbr.rel (%p239) target = $region44
        $region43: #{overlap_window_mha2d.1} parent=39 // pred_region
          %p242 = scmp.lt.s32.totalorder %s14, 1
          %s243 = scalar_select %p242, %s14, 1
          %s244 = smul.addr %s243, 2
          %s245 = smul.addr %s244, 4
          %s246 = scalar_lea.vmem %s0, %s245
        $region44: #{overlap_window_mha2d.1} parent=39 // pred_fallthru
          _
      $region40: #{overlap_window_mha2d.1} parent=5 // pred_fallthru
        _
      %p247 = scmp.le.s32.totalorder 1, %s14
      %p248 = scmp.lt.s32.totalorder %s14, 3
      %p249 = pnand %p247, %p248
      %p250 = pneg %p249
      // Predicated region
      $region45: #{overlap_window_mha2d.1} parent=5 // pred_check
        _
      $region46: #{overlap_window_mha2d.1} parent=5 // pred_check_branch
        %252 = sbr.rel (%p249) target = $region48
      $region47: #{overlap_window_mha2d.1} parent=5 // pred_region
        %s253 = ssub.s32 %s14, 1
        // Predicated region
        $region49: #{overlap_window_mha2d.1} parent=47 // pred_check
          %p254 = pneg %p61
        $region50: #{overlap_window_mha2d.1} parent=47 // pred_check_branch
          %256 = sbr.rel (%p254) target = $region52
        $region51: #{overlap_window_mha2d.1} parent=47 // pred_region
          %257 = dma.done [#allocation3], 24576
        $region52: #{overlap_window_mha2d.1} parent=47 // pred_fallthru
          _
        %p258 = scmp.lt.s32.totalorder %s19, 1
        %s259 = scalar_select %p258, %s19, 1
        %s260 = smul.addr %s259, 2
        %s261 = smul.addr %s260, 4
        %s262 = scalar_lea.vmem %s0, %s261
        %p263 = pneg %p40
        %p264 = pneg %p37
        %p265 = pneg %p61
        %p266 = pneg %p58
        %p267 = pneg %p82
        %p268 = pneg %p79
        %p269 = pneg %p103
        %p270 = pneg %p100
        %p271 = pneg %p124
        %p272 = pneg %p121
        %p273 = pneg %p145
        %p274 = pneg %p142
        %p275 = pneg %p166
        %p276 = pneg %p163
        %p277 = pneg %p192
        %p278 = pneg %p189
        %p279 = scmp.lt.s32.totalorder %s19, 1
        %s280 = scalar_select %p279, %s19, 1
        %s281 = smul.addr %s280, 2
        %s282 = smul.addr %s281, 4
        %s283 = scalar_lea.vmem %s7, %s282
        %p284 = scmp.lt.s32.totalorder %s19, 1
        %s285 = scalar_select %p284, %s19, 1
        %s286 = smul.addr %s285, 2
        %s287 = smul.addr %s286, 4
        %s288 = scalar_lea.vmem %s0, %s287
        %p289 = scmp.lt.s32.totalorder %s19, 1
        %s290 = scalar_select %p289, %s19, 1
        %s291 = smul.addr %s290, 2
        %s292 = smul.addr %s291, 4
        %s293 = scalar_lea.vmem %s7, %s292
        %v294 = vld [vmem:[%s288] sm:$0xff]
        %v295 = vld [vmem:[#allocation2] sm:$0xff]
        %v296 = vld [vmem:[#allocation2 + $0x8] sm:$0xff]
        %v297 = vld [vmem:[#allocation2 + $0x10] sm:$0xff]
        %v298 = vld [vmem:[#allocation2 + $0x18] sm:$0xff]
        %v299 = vld [vmem:[#allocation2 + $0x20] sm:$0xff]
        %v300 = vld [vmem:[#allocation2 + $0x28] sm:$0xff]
        %v301 = vld [vmem:[#allocation2 + $0x30] sm:$0xff]
        %v302 = vld [vmem:[#allocation2 + $0x38] sm:$0xff]
        %v303 = vld [vmem:[#allocation2 + $0x40] sm:$0xff]
        %v304 = vld [vmem:[#allocation2 + $0x48] sm:$0xff]
        %v305 = vld [vmem:[#allocation2 + $0x50] sm:$0xff]
        %v306 = vld [vmem:[#allocation2 + $0x58] sm:$0xff]
        %v307 = vld [vmem:[#allocation2 + $0x60] sm:$0xff]
        %v308 = vld [vmem:[#allocation2 + $0x68] sm:$0xff]
        %v309 = vld [vmem:[#allocation2 + $0x70] sm:$0xff]
        %v310 = vld [vmem:[#allocation2 + $0x78] sm:$0xff]
        %v311 = vld [vmem:[#allocation2 + $0x80] sm:$0xff]
        %v312 = vld [vmem:[#allocation2 + $0x88] sm:$0xff]
        %v313 = vld [vmem:[#allocation2 + $0x90] sm:$0xff]
        %v314 = vld [vmem:[#allocation2 + $0x98] sm:$0xff]
        %v315 = vld [vmem:[#allocation2 + $0xa0] sm:$0xff]
        %v316 = vld [vmem:[#allocation2 + $0xa8] sm:$0xff]
        %v317 = vld [vmem:[#allocation2 + $0xb0] sm:$0xff]
        %v318 = vld [vmem:[#allocation2 + $0xb8] sm:$0xff]
        %v319 = vld [vmem:[#allocation2 + $0xc0] sm:$0xff]
        %v320 = vld [vmem:[#allocation2 + $0xc8] sm:$0xff]
        %v321 = vld [vmem:[#allocation2 + $0xd0] sm:$0xff]
        %v322 = vld [vmem:[#allocation2 + $0xd8] sm:$0xff]
        %v323 = vld [vmem:[#allocation2 + $0xe0] sm:$0xff]
        %v324 = vld [vmem:[#allocation2 + $0xe8] sm:$0xff]
        %v325 = vld [vmem:[#allocation2 + $0xf0] sm:$0xff]
        %v326 = vld [vmem:[#allocation2 + $0xf8] sm:$0xff]
        %v327 = vld [vmem:[#allocation2 + $0x100] sm:$0xff]
        %v328 = vld [vmem:[#allocation2 + $0x108] sm:$0xff]
        %v329 = vld [vmem:[#allocation2 + $0x110] sm:$0xff]
        %v330 = vld [vmem:[#allocation2 + $0x118] sm:$0xff]
        %v331 = vld [vmem:[#allocation2 + $0x120] sm:$0xff]
        %v332 = vld [vmem:[#allocation2 + $0x128] sm:$0xff]
        %v333 = vld [vmem:[#allocation2 + $0x130] sm:$0xff]
        %v334 = vld [vmem:[#allocation2 + $0x138] sm:$0xff]
        %v335 = vld [vmem:[#allocation2 + $0x140] sm:$0xff]
        %v336 = vld [vmem:[#allocation2 + $0x148] sm:$0xff]
        %v337 = vld [vmem:[#allocation2 + $0x150] sm:$0xff]
        %v338 = vld [vmem:[#allocation2 + $0x158] sm:$0xff]
        %v339 = vld [vmem:[#allocation2 + $0x160] sm:$0xff]
        %v340 = vld [vmem:[#allocation2 + $0x168] sm:$0xff]
        %v341 = vld [vmem:[#allocation2 + $0x170] sm:$0xff]
        %v342 = vld [vmem:[#allocation2 + $0x178] sm:$0xff]
        %v343 = vld [vmem:[#allocation2 + $0x180] sm:$0xff]
        %v344 = vld [vmem:[#allocation2 + $0x188] sm:$0xff]
        %v345 = vld [vmem:[#allocation2 + $0x190] sm:$0xff]
        %v346 = vld [vmem:[#allocation2 + $0x198] sm:$0xff]
        %v347 = vld [vmem:[#allocation2 + $0x1a0] sm:$0xff]
        %v348 = vld [vmem:[#allocation2 + $0x1a8] sm:$0xff]
        %v349 = vld [vmem:[#allocation2 + $0x1b0] sm:$0xff]
        %v350 = vld [vmem:[#allocation2 + $0x1b8] sm:$0xff]
        %v351 = vld [vmem:[#allocation2 + $0x1c0] sm:$0xff]
        %v352 = vld [vmem:[#allocation2 + $0x1c8] sm:$0xff]
        %v353 = vld [vmem:[#allocation2 + $0x1d0] sm:$0xff]
        %v354 = vld [vmem:[#allocation2 + $0x1d8] sm:$0xff]
        %v355 = vld [vmem:[#allocation2 + $0x1e0] sm:$0xff]
        %v356 = vld [vmem:[#allocation2 + $0x1e8] sm:$0xff]
        %v357 = vld [vmem:[#allocation2 + $0x1f0] sm:$0xff]
        %v358 = vld [vmem:[#allocation2 + $0x1f8] sm:$0xff]
        %v359 = vld [vmem:[#allocation2 + $0x200] sm:$0xff]
        %v360 = vld [vmem:[#allocation2 + $0x208] sm:$0xff]
        %v361 = vld [vmem:[#allocation2 + $0x210] sm:$0xff]
        %v362 = vld [vmem:[#allocation2 + $0x218] sm:$0xff]
        %v363 = vld [vmem:[#allocation2 + $0x220] sm:$0xff]
        %v364 = vld [vmem:[#allocation2 + $0x228] sm:$0xff]
        %v365 = vld [vmem:[#allocation2 + $0x230] sm:$0xff]
        %v366 = vld [vmem:[#allocation2 + $0x238] sm:$0xff]
        %v367 = vld [vmem:[#allocation2 + $0x240] sm:$0xff]
        %v368 = vld [vmem:[#allocation2 + $0x248] sm:$0xff]
        %v369 = vld [vmem:[#allocation2 + $0x250] sm:$0xff]
        %v370 = vld [vmem:[#allocation2 + $0x258] sm:$0xff]
        %v371 = vld [vmem:[#allocation2 + $0x260] sm:$0xff]
        %v372 = vld [vmem:[#allocation2 + $0x268] sm:$0xff]
        %v373 = vld [vmem:[#allocation2 + $0x270] sm:$0xff]
        %v374 = vld [vmem:[#allocation2 + $0x278] sm:$0xff]
        %v375 = vld [vmem:[#allocation2 + $0x280] sm:$0xff]
        %v376 = vld [vmem:[#allocation2 + $0x288] sm:$0xff]
        %v377 = vld [vmem:[#allocation2 + $0x290] sm:$0xff]
        %v378 = vld [vmem:[#allocation2 + $0x298] sm:$0xff]
        %v379 = vld [vmem:[#allocation2 + $0x2a0] sm:$0xff]
        %v380 = vld [vmem:[#allocation2 + $0x2a8] sm:$0xff]
        %v381 = vld [vmem:[#allocation2 + $0x2b0] sm:$0xff]
        %v382 = vld [vmem:[#allocation2 + $0x2b8] sm:$0xff]
        %v383 = vld [vmem:[#allocation2 + $0x2c0] sm:$0xff]
        %v384 = vld [vmem:[#allocation2 + $0x2c8] sm:$0xff]
        %v385 = vld [vmem:[#allocation2 + $0x2d0] sm:$0xff]
        %v386 = vld [vmem:[#allocation2 + $0x2d8] sm:$0xff]
        %v387 = vld [vmem:[#allocation2 + $0x2e0] sm:$0xff]
        %v388 = vld [vmem:[#allocation2 + $0x2e8] sm:$0xff]
        %v389 = vld [vmem:[#allocation2 + $0x2f0] sm:$0xff]
        %v390 = vld [vmem:[#allocation2 + $0x2f8] sm:$0xff]
        %v391 = vld [vmem:[#allocation2 + $0x300] sm:$0xff]
        %v392 = vld [vmem:[#allocation2 + $0x308] sm:$0xff]
        %v393 = vld [vmem:[#allocation2 + $0x310] sm:$0xff]
        %v394 = vld [vmem:[#allocation2 + $0x318] sm:$0xff]
        %v395 = vld [vmem:[#allocation2 + $0x320] sm:$0xff]
        %v396 = vld [vmem:[#allocation2 + $0x328] sm:$0xff]
        %v397 = vld [vmem:[#allocation2 + $0x330] sm:$0xff]
        %v398 = vld [vmem:[#allocation2 + $0x338] sm:$0xff]
        %v399 = vld [vmem:[#allocation2 + $0x340] sm:$0xff]
        %v400 = vld [vmem:[#allocation2 + $0x348] sm:$0xff]
        %v401 = vld [vmem:[#allocation2 + $0x350] sm:$0xff]
        %v402 = vld [vmem:[#allocation2 + $0x358] sm:$0xff]
        %v403 = vld [vmem:[#allocation2 + $0x360] sm:$0xff]
        %v404 = vld [vmem:[#allocation2 + $0x368] sm:$0xff]
        %v405 = vld [vmem:[#allocation2 + $0x370] sm:$0xff]
        %v406 = vld [vmem:[#allocation2 + $0x378] sm:$0xff]
        %v407 = vld [vmem:[#allocation2 + $0x380] sm:$0xff]
        %v408 = vld [vmem:[#allocation2 + $0x388] sm:$0xff]
        %v409 = vld [vmem:[#allocation2 + $0x390] sm:$0xff]
        %v410 = vld [vmem:[#allocation2 + $0x398] sm:$0xff]
        %v411 = vld [vmem:[#allocation2 + $0x3a0] sm:$0xff]
        %v412 = vld [vmem:[#allocation2 + $0x3a8] sm:$0xff]
        %v413 = vld [vmem:[#allocation2 + $0x3b0] sm:$0xff]
        %v414 = vld [vmem:[#allocation2 + $0x3b8] sm:$0xff]
        %v415 = vld [vmem:[#allocation2 + $0x3c0] sm:$0xff]
        %v416 = vld [vmem:[#allocation2 + $0x3c8] sm:$0xff]
        %v417 = vld [vmem:[#allocation2 + $0x3d0] sm:$0xff]
        %v418 = vld [vmem:[#allocation2 + $0x3d8] sm:$0xff]
        %v419 = vld [vmem:[#allocation2 + $0x3e0] sm:$0xff]
        %v420 = vld [vmem:[#allocation2 + $0x3e8] sm:$0xff]
        %v421 = vld [vmem:[#allocation2 + $0x3f0] sm:$0xff]
        %v422 = vld [vmem:[#allocation2 + $0x3f8] sm:$0xff]
        %v423 = vld [vmem:[#allocation2 + $0x400] sm:$0xff]
        %v424 = vld [vmem:[#allocation2 + $0x408] sm:$0xff]
        %v425 = vld [vmem:[#allocation2 + $0x410] sm:$0xff]
        %v426 = vld [vmem:[#allocation2 + $0x418] sm:$0xff]
        %v427 = vld [vmem:[#allocation2 + $0x420] sm:$0xff]
        %v428 = vld [vmem:[#allocation2 + $0x428] sm:$0xff]
        %v429 = vld [vmem:[#allocation2 + $0x430] sm:$0xff]
        %v430 = vld [vmem:[#allocation2 + $0x438] sm:$0xff]
        %v431 = vld [vmem:[#allocation2 + $0x440] sm:$0xff]
        %v432 = vld [vmem:[#allocation2 + $0x448] sm:$0xff]
        %v433 = vld [vmem:[#allocation2 + $0x450] sm:$0xff]
        %v434 = vld [vmem:[#allocation2 + $0x458] sm:$0xff]
        %v435 = vld [vmem:[#allocation2 + $0x460] sm:$0xff]
        %v436 = vld [vmem:[#allocation2 + $0x468] sm:$0xff]
        %v437 = vld [vmem:[#allocation2 + $0x470] sm:$0xff]
        %v438 = vld [vmem:[#allocation2 + $0x478] sm:$0xff]
        %v439 = vld [vmem:[#allocation2 + $0x480] sm:$0xff]
        %v440 = vld [vmem:[#allocation2 + $0x488] sm:$0xff]
        %v441 = vld [vmem:[#allocation2 + $0x490] sm:$0xff]
        %v442 = vld [vmem:[#allocation2 + $0x498] sm:$0xff]
        %v443 = vld [vmem:[#allocation2 + $0x4a0] sm:$0xff]
        %v444 = vld [vmem:[#allocation2 + $0x4a8] sm:$0xff]
        %v445 = vld [vmem:[#allocation2 + $0x4b0] sm:$0xff]
        %v446 = vld [vmem:[#allocation2 + $0x4b8] sm:$0xff]
        %v447 = vld [vmem:[#allocation2 + $0x4c0] sm:$0xff]
        %v448 = vld [vmem:[#allocation2 + $0x4c8] sm:$0xff]
        %v449 = vld [vmem:[#allocation2 + $0x4d0] sm:$0xff]
        %v450 = vld [vmem:[#allocation2 + $0x4d8] sm:$0xff]
        %v451 = vld [vmem:[#allocation2 + $0x4e0] sm:$0xff]
        %v452 = vld [vmem:[#allocation2 + $0x4e8] sm:$0xff]
        %v453 = vld [vmem:[#allocation2 + $0x4f0] sm:$0xff]
        %v454 = vld [vmem:[#allocation2 + $0x4f8] sm:$0xff]
        %v455 = vld [vmem:[#allocation2 + $0x500] sm:$0xff]
        %v456 = vld [vmem:[#allocation2 + $0x508] sm:$0xff]
        %v457 = vld [vmem:[#allocation2 + $0x510] sm:$0xff]
        %v458 = vld [vmem:[#allocation2 + $0x518] sm:$0xff]
        %v459 = vld [vmem:[#allocation2 + $0x520] sm:$0xff]
        %v460 = vld [vmem:[#allocation2 + $0x528] sm:$0xff]
        %v461 = vld [vmem:[#allocation2 + $0x530] sm:$0xff]
        %v462 = vld [vmem:[#allocation2 + $0x538] sm:$0xff]
        %v463 = vld [vmem:[#allocation2 + $0x540] sm:$0xff]
        %v464 = vld [vmem:[#allocation2 + $0x548] sm:$0xff]
        %v465 = vld [vmem:[#allocation2 + $0x550] sm:$0xff]
        %v466 = vld [vmem:[#allocation2 + $0x558] sm:$0xff]
        %v467 = vld [vmem:[#allocation2 + $0x560] sm:$0xff]
        %v468 = vld [vmem:[#allocation2 + $0x568] sm:$0xff]
        %v469 = vld [vmem:[#allocation2 + $0x570] sm:$0xff]
        %v470 = vld [vmem:[#allocation2 + $0x578] sm:$0xff]
        %v471 = vld [vmem:[#allocation2 + $0x580] sm:$0xff]
        %v472 = vld [vmem:[#allocation2 + $0x588] sm:$0xff]
        %v473 = vld [vmem:[#allocation2 + $0x590] sm:$0xff]
        %v474 = vld [vmem:[#allocation2 + $0x598] sm:$0xff]
        %v475 = vld [vmem:[#allocation2 + $0x5a0] sm:$0xff]
        %v476 = vld [vmem:[#allocation2 + $0x5a8] sm:$0xff]
        %v477 = vld [vmem:[#allocation2 + $0x5b0] sm:$0xff]
        %v478 = vld [vmem:[#allocation2 + $0x5b8] sm:$0xff]
        %v479 = vld [vmem:[#allocation2 + $0x5c0] sm:$0xff]
        %v480 = vld [vmem:[#allocation2 + $0x5c8] sm:$0xff]
        %v481 = vld [vmem:[#allocation2 + $0x5d0] sm:$0xff]
        %v482 = vld [vmem:[#allocation2 + $0x5d8] sm:$0xff]
        %v483 = vld [vmem:[#allocation2 + $0x5e0] sm:$0xff]
        %v484 = vld [vmem:[#allocation2 + $0x5e8] sm:$0xff]
        %v485 = vld [vmem:[#allocation2 + $0x5f0] sm:$0xff]
        %v486 = vld [vmem:[#allocation2 + $0x5f8] sm:$0xff]
        %v487 = vld [vmem:[%s2] sm:$0xff]
        %v488 = vld [vmem:[%s2 + $0x8] sm:$0xff]
        %v489 = vld [vmem:[%s2 + $0x10] sm:$0xff]
        %v490 = vld [vmem:[%s2 + $0x18] sm:$0xff]
        %v491 = vld [vmem:[%s2 + $0x20] sm:$0xff]
        %v492 = vld [vmem:[%s2 + $0x28] sm:$0xff]
        %v493 = vld [vmem:[%s2 + $0x30] sm:$0xff]
        %v494 = vld [vmem:[%s2 + $0x38] sm:$0xff]
        %v495 = vld [vmem:[%s2 + $0x40] sm:$0xff]
        %v496 = vld [vmem:[%s2 + $0x48] sm:$0xff]
        %v497 = vld [vmem:[%s2 + $0x50] sm:$0xff]
        %v498 = vld [vmem:[%s2 + $0x58] sm:$0xff]
        %v499 = vld [vmem:[%s2 + $0x60] sm:$0xff]
        %v500 = vld [vmem:[%s2 + $0x68] sm:$0xff]
        %v501 = vld [vmem:[%s2 + $0x70] sm:$0xff]
        %v502 = vld [vmem:[%s2 + $0x78] sm:$0xff]
        %v503 = vld [vmem:[%s5] sm:$0xf]
        %v504 = vld [vmem:[%s3] sm:$0xff]
        %v505 = vld [vmem:[%s3 + $0x8] sm:$0xf]
        %v506 = vld [vmem:[%s4] sm:$0xff]
        %v507 = vld [vmem:[%s4 + $0x8] sm:$0xf]
        %509 = vset.pattern.permute.xlu0 0
        %510 = vperm.xlu0 %509, %v506
        %v511 = vpop.permute.xlu0 %510
        %514 = vset.pattern.permute.xlu0 0
        %515 = vperm.xlu0 %514, %v507
        %v516 = vpop.permute.xlu0 %515
        %v519 = vcombine.high %v294, %v294
        %vm520 = vcmask 31744
        %v522 = vsel %vm520, %v504, 0
        %v525 = vsel %vm520, %v505, 0
        %vm527 = vcmask 1043456
        %v528 = vsel %vm527, %v294, 0
        %v530 = vsel %vm527, %v519, 0
        %532 = vmatprep.subr.mxu0 0.0
        %533 = vmatpush1.msra.mxu0 0.0
        %534 = vmatprep.subr.mxu0 0.0
        %535 = vmatpush1.msra.mxu0 0.0
        %536 = vmatprep.subr.mxu0 0.0
        %537 = vmatpush1.msra.mxu0 0.0
        %538 = vmatprep.subr.mxu0 0.0
        %539 = vmatpush1.msra.mxu0 0.0
        %540 = vmatprep.subr.mxu0 0.0
        %541 = vmatpush1.msra.mxu0 0.0
        %542 = vmatprep.subr.mxu0 0.0
        %543 = vmatpush1.msra.mxu0 0.0
        %544 = vmatprep.subr.mxu0 0.0
        %545 = vmatpush1.msra.mxu0 0.0
        %546 = vmatprep.subr.mxu0 0.0
        %547 = vmatpush1.msra.mxu0 0.0
        %548 = vmatprep.subr.mxu0 0.0
        %549 = vmatpush1.msra.mxu0 0.0
        %550 = vmatprep.subr.mxu0 0.0
        %551 = vmatpush1.msra.mxu0 0.0
        %552 = vmatprep.subr.mxu0 0.0
        %553 = vmatpush1.msra.mxu0 0.0
        %554 = vmatprep.subr.mxu0 0.0
        %555 = vmatpush1.msra.mxu0 0.0
        %556 = vmatprep.subr.mxu0 0.0
        %557 = vmatpush1.msra.mxu0 0.0
        %558 = vmatprep.subr.mxu0 0.0
        %559 = vmatpush1.msra.mxu0 0.0
        %560 = vmatprep.subr.mxu0 0.0
        %561 = vmatpush1.msra.mxu0 0.0
        %562 = vmatprep.subr.mxu0 %v530
        %563 = vmatpush1.msra.mxu0 %v528
        %564 = vmatprep.subr.mxu0 0.0
        %565 = vmatpush2.msra.mxu0 0.0
        %566 = vmatprep.subr.mxu0 0.0
        %567 = vmatpush2.msra.mxu0 0.0
        %568 = vmatprep.subr.mxu0 0.0
        %569 = vmatpush2.msra.mxu0 0.0
        %570 = vmatprep.subr.mxu0 0.0
        %571 = vmatpush2.msra.mxu0 0.0
        %572 = vmatprep.subr.mxu0 0.0
        %573 = vmatpush2.msra.mxu0 0.0
        %574 = vmatprep.subr.mxu0 0.0
        %575 = vmatpush2.msra.mxu0 0.0
        %576 = vmatprep.subr.mxu0 0.0
        %577 = vmatpush2.msra.mxu0 0.0
        %578 = vmatprep.subr.mxu0 0.0
        %579 = vmatpush2.msra.mxu0 0.0
        %580 = vmatprep.subr.mxu0 0.0
        %581 = vmatpush2.msra.mxu0 0.0
        %582 = vmatprep.subr.mxu0 0.0
        %583 = vmatpush2.msra.mxu0 0.0
        %584 = vmatprep.subr.mxu0 0.0
        %585 = vmatpush2.msra.mxu0 0.0
        %586 = vmatprep.subr.mxu0 0.0
        %587 = vmatpush2.msra.mxu0 0.0
        %588 = vmatprep.subr.mxu0 0.0
        %589 = vmatpush2.msra.mxu0 0.0
        %590 = vmatprep.subr.mxu0 0.0
        %591 = vmatpush2.msra.mxu0 0.0
        %592 = vmatprep.subr.mxu0 0.0
        %593 = vmatpush2.msra.mxu0 0.0
        %594 = vmatprep.subr.mxu0 0.0
        %595 = vmatpush2.msra.mxu0 0.0
        %596 = vmatprep.mubr.f32.mxu0 0.0
        %597 = vmatmul.mubr.f32.gmra.mxu0 %v522
        %v598 = vpop.f32.mrf.mxu0
        %v599 = vadd.f32 %v511, %v598
        %v600 = vpop.f32.mrf.mxu0
        %v601 = vadd.f32 %v511, %v600
        %602 = vmatprep.mubr.f32.mxu0 0.0
        %603 = vmatmul.mubr.f32.gmra.mxu0 %v525
        %v604 = vpop.f32.mrf.mxu0
        %v605 = vadd.f32 %v516, %v604
        %v606 = vpop.f32.mrf.mxu0
        %v607 = vadd.f32 %v516, %v606
        %608 = vdwg.mxu0
        %609 = vmatprep.subr.mxu0 0.0
        %610 = vmatpush1.xpose.msra.mxu0 0.0
        %611 = vmatprep.subr.mxu0 0.0
        %612 = vmatpush1.xpose.msra.mxu0 0.0
        %613 = vmatprep.subr.mxu0 0.0
        %614 = vmatpush1.xpose.msra.mxu0 0.0
        %615 = vmatprep.subr.mxu0 0.0
        %616 = vmatpush1.xpose.msra.mxu0 0.0
        %617 = vmatprep.subr.mxu0 0.0
        %618 = vmatpush1.xpose.msra.mxu0 0.0
        %619 = vmatprep.subr.mxu0 0.0
        %620 = vmatpush1.xpose.msra.mxu0 0.0
        %621 = vmatprep.subr.mxu0 0.0
        %622 = vmatpush1.xpose.msra.mxu0 0.0
        %623 = vmatprep.subr.mxu0 0.0
        %624 = vmatpush1.xpose.msra.mxu0 0.0
        %625 = vmatprep.subr.mxu0 0.0
        %626 = vmatpush1.xpose.msra.mxu0 0.0
        %627 = vmatprep.subr.mxu0 0.0
        %628 = vmatpush1.xpose.msra.mxu0 0.0
        %629 = vmatprep.subr.mxu0 0.0
        %630 = vmatpush1.xpose.msra.mxu0 0.0
        %631 = vmatprep.subr.mxu0 0.0
        %632 = vmatpush1.xpose.msra.mxu0 0.0
        %633 = vmatprep.subr.mxu0 0.0
        %634 = vmatpush1.xpose.msra.mxu0 0.0
        %635 = vmatprep.subr.mxu0 0.0
        %636 = vmatpush1.xpose.msra.mxu0 0.0
        %637 = vmatprep.subr.mxu0 %v607
        %638 = vmatpush1.xpose.msra.mxu0 %v605
        %639 = vmatprep.subr.mxu0 %v601
        %640 = vmatpush1.xpose.msra.mxu0 %v599
        %641 = vmatprep.subr.mxu0 0.0
        %642 = vmatpush2.xpose.msra.mxu0 0.0
        %643 = vmatprep.subr.mxu0 0.0
        %644 = vmatpush2.xpose.msra.mxu0 0.0
        %645 = vmatprep.subr.mxu0 0.0
        %646 = vmatpush2.xpose.msra.mxu0 0.0
        %647 = vmatprep.subr.mxu0 0.0
        %648 = vmatpush2.xpose.msra.mxu0 0.0
        %649 = vmatprep.subr.mxu0 0.0
        %650 = vmatpush2.xpose.msra.mxu0 0.0
        %651 = vmatprep.subr.mxu0 0.0
        %652 = vmatpush2.xpose.msra.mxu0 0.0
        %653 = vmatprep.subr.mxu0 0.0
        %654 = vmatpush2.xpose.msra.mxu0 0.0
        %655 = vmatprep.subr.mxu0 0.0
        %656 = vmatpush2.xpose.msra.mxu0 0.0
        %657 = vmatprep.subr.mxu0 0.0
        %658 = vmatpush2.xpose.msra.mxu0 0.0
        %659 = vmatprep.subr.mxu0 0.0
        %660 = vmatpush2.xpose.msra.mxu0 0.0
        %661 = vmatprep.subr.mxu0 0.0
        %662 = vmatpush2.xpose.msra.mxu0 0.0
        %663 = vmatprep.subr.mxu0 0.0
        %664 = vmatpush2.xpose.msra.mxu0 0.0
        %665 = vmatprep.subr.mxu0 0.0
        %666 = vmatpush2.xpose.msra.mxu0 0.0
        %667 = vmatprep.subr.mxu0 0.0
        %668 = vmatpush2.xpose.msra.mxu0 0.0
        %669 = vmatprep.subr.mxu0 0.0
        %670 = vmatpush2.xpose.msra.mxu0 0.0
        %671 = vmatprep.subr.mxu0 0.0
        %672 = vmatpush2.xpose.msra.mxu0 0.0
        %673 = vmatprep.mubr.f32.mxu0 %v296
        %674 = vmatmul.mubr.f32.gmra.mxu0 %v295
        %v675 = vpop.f32.mrf.mxu0
        %v676 = vadd.f32 0.0, %v675
        %v677 = vpop.f32.mrf.mxu0
        %678 = vmatprep.mubr.f32.mxu0 %v298
        %679 = vmatmul.mubr.f32.gmra.mxu0 %v297
        %v680 = vpop.f32.mrf.mxu0
        %v681 = vadd.f32 0.0, %v680
        %v682 = vpop.f32.mrf.mxu0
        %683 = vmatprep.mubr.f32.mxu0 %v300
        %684 = vmatmul.mubr.f32.gmra.mxu0 %v299
        %v685 = vpop.f32.mrf.mxu0
        %v686 = vadd.f32 0.0, %v685
        %v687 = vpop.f32.mrf.mxu0
        %688 = vmatprep.mubr.f32.mxu0 %v302
        %689 = vmatmul.mubr.f32.gmra.mxu0 %v301
        %v690 = vpop.f32.mrf.mxu0
        %v691 = vadd.f32 0.0, %v690
        %v692 = vpop.f32.mrf.mxu0
        %693 = vmatprep.mubr.f32.mxu0 %v304
        %694 = vmatmul.mubr.f32.gmra.mxu0 %v303
        %v695 = vpop.f32.mrf.mxu0
        %v696 = vadd.f32 0.0, %v695
        %v697 = vpop.f32.mrf.mxu0
        %698 = vmatprep.mubr.f32.mxu0 %v306
        %699 = vmatmul.mubr.f32.gmra.mxu0 %v305
        %v700 = vpop.f32.mrf.mxu0
        %v701 = vadd.f32 0.0, %v700
        %v702 = vpop.f32.mrf.mxu0
        %703 = vmatprep.mubr.f32.mxu0 %v308
        %704 = vmatmul.mubr.f32.gmra.mxu0 %v307
        %v705 = vpop.f32.mrf.mxu0
        %v706 = vadd.f32 0.0, %v705
        %v707 = vpop.f32.mrf.mxu0
        %708 = vmatprep.mubr.f32.mxu0 %v310
        %709 = vmatmul.mubr.f32.gmra.mxu0 %v309
        %v710 = vpop.f32.mrf.mxu0
        %v711 = vadd.f32 0.0, %v710
        %v712 = vpop.f32.mrf.mxu0
        %713 = vmatprep.mubr.f32.mxu0 %v312
        %714 = vmatmul.mubr.f32.gmra.mxu0 %v311
        %v715 = vpop.f32.mrf.mxu0
        %v716 = vadd.f32 0.0, %v715
        %v717 = vpop.f32.mrf.mxu0
        %718 = vmatprep.mubr.f32.mxu0 %v314
        %719 = vmatmul.mubr.f32.gmra.mxu0 %v313
        %v720 = vpop.f32.mrf.mxu0
        %v721 = vadd.f32 0.0, %v720
        %v722 = vpop.f32.mrf.mxu0
        %723 = vmatprep.mubr.f32.mxu0 %v316
        %724 = vmatmul.mubr.f32.gmra.mxu0 %v315
        %v725 = vpop.f32.mrf.mxu0
        %v726 = vadd.f32 0.0, %v725
        %v727 = vpop.f32.mrf.mxu0
        %728 = vmatprep.mubr.f32.mxu0 %v318
        %729 = vmatmul.mubr.f32.gmra.mxu0 %v317
        %v730 = vpop.f32.mrf.mxu0
        %v731 = vadd.f32 0.0, %v730
        %v732 = vpop.f32.mrf.mxu0
        %733 = vmatprep.mubr.f32.mxu0 %v320
        %734 = vmatmul.mubr.f32.gmra.mxu0 %v319
        %v735 = vpop.f32.mrf.mxu0
        %v736 = vadd.f32 0.0, %v735
        %v737 = vpop.f32.mrf.mxu0
        %738 = vmatprep.mubr.f32.mxu0 %v322
        %739 = vmatmul.mubr.f32.gmra.mxu0 %v321
        %v740 = vpop.f32.mrf.mxu0
        %v741 = vadd.f32 0.0, %v740
        %v742 = vpop.f32.mrf.mxu0
        %743 = vmatprep.mubr.f32.mxu0 %v324
        %744 = vmatmul.mubr.f32.gmra.mxu0 %v323
        %v745 = vpop.f32.mrf.mxu0
        %v746 = vadd.f32 0.0, %v745
        %v747 = vpop.f32.mrf.mxu0
        %748 = vmatprep.mubr.f32.mxu0 %v326
        %749 = vmatmul.mubr.f32.gmra.mxu0 %v325
        %v750 = vpop.f32.mrf.mxu0
        %v751 = vadd.f32 0.0, %v750
        %v752 = vpop.f32.mrf.mxu0
        %753 = vmatprep.mubr.f32.mxu0 %v328
        %754 = vmatmul.mubr.f32.gmra.mxu0 %v327
        %v755 = vpop.f32.mrf.mxu0
        %v756 = vadd.f32 0.0, %v755
        %v757 = vpop.f32.mrf.mxu0
        %758 = vmatprep.mubr.f32.mxu0 %v330
        %759 = vmatmul.mubr.f32.gmra.mxu0 %v329
        %v760 = vpop.f32.mrf.mxu0
        %v761 = vadd.f32 0.0, %v760
        %v762 = vpop.f32.mrf.mxu0
        %763 = vmatprep.mubr.f32.mxu0 %v332
        %764 = vmatmul.mubr.f32.gmra.mxu0 %v331
        %v765 = vpop.f32.mrf.mxu0
        %v766 = vadd.f32 0.0, %v765
        %v767 = vpop.f32.mrf.mxu0
        %768 = vmatprep.mubr.f32.mxu0 %v334
        %769 = vmatmul.mubr.f32.gmra.mxu0 %v333
        %v770 = vpop.f32.mrf.mxu0
        %v771 = vadd.f32 0.0, %v770
        %v772 = vpop.f32.mrf.mxu0
        %773 = vmatprep.mubr.f32.mxu0 %v336
        %774 = vmatmul.mubr.f32.gmra.mxu0 %v335
        %v775 = vpop.f32.mrf.mxu0
        %v776 = vadd.f32 0.0, %v775
        %v777 = vpop.f32.mrf.mxu0
        %778 = vmatprep.mubr.f32.mxu0 %v338
        %779 = vmatmul.mubr.f32.gmra.mxu0 %v337
        %v780 = vpop.f32.mrf.mxu0
        %v781 = vadd.f32 0.0, %v780
        %v782 = vpop.f32.mrf.mxu0
        %783 = vmatprep.mubr.f32.mxu0 %v340
        %784 = vmatmul.mubr.f32.gmra.mxu0 %v339
        %v785 = vpop.f32.mrf.mxu0
        %v786 = vadd.f32 0.0, %v785
        %v787 = vpop.f32.mrf.mxu0
        %788 = vmatprep.mubr.f32.mxu0 %v342
        %789 = vmatmul.mubr.f32.gmra.mxu0 %v341
        %v790 = vpop.f32.mrf.mxu0
        %v791 = vadd.f32 0.0, %v790
        %v792 = vpop.f32.mrf.mxu0
        %793 = vmatprep.mubr.f32.mxu0 %v344
        %794 = vmatmul.mubr.f32.gmra.mxu0 %v343
        %v795 = vpop.f32.mrf.mxu0
        %v796 = vadd.f32 0.0, %v795
        %v797 = vpop.f32.mrf.mxu0
        %798 = vmatprep.mubr.f32.mxu0 %v346
        %799 = vmatmul.mubr.f32.gmra.mxu0 %v345
        %v800 = vpop.f32.mrf.mxu0
        %v801 = vadd.f32 0.0, %v800
        %v802 = vpop.f32.mrf.mxu0
        %803 = vmatprep.mubr.f32.mxu0 %v348
        %804 = vmatmul.mubr.f32.gmra.mxu0 %v347
        %v805 = vpop.f32.mrf.mxu0
        %v806 = vadd.f32 0.0, %v805
        %v807 = vpop.f32.mrf.mxu0
        %808 = vmatprep.mubr.f32.mxu0 %v350
        %809 = vmatmul.mubr.f32.gmra.mxu0 %v349
        %v810 = vpop.f32.mrf.mxu0
        %v811 = vadd.f32 0.0, %v810
        %v812 = vpop.f32.mrf.mxu0
        %813 = vmatprep.mubr.f32.mxu0 %v352
        %814 = vmatmul.mubr.f32.gmra.mxu0 %v351
        %v815 = vpop.f32.mrf.mxu0
        %v816 = vadd.f32 0.0, %v815
        %v817 = vpop.f32.mrf.mxu0
        %818 = vmatprep.mubr.f32.mxu0 %v354
        %819 = vmatmul.mubr.f32.gmra.mxu0 %v353
        %v820 = vpop.f32.mrf.mxu0
        %v821 = vadd.f32 0.0, %v820
        %v822 = vpop.f32.mrf.mxu0
        %823 = vmatprep.mubr.f32.mxu0 %v356
        %824 = vmatmul.mubr.f32.gmra.mxu0 %v355
        %v825 = vpop.f32.mrf.mxu0
        %v826 = vadd.f32 0.0, %v825
        %v827 = vpop.f32.mrf.mxu0
        %828 = vmatprep.mubr.f32.mxu0 %v358
        %829 = vmatmul.mubr.f32.gmra.mxu0 %v357
        %v830 = vpop.f32.mrf.mxu0
        %v831 = vadd.f32 0.0, %v830
        %v832 = vpop.f32.mrf.mxu0
        %833 = vmatprep.mubr.f32.mxu0 %v360
        %834 = vmatmul.mubr.f32.gmra.mxu0 %v359
        %v835 = vpop.f32.mrf.mxu0
        %v836 = vadd.f32 0.0, %v835
        %v837 = vpop.f32.mrf.mxu0
        %838 = vmatprep.mubr.f32.mxu0 %v362
        %839 = vmatmul.mubr.f32.gmra.mxu0 %v361
        %v840 = vpop.f32.mrf.mxu0
        %v841 = vadd.f32 0.0, %v840
        %v842 = vpop.f32.mrf.mxu0
        %843 = vmatprep.mubr.f32.mxu0 %v364
        %844 = vmatmul.mubr.f32.gmra.mxu0 %v363
        %v845 = vpop.f32.mrf.mxu0
        %v846 = vadd.f32 0.0, %v845
        %v847 = vpop.f32.mrf.mxu0
        %848 = vmatprep.mubr.f32.mxu0 %v366
        %849 = vmatmul.mubr.f32.gmra.mxu0 %v365
        %v850 = vpop.f32.mrf.mxu0
        %v851 = vadd.f32 0.0, %v850
        %v852 = vpop.f32.mrf.mxu0
        %853 = vmatprep.mubr.f32.mxu0 %v368
        %854 = vmatmul.mubr.f32.gmra.mxu0 %v367
        %v855 = vpop.f32.mrf.mxu0
        %v856 = vadd.f32 0.0, %v855
        %v857 = vpop.f32.mrf.mxu0
        %858 = vmatprep.mubr.f32.mxu0 %v370
        %859 = vmatmul.mubr.f32.gmra.mxu0 %v369
        %v860 = vpop.f32.mrf.mxu0
        %v861 = vadd.f32 0.0, %v860
        %v862 = vpop.f32.mrf.mxu0
        %863 = vmatprep.mubr.f32.mxu0 %v372
        %864 = vmatmul.mubr.f32.gmra.mxu0 %v371
        %v865 = vpop.f32.mrf.mxu0
        %v866 = vadd.f32 0.0, %v865
        %v867 = vpop.f32.mrf.mxu0
        %868 = vmatprep.mubr.f32.mxu0 %v374
        %869 = vmatmul.mubr.f32.gmra.mxu0 %v373
        %v870 = vpop.f32.mrf.mxu0
        %v871 = vadd.f32 0.0, %v870
        %v872 = vpop.f32.mrf.mxu0
        %873 = vmatprep.mubr.f32.mxu0 %v376
        %874 = vmatmul.mubr.f32.gmra.mxu0 %v375
        %v875 = vpop.f32.mrf.mxu0
        %v876 = vadd.f32 0.0, %v875
        %v877 = vpop.f32.mrf.mxu0
        %878 = vmatprep.mubr.f32.mxu0 %v378
        %879 = vmatmul.mubr.f32.gmra.mxu0 %v377
        %v880 = vpop.f32.mrf.mxu0
        %v881 = vadd.f32 0.0, %v880
        %v882 = vpop.f32.mrf.mxu0
        %883 = vmatprep.mubr.f32.mxu0 %v380
        %884 = vmatmul.mubr.f32.gmra.mxu0 %v379
        %v885 = vpop.f32.mrf.mxu0
        %v886 = vadd.f32 0.0, %v885
        %v887 = vpop.f32.mrf.mxu0
        %888 = vmatprep.mubr.f32.mxu0 %v382
        %889 = vmatmul.mubr.f32.gmra.mxu0 %v381
        %v890 = vpop.f32.mrf.mxu0
        %v891 = vadd.f32 0.0, %v890
        %v892 = vpop.f32.mrf.mxu0
        %893 = vmatprep.mubr.f32.mxu0 %v384
        %894 = vmatmul.mubr.f32.gmra.mxu0 %v383
        %v895 = vpop.f32.mrf.mxu0
        %v896 = vadd.f32 0.0, %v895
        %v897 = vpop.f32.mrf.mxu0
        %898 = vmatprep.mubr.f32.mxu0 %v386
        %899 = vmatmul.mubr.f32.gmra.mxu0 %v385
        %v900 = vpop.f32.mrf.mxu0
        %v901 = vadd.f32 0.0, %v900
        %v902 = vpop.f32.mrf.mxu0
        %903 = vmatprep.mubr.f32.mxu0 %v388
        %904 = vmatmul.mubr.f32.gmra.mxu0 %v387
        %v905 = vpop.f32.mrf.mxu0
        %v906 = vadd.f32 0.0, %v905
        %v907 = vpop.f32.mrf.mxu0
        %908 = vmatprep.mubr.f32.mxu0 %v390
        %909 = vmatmul.mubr.f32.gmra.mxu0 %v389
        %v910 = vpop.f32.mrf.mxu0
        %v911 = vadd.f32 0.0, %v910
        %v912 = vpop.f32.mrf.mxu0
        %913 = vmatprep.mubr.f32.mxu0 %v392
        %914 = vmatmul.mubr.f32.gmra.mxu0 %v391
        %v915 = vpop.f32.mrf.mxu0
        %v916 = vadd.f32 0.0, %v915
        %v917 = vpop.f32.mrf.mxu0
        %918 = vmatprep.mubr.f32.mxu0 %v394
        %919 = vmatmul.mubr.f32.gmra.mxu0 %v393
        %v920 = vpop.f32.mrf.mxu0
        %v921 = vadd.f32 0.0, %v920
        %v922 = vpop.f32.mrf.mxu0
        %923 = vmatprep.mubr.f32.mxu0 %v396
        %924 = vmatmul.mubr.f32.gmra.mxu0 %v395
        %v925 = vpop.f32.mrf.mxu0
        %v926 = vadd.f32 0.0, %v925
        %v927 = vpop.f32.mrf.mxu0
        %928 = vmatprep.mubr.f32.mxu0 %v398
        %929 = vmatmul.mubr.f32.gmra.mxu0 %v397
        %v930 = vpop.f32.mrf.mxu0
        %v931 = vadd.f32 0.0, %v930
        %v932 = vpop.f32.mrf.mxu0
        %933 = vmatprep.mubr.f32.mxu0 %v400
        %934 = vmatmul.mubr.f32.gmra.mxu0 %v399
        %v935 = vpop.f32.mrf.mxu0
        %v936 = vadd.f32 0.0, %v935
        %v937 = vpop.f32.mrf.mxu0
        %938 = vmatprep.mubr.f32.mxu0 %v402
        %939 = vmatmul.mubr.f32.gmra.mxu0 %v401
        %v940 = vpop.f32.mrf.mxu0
        %v941 = vadd.f32 0.0, %v940
        %v942 = vpop.f32.mrf.mxu0
        %943 = vmatprep.mubr.f32.mxu0 %v404
        %944 = vmatmul.mubr.f32.gmra.mxu0 %v403
        %v945 = vpop.f32.mrf.mxu0
        %v946 = vadd.f32 0.0, %v945
        %v947 = vpop.f32.mrf.mxu0
        %948 = vmatprep.mubr.f32.mxu0 %v406
        %949 = vmatmul.mubr.f32.gmra.mxu0 %v405
        %v950 = vpop.f32.mrf.mxu0
        %v951 = vadd.f32 0.0, %v950
        %v952 = vpop.f32.mrf.mxu0
        %953 = vmatprep.mubr.f32.mxu0 %v408
        %954 = vmatmul.mubr.f32.gmra.mxu0 %v407
        %v955 = vpop.f32.mrf.mxu0
        %v956 = vadd.f32 0.0, %v955
        %v957 = vpop.f32.mrf.mxu0
        %958 = vmatprep.mubr.f32.mxu0 %v410
        %959 = vmatmul.mubr.f32.gmra.mxu0 %v409
        %v960 = vpop.f32.mrf.mxu0
        %v961 = vadd.f32 0.0, %v960
        %v962 = vpop.f32.mrf.mxu0
        %963 = vmatprep.mubr.f32.mxu0 %v412
        %964 = vmatmul.mubr.f32.gmra.mxu0 %v411
        %v965 = vpop.f32.mrf.mxu0
        %v966 = vadd.f32 0.0, %v965
        %v967 = vpop.f32.mrf.mxu0
        %968 = vmatprep.mubr.f32.mxu0 %v414
        %969 = vmatmul.mubr.f32.gmra.mxu0 %v413
        %v970 = vpop.f32.mrf.mxu0
        %v971 = vadd.f32 0.0, %v970
        %v972 = vpop.f32.mrf.mxu0
        %973 = vmatprep.mubr.f32.mxu0 %v416
        %974 = vmatmul.mubr.f32.gmra.mxu0 %v415
        %v975 = vpop.f32.mrf.mxu0
        %v976 = vadd.f32 0.0, %v975
        %v977 = vpop.f32.mrf.mxu0
        %978 = vmatprep.mubr.f32.mxu0 %v418
        %979 = vmatmul.mubr.f32.gmra.mxu0 %v417
        %v980 = vpop.f32.mrf.mxu0
        %v981 = vadd.f32 0.0, %v980
        %v982 = vpop.f32.mrf.mxu0
        %983 = vmatprep.mubr.f32.mxu0 %v420
        %984 = vmatmul.mubr.f32.gmra.mxu0 %v419
        %v985 = vpop.f32.mrf.mxu0
        %v986 = vadd.f32 0.0, %v985
        %v987 = vpop.f32.mrf.mxu0
        %988 = vmatprep.mubr.f32.mxu0 %v422
        %989 = vmatmul.mubr.f32.gmra.mxu0 %v421
        %v990 = vpop.f32.mrf.mxu0
        %v991 = vadd.f32 0.0, %v990
        %v992 = vpop.f32.mrf.mxu0
        %993 = vmatprep.mubr.f32.mxu0 %v424
        %994 = vmatmul.mubr.f32.gmra.mxu0 %v423
        %v995 = vpop.f32.mrf.mxu0
        %v996 = vadd.f32 0.0, %v995
        %v997 = vpop.f32.mrf.mxu0
        %998 = vmatprep.mubr.f32.mxu0 %v426
        %999 = vmatmul.mubr.f32.gmra.mxu0 %v425
        %v1000 = vpop.f32.mrf.mxu0
        %v1001 = vadd.f32 0.0, %v1000
        %v1002 = vpop.f32.mrf.mxu0
        %1003 = vmatprep.mubr.f32.mxu0 %v428
        %1004 = vmatmul.mubr.f32.gmra.mxu0 %v427
        %v1005 = vpop.f32.mrf.mxu0
        %v1006 = vadd.f32 0.0, %v1005
        %v1007 = vpop.f32.mrf.mxu0
        %1008 = vmatprep.mubr.f32.mxu0 %v430
        %1009 = vmatmul.mubr.f32.gmra.mxu0 %v429
        %v1010 = vpop.f32.mrf.mxu0
        %v1011 = vadd.f32 0.0, %v1010
        %v1012 = vpop.f32.mrf.mxu0
        %1013 = vmatprep.mubr.f32.mxu0 %v432
        %1014 = vmatmul.mubr.f32.gmra.mxu0 %v431
        %v1015 = vpop.f32.mrf.mxu0
        %v1016 = vadd.f32 0.0, %v1015
        %v1017 = vpop.f32.mrf.mxu0
        %1018 = vmatprep.mubr.f32.mxu0 %v434
        %1019 = vmatmul.mubr.f32.gmra.mxu0 %v433
        %v1020 = vpop.f32.mrf.mxu0
        %v1021 = vadd.f32 0.0, %v1020
        %v1022 = vpop.f32.mrf.mxu0
        %1023 = vmatprep.mubr.f32.mxu0 %v436
        %1024 = vmatmul.mubr.f32.gmra.mxu0 %v435
        %v1025 = vpop.f32.mrf.mxu0
        %v1026 = vadd.f32 0.0, %v1025
        %v1027 = vpop.f32.mrf.mxu0
        %1028 = vmatprep.mubr.f32.mxu0 %v438
        %1029 = vmatmul.mubr.f32.gmra.mxu0 %v437
        %v1030 = vpop.f32.mrf.mxu0
        %v1031 = vadd.f32 0.0, %v1030
        %v1032 = vpop.f32.mrf.mxu0
        %1033 = vmatprep.mubr.f32.mxu0 %v440
        %1034 = vmatmul.mubr.f32.gmra.mxu0 %v439
        %v1035 = vpop.f32.mrf.mxu0
        %v1036 = vadd.f32 0.0, %v1035
        %v1037 = vpop.f32.mrf.mxu0
        %1038 = vmatprep.mubr.f32.mxu0 %v442
        %1039 = vmatmul.mubr.f32.gmra.mxu0 %v441
        %v1040 = vpop.f32.mrf.mxu0
        %v1041 = vadd.f32 0.0, %v1040
        %v1042 = vpop.f32.mrf.mxu0
        %1043 = vmatprep.mubr.f32.mxu0 %v444
        %1044 = vmatmul.mubr.f32.gmra.mxu0 %v443
        %v1045 = vpop.f32.mrf.mxu0
        %v1046 = vadd.f32 0.0, %v1045
        %v1047 = vpop.f32.mrf.mxu0
        %1048 = vmatprep.mubr.f32.mxu0 %v446
        %1049 = vmatmul.mubr.f32.gmra.mxu0 %v445
        %v1050 = vpop.f32.mrf.mxu0
        %v1051 = vadd.f32 0.0, %v1050
        %v1052 = vpop.f32.mrf.mxu0
        %1053 = vmatprep.mubr.f32.mxu0 %v448
        %1054 = vmatmul.mubr.f32.gmra.mxu0 %v447
        %v1055 = vpop.f32.mrf.mxu0
        %v1056 = vadd.f32 0.0, %v1055
        %v1057 = vpop.f32.mrf.mxu0
        %1058 = vmatprep.mubr.f32.mxu0 %v450
        %1059 = vmatmul.mubr.f32.gmra.mxu0 %v449
        %v1060 = vpop.f32.mrf.mxu0
        %v1061 = vadd.f32 0.0, %v1060
        %v1062 = vpop.f32.mrf.mxu0
        %1063 = vmatprep.mubr.f32.mxu0 %v452
        %1064 = vmatmul.mubr.f32.gmra.mxu0 %v451
        %v1065 = vpop.f32.mrf.mxu0
        %v1066 = vadd.f32 0.0, %v1065
        %v1067 = vpop.f32.mrf.mxu0
        %1068 = vmatprep.mubr.f32.mxu0 %v454
        %1069 = vmatmul.mubr.f32.gmra.mxu0 %v453
        %v1070 = vpop.f32.mrf.mxu0
        %v1071 = vadd.f32 0.0, %v1070
        %v1072 = vpop.f32.mrf.mxu0
        %1073 = vmatprep.mubr.f32.mxu0 %v456
        %1074 = vmatmul.mubr.f32.gmra.mxu0 %v455
        %v1075 = vpop.f32.mrf.mxu0
        %v1076 = vadd.f32 0.0, %v1075
        %v1077 = vpop.f32.mrf.mxu0
        %1078 = vmatprep.mubr.f32.mxu0 %v458
        %1079 = vmatmul.mubr.f32.gmra.mxu0 %v457
        %v1080 = vpop.f32.mrf.mxu0
        %v1081 = vadd.f32 0.0, %v1080
        %v1082 = vpop.f32.mrf.mxu0
        %1083 = vmatprep.mubr.f32.mxu0 %v460
        %1084 = vmatmul.mubr.f32.gmra.mxu0 %v459
        %v1085 = vpop.f32.mrf.mxu0
        %v1086 = vadd.f32 0.0, %v1085
        %v1087 = vpop.f32.mrf.mxu0
        %1088 = vmatprep.mubr.f32.mxu0 %v462
        %1089 = vmatmul.mubr.f32.gmra.mxu0 %v461
        %v1090 = vpop.f32.mrf.mxu0
        %v1091 = vadd.f32 0.0, %v1090
        %v1092 = vpop.f32.mrf.mxu0
        %1093 = vmatprep.mubr.f32.mxu0 %v464
        %1094 = vmatmul.mubr.f32.gmra.mxu0 %v463
        %v1095 = vpop.f32.mrf.mxu0
        %v1096 = vadd.f32 0.0, %v1095
        %v1097 = vpop.f32.mrf.mxu0
        %1098 = vmatprep.mubr.f32.mxu0 %v466
        %1099 = vmatmul.mubr.f32.gmra.mxu0 %v465
        %v1100 = vpop.f32.mrf.mxu0
        %v1101 = vadd.f32 0.0, %v1100
        %v1102 = vpop.f32.mrf.mxu0
        %1103 = vmatprep.mubr.f32.mxu0 %v468
        %1104 = vmatmul.mubr.f32.gmra.mxu0 %v467
        %v1105 = vpop.f32.mrf.mxu0
        %v1106 = vadd.f32 0.0, %v1105
        %v1107 = vpop.f32.mrf.mxu0
        %1108 = vmatprep.mubr.f32.mxu0 %v470
        %1109 = vmatmul.mubr.f32.gmra.mxu0 %v469
        %v1110 = vpop.f32.mrf.mxu0
        %v1111 = vadd.f32 0.0, %v1110
        %v1112 = vpop.f32.mrf.mxu0
        %1113 = vmatprep.mubr.f32.mxu0 %v472
        %1114 = vmatmul.mubr.f32.gmra.mxu0 %v471
        %v1115 = vpop.f32.mrf.mxu0
        %v1116 = vadd.f32 0.0, %v1115
        %v1117 = vpop.f32.mrf.mxu0
        %1118 = vmatprep.mubr.f32.mxu0 %v474
        %1119 = vmatmul.mubr.f32.gmra.mxu0 %v473
        %v1120 = vpop.f32.mrf.mxu0
        %v1121 = vadd.f32 0.0, %v1120
        %v1122 = vpop.f32.mrf.mxu0
        %1123 = vmatprep.mubr.f32.mxu0 %v476
        %1124 = vmatmul.mubr.f32.gmra.mxu0 %v475
        %v1125 = vpop.f32.mrf.mxu0
        %v1126 = vadd.f32 0.0, %v1125
        %v1127 = vpop.f32.mrf.mxu0
        %1128 = vmatprep.mubr.f32.mxu0 %v478
        %1129 = vmatmul.mubr.f32.gmra.mxu0 %v477
        %v1130 = vpop.f32.mrf.mxu0
        %v1131 = vadd.f32 0.0, %v1130
        %v1132 = vpop.f32.mrf.mxu0
        %1133 = vmatprep.mubr.f32.mxu0 %v480
        %1134 = vmatmul.mubr.f32.gmra.mxu0 %v479
        %v1135 = vpop.f32.mrf.mxu0
        %v1136 = vadd.f32 0.0, %v1135
        %v1137 = vpop.f32.mrf.mxu0
        %1138 = vmatprep.mubr.f32.mxu0 %v482
        %1139 = vmatmul.mubr.f32.gmra.mxu0 %v481
        %v1140 = vpop.f32.mrf.mxu0
        %v1141 = vadd.f32 0.0, %v1140
        %v1142 = vpop.f32.mrf.mxu0
        %1143 = vmatprep.mubr.f32.mxu0 %v484
        %1144 = vmatmul.mubr.f32.gmra.mxu0 %v483
        %v1145 = vpop.f32.mrf.mxu0
        %v1146 = vadd.f32 0.0, %v1145
        %v1147 = vpop.f32.mrf.mxu0
        %1148 = vmatprep.mubr.f32.mxu0 %v486
        %1149 = vmatmul.mubr.f32.gmra.mxu0 %v485
        %v1150 = vpop.f32.mrf.mxu0
        %v1151 = vadd.f32 0.0, %v1150
        %v1152 = vpop.f32.mrf.mxu0
        %1153 = vdwg.mxu0
        %v1154 = vmul.f32 %v676, 0.70710677
        %v1155 = vmul.f32 %v681, 0.70710677
        %v1156 = vmul.f32 %v686, 0.70710677
        %v1157 = vmul.f32 %v691, 0.70710677
        %v1158 = vmul.f32 %v696, 0.70710677
        %v1159 = vmul.f32 %v701, 0.70710677
        %v1160 = vmul.f32 %v706, 0.70710677
        %v1161 = vmul.f32 %v711, 0.70710677
        %v1162 = vmul.f32 %v716, 0.70710677
        %v1163 = vmul.f32 %v721, 0.70710677
        %v1164 = vmul.f32 %v726, 0.70710677
        %v1165 = vmul.f32 %v731, 0.70710677
        %v1166 = vmul.f32 %v736, 0.70710677
        %v1167 = vmul.f32 %v741, 0.70710677
        %v1168 = vmul.f32 %v746, 0.70710677
        %v1169 = vmul.f32 %v751, 0.70710677
        %v1170 = vmul.f32 %v756, 0.70710677
        %v1171 = vmul.f32 %v761, 0.70710677
        %v1172 = vmul.f32 %v766, 0.70710677
        %v1173 = vmul.f32 %v771, 0.70710677
        %v1174 = vmul.f32 %v776, 0.70710677
        %v1175 = vmul.f32 %v781, 0.70710677
        %v1176 = vmul.f32 %v786, 0.70710677
        %v1177 = vmul.f32 %v791, 0.70710677
        %v1178 = vmul.f32 %v796, 0.70710677
        %v1179 = vmul.f32 %v801, 0.70710677
        %v1180 = vmul.f32 %v806, 0.70710677
        %v1181 = vmul.f32 %v811, 0.70710677
        %v1182 = vmul.f32 %v816, 0.70710677
        %v1183 = vmul.f32 %v821, 0.70710677
        %v1184 = vmul.f32 %v826, 0.70710677
        %v1185 = vmul.f32 %v831, 0.70710677
        %v1186 = vmul.f32 %v836, 0.70710677
        %v1187 = vmul.f32 %v841, 0.70710677
        %v1188 = vmul.f32 %v846, 0.70710677
        %v1189 = vmul.f32 %v851, 0.70710677
        %v1190 = vmul.f32 %v856, 0.70710677
        %v1191 = vmul.f32 %v861, 0.70710677
        %v1192 = vmul.f32 %v866, 0.70710677
        %v1193 = vmul.f32 %v871, 0.70710677
        %v1194 = vmul.f32 %v876, 0.70710677
        %v1195 = vmul.f32 %v881, 0.70710677
        %v1196 = vmul.f32 %v886, 0.70710677
        %v1197 = vmul.f32 %v891, 0.70710677
        %v1198 = vmul.f32 %v896, 0.70710677
        %v1199 = vmul.f32 %v901, 0.70710677
        %v1200 = vmul.f32 %v906, 0.70710677
        %v1201 = vmul.f32 %v911, 0.70710677
        %v1202 = vmul.f32 %v916, 0.70710677
        %v1203 = vmul.f32 %v921, 0.70710677
        %v1204 = vmul.f32 %v926, 0.70710677
        %v1205 = vmul.f32 %v931, 0.70710677
        %v1206 = vmul.f32 %v936, 0.70710677
        %v1207 = vmul.f32 %v941, 0.70710677
        %v1208 = vmul.f32 %v946, 0.70710677
        %v1209 = vmul.f32 %v951, 0.70710677
        %v1210 = vmul.f32 %v956, 0.70710677
        %v1211 = vmul.f32 %v961, 0.70710677
        %v1212 = vmul.f32 %v966, 0.70710677
        %v1213 = vmul.f32 %v971, 0.70710677
        %v1214 = vmul.f32 %v976, 0.70710677
        %v1215 = vmul.f32 %v981, 0.70710677
        %v1216 = vmul.f32 %v986, 0.70710677
        %v1217 = vmul.f32 %v991, 0.70710677
        %v1218 = vmul.f32 %v996, 0.70710677
        %v1219 = vmul.f32 %v1001, 0.70710677
        %v1220 = vmul.f32 %v1006, 0.70710677
        %v1221 = vmul.f32 %v1011, 0.70710677
        %v1222 = vmul.f32 %v1016, 0.70710677
        %v1223 = vmul.f32 %v1021, 0.70710677
        %v1224 = vmul.f32 %v1026, 0.70710677
        %v1225 = vmul.f32 %v1031, 0.70710677
        %v1226 = vmul.f32 %v1036, 0.70710677
        %v1227 = vmul.f32 %v1041, 0.70710677
        %v1228 = vmul.f32 %v1046, 0.70710677
        %v1229 = vmul.f32 %v1051, 0.70710677
        %v1230 = vmul.f32 %v1056, 0.70710677
        %v1231 = vmul.f32 %v1061, 0.70710677
        %v1232 = vmul.f32 %v1066, 0.70710677
        %v1233 = vmul.f32 %v1071, 0.70710677
        %v1234 = vmul.f32 %v1076, 0.70710677
        %v1235 = vmul.f32 %v1081, 0.70710677
        %v1236 = vmul.f32 %v1086, 0.70710677
        %v1237 = vmul.f32 %v1091, 0.70710677
        %v1238 = vmul.f32 %v1096, 0.70710677
        %v1239 = vmul.f32 %v1101, 0.70710677
        %v1240 = vmul.f32 %v1106, 0.70710677
        %v1241 = vmul.f32 %v1111, 0.70710677
        %v1242 = vmul.f32 %v1116, 0.70710677
        %v1243 = vmul.f32 %v1121, 0.70710677
        %v1244 = vmul.f32 %v1126, 0.70710677
        %v1245 = vmul.f32 %v1131, 0.70710677
        %v1246 = vmul.f32 %v1136, 0.70710677
        %v1247 = vmul.f32 %v1141, 0.70710677
        %v1248 = vmul.f32 %v1146, 0.70710677
        %v1249 = vmul.f32 %v1151, 0.70710677
        %1266 = vrot.lane.b32.xlu0 %v676, 124
        %v1267 = vpop.permute.xlu0 %1266
        %1268 = vrot.lane.b32.xlu0 %v681, 124
        %v1269 = vpop.permute.xlu0 %1268
        %1270 = vrot.lane.b32.xlu0 %v686, 124
        %v1271 = vpop.permute.xlu0 %1270
        %1272 = vrot.lane.b32.xlu0 %v691, 124
        %v1273 = vpop.permute.xlu0 %1272
        %1274 = vrot.lane.b32.xlu0 %v696, 124
        %v1275 = vpop.permute.xlu0 %1274
        %1276 = vrot.lane.b32.xlu0 %v701, 124
        %v1277 = vpop.permute.xlu0 %1276
        %1278 = vrot.lane.b32.xlu0 %v706, 124
        %v1279 = vpop.permute.xlu0 %1278
        %1280 = vrot.lane.b32.xlu0 %v711, 124
        %v1281 = vpop.permute.xlu0 %1280
        %1282 = vrot.lane.b32.xlu0 %v716, 124
        %v1283 = vpop.permute.xlu0 %1282
        %1284 = vrot.lane.b32.xlu0 %v721, 124
        %v1285 = vpop.permute.xlu0 %1284
        %1286 = vrot.lane.b32.xlu0 %v726, 124
        %v1287 = vpop.permute.xlu0 %1286
        %1288 = vrot.lane.b32.xlu0 %v731, 124
        %v1289 = vpop.permute.xlu0 %1288
        %1290 = vrot.lane.b32.xlu0 %v736, 124
        %v1291 = vpop.permute.xlu0 %1290
        %1292 = vrot.lane.b32.xlu0 %v741, 124
        %v1293 = vpop.permute.xlu0 %1292
        %1294 = vrot.lane.b32.xlu0 %v746, 124
        %v1295 = vpop.permute.xlu0 %1294
        %1296 = vrot.lane.b32.xlu0 %v751, 124
        %v1297 = vpop.permute.xlu0 %1296
        %vm1298 = vcmask 15360
        %v1300 = vsel %vm1298, %v1154, 0
        %v1303 = vsel %vm1298, %v1155, 0
        %v1306 = vsel %vm1298, %v1156, 0
        %v1309 = vsel %vm1298, %v1157, 0
        %v1312 = vsel %vm1298, %v1158, 0
        %v1315 = vsel %vm1298, %v1159, 0
        %v1318 = vsel %vm1298, %v1160, 0
        %v1321 = vsel %vm1298, %v1161, 0
        %v1324 = vsel %vm1298, %v1162, 0
        %v1327 = vsel %vm1298, %v1163, 0
        %v1330 = vsel %vm1298, %v1164, 0
        %v1333 = vsel %vm1298, %v1165, 0
        %v1336 = vsel %vm1298, %v1166, 0
        %v1339 = vsel %vm1298, %v1167, 0
        %v1342 = vsel %vm1298, %v1168, 0
        %v1345 = vsel %vm1298, %v1169, 0
        %v1347 = vsel %vm1298, %v1267, 0
        %v1349 = vsel %vm1298, %v1269, 0
        %v1351 = vsel %vm1298, %v1271, 0
        %v1353 = vsel %vm1298, %v1273, 0
        %v1355 = vsel %vm1298, %v1275, 0
        %v1357 = vsel %vm1298, %v1277, 0
        %v1359 = vsel %vm1298, %v1279, 0
        %v1361 = vsel %vm1298, %v1281, 0
        %v1363 = vsel %vm1298, %v1283, 0
        %v1365 = vsel %vm1298, %v1285, 0
        %v1367 = vsel %vm1298, %v1287, 0
        %v1369 = vsel %vm1298, %v1289, 0
        %v1371 = vsel %vm1298, %v1291, 0
        %v1373 = vsel %vm1298, %v1293, 0
        %v1375 = vsel %vm1298, %v1295, 0
        %v1377 = vsel %vm1298, %v1297, 0
        %1379 = vmatprep.subr.mxu0 0.0
        %1380 = vmatpush1.xpose.msra.mxu0 %v1377
        %1381 = vmatprep.subr.mxu0 0.0
        %1382 = vmatpush1.xpose.msra.mxu0 %v1375
        %1383 = vmatprep.subr.mxu0 0.0
        %1384 = vmatpush1.xpose.msra.mxu0 %v1373
        %1385 = vmatprep.subr.mxu0 0.0
        %1386 = vmatpush1.xpose.msra.mxu0 %v1371
        %1387 = vmatprep.subr.mxu0 0.0
        %1388 = vmatpush1.xpose.msra.mxu0 %v1369
        %1389 = vmatprep.subr.mxu0 0.0
        %1390 = vmatpush1.xpose.msra.mxu0 %v1367
        %1391 = vmatprep.subr.mxu0 0.0
        %1392 = vmatpush1.xpose.msra.mxu0 %v1365
        %1393 = vmatprep.subr.mxu0 0.0
        %1394 = vmatpush1.xpose.msra.mxu0 %v1363
        %1395 = vmatprep.subr.mxu0 0.0
        %1396 = vmatpush1.xpose.msra.mxu0 %v1361
        %1397 = vmatprep.subr.mxu0 0.0
        %1398 = vmatpush1.xpose.msra.mxu0 %v1359
        %1399 = vmatprep.subr.mxu0 0.0
        %1400 = vmatpush1.xpose.msra.mxu0 %v1357
        %1401 = vmatprep.subr.mxu0 0.0
        %1402 = vmatpush1.xpose.msra.mxu0 %v1355
        %1403 = vmatprep.subr.mxu0 0.0
        %1404 = vmatpush1.xpose.msra.mxu0 %v1353
        %1405 = vmatprep.subr.mxu0 0.0
        %1406 = vmatpush1.xpose.msra.mxu0 %v1351
        %1407 = vmatprep.subr.mxu0 0.0
        %1408 = vmatpush1.xpose.msra.mxu0 %v1349
        %1409 = vmatprep.subr.mxu0 0.0
        %1410 = vmatpush1.xpose.msra.mxu0 %v1347
        %1411 = vmatprep.subr.mxu0 0.0
        %1412 = vmatpush2.xpose.msra.mxu0 0.0
        %1413 = vmatprep.subr.mxu0 0.0
        %1414 = vmatpush2.xpose.msra.mxu0 0.0
        %1415 = vmatprep.subr.mxu0 0.0
        %1416 = vmatpush2.xpose.msra.mxu0 0.0
        %1417 = vmatprep.subr.mxu0 0.0
        %1418 = vmatpush2.xpose.msra.mxu0 0.0
        %1419 = vmatprep.subr.mxu0 0.0
        %1420 = vmatpush2.xpose.msra.mxu0 0.0
        %1421 = vmatprep.subr.mxu0 0.0
        %1422 = vmatpush2.xpose.msra.mxu0 0.0
        %1423 = vmatprep.subr.mxu0 0.0
        %1424 = vmatpush2.xpose.msra.mxu0 0.0
        %1425 = vmatprep.subr.mxu0 0.0
        %1426 = vmatpush2.xpose.msra.mxu0 0.0
        %1427 = vmatprep.subr.mxu0 0.0
        %1428 = vmatpush2.xpose.msra.mxu0 0.0
        %1429 = vmatprep.subr.mxu0 0.0
        %1430 = vmatpush2.xpose.msra.mxu0 0.0
        %1431 = vmatprep.subr.mxu0 0.0
        %1432 = vmatpush2.xpose.msra.mxu0 0.0
        %1433 = vmatprep.subr.mxu0 0.0
        %1434 = vmatpush2.xpose.msra.mxu0 0.0
        %1435 = vmatprep.subr.mxu0 0.0
        %1436 = vmatpush2.xpose.msra.mxu0 0.0
        %1437 = vmatprep.subr.mxu0 0.0
        %1438 = vmatpush2.xpose.msra.mxu0 0.0
        %1439 = vmatprep.subr.mxu0 0.0
        %1440 = vmatpush2.xpose.msra.mxu0 0.0
        %1441 = vmatprep.subr.mxu0 0.0
        %1442 = vmatpush2.xpose.msra.mxu0 0.0
        %1443 = vmatprep.mubr.f32.mxu0 0.0
        %1444 = vmatmul.mubr.f32.gmra.mxu0 %v1300
        %v1445 = vpop.f32.mrf.mxu0
        %v1446 = vadd.f32 %v487, %v1445
        %v1447 = vpop.f32.mrf.mxu0
        %1448 = vmatprep.mubr.f32.mxu0 0.0
        %1449 = vmatmul.mubr.f32.gmra.mxu0 %v1303
        %v1450 = vpop.f32.mrf.mxu0
        %v1451 = vadd.f32 %v488, %v1450
        %v1452 = vpop.f32.mrf.mxu0
        %1453 = vmatprep.mubr.f32.mxu0 0.0
        %1454 = vmatmul.mubr.f32.gmra.mxu0 %v1306
        %v1455 = vpop.f32.mrf.mxu0
        %v1456 = vadd.f32 %v489, %v1455
        %v1457 = vpop.f32.mrf.mxu0
        %1458 = vmatprep.mubr.f32.mxu0 0.0
        %1459 = vmatmul.mubr.f32.gmra.mxu0 %v1309
        %v1460 = vpop.f32.mrf.mxu0
        %v1461 = vadd.f32 %v490, %v1460
        %v1462 = vpop.f32.mrf.mxu0
        %1463 = vmatprep.mubr.f32.mxu0 0.0
        %1464 = vmatmul.mubr.f32.gmra.mxu0 %v1312
        %v1465 = vpop.f32.mrf.mxu0
        %v1466 = vadd.f32 %v491, %v1465
        %v1467 = vpop.f32.mrf.mxu0
        %1468 = vmatprep.mubr.f32.mxu0 0.0
        %1469 = vmatmul.mubr.f32.gmra.mxu0 %v1315
        %v1470 = vpop.f32.mrf.mxu0
        %v1471 = vadd.f32 %v492, %v1470
        %v1472 = vpop.f32.mrf.mxu0
        %1473 = vmatprep.mubr.f32.mxu0 0.0
        %1474 = vmatmul.mubr.f32.gmra.mxu0 %v1318
        %v1475 = vpop.f32.mrf.mxu0
        %v1476 = vadd.f32 %v493, %v1475
        %v1477 = vpop.f32.mrf.mxu0
        %1478 = vmatprep.mubr.f32.mxu0 0.0
        %1479 = vmatmul.mubr.f32.gmra.mxu0 %v1321
        %v1480 = vpop.f32.mrf.mxu0
        %v1481 = vadd.f32 %v494, %v1480
        %v1482 = vpop.f32.mrf.mxu0
        %1483 = vmatprep.mubr.f32.mxu0 0.0
        %1484 = vmatmul.mubr.f32.gmra.mxu0 %v1324
        %v1485 = vpop.f32.mrf.mxu0
        %v1486 = vadd.f32 %v495, %v1485
        %v1487 = vpop.f32.mrf.mxu0
        %1488 = vmatprep.mubr.f32.mxu0 0.0
        %1489 = vmatmul.mubr.f32.gmra.mxu0 %v1327
        %v1490 = vpop.f32.mrf.mxu0
        %v1491 = vadd.f32 %v496, %v1490
        %v1492 = vpop.f32.mrf.mxu0
        %1493 = vmatprep.mubr.f32.mxu0 0.0
        %1494 = vmatmul.mubr.f32.gmra.mxu0 %v1330
        %v1495 = vpop.f32.mrf.mxu0
        %v1496 = vadd.f32 %v497, %v1495
        %v1497 = vpop.f32.mrf.mxu0
        %1498 = vmatprep.mubr.f32.mxu0 0.0
        %1499 = vmatmul.mubr.f32.gmra.mxu0 %v1333
        %v1500 = vpop.f32.mrf.mxu0
        %v1501 = vadd.f32 %v498, %v1500
        %v1502 = vpop.f32.mrf.mxu0
        %1503 = vmatprep.mubr.f32.mxu0 0.0
        %1504 = vmatmul.mubr.f32.gmra.mxu0 %v1336
        %v1505 = vpop.f32.mrf.mxu0
        %v1506 = vadd.f32 %v499, %v1505
        %v1507 = vpop.f32.mrf.mxu0
        %1508 = vmatprep.mubr.f32.mxu0 0.0
        %1509 = vmatmul.mubr.f32.gmra.mxu0 %v1339
        %v1510 = vpop.f32.mrf.mxu0
        %v1511 = vadd.f32 %v500, %v1510
        %v1512 = vpop.f32.mrf.mxu0
        %1513 = vmatprep.mubr.f32.mxu0 0.0
        %1514 = vmatmul.mubr.f32.gmra.mxu0 %v1342
        %v1515 = vpop.f32.mrf.mxu0
        %v1516 = vadd.f32 %v501, %v1515
        %v1517 = vpop.f32.mrf.mxu0
        %1518 = vmatprep.mubr.f32.mxu0 0.0
        %1519 = vmatmul.mubr.f32.gmra.mxu0 %v1345
        %v1520 = vpop.f32.mrf.mxu0
        %v1521 = vadd.f32 %v502, %v1520
        %v1522 = vpop.f32.mrf.mxu0
        %1523 = vdwg.mxu0
        %1524 = vmax.xlane.f32.xlu0 %v1446
        %v1525 = vpop.xlane.xlu0 %1524
        %1526 = vmax.xlane.f32.xlu0 %v1451
        %v1527 = vpop.xlane.xlu0 %1526
        %1528 = vmax.xlane.f32.xlu0 %v1456
        %v1529 = vpop.xlane.xlu0 %1528
        %1530 = vmax.xlane.f32.xlu0 %v1461
        %v1531 = vpop.xlane.xlu0 %1530
        %1532 = vmax.xlane.f32.xlu0 %v1466
        %v1533 = vpop.xlane.xlu0 %1532
        %1534 = vmax.xlane.f32.xlu0 %v1471
        %v1535 = vpop.xlane.xlu0 %1534
        %1536 = vmax.xlane.f32.xlu0 %v1476
        %v1537 = vpop.xlane.xlu0 %1536
        %1538 = vmax.xlane.f32.xlu0 %v1481
        %v1539 = vpop.xlane.xlu0 %1538
        %1540 = vmax.xlane.f32.xlu0 %v1486
        %v1541 = vpop.xlane.xlu0 %1540
        %1542 = vmax.xlane.f32.xlu0 %v1491
        %v1543 = vpop.xlane.xlu0 %1542
        %1544 = vmax.xlane.f32.xlu0 %v1496
        %v1545 = vpop.xlane.xlu0 %1544
        %1546 = vmax.xlane.f32.xlu0 %v1501
        %v1547 = vpop.xlane.xlu0 %1546
        %1548 = vmax.xlane.f32.xlu0 %v1506
        %v1549 = vpop.xlane.xlu0 %1548
        %1550 = vmax.xlane.f32.xlu0 %v1511
        %v1551 = vpop.xlane.xlu0 %1550
        %1552 = vmax.xlane.f32.xlu0 %v1516
        %v1553 = vpop.xlane.xlu0 %1552
        %1554 = vmax.xlane.f32.xlu0 %v1521
        %v1555 = vpop.xlane.xlu0 %1554
        %v1556 = vsub.f32 %v1446, %v1525
        %v1557 = vsub.f32 %v1451, %v1527
        %v1558 = vsub.f32 %v1456, %v1529
        %v1559 = vsub.f32 %v1461, %v1531
        %v1560 = vsub.f32 %v1466, %v1533
        %v1561 = vsub.f32 %v1471, %v1535
        %v1562 = vsub.f32 %v1476, %v1537
        %v1563 = vsub.f32 %v1481, %v1539
        %v1564 = vsub.f32 %v1486, %v1541
        %v1565 = vsub.f32 %v1491, %v1543
        %v1566 = vsub.f32 %v1496, %v1545
        %v1567 = vsub.f32 %v1501, %v1547
        %v1568 = vsub.f32 %v1506, %v1549
        %v1569 = vsub.f32 %v1511, %v1551
        %v1570 = vsub.f32 %v1516, %v1553
        %v1571 = vsub.f32 %v1521, %v1555
        %v1572 = vmul.f32 %v1556, 1.442695
        %v1573 = vpow.pop %v1572
        %v1574 = vmul.f32 %v1557, 1.442695
        %v1575 = vpow.pop %v1574
        %v1576 = vmul.f32 %v1558, 1.442695
        %v1577 = vpow.pop %v1576
        %v1578 = vmul.f32 %v1559, 1.442695
        %v1579 = vpow.pop %v1578
        %v1580 = vmul.f32 %v1560, 1.442695
        %v1581 = vpow.pop %v1580
        %v1582 = vmul.f32 %v1561, 1.442695
        %v1583 = vpow.pop %v1582
        %v1584 = vmul.f32 %v1562, 1.442695
        %v1585 = vpow.pop %v1584
        %v1586 = vmul.f32 %v1563, 1.442695
        %v1587 = vpow.pop %v1586
        %v1588 = vmul.f32 %v1564, 1.442695
        %v1589 = vpow.pop %v1588
        %v1590 = vmul.f32 %v1565, 1.442695
        %v1591 = vpow.pop %v1590
        %v1592 = vmul.f32 %v1566, 1.442695
        %v1593 = vpow.pop %v1592
        %v1594 = vmul.f32 %v1567, 1.442695
        %v1595 = vpow.pop %v1594
        %v1596 = vmul.f32 %v1568, 1.442695
        %v1597 = vpow.pop %v1596
        %v1598 = vmul.f32 %v1569, 1.442695
        %v1599 = vpow.pop %v1598
        %v1600 = vmul.f32 %v1570, 1.442695
        %v1601 = vpow.pop %v1600
        %v1602 = vmul.f32 %v1571, 1.442695
        %v1603 = vpow.pop %v1602
        %1604 = vadd.xlane.f32.xlu0 %v1573
        %v1605 = vpop.xlane.xlu0 %1604
        %1606 = vadd.xlane.f32.xlu0 %v1575
        %v1607 = vpop.xlane.xlu0 %1606
        %1608 = vadd.xlane.f32.xlu0 %v1577
        %v1609 = vpop.xlane.xlu0 %1608
        %1610 = vadd.xlane.f32.xlu0 %v1579
        %v1611 = vpop.xlane.xlu0 %1610
        %1612 = vadd.xlane.f32.xlu0 %v1581
        %v1613 = vpop.xlane.xlu0 %1612
        %1614 = vadd.xlane.f32.xlu0 %v1583
        %v1615 = vpop.xlane.xlu0 %1614
        %1616 = vadd.xlane.f32.xlu0 %v1585
        %v1617 = vpop.xlane.xlu0 %1616
        %1618 = vadd.xlane.f32.xlu0 %v1587
        %v1619 = vpop.xlane.xlu0 %1618
        %1620 = vadd.xlane.f32.xlu0 %v1589
        %v1621 = vpop.xlane.xlu0 %1620
        %1622 = vadd.xlane.f32.xlu0 %v1591
        %v1623 = vpop.xlane.xlu0 %1622
        %1624 = vadd.xlane.f32.xlu0 %v1593
        %v1625 = vpop.xlane.xlu0 %1624
        %1626 = vadd.xlane.f32.xlu0 %v1595
        %v1627 = vpop.xlane.xlu0 %1626
        %1628 = vadd.xlane.f32.xlu0 %v1597
        %v1629 = vpop.xlane.xlu0 %1628
        %1630 = vadd.xlane.f32.xlu0 %v1599
        %v1631 = vpop.xlane.xlu0 %1630
        %1632 = vadd.xlane.f32.xlu0 %v1601
        %v1633 = vpop.xlane.xlu0 %1632
        %1634 = vadd.xlane.f32.xlu0 %v1603
        %v1635 = vpop.xlane.xlu0 %1634
        %1636 = vrot.lane.b32.xlu0 %v676, 120
        %v1637 = vpop.permute.xlu0 %1636
        %1638 = vrot.lane.b32.xlu0 %v681, 120
        %v1639 = vpop.permute.xlu0 %1638
        %1640 = vrot.lane.b32.xlu0 %v686, 120
        %v1641 = vpop.permute.xlu0 %1640
        %1642 = vrot.lane.b32.xlu0 %v691, 120
        %v1643 = vpop.permute.xlu0 %1642
        %1644 = vrot.lane.b32.xlu0 %v696, 120
        %v1645 = vpop.permute.xlu0 %1644
        %1646 = vrot.lane.b32.xlu0 %v701, 120
        %v1647 = vpop.permute.xlu0 %1646
        %1648 = vrot.lane.b32.xlu0 %v706, 120
        %v1649 = vpop.permute.xlu0 %1648
        %1650 = vrot.lane.b32.xlu0 %v711, 120
        %v1651 = vpop.permute.xlu0 %1650
        %1652 = vrot.lane.b32.xlu0 %v716, 120
        %v1653 = vpop.permute.xlu0 %1652
        %1654 = vrot.lane.b32.xlu0 %v721, 120
        %v1655 = vpop.permute.xlu0 %1654
        %1656 = vrot.lane.b32.xlu0 %v726, 120
        %v1657 = vpop.permute.xlu0 %1656
        %1658 = vrot.lane.b32.xlu0 %v731, 120
        %v1659 = vpop.permute.xlu0 %1658
        %1660 = vrot.lane.b32.xlu0 %v736, 120
        %v1661 = vpop.permute.xlu0 %1660
        %1662 = vrot.lane.b32.xlu0 %v741, 120
        %v1663 = vpop.permute.xlu0 %1662
        %1664 = vrot.lane.b32.xlu0 %v746, 120
        %v1665 = vpop.permute.xlu0 %1664
        %1666 = vrot.lane.b32.xlu0 %v751, 120
        %v1667 = vpop.permute.xlu0 %1666
        %1684 = vmatprep.subr.mxu0 0.0
        %1685 = vmatpush1.msra.mxu0 %v1667
        %1686 = vmatprep.subr.mxu0 0.0
        %1687 = vmatpush1.msra.mxu0 %v1665
        %1688 = vmatprep.subr.mxu0 0.0
        %1689 = vmatpush1.msra.mxu0 %v1663
        %1690 = vmatprep.subr.mxu0 0.0
        %1691 = vmatpush1.msra.mxu0 %v1661
        %1692 = vmatprep.subr.mxu0 0.0
        %1693 = vmatpush1.msra.mxu0 %v1659
        %1694 = vmatprep.subr.mxu0 0.0
        %1695 = vmatpush1.msra.mxu0 %v1657
        %1696 = vmatprep.subr.mxu0 0.0
        %1697 = vmatpush1.msra.mxu0 %v1655
        %1698 = vmatprep.subr.mxu0 0.0
        %1699 = vmatpush1.msra.mxu0 %v1653
        %1700 = vmatprep.subr.mxu0 0.0
        %1701 = vmatpush1.msra.mxu0 %v1651
        %1702 = vmatprep.subr.mxu0 0.0
        %1703 = vmatpush1.msra.mxu0 %v1649
        %1704 = vmatprep.subr.mxu0 0.0
        %1705 = vmatpush1.msra.mxu0 %v1647
        %1706 = vmatprep.subr.mxu0 0.0
        %1707 = vmatpush1.msra.mxu0 %v1645
        %1708 = vmatprep.subr.mxu0 0.0
        %1709 = vmatpush1.msra.mxu0 %v1643
        %1710 = vmatprep.subr.mxu0 0.0
        %1711 = vmatpush1.msra.mxu0 %v1641
        %1712 = vmatprep.subr.mxu0 0.0
        %1713 = vmatpush1.msra.mxu0 %v1639
        %1714 = vmatprep.subr.mxu0 0.0
        %1715 = vmatpush1.msra.mxu0 %v1637
        %1716 = vmatprep.subr.mxu0 0.0
        %1717 = vmatpush2.msra.mxu0 0.0
        %1718 = vmatprep.subr.mxu0 0.0
        %1719 = vmatpush2.msra.mxu0 0.0
        %1720 = vmatprep.subr.mxu0 0.0
        %1721 = vmatpush2.msra.mxu0 0.0
        %1722 = vmatprep.subr.mxu0 0.0
        %1723 = vmatpush2.msra.mxu0 0.0
        %1724 = vmatprep.subr.mxu0 0.0
        %1725 = vmatpush2.msra.mxu0 0.0
        %1726 = vmatprep.subr.mxu0 0.0
        %1727 = vmatpush2.msra.mxu0 0.0
        %1728 = vmatprep.subr.mxu0 0.0
        %1729 = vmatpush2.msra.mxu0 0.0
        %1730 = vmatprep.subr.mxu0 0.0
        %1731 = vmatpush2.msra.mxu0 0.0
        %1732 = vmatprep.subr.mxu0 0.0
        %1733 = vmatpush2.msra.mxu0 0.0
        %1734 = vmatprep.subr.mxu0 0.0
        %1735 = vmatpush2.msra.mxu0 0.0
        %1736 = vmatprep.subr.mxu0 0.0
        %1737 = vmatpush2.msra.mxu0 0.0
        %1738 = vmatprep.subr.mxu0 0.0
        %1739 = vmatpush2.msra.mxu0 0.0
        %1740 = vmatprep.subr.mxu0 0.0
        %1741 = vmatpush2.msra.mxu0 0.0
        %1742 = vmatprep.subr.mxu0 0.0
        %1743 = vmatpush2.msra.mxu0 0.0
        %1744 = vmatprep.subr.mxu0 0.0
        %1745 = vmatpush2.msra.mxu0 0.0
        %1746 = vmatprep.subr.mxu0 0.0
        %1747 = vmatpush2.msra.mxu0 0.0
        %1748 = vmatprep.mubr.f32.mxu0 0.0
        %1749 = vmatmul.mubr.f32.gmra.mxu0 %v1573
        %v1750 = vpop.f32.mrf.mxu0
        %v1751 = vadd.f32 0.0, %v1750
        %v1752 = vpop.f32.mrf.mxu0
        %1753 = vmatprep.mubr.f32.mxu0 0.0
        %1754 = vmatmul.mubr.f32.gmra.mxu0 %v1575
        %v1755 = vpop.f32.mrf.mxu0
        %v1756 = vadd.f32 0.0, %v1755
        %v1757 = vpop.f32.mrf.mxu0
        %1758 = vmatprep.mubr.f32.mxu0 0.0
        %1759 = vmatmul.mubr.f32.gmra.mxu0 %v1577
        %v1760 = vpop.f32.mrf.mxu0
        %v1761 = vadd.f32 0.0, %v1760
        %v1762 = vpop.f32.mrf.mxu0
        %1763 = vmatprep.mubr.f32.mxu0 0.0
        %1764 = vmatmul.mubr.f32.gmra.mxu0 %v1579
        %v1765 = vpop.f32.mrf.mxu0
        %v1766 = vadd.f32 0.0, %v1765
        %v1767 = vpop.f32.mrf.mxu0
        %1768 = vmatprep.mubr.f32.mxu0 0.0
        %1769 = vmatmul.mubr.f32.gmra.mxu0 %v1581
        %v1770 = vpop.f32.mrf.mxu0
        %v1771 = vadd.f32 0.0, %v1770
        %v1772 = vpop.f32.mrf.mxu0
        %1773 = vmatprep.mubr.f32.mxu0 0.0
        %1774 = vmatmul.mubr.f32.gmra.mxu0 %v1583
        %v1775 = vpop.f32.mrf.mxu0
        %v1776 = vadd.f32 0.0, %v1775
        %v1777 = vpop.f32.mrf.mxu0
        %1778 = vmatprep.mubr.f32.mxu0 0.0
        %1779 = vmatmul.mubr.f32.gmra.mxu0 %v1585
        %v1780 = vpop.f32.mrf.mxu0
        %v1781 = vadd.f32 0.0, %v1780
        %v1782 = vpop.f32.mrf.mxu0
        %1783 = vmatprep.mubr.f32.mxu0 0.0
        %1784 = vmatmul.mubr.f32.gmra.mxu0 %v1587
        %v1785 = vpop.f32.mrf.mxu0
        %v1786 = vadd.f32 0.0, %v1785
        %v1787 = vpop.f32.mrf.mxu0
        %1788 = vmatprep.mubr.f32.mxu0 0.0
        %1789 = vmatmul.mubr.f32.gmra.mxu0 %v1589
        %v1790 = vpop.f32.mrf.mxu0
        %v1791 = vadd.f32 0.0, %v1790
        %v1792 = vpop.f32.mrf.mxu0
        %1793 = vmatprep.mubr.f32.mxu0 0.0
        %1794 = vmatmul.mubr.f32.gmra.mxu0 %v1591
        %v1795 = vpop.f32.mrf.mxu0
        %v1796 = vadd.f32 0.0, %v1795
        %v1797 = vpop.f32.mrf.mxu0
        %1798 = vmatprep.mubr.f32.mxu0 0.0
        %1799 = vmatmul.mubr.f32.gmra.mxu0 %v1593
        %v1800 = vpop.f32.mrf.mxu0
        %v1801 = vadd.f32 0.0, %v1800
        %v1802 = vpop.f32.mrf.mxu0
        %1803 = vmatprep.mubr.f32.mxu0 0.0
        %1804 = vmatmul.mubr.f32.gmra.mxu0 %v1595
        %v1805 = vpop.f32.mrf.mxu0
        %v1806 = vadd.f32 0.0, %v1805
        %v1807 = vpop.f32.mrf.mxu0
        %1808 = vmatprep.mubr.f32.mxu0 0.0
        %1809 = vmatmul.mubr.f32.gmra.mxu0 %v1597
        %v1810 = vpop.f32.mrf.mxu0
        %v1811 = vadd.f32 0.0, %v1810
        %v1812 = vpop.f32.mrf.mxu0
        %1813 = vmatprep.mubr.f32.mxu0 0.0
        %1814 = vmatmul.mubr.f32.gmra.mxu0 %v1599
        %v1815 = vpop.f32.mrf.mxu0
        %v1816 = vadd.f32 0.0, %v1815
        %v1817 = vpop.f32.mrf.mxu0
        %1818 = vmatprep.mubr.f32.mxu0 0.0
        %1819 = vmatmul.mubr.f32.gmra.mxu0 %v1601
        %v1820 = vpop.f32.mrf.mxu0
        %v1821 = vadd.f32 0.0, %v1820
        %v1822 = vpop.f32.mrf.mxu0
        %1823 = vmatprep.mubr.f32.mxu0 0.0
        %1824 = vmatmul.mubr.f32.gmra.mxu0 %v1603
        %v1825 = vpop.f32.mrf.mxu0
        %v1826 = vadd.f32 0.0, %v1825
        %v1827 = vpop.f32.mrf.mxu0
        %1828 = vdwg.mxu0
        %v1829 = vrcp.pop %v1605
        %v1830 = vrcp.pop %v1607
        %v1831 = vrcp.pop %v1609
        %v1832 = vrcp.pop %v1611
        %v1833 = vrcp.pop %v1613
        %v1834 = vrcp.pop %v1615
        %v1835 = vrcp.pop %v1617
        %v1836 = vrcp.pop %v1619
        %v1837 = vrcp.pop %v1621
        %v1838 = vrcp.pop %v1623
        %v1839 = vrcp.pop %v1625
        %v1840 = vrcp.pop %v1627
        %v1841 = vrcp.pop %v1629
        %v1842 = vrcp.pop %v1631
        %v1843 = vrcp.pop %v1633
        %v1844 = vrcp.pop %v1635
        %v1845 = vmul.f32 %v1751, %v1829
        %v1846 = vmul.f32 %v1756, %v1830
        %v1847 = vmul.f32 %v1761, %v1831
        %v1848 = vmul.f32 %v1766, %v1832
        %v1849 = vmul.f32 %v1771, %v1833
        %v1850 = vmul.f32 %v1776, %v1834
        %v1851 = vmul.f32 %v1781, %v1835
        %v1852 = vmul.f32 %v1786, %v1836
        %v1853 = vmul.f32 %v1791, %v1837
        %v1854 = vmul.f32 %v1796, %v1838
        %v1855 = vmul.f32 %v1801, %v1839
        %v1856 = vmul.f32 %v1806, %v1840
        %v1857 = vmul.f32 %v1811, %v1841
        %v1858 = vmul.f32 %v1816, %v1842
        %v1859 = vmul.f32 %v1821, %v1843
        %v1860 = vmul.f32 %v1826, %v1844
        %1861 = vrot.lane.b32.xlu0 %v1154, 126
        %v1862 = vpop.permute.xlu0 %1861
        %1863 = vrot.lane.b32.xlu0 %v1155, 126
        %v1864 = vpop.permute.xlu0 %1863
        %1865 = vrot.lane.b32.xlu0 %v1156, 126
        %v1866 = vpop.permute.xlu0 %1865
        %1867 = vrot.lane.b32.xlu0 %v1157, 126
        %v1868 = vpop.permute.xlu0 %1867
        %1869 = vrot.lane.b32.xlu0 %v1158, 126
        %v1870 = vpop.permute.xlu0 %1869
        %1871 = vrot.lane.b32.xlu0 %v1159, 126
        %v1872 = vpop.permute.xlu0 %1871
        %1873 = vrot.lane.b32.xlu0 %v1160, 126
        %v1874 = vpop.permute.xlu0 %1873
        %1875 = vrot.lane.b32.xlu0 %v1161, 126
        %v1876 = vpop.permute.xlu0 %1875
        %1877 = vrot.lane.b32.xlu0 %v1162, 126
        %v1878 = vpop.permute.xlu0 %1877
        %1879 = vrot.lane.b32.xlu0 %v1163, 126
        %v1880 = vpop.permute.xlu0 %1879
        %1881 = vrot.lane.b32.xlu0 %v1164, 126
        %v1882 = vpop.permute.xlu0 %1881
        %1883 = vrot.lane.b32.xlu0 %v1165, 126
        %v1884 = vpop.permute.xlu0 %1883
        %1885 = vrot.lane.b32.xlu0 %v1166, 126
        %v1886 = vpop.permute.xlu0 %1885
        %1887 = vrot.lane.b32.xlu0 %v1167, 126
        %v1888 = vpop.permute.xlu0 %1887
        %1889 = vrot.lane.b32.xlu0 %v1168, 126
        %v1890 = vpop.permute.xlu0 %1889
        %1891 = vrot.lane.b32.xlu0 %v1169, 126
        %v1892 = vpop.permute.xlu0 %1891
        %1893 = vrot.lane.b32.xlu0 %v676, 122
        %v1894 = vpop.permute.xlu0 %1893
        %1895 = vrot.lane.b32.xlu0 %v681, 122
        %v1896 = vpop.permute.xlu0 %1895
        %1897 = vrot.lane.b32.xlu0 %v686, 122
        %v1898 = vpop.permute.xlu0 %1897
        %1899 = vrot.lane.b32.xlu0 %v691, 122
        %v1900 = vpop.permute.xlu0 %1899
        %1901 = vrot.lane.b32.xlu0 %v696, 122
        %v1902 = vpop.permute.xlu0 %1901
        %1903 = vrot.lane.b32.xlu0 %v701, 122
        %v1904 = vpop.permute.xlu0 %1903
        %1905 = vrot.lane.b32.xlu0 %v706, 122
        %v1906 = vpop.permute.xlu0 %1905
        %1907 = vrot.lane.b32.xlu0 %v711, 122
        %v1908 = vpop.permute.xlu0 %1907
        %1909 = vrot.lane.b32.xlu0 %v716, 122
        %v1910 = vpop.permute.xlu0 %1909
        %1911 = vrot.lane.b32.xlu0 %v721, 122
        %v1912 = vpop.permute.xlu0 %1911
        %1913 = vrot.lane.b32.xlu0 %v726, 122
        %v1914 = vpop.permute.xlu0 %1913
        %1915 = vrot.lane.b32.xlu0 %v731, 122
        %v1916 = vpop.permute.xlu0 %1915
        %1917 = vrot.lane.b32.xlu0 %v736, 122
        %v1918 = vpop.permute.xlu0 %1917
        %1919 = vrot.lane.b32.xlu0 %v741, 122
        %v1920 = vpop.permute.xlu0 %1919
        %1921 = vrot.lane.b32.xlu0 %v746, 122
        %v1922 = vpop.permute.xlu0 %1921
        %1923 = vrot.lane.b32.xlu0 %v751, 122
        %v1924 = vpop.permute.xlu0 %1923
        %v1925 = vsel %vm1298, %v1862, 0
        %v1927 = vsel %vm1298, %v1864, 0
        %v1929 = vsel %vm1298, %v1866, 0
        %v1931 = vsel %vm1298, %v1868, 0
        %v1933 = vsel %vm1298, %v1870, 0
        %v1935 = vsel %vm1298, %v1872, 0
        %v1937 = vsel %vm1298, %v1874, 0
        %v1939 = vsel %vm1298, %v1876, 0
        %v1941 = vsel %vm1298, %v1878, 0
        %v1943 = vsel %vm1298, %v1880, 0
        %v1945 = vsel %vm1298, %v1882, 0
        %v1947 = vsel %vm1298, %v1884, 0
        %v1949 = vsel %vm1298, %v1886, 0
        %v1951 = vsel %vm1298, %v1888, 0
        %v1953 = vsel %vm1298, %v1890, 0
        %v1955 = vsel %vm1298, %v1892, 0
        %v1957 = vsel %vm1298, %v1894, 0
        %v1959 = vsel %vm1298, %v1896, 0
        %v1961 = vsel %vm1298, %v1898, 0
        %v1963 = vsel %vm1298, %v1900, 0
        %v1965 = vsel %vm1298, %v1902, 0
        %v1967 = vsel %vm1298, %v1904, 0
        %v1969 = vsel %vm1298, %v1906, 0
        %v1971 = vsel %vm1298, %v1908, 0
        %v1973 = vsel %vm1298, %v1910, 0
        %v1975 = vsel %vm1298, %v1912, 0
        %v1977 = vsel %vm1298, %v1914, 0
        %v1979 = vsel %vm1298, %v1916, 0
        %v1981 = vsel %vm1298, %v1918, 0
        %v1983 = vsel %vm1298, %v1920, 0
        %v1985 = vsel %vm1298, %v1922, 0
        %v1987 = vsel %vm1298, %v1924, 0
        %1989 = vmatprep.subr.mxu0 0.0
        %1990 = vmatpush1.xpose.msra.mxu0 %v1987
        %1991 = vmatprep.subr.mxu0 0.0
        %1992 = vmatpush1.xpose.msra.mxu0 %v1985
        %1993 = vmatprep.subr.mxu0 0.0
        %1994 = vmatpush1.xpose.msra.mxu0 %v1983
        %1995 = vmatprep.subr.mxu0 0.0
        %1996 = vmatpush1.xpose.msra.mxu0 %v1981
        %1997 = vmatprep.subr.mxu0 0.0
        %1998 = vmatpush1.xpose.msra.mxu0 %v1979
        %1999 = vmatprep.subr.mxu0 0.0
        %2000 = vmatpush1.xpose.msra.mxu0 %v1977
        %2001 = vmatprep.subr.mxu0 0.0
        %2002 = vmatpush1.xpose.msra.mxu0 %v1975
        %2003 = vmatprep.subr.mxu0 0.0
        %2004 = vmatpush1.xpose.msra.mxu0 %v1973
        %2005 = vmatprep.subr.mxu0 0.0
        %2006 = vmatpush1.xpose.msra.mxu0 %v1971
        %2007 = vmatprep.subr.mxu0 0.0
        %2008 = vmatpush1.xpose.msra.mxu0 %v1969
        %2009 = vmatprep.subr.mxu0 0.0
        %2010 = vmatpush1.xpose.msra.mxu0 %v1967
        %2011 = vmatprep.subr.mxu0 0.0
        %2012 = vmatpush1.xpose.msra.mxu0 %v1965
        %2013 = vmatprep.subr.mxu0 0.0
        %2014 = vmatpush1.xpose.msra.mxu0 %v1963
        %2015 = vmatprep.subr.mxu0 0.0
        %2016 = vmatpush1.xpose.msra.mxu0 %v1961
        %2017 = vmatprep.subr.mxu0 0.0
        %2018 = vmatpush1.xpose.msra.mxu0 %v1959
        %2019 = vmatprep.subr.mxu0 0.0
        %2020 = vmatpush1.xpose.msra.mxu0 %v1957
        %2021 = vmatprep.subr.mxu0 0.0
        %2022 = vmatpush2.xpose.msra.mxu0 0.0
        %2023 = vmatprep.subr.mxu0 0.0
        %2024 = vmatpush2.xpose.msra.mxu0 0.0
        %2025 = vmatprep.subr.mxu0 0.0
        %2026 = vmatpush2.xpose.msra.mxu0 0.0
        %2027 = vmatprep.subr.mxu0 0.0
        %2028 = vmatpush2.xpose.msra.mxu0 0.0
        %2029 = vmatprep.subr.mxu0 0.0
        %2030 = vmatpush2.xpose.msra.mxu0 0.0
        %2031 = vmatprep.subr.mxu0 0.0
        %2032 = vmatpush2.xpose.msra.mxu0 0.0
        %2033 = vmatprep.subr.mxu0 0.0
        %2034 = vmatpush2.xpose.msra.mxu0 0.0
        %2035 = vmatprep.subr.mxu0 0.0
        %2036 = vmatpush2.xpose.msra.mxu0 0.0
        %2037 = vmatprep.subr.mxu0 0.0
        %2038 = vmatpush2.xpose.msra.mxu0 0.0
        %2039 = vmatprep.subr.mxu0 0.0
        %2040 = vmatpush2.xpose.msra.mxu0 0.0
        %2041 = vmatprep.subr.mxu0 0.0
        %2042 = vmatpush2.xpose.msra.mxu0 0.0
        %2043 = vmatprep.subr.mxu0 0.0
        %2044 = vmatpush2.xpose.msra.mxu0 0.0
        %2045 = vmatprep.subr.mxu0 0.0
        %2046 = vmatpush2.xpose.msra.mxu0 0.0
        %2047 = vmatprep.subr.mxu0 0.0
        %2048 = vmatpush2.xpose.msra.mxu0 0.0
        %2049 = vmatprep.subr.mxu0 0.0
        %2050 = vmatpush2.xpose.msra.mxu0 0.0
        %2051 = vmatprep.subr.mxu0 0.0
        %2052 = vmatpush2.xpose.msra.mxu0 0.0
        %2053 = vmatprep.mubr.f32.mxu0 0.0
        %2054 = vmatmul.mubr.f32.gmra.mxu0 %v1925
        %v2055 = vpop.f32.mrf.mxu0
        %v2056 = vadd.f32 %v487, %v2055
        %v2057 = vpop.f32.mrf.mxu0
        %2058 = vmatprep.mubr.f32.mxu0 0.0
        %2059 = vmatmul.mubr.f32.gmra.mxu0 %v1927
        %v2060 = vpop.f32.mrf.mxu0
        %v2061 = vadd.f32 %v488, %v2060
        %v2062 = vpop.f32.mrf.mxu0
        %2063 = vmatprep.mubr.f32.mxu0 0.0
        %2064 = vmatmul.mubr.f32.gmra.mxu0 %v1929
        %v2065 = vpop.f32.mrf.mxu0
        %v2066 = vadd.f32 %v489, %v2065
        %v2067 = vpop.f32.mrf.mxu0
        %2068 = vmatprep.mubr.f32.mxu0 0.0
        %2069 = vmatmul.mubr.f32.gmra.mxu0 %v1931
        %v2070 = vpop.f32.mrf.mxu0
        %v2071 = vadd.f32 %v490, %v2070
        %v2072 = vpop.f32.mrf.mxu0
        %2073 = vmatprep.mubr.f32.mxu0 0.0
        %2074 = vmatmul.mubr.f32.gmra.mxu0 %v1933
        %v2075 = vpop.f32.mrf.mxu0
        %v2076 = vadd.f32 %v491, %v2075
        %v2077 = vpop.f32.mrf.mxu0
        %2078 = vmatprep.mubr.f32.mxu0 0.0
        %2079 = vmatmul.mubr.f32.gmra.mxu0 %v1935
        %v2080 = vpop.f32.mrf.mxu0
        %v2081 = vadd.f32 %v492, %v2080
        %v2082 = vpop.f32.mrf.mxu0
        %2083 = vmatprep.mubr.f32.mxu0 0.0
        %2084 = vmatmul.mubr.f32.gmra.mxu0 %v1937
        %v2085 = vpop.f32.mrf.mxu0
        %v2086 = vadd.f32 %v493, %v2085
        %v2087 = vpop.f32.mrf.mxu0
        %2088 = vmatprep.mubr.f32.mxu0 0.0
        %2089 = vmatmul.mubr.f32.gmra.mxu0 %v1939
        %v2090 = vpop.f32.mrf.mxu0
        %v2091 = vadd.f32 %v494, %v2090
        %v2092 = vpop.f32.mrf.mxu0
        %2093 = vmatprep.mubr.f32.mxu0 0.0
        %2094 = vmatmul.mubr.f32.gmra.mxu0 %v1941
        %v2095 = vpop.f32.mrf.mxu0
        %v2096 = vadd.f32 %v495, %v2095
        %v2097 = vpop.f32.mrf.mxu0
        %2098 = vmatprep.mubr.f32.mxu0 0.0
        %2099 = vmatmul.mubr.f32.gmra.mxu0 %v1943
        %v2100 = vpop.f32.mrf.mxu0
        %v2101 = vadd.f32 %v496, %v2100
        %v2102 = vpop.f32.mrf.mxu0
        %2103 = vmatprep.mubr.f32.mxu0 0.0
        %2104 = vmatmul.mubr.f32.gmra.mxu0 %v1945
        %v2105 = vpop.f32.mrf.mxu0
        %v2106 = vadd.f32 %v497, %v2105
        %v2107 = vpop.f32.mrf.mxu0
        %2108 = vmatprep.mubr.f32.mxu0 0.0
        %2109 = vmatmul.mubr.f32.gmra.mxu0 %v1947
        %v2110 = vpop.f32.mrf.mxu0
        %v2111 = vadd.f32 %v498, %v2110
        %v2112 = vpop.f32.mrf.mxu0
        %2113 = vmatprep.mubr.f32.mxu0 0.0
        %2114 = vmatmul.mubr.f32.gmra.mxu0 %v1949
        %v2115 = vpop.f32.mrf.mxu0
        %v2116 = vadd.f32 %v499, %v2115
        %v2117 = vpop.f32.mrf.mxu0
        %2118 = vmatprep.mubr.f32.mxu0 0.0
        %2119 = vmatmul.mubr.f32.gmra.mxu0 %v1951
        %v2120 = vpop.f32.mrf.mxu0
        %v2121 = vadd.f32 %v500, %v2120
        %v2122 = vpop.f32.mrf.mxu0
        %2123 = vmatprep.mubr.f32.mxu0 0.0
        %2124 = vmatmul.mubr.f32.gmra.mxu0 %v1953
        %v2125 = vpop.f32.mrf.mxu0
        %v2126 = vadd.f32 %v501, %v2125
        %v2127 = vpop.f32.mrf.mxu0
        %2128 = vmatprep.mubr.f32.mxu0 0.0
        %2129 = vmatmul.mubr.f32.gmra.mxu0 %v1955
        %v2130 = vpop.f32.mrf.mxu0
        %v2131 = vadd.f32 %v502, %v2130
        %v2132 = vpop.f32.mrf.mxu0
        %2133 = vdwg.mxu0
        %2134 = vmax.xlane.f32.xlu0 %v2056
        %v2135 = vpop.xlane.xlu0 %2134
        %2136 = vmax.xlane.f32.xlu0 %v2061
        %v2137 = vpop.xlane.xlu0 %2136
        %2138 = vmax.xlane.f32.xlu0 %v2066
        %v2139 = vpop.xlane.xlu0 %2138
        %2140 = vmax.xlane.f32.xlu0 %v2071
        %v2141 = vpop.xlane.xlu0 %2140
        %2142 = vmax.xlane.f32.xlu0 %v2076
        %v2143 = vpop.xlane.xlu0 %2142
        %2144 = vmax.xlane.f32.xlu0 %v2081
        %v2145 = vpop.xlane.xlu0 %2144
        %2146 = vmax.xlane.f32.xlu0 %v2086
        %v2147 = vpop.xlane.xlu0 %2146
        %2148 = vmax.xlane.f32.xlu0 %v2091
        %v2149 = vpop.xlane.xlu0 %2148
        %2150 = vmax.xlane.f32.xlu0 %v2096
        %v2151 = vpop.xlane.xlu0 %2150
        %2152 = vmax.xlane.f32.xlu0 %v2101
        %v2153 = vpop.xlane.xlu0 %2152
        %2154 = vmax.xlane.f32.xlu0 %v2106
        %v2155 = vpop.xlane.xlu0 %2154
        %2156 = vmax.xlane.f32.xlu0 %v2111
        %v2157 = vpop.xlane.xlu0 %2156
        %2158 = vmax.xlane.f32.xlu0 %v2116
        %v2159 = vpop.xlane.xlu0 %2158
        %2160 = vmax.xlane.f32.xlu0 %v2121
        %v2161 = vpop.xlane.xlu0 %2160
        %2162 = vmax.xlane.f32.xlu0 %v2126
        %v2163 = vpop.xlane.xlu0 %2162
        %2164 = vmax.xlane.f32.xlu0 %v2131
        %v2165 = vpop.xlane.xlu0 %2164
        %v2166 = vsub.f32 %v2056, %v2135
        %v2167 = vsub.f32 %v2061, %v2137
        %v2168 = vsub.f32 %v2066, %v2139
        %v2169 = vsub.f32 %v2071, %v2141
        %v2170 = vsub.f32 %v2076, %v2143
        %v2171 = vsub.f32 %v2081, %v2145
        %v2172 = vsub.f32 %v2086, %v2147
        %v2173 = vsub.f32 %v2091, %v2149
        %v2174 = vsub.f32 %v2096, %v2151
        %v2175 = vsub.f32 %v2101, %v2153
        %v2176 = vsub.f32 %v2106, %v2155
        %v2177 = vsub.f32 %v2111, %v2157
        %v2178 = vsub.f32 %v2116, %v2159
        %v2179 = vsub.f32 %v2121, %v2161
        %v2180 = vsub.f32 %v2126, %v2163
        %v2181 = vsub.f32 %v2131, %v2165
        %v2182 = vmul.f32 %v2166, 1.442695
        %v2183 = vpow.pop %v2182
        %v2184 = vmul.f32 %v2167, 1.442695
        %v2185 = vpow.pop %v2184
        %v2186 = vmul.f32 %v2168, 1.442695
        %v2187 = vpow.pop %v2186
        %v2188 = vmul.f32 %v2169, 1.442695
        %v2189 = vpow.pop %v2188
        %v2190 = vmul.f32 %v2170, 1.442695
        %v2191 = vpow.pop %v2190
        %v2192 = vmul.f32 %v2171, 1.442695
        %v2193 = vpow.pop %v2192
        %v2194 = vmul.f32 %v2172, 1.442695
        %v2195 = vpow.pop %v2194
        %v2196 = vmul.f32 %v2173, 1.442695
        %v2197 = vpow.pop %v2196
        %v2198 = vmul.f32 %v2174, 1.442695
        %v2199 = vpow.pop %v2198
        %v2200 = vmul.f32 %v2175, 1.442695
        %v2201 = vpow.pop %v2200
        %v2202 = vmul.f32 %v2176, 1.442695
        %v2203 = vpow.pop %v2202
        %v2204 = vmul.f32 %v2177, 1.442695
        %v2205 = vpow.pop %v2204
        %v2206 = vmul.f32 %v2178, 1.442695
        %v2207 = vpow.pop %v2206
        %v2208 = vmul.f32 %v2179, 1.442695
        %v2209 = vpow.pop %v2208
        %v2210 = vmul.f32 %v2180, 1.442695
        %v2211 = vpow.pop %v2210
        %v2212 = vmul.f32 %v2181, 1.442695
        %v2213 = vpow.pop %v2212
        %2214 = vadd.xlane.f32.xlu0 %v2183
        %v2215 = vpop.xlane.xlu0 %2214
        %2216 = vadd.xlane.f32.xlu0 %v2185
        %v2217 = vpop.xlane.xlu0 %2216
        %2218 = vadd.xlane.f32.xlu0 %v2187
        %v2219 = vpop.xlane.xlu0 %2218
        %2220 = vadd.xlane.f32.xlu0 %v2189
        %v2221 = vpop.xlane.xlu0 %2220
        %2222 = vadd.xlane.f32.xlu0 %v2191
        %v2223 = vpop.xlane.xlu0 %2222
        %2224 = vadd.xlane.f32.xlu0 %v2193
        %v2225 = vpop.xlane.xlu0 %2224
        %2226 = vadd.xlane.f32.xlu0 %v2195
        %v2227 = vpop.xlane.xlu0 %2226
        %2228 = vadd.xlane.f32.xlu0 %v2197
        %v2229 = vpop.xlane.xlu0 %2228
        %2230 = vadd.xlane.f32.xlu0 %v2199
        %v2231 = vpop.xlane.xlu0 %2230
        %2232 = vadd.xlane.f32.xlu0 %v2201
        %v2233 = vpop.xlane.xlu0 %2232
        %2234 = vadd.xlane.f32.xlu0 %v2203
        %v2235 = vpop.xlane.xlu0 %2234
        %2236 = vadd.xlane.f32.xlu0 %v2205
        %v2237 = vpop.xlane.xlu0 %2236
        %2238 = vadd.xlane.f32.xlu0 %v2207
        %v2239 = vpop.xlane.xlu0 %2238
        %2240 = vadd.xlane.f32.xlu0 %v2209
        %v2241 = vpop.xlane.xlu0 %2240
        %2242 = vadd.xlane.f32.xlu0 %v2211
        %v2243 = vpop.xlane.xlu0 %2242
        %2244 = vadd.xlane.f32.xlu0 %v2213
        %v2245 = vpop.xlane.xlu0 %2244
        %2246 = vrot.lane.b32.xlu0 %v676, 118
        %v2247 = vpop.permute.xlu0 %2246
        %2248 = vrot.lane.b32.xlu0 %v681, 118
        %v2249 = vpop.permute.xlu0 %2248
        %2250 = vrot.lane.b32.xlu0 %v686, 118
        %v2251 = vpop.permute.xlu0 %2250
        %2252 = vrot.lane.b32.xlu0 %v691, 118
        %v2253 = vpop.permute.xlu0 %2252
        %2254 = vrot.lane.b32.xlu0 %v696, 118
        %v2255 = vpop.permute.xlu0 %2254
        %2256 = vrot.lane.b32.xlu0 %v701, 118
        %v2257 = vpop.permute.xlu0 %2256
        %2258 = vrot.lane.b32.xlu0 %v706, 118
        %v2259 = vpop.permute.xlu0 %2258
        %2260 = vrot.lane.b32.xlu0 %v711, 118
        %v2261 = vpop.permute.xlu0 %2260
        %2262 = vrot.lane.b32.xlu0 %v716, 118
        %v2263 = vpop.permute.xlu0 %2262
        %2264 = vrot.lane.b32.xlu0 %v721, 118
        %v2265 = vpop.permute.xlu0 %2264
        %2266 = vrot.lane.b32.xlu0 %v726, 118
        %v2267 = vpop.permute.xlu0 %2266
        %2268 = vrot.lane.b32.xlu0 %v731, 118
        %v2269 = vpop.permute.xlu0 %2268
        %2270 = vrot.lane.b32.xlu0 %v736, 118
        %v2271 = vpop.permute.xlu0 %2270
        %2272 = vrot.lane.b32.xlu0 %v741, 118
        %v2273 = vpop.permute.xlu0 %2272
        %2274 = vrot.lane.b32.xlu0 %v746, 118
        %v2275 = vpop.permute.xlu0 %2274
        %2276 = vrot.lane.b32.xlu0 %v751, 118
        %v2277 = vpop.permute.xlu0 %2276
        %2294 = vmatprep.subr.mxu0 0.0
        %2295 = vmatpush1.msra.mxu0 %v2277
        %2296 = vmatprep.subr.mxu0 0.0
        %2297 = vmatpush1.msra.mxu0 %v2275
        %2298 = vmatprep.subr.mxu0 0.0
        %2299 = vmatpush1.msra.mxu0 %v2273
        %2300 = vmatprep.subr.mxu0 0.0
        %2301 = vmatpush1.msra.mxu0 %v2271
        %2302 = vmatprep.subr.mxu0 0.0
        %2303 = vmatpush1.msra.mxu0 %v2269
        %2304 = vmatprep.subr.mxu0 0.0
        %2305 = vmatpush1.msra.mxu0 %v2267
        %2306 = vmatprep.subr.mxu0 0.0
        %2307 = vmatpush1.msra.mxu0 %v2265
        %2308 = vmatprep.subr.mxu0 0.0
        %2309 = vmatpush1.msra.mxu0 %v2263
        %2310 = vmatprep.subr.mxu0 0.0
        %2311 = vmatpush1.msra.mxu0 %v2261
        %2312 = vmatprep.subr.mxu0 0.0
        %2313 = vmatpush1.msra.mxu0 %v2259
        %2314 = vmatprep.subr.mxu0 0.0
        %2315 = vmatpush1.msra.mxu0 %v2257
        %2316 = vmatprep.subr.mxu0 0.0
        %2317 = vmatpush1.msra.mxu0 %v2255
        %2318 = vmatprep.subr.mxu0 0.0
        %2319 = vmatpush1.msra.mxu0 %v2253
        %2320 = vmatprep.subr.mxu0 0.0
        %2321 = vmatpush1.msra.mxu0 %v2251
        %2322 = vmatprep.subr.mxu0 0.0
        %2323 = vmatpush1.msra.mxu0 %v2249
        %2324 = vmatprep.subr.mxu0 0.0
        %2325 = vmatpush1.msra.mxu0 %v2247
        %2326 = vmatprep.subr.mxu0 0.0
        %2327 = vmatpush2.msra.mxu0 0.0
        %2328 = vmatprep.subr.mxu0 0.0
        %2329 = vmatpush2.msra.mxu0 0.0
        %2330 = vmatprep.subr.mxu0 0.0
        %2331 = vmatpush2.msra.mxu0 0.0
        %2332 = vmatprep.subr.mxu0 0.0
        %2333 = vmatpush2.msra.mxu0 0.0
        %2334 = vmatprep.subr.mxu0 0.0
        %2335 = vmatpush2.msra.mxu0 0.0
        %2336 = vmatprep.subr.mxu0 0.0
        %2337 = vmatpush2.msra.mxu0 0.0
        %2338 = vmatprep.subr.mxu0 0.0
        %2339 = vmatpush2.msra.mxu0 0.0
        %2340 = vmatprep.subr.mxu0 0.0
        %2341 = vmatpush2.msra.mxu0 0.0
        %2342 = vmatprep.subr.mxu0 0.0
        %2343 = vmatpush2.msra.mxu0 0.0
        %2344 = vmatprep.subr.mxu0 0.0
        %2345 = vmatpush2.msra.mxu0 0.0
        %2346 = vmatprep.subr.mxu0 0.0
        %2347 = vmatpush2.msra.mxu0 0.0
        %2348 = vmatprep.subr.mxu0 0.0
        %2349 = vmatpush2.msra.mxu0 0.0
        %2350 = vmatprep.subr.mxu0 0.0
        %2351 = vmatpush2.msra.mxu0 0.0
        %2352 = vmatprep.subr.mxu0 0.0
        %2353 = vmatpush2.msra.mxu0 0.0
        %2354 = vmatprep.subr.mxu0 0.0
        %2355 = vmatpush2.msra.mxu0 0.0
        %2356 = vmatprep.subr.mxu0 0.0
        %2357 = vmatpush2.msra.mxu0 0.0
        %2358 = vmatprep.mubr.f32.mxu0 0.0
        %2359 = vmatmul.mubr.f32.gmra.mxu0 %v2183
        %v2360 = vpop.f32.mrf.mxu0
        %v2361 = vadd.f32 0.0, %v2360
        %v2362 = vpop.f32.mrf.mxu0
        %2363 = vmatprep.mubr.f32.mxu0 0.0
        %2364 = vmatmul.mubr.f32.gmra.mxu0 %v2185
        %v2365 = vpop.f32.mrf.mxu0
        %v2366 = vadd.f32 0.0, %v2365
        %v2367 = vpop.f32.mrf.mxu0
        %2368 = vmatprep.mubr.f32.mxu0 0.0
        %2369 = vmatmul.mubr.f32.gmra.mxu0 %v2187
        %v2370 = vpop.f32.mrf.mxu0
        %v2371 = vadd.f32 0.0, %v2370
        %v2372 = vpop.f32.mrf.mxu0
        %2373 = vmatprep.mubr.f32.mxu0 0.0
        %2374 = vmatmul.mubr.f32.gmra.mxu0 %v2189
        %v2375 = vpop.f32.mrf.mxu0
        %v2376 = vadd.f32 0.0, %v2375
        %v2377 = vpop.f32.mrf.mxu0
        %2378 = vmatprep.mubr.f32.mxu0 0.0
        %2379 = vmatmul.mubr.f32.gmra.mxu0 %v2191
        %v2380 = vpop.f32.mrf.mxu0
        %v2381 = vadd.f32 0.0, %v2380
        %v2382 = vpop.f32.mrf.mxu0
        %2383 = vmatprep.mubr.f32.mxu0 0.0
        %2384 = vmatmul.mubr.f32.gmra.mxu0 %v2193
        %v2385 = vpop.f32.mrf.mxu0
        %v2386 = vadd.f32 0.0, %v2385
        %v2387 = vpop.f32.mrf.mxu0
        %2388 = vmatprep.mubr.f32.mxu0 0.0
        %2389 = vmatmul.mubr.f32.gmra.mxu0 %v2195
        %v2390 = vpop.f32.mrf.mxu0
        %v2391 = vadd.f32 0.0, %v2390
        %v2392 = vpop.f32.mrf.mxu0
        %2393 = vmatprep.mubr.f32.mxu0 0.0
        %2394 = vmatmul.mubr.f32.gmra.mxu0 %v2197
        %v2395 = vpop.f32.mrf.mxu0
        %v2396 = vadd.f32 0.0, %v2395
        %v2397 = vpop.f32.mrf.mxu0
        %2398 = vmatprep.mubr.f32.mxu0 0.0
        %2399 = vmatmul.mubr.f32.gmra.mxu0 %v2199
        %v2400 = vpop.f32.mrf.mxu0
        %v2401 = vadd.f32 0.0, %v2400
        %v2402 = vpop.f32.mrf.mxu0
        %2403 = vmatprep.mubr.f32.mxu0 0.0
        %2404 = vmatmul.mubr.f32.gmra.mxu0 %v2201
        %v2405 = vpop.f32.mrf.mxu0
        %v2406 = vadd.f32 0.0, %v2405
        %v2407 = vpop.f32.mrf.mxu0
        %2408 = vmatprep.mubr.f32.mxu0 0.0
        %2409 = vmatmul.mubr.f32.gmra.mxu0 %v2203
        %v2410 = vpop.f32.mrf.mxu0
        %v2411 = vadd.f32 0.0, %v2410
        %v2412 = vpop.f32.mrf.mxu0
        %2413 = vmatprep.mubr.f32.mxu0 0.0
        %2414 = vmatmul.mubr.f32.gmra.mxu0 %v2205
        %v2415 = vpop.f32.mrf.mxu0
        %v2416 = vadd.f32 0.0, %v2415
        %v2417 = vpop.f32.mrf.mxu0
        %2418 = vmatprep.mubr.f32.mxu0 0.0
        %2419 = vmatmul.mubr.f32.gmra.mxu0 %v2207
        %v2420 = vpop.f32.mrf.mxu0
        %v2421 = vadd.f32 0.0, %v2420
        %v2422 = vpop.f32.mrf.mxu0
        %2423 = vmatprep.mubr.f32.mxu0 0.0
        %2424 = vmatmul.mubr.f32.gmra.mxu0 %v2209
        %v2425 = vpop.f32.mrf.mxu0
        %v2426 = vadd.f32 0.0, %v2425
        %v2427 = vpop.f32.mrf.mxu0
        %2428 = vmatprep.mubr.f32.mxu0 0.0
        %2429 = vmatmul.mubr.f32.gmra.mxu0 %v2211
        %v2430 = vpop.f32.mrf.mxu0
        %v2431 = vadd.f32 0.0, %v2430
        %v2432 = vpop.f32.mrf.mxu0
        %2433 = vmatprep.mubr.f32.mxu0 0.0
        %2434 = vmatmul.mubr.f32.gmra.mxu0 %v2213
        %v2435 = vpop.f32.mrf.mxu0
        %v2436 = vadd.f32 0.0, %v2435
        %v2437 = vpop.f32.mrf.mxu0
        %2438 = vdwg.mxu0
        %v2439 = vrcp.pop %v2215
        %v2440 = vrcp.pop %v2217
        %v2441 = vrcp.pop %v2219
        %v2442 = vrcp.pop %v2221
        %v2443 = vrcp.pop %v2223
        %v2444 = vrcp.pop %v2225
        %v2445 = vrcp.pop %v2227
        %v2446 = vrcp.pop %v2229
        %v2447 = vrcp.pop %v2231
        %v2448 = vrcp.pop %v2233
        %v2449 = vrcp.pop %v2235
        %v2450 = vrcp.pop %v2237
        %v2451 = vrcp.pop %v2239
        %v2452 = vrcp.pop %v2241
        %v2453 = vrcp.pop %v2243
        %v2454 = vrcp.pop %v2245
        %v2455 = vmul.f32 %v2361, %v2439
        %v2456 = vmul.f32 %v2366, %v2440
        %v2457 = vmul.f32 %v2371, %v2441
        %v2458 = vmul.f32 %v2376, %v2442
        %v2459 = vmul.f32 %v2381, %v2443
        %v2460 = vmul.f32 %v2386, %v2444
        %v2461 = vmul.f32 %v2391, %v2445
        %v2462 = vmul.f32 %v2396, %v2446
        %v2463 = vmul.f32 %v2401, %v2447
        %v2464 = vmul.f32 %v2406, %v2448
        %v2465 = vmul.f32 %v2411, %v2449
        %v2466 = vmul.f32 %v2416, %v2450
        %v2467 = vmul.f32 %v2421, %v2451
        %v2468 = vmul.f32 %v2426, %v2452
        %v2469 = vmul.f32 %v2431, %v2453
        %v2470 = vmul.f32 %v2436, %v2454
        %2472 = vrot.lane.b32.xlu0 %v503, 126
        %v2473 = vpop.permute.xlu0 %2472
        %v2474 = vsel %vm1298, %v2473, 0
        %v2477 = vsel %vm1298, %v2455, 0
        %v2480 = vsel %vm1298, %v2456, 0
        %v2483 = vsel %vm1298, %v2457, 0
        %v2486 = vsel %vm1298, %v2458, 0
        %v2489 = vsel %vm1298, %v2459, 0
        %v2492 = vsel %vm1298, %v2460, 0
        %v2495 = vsel %vm1298, %v2461, 0
        %v2498 = vsel %vm1298, %v2462, 0
        %v2501 = vsel %vm1298, %v2463, 0
        %v2504 = vsel %vm1298, %v2464, 0
        %v2507 = vsel %vm1298, %v2465, 0
        %v2510 = vsel %vm1298, %v2466, 0
        %v2513 = vsel %vm1298, %v2467, 0
        %v2516 = vsel %vm1298, %v2468, 0
        %v2519 = vsel %vm1298, %v2469, 0
        %v2522 = vsel %vm1298, %v2470, 0
        %2524 = vmatprep.subr.mxu0 0.0
        %2525 = vmatpush1.xpose.msra.mxu0 %v2522
        %2526 = vmatprep.subr.mxu0 0.0
        %2527 = vmatpush1.xpose.msra.mxu0 %v2519
        %2528 = vmatprep.subr.mxu0 0.0
        %2529 = vmatpush1.xpose.msra.mxu0 %v2516
        %2530 = vmatprep.subr.mxu0 0.0
        %2531 = vmatpush1.xpose.msra.mxu0 %v2513
        %2532 = vmatprep.subr.mxu0 0.0
        %2533 = vmatpush1.xpose.msra.mxu0 %v2510
        %2534 = vmatprep.subr.mxu0 0.0
        %2535 = vmatpush1.xpose.msra.mxu0 %v2507
        %2536 = vmatprep.subr.mxu0 0.0
        %2537 = vmatpush1.xpose.msra.mxu0 %v2504
        %2538 = vmatprep.subr.mxu0 0.0
        %2539 = vmatpush1.xpose.msra.mxu0 %v2501
        %2540 = vmatprep.subr.mxu0 0.0
        %2541 = vmatpush1.xpose.msra.mxu0 %v2498
        %2542 = vmatprep.subr.mxu0 0.0
        %2543 = vmatpush1.xpose.msra.mxu0 %v2495
        %2544 = vmatprep.subr.mxu0 0.0
        %2545 = vmatpush1.xpose.msra.mxu0 %v2492
        %2546 = vmatprep.subr.mxu0 0.0
        %2547 = vmatpush1.xpose.msra.mxu0 %v2489
        %2548 = vmatprep.subr.mxu0 0.0
        %2549 = vmatpush1.xpose.msra.mxu0 %v2486
        %2550 = vmatprep.subr.mxu0 0.0
        %2551 = vmatpush1.xpose.msra.mxu0 %v2483
        %2552 = vmatprep.subr.mxu0 0.0
        %2553 = vmatpush1.xpose.msra.mxu0 %v2480
        %2554 = vmatprep.subr.mxu0 0.0
        %2555 = vmatpush1.xpose.msra.mxu0 %v2477
        %2556 = vmatprep.subr.mxu0 0.0
        %2557 = vmatpush2.xpose.msra.mxu0 0.0
        %2558 = vmatprep.subr.mxu0 0.0
        %2559 = vmatpush2.xpose.msra.mxu0 0.0
        %2560 = vmatprep.subr.mxu0 0.0
        %2561 = vmatpush2.xpose.msra.mxu0 0.0
        %2562 = vmatprep.subr.mxu0 0.0
        %2563 = vmatpush2.xpose.msra.mxu0 0.0
        %2564 = vmatprep.subr.mxu0 0.0
        %2565 = vmatpush2.xpose.msra.mxu0 0.0
        %2566 = vmatprep.subr.mxu0 0.0
        %2567 = vmatpush2.xpose.msra.mxu0 0.0
        %2568 = vmatprep.subr.mxu0 0.0
        %2569 = vmatpush2.xpose.msra.mxu0 0.0
        %2570 = vmatprep.subr.mxu0 0.0
        %2571 = vmatpush2.xpose.msra.mxu0 0.0
        %2572 = vmatprep.subr.mxu0 0.0
        %2573 = vmatpush2.xpose.msra.mxu0 0.0
        %2574 = vmatprep.subr.mxu0 0.0
        %2575 = vmatpush2.xpose.msra.mxu0 0.0
        %2576 = vmatprep.subr.mxu0 0.0
        %2577 = vmatpush2.xpose.msra.mxu0 0.0
        %2578 = vmatprep.subr.mxu0 0.0
        %2579 = vmatpush2.xpose.msra.mxu0 0.0
        %2580 = vmatprep.subr.mxu0 0.0
        %2581 = vmatpush2.xpose.msra.mxu0 0.0
        %2582 = vmatprep.subr.mxu0 0.0
        %2583 = vmatpush2.xpose.msra.mxu0 0.0
        %2584 = vmatprep.subr.mxu0 0.0
        %2585 = vmatpush2.xpose.msra.mxu0 0.0
        %2586 = vmatprep.subr.mxu0 0.0
        %2587 = vmatpush2.xpose.msra.mxu0 0.0
        %2588 = vmatprep.mubr.f32.mxu0 0.0
        %2589 = vmatmul.mubr.f32.gmra.mxu0 %v2474
        %v2590 = vpop.f32.mrf.mxu0
        %v2591 = vadd.f32 0.0, %v2590
        %v2592 = vpop.f32.mrf.mxu0
        %2593 = vdwg.mxu0
        %v2594 = vsel %vm1298, %v503, 0
        %v2597 = vsel %vm1298, %v1845, 0
        %v2600 = vsel %vm1298, %v1846, 0
        %v2603 = vsel %vm1298, %v1847, 0
        %v2606 = vsel %vm1298, %v1848, 0
        %v2609 = vsel %vm1298, %v1849, 0
        %v2612 = vsel %vm1298, %v1850, 0
        %v2615 = vsel %vm1298, %v1851, 0
        %v2618 = vsel %vm1298, %v1852, 0
        %v2621 = vsel %vm1298, %v1853, 0
        %v2624 = vsel %vm1298, %v1854, 0
        %v2627 = vsel %vm1298, %v1855, 0
        %v2630 = vsel %vm1298, %v1856, 0
        %v2633 = vsel %vm1298, %v1857, 0
        %v2636 = vsel %vm1298, %v1858, 0
        %v2639 = vsel %vm1298, %v1859, 0
        %v2642 = vsel %vm1298, %v1860, 0
        %2644 = vmatprep.subr.mxu0 0.0
        %2645 = vmatpush1.xpose.msra.mxu0 %v2642
        %2646 = vmatprep.subr.mxu0 0.0
        %2647 = vmatpush1.xpose.msra.mxu0 %v2639
        %2648 = vmatprep.subr.mxu0 0.0
        %2649 = vmatpush1.xpose.msra.mxu0 %v2636
        %2650 = vmatprep.subr.mxu0 0.0
        %2651 = vmatpush1.xpose.msra.mxu0 %v2633
        %2652 = vmatprep.subr.mxu0 0.0
        %2653 = vmatpush1.xpose.msra.mxu0 %v2630
        %2654 = vmatprep.subr.mxu0 0.0
        %2655 = vmatpush1.xpose.msra.mxu0 %v2627
        %2656 = vmatprep.subr.mxu0 0.0
        %2657 = vmatpush1.xpose.msra.mxu0 %v2624
        %2658 = vmatprep.subr.mxu0 0.0
        %2659 = vmatpush1.xpose.msra.mxu0 %v2621
        %2660 = vmatprep.subr.mxu0 0.0
        %2661 = vmatpush1.xpose.msra.mxu0 %v2618
        %2662 = vmatprep.subr.mxu0 0.0
        %2663 = vmatpush1.xpose.msra.mxu0 %v2615
        %2664 = vmatprep.subr.mxu0 0.0
        %2665 = vmatpush1.xpose.msra.mxu0 %v2612
        %2666 = vmatprep.subr.mxu0 0.0
        %2667 = vmatpush1.xpose.msra.mxu0 %v2609
        %2668 = vmatprep.subr.mxu0 0.0
        %2669 = vmatpush1.xpose.msra.mxu0 %v2606
        %2670 = vmatprep.subr.mxu0 0.0
        %2671 = vmatpush1.xpose.msra.mxu0 %v2603
        %2672 = vmatprep.subr.mxu0 0.0
        %2673 = vmatpush1.xpose.msra.mxu0 %v2600
        %2674 = vmatprep.subr.mxu0 0.0
        %2675 = vmatpush1.xpose.msra.mxu0 %v2597
        %2676 = vmatprep.subr.mxu0 0.0
        %2677 = vmatpush2.xpose.msra.mxu0 0.0
        %2678 = vmatprep.subr.mxu0 0.0
        %2679 = vmatpush2.xpose.msra.mxu0 0.0
        %2680 = vmatprep.subr.mxu0 0.0
        %2681 = vmatpush2.xpose.msra.mxu0 0.0
        %2682 = vmatprep.subr.mxu0 0.0
        %2683 = vmatpush2.xpose.msra.mxu0 0.0
        %2684 = vmatprep.subr.mxu0 0.0
        %2685 = vmatpush2.xpose.msra.mxu0 0.0
        %2686 = vmatprep.subr.mxu0 0.0
        %2687 = vmatpush2.xpose.msra.mxu0 0.0
        %2688 = vmatprep.subr.mxu0 0.0
        %2689 = vmatpush2.xpose.msra.mxu0 0.0
        %2690 = vmatprep.subr.mxu0 0.0
        %2691 = vmatpush2.xpose.msra.mxu0 0.0
        %2692 = vmatprep.subr.mxu0 0.0
        %2693 = vmatpush2.xpose.msra.mxu0 0.0
        %2694 = vmatprep.subr.mxu0 0.0
        %2695 = vmatpush2.xpose.msra.mxu0 0.0
        %2696 = vmatprep.subr.mxu0 0.0
        %2697 = vmatpush2.xpose.msra.mxu0 0.0
        %2698 = vmatprep.subr.mxu0 0.0
        %2699 = vmatpush2.xpose.msra.mxu0 0.0
        %2700 = vmatprep.subr.mxu0 0.0
        %2701 = vmatpush2.xpose.msra.mxu0 0.0
        %2702 = vmatprep.subr.mxu0 0.0
        %2703 = vmatpush2.xpose.msra.mxu0 0.0
        %2704 = vmatprep.subr.mxu0 0.0
        %2705 = vmatpush2.xpose.msra.mxu0 0.0
        %2706 = vmatprep.subr.mxu0 0.0
        %2707 = vmatpush2.xpose.msra.mxu0 0.0
        %2708 = vmatprep.mubr.f32.mxu0 0.0
        %2709 = vmatmul.mubr.f32.gmra.mxu0 %v2594
        %v2710 = vpop.f32.mrf.mxu0
        %v2711 = vadd.f32 %v2591, %v2710
        %v2712 = vpop.f32.mrf.mxu0
        %2713 = vdwg.mxu0
        %2730 = vrot.lane.b32.xlu0 %v756, 124
        %v2731 = vpop.permute.xlu0 %2730
        %2732 = vrot.lane.b32.xlu0 %v761, 124
        %v2733 = vpop.permute.xlu0 %2732
        %2734 = vrot.lane.b32.xlu0 %v766, 124
        %v2735 = vpop.permute.xlu0 %2734
        %2736 = vrot.lane.b32.xlu0 %v771, 124
        %v2737 = vpop.permute.xlu0 %2736
        %2738 = vrot.lane.b32.xlu0 %v776, 124
        %v2739 = vpop.permute.xlu0 %2738
        %2740 = vrot.lane.b32.xlu0 %v781, 124
        %v2741 = vpop.permute.xlu0 %2740
        %2742 = vrot.lane.b32.xlu0 %v786, 124
        %v2743 = vpop.permute.xlu0 %2742
        %2744 = vrot.lane.b32.xlu0 %v791, 124
        %v2745 = vpop.permute.xlu0 %2744
        %2746 = vrot.lane.b32.xlu0 %v796, 124
        %v2747 = vpop.permute.xlu0 %2746
        %2748 = vrot.lane.b32.xlu0 %v801, 124
        %v2749 = vpop.permute.xlu0 %2748
        %2750 = vrot.lane.b32.xlu0 %v806, 124
        %v2751 = vpop.permute.xlu0 %2750
        %2752 = vrot.lane.b32.xlu0 %v811, 124
        %v2753 = vpop.permute.xlu0 %2752
        %2754 = vrot.lane.b32.xlu0 %v816, 124
        %v2755 = vpop.permute.xlu0 %2754
        %2756 = vrot.lane.b32.xlu0 %v821, 124
        %v2757 = vpop.permute.xlu0 %2756
        %2758 = vrot.lane.b32.xlu0 %v826, 124
        %v2759 = vpop.permute.xlu0 %2758
        %2760 = vrot.lane.b32.xlu0 %v831, 124
        %v2761 = vpop.permute.xlu0 %2760
        %v2763 = vsel %vm1298, %v1170, 0
        %v2766 = vsel %vm1298, %v1171, 0
        %v2769 = vsel %vm1298, %v1172, 0
        %v2772 = vsel %vm1298, %v1173, 0
        %v2775 = vsel %vm1298, %v1174, 0
        %v2778 = vsel %vm1298, %v1175, 0
        %v2781 = vsel %vm1298, %v1176, 0
        %v2784 = vsel %vm1298, %v1177, 0
        %v2787 = vsel %vm1298, %v1178, 0
        %v2790 = vsel %vm1298, %v1179, 0
        %v2793 = vsel %vm1298, %v1180, 0
        %v2796 = vsel %vm1298, %v1181, 0
        %v2799 = vsel %vm1298, %v1182, 0
        %v2802 = vsel %vm1298, %v1183, 0
        %v2805 = vsel %vm1298, %v1184, 0
        %v2808 = vsel %vm1298, %v1185, 0
        %v2810 = vsel %vm1298, %v2731, 0
        %v2812 = vsel %vm1298, %v2733, 0
        %v2814 = vsel %vm1298, %v2735, 0
        %v2816 = vsel %vm1298, %v2737, 0
        %v2818 = vsel %vm1298, %v2739, 0
        %v2820 = vsel %vm1298, %v2741, 0
        %v2822 = vsel %vm1298, %v2743, 0
        %v2824 = vsel %vm1298, %v2745, 0
        %v2826 = vsel %vm1298, %v2747, 0
        %v2828 = vsel %vm1298, %v2749, 0
        %v2830 = vsel %vm1298, %v2751, 0
        %v2832 = vsel %vm1298, %v2753, 0
        %v2834 = vsel %vm1298, %v2755, 0
        %v2836 = vsel %vm1298, %v2757, 0
        %v2838 = vsel %vm1298, %v2759, 0
        %v2840 = vsel %vm1298, %v2761, 0
        %2842 = vmatprep.subr.mxu0 0.0
        %2843 = vmatpush1.xpose.msra.mxu0 %v2840
        %2844 = vmatprep.subr.mxu0 0.0
        %2845 = vmatpush1.xpose.msra.mxu0 %v2838
        %2846 = vmatprep.subr.mxu0 0.0
        %2847 = vmatpush1.xpose.msra.mxu0 %v2836
        %2848 = vmatprep.subr.mxu0 0.0
        %2849 = vmatpush1.xpose.msra.mxu0 %v2834
        %2850 = vmatprep.subr.mxu0 0.0
        %2851 = vmatpush1.xpose.msra.mxu0 %v2832
        %2852 = vmatprep.subr.mxu0 0.0
        %2853 = vmatpush1.xpose.msra.mxu0 %v2830
        %2854 = vmatprep.subr.mxu0 0.0
        %2855 = vmatpush1.xpose.msra.mxu0 %v2828
        %2856 = vmatprep.subr.mxu0 0.0
        %2857 = vmatpush1.xpose.msra.mxu0 %v2826
        %2858 = vmatprep.subr.mxu0 0.0
        %2859 = vmatpush1.xpose.msra.mxu0 %v2824
        %2860 = vmatprep.subr.mxu0 0.0
        %2861 = vmatpush1.xpose.msra.mxu0 %v2822
        %2862 = vmatprep.subr.mxu0 0.0
        %2863 = vmatpush1.xpose.msra.mxu0 %v2820
        %2864 = vmatprep.subr.mxu0 0.0
        %2865 = vmatpush1.xpose.msra.mxu0 %v2818
        %2866 = vmatprep.subr.mxu0 0.0
        %2867 = vmatpush1.xpose.msra.mxu0 %v2816
        %2868 = vmatprep.subr.mxu0 0.0
        %2869 = vmatpush1.xpose.msra.mxu0 %v2814
        %2870 = vmatprep.subr.mxu0 0.0
        %2871 = vmatpush1.xpose.msra.mxu0 %v2812
        %2872 = vmatprep.subr.mxu0 0.0
        %2873 = vmatpush1.xpose.msra.mxu0 %v2810
        %2874 = vmatprep.subr.mxu0 0.0
        %2875 = vmatpush2.xpose.msra.mxu0 0.0
        %2876 = vmatprep.subr.mxu0 0.0
        %2877 = vmatpush2.xpose.msra.mxu0 0.0
        %2878 = vmatprep.subr.mxu0 0.0
        %2879 = vmatpush2.xpose.msra.mxu0 0.0
        %2880 = vmatprep.subr.mxu0 0.0
        %2881 = vmatpush2.xpose.msra.mxu0 0.0
        %2882 = vmatprep.subr.mxu0 0.0
        %2883 = vmatpush2.xpose.msra.mxu0 0.0
        %2884 = vmatprep.subr.mxu0 0.0
        %2885 = vmatpush2.xpose.msra.mxu0 0.0
        %2886 = vmatprep.subr.mxu0 0.0
        %2887 = vmatpush2.xpose.msra.mxu0 0.0
        %2888 = vmatprep.subr.mxu0 0.0
        %2889 = vmatpush2.xpose.msra.mxu0 0.0
        %2890 = vmatprep.subr.mxu0 0.0
        %2891 = vmatpush2.xpose.msra.mxu0 0.0
        %2892 = vmatprep.subr.mxu0 0.0
        %2893 = vmatpush2.xpose.msra.mxu0 0.0
        %2894 = vmatprep.subr.mxu0 0.0
        %2895 = vmatpush2.xpose.msra.mxu0 0.0
        %2896 = vmatprep.subr.mxu0 0.0
        %2897 = vmatpush2.xpose.msra.mxu0 0.0
        %2898 = vmatprep.subr.mxu0 0.0
        %2899 = vmatpush2.xpose.msra.mxu0 0.0
        %2900 = vmatprep.subr.mxu0 0.0
        %2901 = vmatpush2.xpose.msra.mxu0 0.0
        %2902 = vmatprep.subr.mxu0 0.0
        %2903 = vmatpush2.xpose.msra.mxu0 0.0
        %2904 = vmatprep.subr.mxu0 0.0
        %2905 = vmatpush2.xpose.msra.mxu0 0.0
        %2906 = vmatprep.mubr.f32.mxu0 0.0
        %2907 = vmatmul.mubr.f32.gmra.mxu0 %v2763
        %v2908 = vpop.f32.mrf.mxu0
        %v2909 = vadd.f32 %v487, %v2908
        %v2910 = vpop.f32.mrf.mxu0
        %2911 = vmatprep.mubr.f32.mxu0 0.0
        %2912 = vmatmul.mubr.f32.gmra.mxu0 %v2766
        %v2913 = vpop.f32.mrf.mxu0
        %v2914 = vadd.f32 %v488, %v2913
        %v2915 = vpop.f32.mrf.mxu0
        %2916 = vmatprep.mubr.f32.mxu0 0.0
        %2917 = vmatmul.mubr.f32.gmra.mxu0 %v2769
        %v2918 = vpop.f32.mrf.mxu0
        %v2919 = vadd.f32 %v489, %v2918
        %v2920 = vpop.f32.mrf.mxu0
        %2921 = vmatprep.mubr.f32.mxu0 0.0
        %2922 = vmatmul.mubr.f32.gmra.mxu0 %v2772
        %v2923 = vpop.f32.mrf.mxu0
        %v2924 = vadd.f32 %v490, %v2923
        %v2925 = vpop.f32.mrf.mxu0
        %2926 = vmatprep.mubr.f32.mxu0 0.0
        %2927 = vmatmul.mubr.f32.gmra.mxu0 %v2775
        %v2928 = vpop.f32.mrf.mxu0
        %v2929 = vadd.f32 %v491, %v2928
        %v2930 = vpop.f32.mrf.mxu0
        %2931 = vmatprep.mubr.f32.mxu0 0.0
        %2932 = vmatmul.mubr.f32.gmra.mxu0 %v2778
        %v2933 = vpop.f32.mrf.mxu0
        %v2934 = vadd.f32 %v492, %v2933
        %v2935 = vpop.f32.mrf.mxu0
        %2936 = vmatprep.mubr.f32.mxu0 0.0
        %2937 = vmatmul.mubr.f32.gmra.mxu0 %v2781
        %v2938 = vpop.f32.mrf.mxu0
        %v2939 = vadd.f32 %v493, %v2938
        %v2940 = vpop.f32.mrf.mxu0
        %2941 = vmatprep.mubr.f32.mxu0 0.0
        %2942 = vmatmul.mubr.f32.gmra.mxu0 %v2784
        %v2943 = vpop.f32.mrf.mxu0
        %v2944 = vadd.f32 %v494, %v2943
        %v2945 = vpop.f32.mrf.mxu0
        %2946 = vmatprep.mubr.f32.mxu0 0.0
        %2947 = vmatmul.mubr.f32.gmra.mxu0 %v2787
        %v2948 = vpop.f32.mrf.mxu0
        %v2949 = vadd.f32 %v495, %v2948
        %v2950 = vpop.f32.mrf.mxu0
        %2951 = vmatprep.mubr.f32.mxu0 0.0
        %2952 = vmatmul.mubr.f32.gmra.mxu0 %v2790
        %v2953 = vpop.f32.mrf.mxu0
        %v2954 = vadd.f32 %v496, %v2953
        %v2955 = vpop.f32.mrf.mxu0
        %2956 = vmatprep.mubr.f32.mxu0 0.0
        %2957 = vmatmul.mubr.f32.gmra.mxu0 %v2793
        %v2958 = vpop.f32.mrf.mxu0
        %v2959 = vadd.f32 %v497, %v2958
        %v2960 = vpop.f32.mrf.mxu0
        %2961 = vmatprep.mubr.f32.mxu0 0.0
        %2962 = vmatmul.mubr.f32.gmra.mxu0 %v2796
        %v2963 = vpop.f32.mrf.mxu0
        %v2964 = vadd.f32 %v498, %v2963
        %v2965 = vpop.f32.mrf.mxu0
        %2966 = vmatprep.mubr.f32.mxu0 0.0
        %2967 = vmatmul.mubr.f32.gmra.mxu0 %v2799
        %v2968 = vpop.f32.mrf.mxu0
        %v2969 = vadd.f32 %v499, %v2968
        %v2970 = vpop.f32.mrf.mxu0
        %2971 = vmatprep.mubr.f32.mxu0 0.0
        %2972 = vmatmul.mubr.f32.gmra.mxu0 %v2802
        %v2973 = vpop.f32.mrf.mxu0
        %v2974 = vadd.f32 %v500, %v2973
        %v2975 = vpop.f32.mrf.mxu0
        %2976 = vmatprep.mubr.f32.mxu0 0.0
        %2977 = vmatmul.mubr.f32.gmra.mxu0 %v2805
        %v2978 = vpop.f32.mrf.mxu0
        %v2979 = vadd.f32 %v501, %v2978
        %v2980 = vpop.f32.mrf.mxu0
        %2981 = vmatprep.mubr.f32.mxu0 0.0
        %2982 = vmatmul.mubr.f32.gmra.mxu0 %v2808
        %v2983 = vpop.f32.mrf.mxu0
        %v2984 = vadd.f32 %v502, %v2983
        %v2985 = vpop.f32.mrf.mxu0
        %2986 = vdwg.mxu0
        %2987 = vmax.xlane.f32.xlu0 %v2909
        %v2988 = vpop.xlane.xlu0 %2987
        %2989 = vmax.xlane.f32.xlu0 %v2914
        %v2990 = vpop.xlane.xlu0 %2989
        %2991 = vmax.xlane.f32.xlu0 %v2919
        %v2992 = vpop.xlane.xlu0 %2991
        %2993 = vmax.xlane.f32.xlu0 %v2924
        %v2994 = vpop.xlane.xlu0 %2993
        %2995 = vmax.xlane.f32.xlu0 %v2929
        %v2996 = vpop.xlane.xlu0 %2995
        %2997 = vmax.xlane.f32.xlu0 %v2934
        %v2998 = vpop.xlane.xlu0 %2997
        %2999 = vmax.xlane.f32.xlu0 %v2939
        %v3000 = vpop.xlane.xlu0 %2999
        %3001 = vmax.xlane.f32.xlu0 %v2944
        %v3002 = vpop.xlane.xlu0 %3001
        %3003 = vmax.xlane.f32.xlu0 %v2949
        %v3004 = vpop.xlane.xlu0 %3003
        %3005 = vmax.xlane.f32.xlu0 %v2954
        %v3006 = vpop.xlane.xlu0 %3005
        %3007 = vmax.xlane.f32.xlu0 %v2959
        %v3008 = vpop.xlane.xlu0 %3007
        %3009 = vmax.xlane.f32.xlu0 %v2964
        %v3010 = vpop.xlane.xlu0 %3009
        %3011 = vmax.xlane.f32.xlu0 %v2969
        %v3012 = vpop.xlane.xlu0 %3011
        %3013 = vmax.xlane.f32.xlu0 %v2974
        %v3014 = vpop.xlane.xlu0 %3013
        %3015 = vmax.xlane.f32.xlu0 %v2979
        %v3016 = vpop.xlane.xlu0 %3015
        %3017 = vmax.xlane.f32.xlu0 %v2984
        %v3018 = vpop.xlane.xlu0 %3017
        %v3019 = vsub.f32 %v2909, %v2988
        %v3020 = vsub.f32 %v2914, %v2990
        %v3021 = vsub.f32 %v2919, %v2992
        %v3022 = vsub.f32 %v2924, %v2994
        %v3023 = vsub.f32 %v2929, %v2996
        %v3024 = vsub.f32 %v2934, %v2998
        %v3025 = vsub.f32 %v2939, %v3000
        %v3026 = vsub.f32 %v2944, %v3002
        %v3027 = vsub.f32 %v2949, %v3004
        %v3028 = vsub.f32 %v2954, %v3006
        %v3029 = vsub.f32 %v2959, %v3008
        %v3030 = vsub.f32 %v2964, %v3010
        %v3031 = vsub.f32 %v2969, %v3012
        %v3032 = vsub.f32 %v2974, %v3014
        %v3033 = vsub.f32 %v2979, %v3016
        %v3034 = vsub.f32 %v2984, %v3018
        %v3035 = vmul.f32 %v3019, 1.442695
        %v3036 = vpow.pop %v3035
        %v3037 = vmul.f32 %v3020, 1.442695
        %v3038 = vpow.pop %v3037
        %v3039 = vmul.f32 %v3021, 1.442695
        %v3040 = vpow.pop %v3039
        %v3041 = vmul.f32 %v3022, 1.442695
        %v3042 = vpow.pop %v3041
        %v3043 = vmul.f32 %v3023, 1.442695
        %v3044 = vpow.pop %v3043
        %v3045 = vmul.f32 %v3024, 1.442695
        %v3046 = vpow.pop %v3045
        %v3047 = vmul.f32 %v3025, 1.442695
        %v3048 = vpow.pop %v3047
        %v3049 = vmul.f32 %v3026, 1.442695
        %v3050 = vpow.pop %v3049
        %v3051 = vmul.f32 %v3027, 1.442695
        %v3052 = vpow.pop %v3051
        %v3053 = vmul.f32 %v3028, 1.442695
        %v3054 = vpow.pop %v3053
        %v3055 = vmul.f32 %v3029, 1.442695
        %v3056 = vpow.pop %v3055
        %v3057 = vmul.f32 %v3030, 1.442695
        %v3058 = vpow.pop %v3057
        %v3059 = vmul.f32 %v3031, 1.442695
        %v3060 = vpow.pop %v3059
        %v3061 = vmul.f32 %v3032, 1.442695
        %v3062 = vpow.pop %v3061
        %v3063 = vmul.f32 %v3033, 1.442695
        %v3064 = vpow.pop %v3063
        %v3065 = vmul.f32 %v3034, 1.442695
        %v3066 = vpow.pop %v3065
        %3067 = vadd.xlane.f32.xlu0 %v3036
        %v3068 = vpop.xlane.xlu0 %3067
        %3069 = vadd.xlane.f32.xlu0 %v3038
        %v3070 = vpop.xlane.xlu0 %3069
        %3071 = vadd.xlane.f32.xlu0 %v3040
        %v3072 = vpop.xlane.xlu0 %3071
        %3073 = vadd.xlane.f32.xlu0 %v3042
        %v3074 = vpop.xlane.xlu0 %3073
        %3075 = vadd.xlane.f32.xlu0 %v3044
        %v3076 = vpop.xlane.xlu0 %3075
        %3077 = vadd.xlane.f32.xlu0 %v3046
        %v3078 = vpop.xlane.xlu0 %3077
        %3079 = vadd.xlane.f32.xlu0 %v3048
        %v3080 = vpop.xlane.xlu0 %3079
        %3081 = vadd.xlane.f32.xlu0 %v3050
        %v3082 = vpop.xlane.xlu0 %3081
        %3083 = vadd.xlane.f32.xlu0 %v3052
        %v3084 = vpop.xlane.xlu0 %3083
        %3085 = vadd.xlane.f32.xlu0 %v3054
        %v3086 = vpop.xlane.xlu0 %3085
        %3087 = vadd.xlane.f32.xlu0 %v3056
        %v3088 = vpop.xlane.xlu0 %3087
        %3089 = vadd.xlane.f32.xlu0 %v3058
        %v3090 = vpop.xlane.xlu0 %3089
        %3091 = vadd.xlane.f32.xlu0 %v3060
        %v3092 = vpop.xlane.xlu0 %3091
        %3093 = vadd.xlane.f32.xlu0 %v3062
        %v3094 = vpop.xlane.xlu0 %3093
        %3095 = vadd.xlane.f32.xlu0 %v3064
        %v3096 = vpop.xlane.xlu0 %3095
        %3097 = vadd.xlane.f32.xlu0 %v3066
        %v3098 = vpop.xlane.xlu0 %3097
        %3099 = vrot.lane.b32.xlu0 %v756, 120
        %v3100 = vpop.permute.xlu0 %3099
        %3101 = vrot.lane.b32.xlu0 %v761, 120
        %v3102 = vpop.permute.xlu0 %3101
        %3103 = vrot.lane.b32.xlu0 %v766, 120
        %v3104 = vpop.permute.xlu0 %3103
        %3105 = vrot.lane.b32.xlu0 %v771, 120
        %v3106 = vpop.permute.xlu0 %3105
        %3107 = vrot.lane.b32.xlu0 %v776, 120
        %v3108 = vpop.permute.xlu0 %3107
        %3109 = vrot.lane.b32.xlu0 %v781, 120
        %v3110 = vpop.permute.xlu0 %3109
        %3111 = vrot.lane.b32.xlu0 %v786, 120
        %v3112 = vpop.permute.xlu0 %3111
        %3113 = vrot.lane.b32.xlu0 %v791, 120
        %v3114 = vpop.permute.xlu0 %3113
        %3115 = vrot.lane.b32.xlu0 %v796, 120
        %v3116 = vpop.permute.xlu0 %3115
        %3117 = vrot.lane.b32.xlu0 %v801, 120
        %v3118 = vpop.permute.xlu0 %3117
        %3119 = vrot.lane.b32.xlu0 %v806, 120
        %v3120 = vpop.permute.xlu0 %3119
        %3121 = vrot.lane.b32.xlu0 %v811, 120
        %v3122 = vpop.permute.xlu0 %3121
        %3123 = vrot.lane.b32.xlu0 %v816, 120
        %v3124 = vpop.permute.xlu0 %3123
        %3125 = vrot.lane.b32.xlu0 %v821, 120
        %v3126 = vpop.permute.xlu0 %3125
        %3127 = vrot.lane.b32.xlu0 %v826, 120
        %v3128 = vpop.permute.xlu0 %3127
        %3129 = vrot.lane.b32.xlu0 %v831, 120
        %v3130 = vpop.permute.xlu0 %3129
        %3147 = vmatprep.subr.mxu0 0.0
        %3148 = vmatpush1.msra.mxu0 %v3130
        %3149 = vmatprep.subr.mxu0 0.0
        %3150 = vmatpush1.msra.mxu0 %v3128
        %3151 = vmatprep.subr.mxu0 0.0
        %3152 = vmatpush1.msra.mxu0 %v3126
        %3153 = vmatprep.subr.mxu0 0.0
        %3154 = vmatpush1.msra.mxu0 %v3124
        %3155 = vmatprep.subr.mxu0 0.0
        %3156 = vmatpush1.msra.mxu0 %v3122
        %3157 = vmatprep.subr.mxu0 0.0
        %3158 = vmatpush1.msra.mxu0 %v3120
        %3159 = vmatprep.subr.mxu0 0.0
        %3160 = vmatpush1.msra.mxu0 %v3118
        %3161 = vmatprep.subr.mxu0 0.0
        %3162 = vmatpush1.msra.mxu0 %v3116
        %3163 = vmatprep.subr.mxu0 0.0
        %3164 = vmatpush1.msra.mxu0 %v3114
        %3165 = vmatprep.subr.mxu0 0.0
        %3166 = vmatpush1.msra.mxu0 %v3112
        %3167 = vmatprep.subr.mxu0 0.0
        %3168 = vmatpush1.msra.mxu0 %v3110
        %3169 = vmatprep.subr.mxu0 0.0
        %3170 = vmatpush1.msra.mxu0 %v3108
        %3171 = vmatprep.subr.mxu0 0.0
        %3172 = vmatpush1.msra.mxu0 %v3106
        %3173 = vmatprep.subr.mxu0 0.0
        %3174 = vmatpush1.msra.mxu0 %v3104
        %3175 = vmatprep.subr.mxu0 0.0
        %3176 = vmatpush1.msra.mxu0 %v3102
        %3177 = vmatprep.subr.mxu0 0.0
        %3178 = vmatpush1.msra.mxu0 %v3100
        %3179 = vmatprep.subr.mxu0 0.0
        %3180 = vmatpush2.msra.mxu0 0.0
        %3181 = vmatprep.subr.mxu0 0.0
        %3182 = vmatpush2.msra.mxu0 0.0
        %3183 = vmatprep.subr.mxu0 0.0
        %3184 = vmatpush2.msra.mxu0 0.0
        %3185 = vmatprep.subr.mxu0 0.0
        %3186 = vmatpush2.msra.mxu0 0.0
        %3187 = vmatprep.subr.mxu0 0.0
        %3188 = vmatpush2.msra.mxu0 0.0
        %3189 = vmatprep.subr.mxu0 0.0
        %3190 = vmatpush2.msra.mxu0 0.0
        %3191 = vmatprep.subr.mxu0 0.0
        %3192 = vmatpush2.msra.mxu0 0.0
        %3193 = vmatprep.subr.mxu0 0.0
        %3194 = vmatpush2.msra.mxu0 0.0
        %3195 = vmatprep.subr.mxu0 0.0
        %3196 = vmatpush2.msra.mxu0 0.0
        %3197 = vmatprep.subr.mxu0 0.0
        %3198 = vmatpush2.msra.mxu0 0.0
        %3199 = vmatprep.subr.mxu0 0.0
        %3200 = vmatpush2.msra.mxu0 0.0
        %3201 = vmatprep.subr.mxu0 0.0
        %3202 = vmatpush2.msra.mxu0 0.0
        %3203 = vmatprep.subr.mxu0 0.0
        %3204 = vmatpush2.msra.mxu0 0.0
        %3205 = vmatprep.subr.mxu0 0.0
        %3206 = vmatpush2.msra.mxu0 0.0
        %3207 = vmatprep.subr.mxu0 0.0
        %3208 = vmatpush2.msra.mxu0 0.0
        %3209 = vmatprep.subr.mxu0 0.0
        %3210 = vmatpush2.msra.mxu0 0.0
        %3211 = vmatprep.mubr.f32.mxu0 0.0
        %3212 = vmatmul.mubr.f32.gmra.mxu0 %v3036
        %v3213 = vpop.f32.mrf.mxu0
        %v3214 = vadd.f32 0.0, %v3213
        %v3215 = vpop.f32.mrf.mxu0
        %3216 = vmatprep.mubr.f32.mxu0 0.0
        %3217 = vmatmul.mubr.f32.gmra.mxu0 %v3038
        %v3218 = vpop.f32.mrf.mxu0
        %v3219 = vadd.f32 0.0, %v3218
        %v3220 = vpop.f32.mrf.mxu0
        %3221 = vmatprep.mubr.f32.mxu0 0.0
        %3222 = vmatmul.mubr.f32.gmra.mxu0 %v3040
        %v3223 = vpop.f32.mrf.mxu0
        %v3224 = vadd.f32 0.0, %v3223
        %v3225 = vpop.f32.mrf.mxu0
        %3226 = vmatprep.mubr.f32.mxu0 0.0
        %3227 = vmatmul.mubr.f32.gmra.mxu0 %v3042
        %v3228 = vpop.f32.mrf.mxu0
        %v3229 = vadd.f32 0.0, %v3228
        %v3230 = vpop.f32.mrf.mxu0
        %3231 = vmatprep.mubr.f32.mxu0 0.0
        %3232 = vmatmul.mubr.f32.gmra.mxu0 %v3044
        %v3233 = vpop.f32.mrf.mxu0
        %v3234 = vadd.f32 0.0, %v3233
        %v3235 = vpop.f32.mrf.mxu0
        %3236 = vmatprep.mubr.f32.mxu0 0.0
        %3237 = vmatmul.mubr.f32.gmra.mxu0 %v3046
        %v3238 = vpop.f32.mrf.mxu0
        %v3239 = vadd.f32 0.0, %v3238
        %v3240 = vpop.f32.mrf.mxu0
        %3241 = vmatprep.mubr.f32.mxu0 0.0
        %3242 = vmatmul.mubr.f32.gmra.mxu0 %v3048
        %v3243 = vpop.f32.mrf.mxu0
        %v3244 = vadd.f32 0.0, %v3243
        %v3245 = vpop.f32.mrf.mxu0
        %3246 = vmatprep.mubr.f32.mxu0 0.0
        %3247 = vmatmul.mubr.f32.gmra.mxu0 %v3050
        %v3248 = vpop.f32.mrf.mxu0
        %v3249 = vadd.f32 0.0, %v3248
        %v3250 = vpop.f32.mrf.mxu0
        %3251 = vmatprep.mubr.f32.mxu0 0.0
        %3252 = vmatmul.mubr.f32.gmra.mxu0 %v3052
        %v3253 = vpop.f32.mrf.mxu0
        %v3254 = vadd.f32 0.0, %v3253
        %v3255 = vpop.f32.mrf.mxu0
        %3256 = vmatprep.mubr.f32.mxu0 0.0
        %3257 = vmatmul.mubr.f32.gmra.mxu0 %v3054
        %v3258 = vpop.f32.mrf.mxu0
        %v3259 = vadd.f32 0.0, %v3258
        %v3260 = vpop.f32.mrf.mxu0
        %3261 = vmatprep.mubr.f32.mxu0 0.0
        %3262 = vmatmul.mubr.f32.gmra.mxu0 %v3056
        %v3263 = vpop.f32.mrf.mxu0
        %v3264 = vadd.f32 0.0, %v3263
        %v3265 = vpop.f32.mrf.mxu0
        %3266 = vmatprep.mubr.f32.mxu0 0.0
        %3267 = vmatmul.mubr.f32.gmra.mxu0 %v3058
        %v3268 = vpop.f32.mrf.mxu0
        %v3269 = vadd.f32 0.0, %v3268
        %v3270 = vpop.f32.mrf.mxu0
        %3271 = vmatprep.mubr.f32.mxu0 0.0
        %3272 = vmatmul.mubr.f32.gmra.mxu0 %v3060
        %v3273 = vpop.f32.mrf.mxu0
        %v3274 = vadd.f32 0.0, %v3273
        %v3275 = vpop.f32.mrf.mxu0
        %3276 = vmatprep.mubr.f32.mxu0 0.0
        %3277 = vmatmul.mubr.f32.gmra.mxu0 %v3062
        %v3278 = vpop.f32.mrf.mxu0
        %v3279 = vadd.f32 0.0, %v3278
        %v3280 = vpop.f32.mrf.mxu0
        %3281 = vmatprep.mubr.f32.mxu0 0.0
        %3282 = vmatmul.mubr.f32.gmra.mxu0 %v3064
        %v3283 = vpop.f32.mrf.mxu0
        %v3284 = vadd.f32 0.0, %v3283
        %v3285 = vpop.f32.mrf.mxu0
        %3286 = vmatprep.mubr.f32.mxu0 0.0
        %3287 = vmatmul.mubr.f32.gmra.mxu0 %v3066
        %v3288 = vpop.f32.mrf.mxu0
        %v3289 = vadd.f32 0.0, %v3288
        %v3290 = vpop.f32.mrf.mxu0
        %3291 = vdwg.mxu0
        %v3292 = vrcp.pop %v3068
        %v3293 = vrcp.pop %v3070
        %v3294 = vrcp.pop %v3072
        %v3295 = vrcp.pop %v3074
        %v3296 = vrcp.pop %v3076
        %v3297 = vrcp.pop %v3078
        %v3298 = vrcp.pop %v3080
        %v3299 = vrcp.pop %v3082
        %v3300 = vrcp.pop %v3084
        %v3301 = vrcp.pop %v3086
        %v3302 = vrcp.pop %v3088
        %v3303 = vrcp.pop %v3090
        %v3304 = vrcp.pop %v3092
        %v3305 = vrcp.pop %v3094
        %v3306 = vrcp.pop %v3096
        %v3307 = vrcp.pop %v3098
        %v3308 = vmul.f32 %v3214, %v3292
        %v3309 = vmul.f32 %v3219, %v3293
        %v3310 = vmul.f32 %v3224, %v3294
        %v3311 = vmul.f32 %v3229, %v3295
        %v3312 = vmul.f32 %v3234, %v3296
        %v3313 = vmul.f32 %v3239, %v3297
        %v3314 = vmul.f32 %v3244, %v3298
        %v3315 = vmul.f32 %v3249, %v3299
        %v3316 = vmul.f32 %v3254, %v3300
        %v3317 = vmul.f32 %v3259, %v3301
        %v3318 = vmul.f32 %v3264, %v3302
        %v3319 = vmul.f32 %v3269, %v3303
        %v3320 = vmul.f32 %v3274, %v3304
        %v3321 = vmul.f32 %v3279, %v3305
        %v3322 = vmul.f32 %v3284, %v3306
        %v3323 = vmul.f32 %v3289, %v3307
        %3324 = vrot.lane.b32.xlu0 %v1170, 126
        %v3325 = vpop.permute.xlu0 %3324
        %3326 = vrot.lane.b32.xlu0 %v1171, 126
        %v3327 = vpop.permute.xlu0 %3326
        %3328 = vrot.lane.b32.xlu0 %v1172, 126
        %v3329 = vpop.permute.xlu0 %3328
        %3330 = vrot.lane.b32.xlu0 %v1173, 126
        %v3331 = vpop.permute.xlu0 %3330
        %3332 = vrot.lane.b32.xlu0 %v1174, 126
        %v3333 = vpop.permute.xlu0 %3332
        %3334 = vrot.lane.b32.xlu0 %v1175, 126
        %v3335 = vpop.permute.xlu0 %3334
        %3336 = vrot.lane.b32.xlu0 %v1176, 126
        %v3337 = vpop.permute.xlu0 %3336
        %3338 = vrot.lane.b32.xlu0 %v1177, 126
        %v3339 = vpop.permute.xlu0 %3338
        %3340 = vrot.lane.b32.xlu0 %v1178, 126
        %v3341 = vpop.permute.xlu0 %3340
        %3342 = vrot.lane.b32.xlu0 %v1179, 126
        %v3343 = vpop.permute.xlu0 %3342
        %3344 = vrot.lane.b32.xlu0 %v1180, 126
        %v3345 = vpop.permute.xlu0 %3344
        %3346 = vrot.lane.b32.xlu0 %v1181, 126
        %v3347 = vpop.permute.xlu0 %3346
        %3348 = vrot.lane.b32.xlu0 %v1182, 126
        %v3349 = vpop.permute.xlu0 %3348
        %3350 = vrot.lane.b32.xlu0 %v1183, 126
        %v3351 = vpop.permute.xlu0 %3350
        %3352 = vrot.lane.b32.xlu0 %v1184, 126
        %v3353 = vpop.permute.xlu0 %3352
        %3354 = vrot.lane.b32.xlu0 %v1185, 126
        %v3355 = vpop.permute.xlu0 %3354
        %3356 = vrot.lane.b32.xlu0 %v756, 122
        %v3357 = vpop.permute.xlu0 %3356
        %3358 = vrot.lane.b32.xlu0 %v761, 122
        %v3359 = vpop.permute.xlu0 %3358
        %3360 = vrot.lane.b32.xlu0 %v766, 122
        %v3361 = vpop.permute.xlu0 %3360
        %3362 = vrot.lane.b32.xlu0 %v771, 122
        %v3363 = vpop.permute.xlu0 %3362
        %3364 = vrot.lane.b32.xlu0 %v776, 122
        %v3365 = vpop.permute.xlu0 %3364
        %3366 = vrot.lane.b32.xlu0 %v781, 122
        %v3367 = vpop.permute.xlu0 %3366
        %3368 = vrot.lane.b32.xlu0 %v786, 122
        %v3369 = vpop.permute.xlu0 %3368
        %3370 = vrot.lane.b32.xlu0 %v791, 122
        %v3371 = vpop.permute.xlu0 %3370
        %3372 = vrot.lane.b32.xlu0 %v796, 122
        %v3373 = vpop.permute.xlu0 %3372
        %3374 = vrot.lane.b32.xlu0 %v801, 122
        %v3375 = vpop.permute.xlu0 %3374
        %3376 = vrot.lane.b32.xlu0 %v806, 122
        %v3377 = vpop.permute.xlu0 %3376
        %3378 = vrot.lane.b32.xlu0 %v811, 122
        %v3379 = vpop.permute.xlu0 %3378
        %3380 = vrot.lane.b32.xlu0 %v816, 122
        %v3381 = vpop.permute.xlu0 %3380
        %3382 = vrot.lane.b32.xlu0 %v821, 122
        %v3383 = vpop.permute.xlu0 %3382
        %3384 = vrot.lane.b32.xlu0 %v826, 122
        %v3385 = vpop.permute.xlu0 %3384
        %3386 = vrot.lane.b32.xlu0 %v831, 122
        %v3387 = vpop.permute.xlu0 %3386
        %v3388 = vsel %vm1298, %v3325, 0
        %v3390 = vsel %vm1298, %v3327, 0
        %v3392 = vsel %vm1298, %v3329, 0
        %v3394 = vsel %vm1298, %v3331, 0
        %v3396 = vsel %vm1298, %v3333, 0
        %v3398 = vsel %vm1298, %v3335, 0
        %v3400 = vsel %vm1298, %v3337, 0
        %v3402 = vsel %vm1298, %v3339, 0
        %v3404 = vsel %vm1298, %v3341, 0
        %v3406 = vsel %vm1298, %v3343, 0
        %v3408 = vsel %vm1298, %v3345, 0
        %v3410 = vsel %vm1298, %v3347, 0
        %v3412 = vsel %vm1298, %v3349, 0
        %v3414 = vsel %vm1298, %v3351, 0
        %v3416 = vsel %vm1298, %v3353, 0
        %v3418 = vsel %vm1298, %v3355, 0
        %v3420 = vsel %vm1298, %v3357, 0
        %v3422 = vsel %vm1298, %v3359, 0
        %v3424 = vsel %vm1298, %v3361, 0
        %v3426 = vsel %vm1298, %v3363, 0
        %v3428 = vsel %vm1298, %v3365, 0
        %v3430 = vsel %vm1298, %v3367, 0
        %v3432 = vsel %vm1298, %v3369, 0
        %v3434 = vsel %vm1298, %v3371, 0
        %v3436 = vsel %vm1298, %v3373, 0
        %v3438 = vsel %vm1298, %v3375, 0
        %v3440 = vsel %vm1298, %v3377, 0
        %v3442 = vsel %vm1298, %v3379, 0
        %v3444 = vsel %vm1298, %v3381, 0
        %v3446 = vsel %vm1298, %v3383, 0
        %v3448 = vsel %vm1298, %v3385, 0
        %v3450 = vsel %vm1298, %v3387, 0
        %3452 = vmatprep.subr.mxu0 0.0
        %3453 = vmatpush1.xpose.msra.mxu0 %v3450
        %3454 = vmatprep.subr.mxu0 0.0
        %3455 = vmatpush1.xpose.msra.mxu0 %v3448
        %3456 = vmatprep.subr.mxu0 0.0
        %3457 = vmatpush1.xpose.msra.mxu0 %v3446
        %3458 = vmatprep.subr.mxu0 0.0
        %3459 = vmatpush1.xpose.msra.mxu0 %v3444
        %3460 = vmatprep.subr.mxu0 0.0
        %3461 = vmatpush1.xpose.msra.mxu0 %v3442
        %3462 = vmatprep.subr.mxu0 0.0
        %3463 = vmatpush1.xpose.msra.mxu0 %v3440
        %3464 = vmatprep.subr.mxu0 0.0
        %3465 = vmatpush1.xpose.msra.mxu0 %v3438
        %3466 = vmatprep.subr.mxu0 0.0
        %3467 = vmatpush1.xpose.msra.mxu0 %v3436
        %3468 = vmatprep.subr.mxu0 0.0
        %3469 = vmatpush1.xpose.msra.mxu0 %v3434
        %3470 = vmatprep.subr.mxu0 0.0
        %3471 = vmatpush1.xpose.msra.mxu0 %v3432
        %3472 = vmatprep.subr.mxu0 0.0
        %3473 = vmatpush1.xpose.msra.mxu0 %v3430
        %3474 = vmatprep.subr.mxu0 0.0
        %3475 = vmatpush1.xpose.msra.mxu0 %v3428
        %3476 = vmatprep.subr.mxu0 0.0
        %3477 = vmatpush1.xpose.msra.mxu0 %v3426
        %3478 = vmatprep.subr.mxu0 0.0
        %3479 = vmatpush1.xpose.msra.mxu0 %v3424
        %3480 = vmatprep.subr.mxu0 0.0
        %3481 = vmatpush1.xpose.msra.mxu0 %v3422
        %3482 = vmatprep.subr.mxu0 0.0
        %3483 = vmatpush1.xpose.msra.mxu0 %v3420
        %3484 = vmatprep.subr.mxu0 0.0
        %3485 = vmatpush2.xpose.msra.mxu0 0.0
        %3486 = vmatprep.subr.mxu0 0.0
        %3487 = vmatpush2.xpose.msra.mxu0 0.0
        %3488 = vmatprep.subr.mxu0 0.0
        %3489 = vmatpush2.xpose.msra.mxu0 0.0
        %3490 = vmatprep.subr.mxu0 0.0
        %3491 = vmatpush2.xpose.msra.mxu0 0.0
        %3492 = vmatprep.subr.mxu0 0.0
        %3493 = vmatpush2.xpose.msra.mxu0 0.0
        %3494 = vmatprep.subr.mxu0 0.0
        %3495 = vmatpush2.xpose.msra.mxu0 0.0
        %3496 = vmatprep.subr.mxu0 0.0
        %3497 = vmatpush2.xpose.msra.mxu0 0.0
        %3498 = vmatprep.subr.mxu0 0.0
        %3499 = vmatpush2.xpose.msra.mxu0 0.0
        %3500 = vmatprep.subr.mxu0 0.0
        %3501 = vmatpush2.xpose.msra.mxu0 0.0
        %3502 = vmatprep.subr.mxu0 0.0
        %3503 = vmatpush2.xpose.msra.mxu0 0.0
        %3504 = vmatprep.subr.mxu0 0.0
        %3505 = vmatpush2.xpose.msra.mxu0 0.0
        %3506 = vmatprep.subr.mxu0 0.0
        %3507 = vmatpush2.xpose.msra.mxu0 0.0
        %3508 = vmatprep.subr.mxu0 0.0
        %3509 = vmatpush2.xpose.msra.mxu0 0.0
        %3510 = vmatprep.subr.mxu0 0.0
        %3511 = vmatpush2.xpose.msra.mxu0 0.0
        %3512 = vmatprep.subr.mxu0 0.0
        %3513 = vmatpush2.xpose.msra.mxu0 0.0
        %3514 = vmatprep.subr.mxu0 0.0
        %3515 = vmatpush2.xpose.msra.mxu0 0.0
        %3516 = vmatprep.mubr.f32.mxu0 0.0
        %3517 = vmatmul.mubr.f32.gmra.mxu0 %v3388
        %v3518 = vpop.f32.mrf.mxu0
        %v3519 = vadd.f32 %v487, %v3518
        %v3520 = vpop.f32.mrf.mxu0
        %3521 = vmatprep.mubr.f32.mxu0 0.0
        %3522 = vmatmul.mubr.f32.gmra.mxu0 %v3390
        %v3523 = vpop.f32.mrf.mxu0
        %v3524 = vadd.f32 %v488, %v3523
        %v3525 = vpop.f32.mrf.mxu0
        %3526 = vmatprep.mubr.f32.mxu0 0.0
        %3527 = vmatmul.mubr.f32.gmra.mxu0 %v3392
        %v3528 = vpop.f32.mrf.mxu0
        %v3529 = vadd.f32 %v489, %v3528
        %v3530 = vpop.f32.mrf.mxu0
        %3531 = vmatprep.mubr.f32.mxu0 0.0
        %3532 = vmatmul.mubr.f32.gmra.mxu0 %v3394
        %v3533 = vpop.f32.mrf.mxu0
        %v3534 = vadd.f32 %v490, %v3533
        %v3535 = vpop.f32.mrf.mxu0
        %3536 = vmatprep.mubr.f32.mxu0 0.0
        %3537 = vmatmul.mubr.f32.gmra.mxu0 %v3396
        %v3538 = vpop.f32.mrf.mxu0
        %v3539 = vadd.f32 %v491, %v3538
        %v3540 = vpop.f32.mrf.mxu0
        %3541 = vmatprep.mubr.f32.mxu0 0.0
        %3542 = vmatmul.mubr.f32.gmra.mxu0 %v3398
        %v3543 = vpop.f32.mrf.mxu0
        %v3544 = vadd.f32 %v492, %v3543
        %v3545 = vpop.f32.mrf.mxu0
        %3546 = vmatprep.mubr.f32.mxu0 0.0
        %3547 = vmatmul.mubr.f32.gmra.mxu0 %v3400
        %v3548 = vpop.f32.mrf.mxu0
        %v3549 = vadd.f32 %v493, %v3548
        %v3550 = vpop.f32.mrf.mxu0
        %3551 = vmatprep.mubr.f32.mxu0 0.0
        %3552 = vmatmul.mubr.f32.gmra.mxu0 %v3402
        %v3553 = vpop.f32.mrf.mxu0
        %v3554 = vadd.f32 %v494, %v3553
        %v3555 = vpop.f32.mrf.mxu0
        %3556 = vmatprep.mubr.f32.mxu0 0.0
        %3557 = vmatmul.mubr.f32.gmra.mxu0 %v3404
        %v3558 = vpop.f32.mrf.mxu0
        %v3559 = vadd.f32 %v495, %v3558
        %v3560 = vpop.f32.mrf.mxu0
        %3561 = vmatprep.mubr.f32.mxu0 0.0
        %3562 = vmatmul.mubr.f32.gmra.mxu0 %v3406
        %v3563 = vpop.f32.mrf.mxu0
        %v3564 = vadd.f32 %v496, %v3563
        %v3565 = vpop.f32.mrf.mxu0
        %3566 = vmatprep.mubr.f32.mxu0 0.0
        %3567 = vmatmul.mubr.f32.gmra.mxu0 %v3408
        %v3568 = vpop.f32.mrf.mxu0
        %v3569 = vadd.f32 %v497, %v3568
        %v3570 = vpop.f32.mrf.mxu0
        %3571 = vmatprep.mubr.f32.mxu0 0.0
        %3572 = vmatmul.mubr.f32.gmra.mxu0 %v3410
        %v3573 = vpop.f32.mrf.mxu0
        %v3574 = vadd.f32 %v498, %v3573
        %v3575 = vpop.f32.mrf.mxu0
        %3576 = vmatprep.mubr.f32.mxu0 0.0
        %3577 = vmatmul.mubr.f32.gmra.mxu0 %v3412
        %v3578 = vpop.f32.mrf.mxu0
        %v3579 = vadd.f32 %v499, %v3578
        %v3580 = vpop.f32.mrf.mxu0
        %3581 = vmatprep.mubr.f32.mxu0 0.0
        %3582 = vmatmul.mubr.f32.gmra.mxu0 %v3414
        %v3583 = vpop.f32.mrf.mxu0
        %v3584 = vadd.f32 %v500, %v3583
        %v3585 = vpop.f32.mrf.mxu0
        %3586 = vmatprep.mubr.f32.mxu0 0.0
        %3587 = vmatmul.mubr.f32.gmra.mxu0 %v3416
        %v3588 = vpop.f32.mrf.mxu0
        %v3589 = vadd.f32 %v501, %v3588
        %v3590 = vpop.f32.mrf.mxu0
        %3591 = vmatprep.mubr.f32.mxu0 0.0
        %3592 = vmatmul.mubr.f32.gmra.mxu0 %v3418
        %v3593 = vpop.f32.mrf.mxu0
        %v3594 = vadd.f32 %v502, %v3593
        %v3595 = vpop.f32.mrf.mxu0
        %3596 = vdwg.mxu0
        %3597 = vmax.xlane.f32.xlu0 %v3519
        %v3598 = vpop.xlane.xlu0 %3597
        %3599 = vmax.xlane.f32.xlu0 %v3524
        %v3600 = vpop.xlane.xlu0 %3599
        %3601 = vmax.xlane.f32.xlu0 %v3529
        %v3602 = vpop.xlane.xlu0 %3601
        %3603 = vmax.xlane.f32.xlu0 %v3534
        %v3604 = vpop.xlane.xlu0 %3603
        %3605 = vmax.xlane.f32.xlu0 %v3539
        %v3606 = vpop.xlane.xlu0 %3605
        %3607 = vmax.xlane.f32.xlu0 %v3544
        %v3608 = vpop.xlane.xlu0 %3607
        %3609 = vmax.xlane.f32.xlu0 %v3549
        %v3610 = vpop.xlane.xlu0 %3609
        %3611 = vmax.xlane.f32.xlu0 %v3554
        %v3612 = vpop.xlane.xlu0 %3611
        %3613 = vmax.xlane.f32.xlu0 %v3559
        %v3614 = vpop.xlane.xlu0 %3613
        %3615 = vmax.xlane.f32.xlu0 %v3564
        %v3616 = vpop.xlane.xlu0 %3615
        %3617 = vmax.xlane.f32.xlu0 %v3569
        %v3618 = vpop.xlane.xlu0 %3617
        %3619 = vmax.xlane.f32.xlu0 %v3574
        %v3620 = vpop.xlane.xlu0 %3619
        %3621 = vmax.xlane.f32.xlu0 %v3579
        %v3622 = vpop.xlane.xlu0 %3621
        %3623 = vmax.xlane.f32.xlu0 %v3584
        %v3624 = vpop.xlane.xlu0 %3623
        %3625 = vmax.xlane.f32.xlu0 %v3589
        %v3626 = vpop.xlane.xlu0 %3625
        %3627 = vmax.xlane.f32.xlu0 %v3594
        %v3628 = vpop.xlane.xlu0 %3627
        %v3629 = vsub.f32 %v3519, %v3598
        %v3630 = vsub.f32 %v3524, %v3600
        %v3631 = vsub.f32 %v3529, %v3602
        %v3632 = vsub.f32 %v3534, %v3604
        %v3633 = vsub.f32 %v3539, %v3606
        %v3634 = vsub.f32 %v3544, %v3608
        %v3635 = vsub.f32 %v3549, %v3610
        %v3636 = vsub.f32 %v3554, %v3612
        %v3637 = vsub.f32 %v3559, %v3614
        %v3638 = vsub.f32 %v3564, %v3616
        %v3639 = vsub.f32 %v3569, %v3618
        %v3640 = vsub.f32 %v3574, %v3620
        %v3641 = vsub.f32 %v3579, %v3622
        %v3642 = vsub.f32 %v3584, %v3624
        %v3643 = vsub.f32 %v3589, %v3626
        %v3644 = vsub.f32 %v3594, %v3628
        %v3645 = vmul.f32 %v3629, 1.442695
        %v3646 = vpow.pop %v3645
        %v3647 = vmul.f32 %v3630, 1.442695
        %v3648 = vpow.pop %v3647
        %v3649 = vmul.f32 %v3631, 1.442695
        %v3650 = vpow.pop %v3649
        %v3651 = vmul.f32 %v3632, 1.442695
        %v3652 = vpow.pop %v3651
        %v3653 = vmul.f32 %v3633, 1.442695
        %v3654 = vpow.pop %v3653
        %v3655 = vmul.f32 %v3634, 1.442695
        %v3656 = vpow.pop %v3655
        %v3657 = vmul.f32 %v3635, 1.442695
        %v3658 = vpow.pop %v3657
        %v3659 = vmul.f32 %v3636, 1.442695
        %v3660 = vpow.pop %v3659
        %v3661 = vmul.f32 %v3637, 1.442695
        %v3662 = vpow.pop %v3661
        %v3663 = vmul.f32 %v3638, 1.442695
        %v3664 = vpow.pop %v3663
        %v3665 = vmul.f32 %v3639, 1.442695
        %v3666 = vpow.pop %v3665
        %v3667 = vmul.f32 %v3640, 1.442695
        %v3668 = vpow.pop %v3667
        %v3669 = vmul.f32 %v3641, 1.442695
        %v3670 = vpow.pop %v3669
        %v3671 = vmul.f32 %v3642, 1.442695
        %v3672 = vpow.pop %v3671
        %v3673 = vmul.f32 %v3643, 1.442695
        %v3674 = vpow.pop %v3673
        %v3675 = vmul.f32 %v3644, 1.442695
        %v3676 = vpow.pop %v3675
        %3677 = vadd.xlane.f32.xlu0 %v3646
        %v3678 = vpop.xlane.xlu0 %3677
        %3679 = vadd.xlane.f32.xlu0 %v3648
        %v3680 = vpop.xlane.xlu0 %3679
        %3681 = vadd.xlane.f32.xlu0 %v3650
        %v3682 = vpop.xlane.xlu0 %3681
        %3683 = vadd.xlane.f32.xlu0 %v3652
        %v3684 = vpop.xlane.xlu0 %3683
        %3685 = vadd.xlane.f32.xlu0 %v3654
        %v3686 = vpop.xlane.xlu0 %3685
        %3687 = vadd.xlane.f32.xlu0 %v3656
        %v3688 = vpop.xlane.xlu0 %3687
        %3689 = vadd.xlane.f32.xlu0 %v3658
        %v3690 = vpop.xlane.xlu0 %3689
        %3691 = vadd.xlane.f32.xlu0 %v3660
        %v3692 = vpop.xlane.xlu0 %3691
        %3693 = vadd.xlane.f32.xlu0 %v3662
        %v3694 = vpop.xlane.xlu0 %3693
        %3695 = vadd.xlane.f32.xlu0 %v3664
        %v3696 = vpop.xlane.xlu0 %3695
        %3697 = vadd.xlane.f32.xlu0 %v3666
        %v3698 = vpop.xlane.xlu0 %3697
        %3699 = vadd.xlane.f32.xlu0 %v3668
        %v3700 = vpop.xlane.xlu0 %3699
        %3701 = vadd.xlane.f32.xlu0 %v3670
        %v3702 = vpop.xlane.xlu0 %3701
        %3703 = vadd.xlane.f32.xlu0 %v3672
        %v3704 = vpop.xlane.xlu0 %3703
        %3705 = vadd.xlane.f32.xlu0 %v3674
        %v3706 = vpop.xlane.xlu0 %3705
        %3707 = vadd.xlane.f32.xlu0 %v3676
        %v3708 = vpop.xlane.xlu0 %3707
        %3709 = vrot.lane.b32.xlu0 %v756, 118
        %v3710 = vpop.permute.xlu0 %3709
        %3711 = vrot.lane.b32.xlu0 %v761, 118
        %v3712 = vpop.permute.xlu0 %3711
        %3713 = vrot.lane.b32.xlu0 %v766, 118
        %v3714 = vpop.permute.xlu0 %3713
        %3715 = vrot.lane.b32.xlu0 %v771, 118
        %v3716 = vpop.permute.xlu0 %3715
        %3717 = vrot.lane.b32.xlu0 %v776, 118
        %v3718 = vpop.permute.xlu0 %3717
        %3719 = vrot.lane.b32.xlu0 %v781, 118
        %v3720 = vpop.permute.xlu0 %3719
        %3721 = vrot.lane.b32.xlu0 %v786, 118
        %v3722 = vpop.permute.xlu0 %3721
        %3723 = vrot.lane.b32.xlu0 %v791, 118
        %v3724 = vpop.permute.xlu0 %3723
        %3725 = vrot.lane.b32.xlu0 %v796, 118
        %v3726 = vpop.permute.xlu0 %3725
        %3727 = vrot.lane.b32.xlu0 %v801, 118
        %v3728 = vpop.permute.xlu0 %3727
        %3729 = vrot.lane.b32.xlu0 %v806, 118
        %v3730 = vpop.permute.xlu0 %3729
        %3731 = vrot.lane.b32.xlu0 %v811, 118
        %v3732 = vpop.permute.xlu0 %3731
        %3733 = vrot.lane.b32.xlu0 %v816, 118
        %v3734 = vpop.permute.xlu0 %3733
        %3735 = vrot.lane.b32.xlu0 %v821, 118
        %v3736 = vpop.permute.xlu0 %3735
        %3737 = vrot.lane.b32.xlu0 %v826, 118
        %v3738 = vpop.permute.xlu0 %3737
        %3739 = vrot.lane.b32.xlu0 %v831, 118
        %v3740 = vpop.permute.xlu0 %3739
        %3757 = vmatprep.subr.mxu0 0.0
        %3758 = vmatpush1.msra.mxu0 %v3740
        %3759 = vmatprep.subr.mxu0 0.0
        %3760 = vmatpush1.msra.mxu0 %v3738
        %3761 = vmatprep.subr.mxu0 0.0
        %3762 = vmatpush1.msra.mxu0 %v3736
        %3763 = vmatprep.subr.mxu0 0.0
        %3764 = vmatpush1.msra.mxu0 %v3734
        %3765 = vmatprep.subr.mxu0 0.0
        %3766 = vmatpush1.msra.mxu0 %v3732
        %3767 = vmatprep.subr.mxu0 0.0
        %3768 = vmatpush1.msra.mxu0 %v3730
        %3769 = vmatprep.subr.mxu0 0.0
        %3770 = vmatpush1.msra.mxu0 %v3728
        %3771 = vmatprep.subr.mxu0 0.0
        %3772 = vmatpush1.msra.mxu0 %v3726
        %3773 = vmatprep.subr.mxu0 0.0
        %3774 = vmatpush1.msra.mxu0 %v3724
        %3775 = vmatprep.subr.mxu0 0.0
        %3776 = vmatpush1.msra.mxu0 %v3722
        %3777 = vmatprep.subr.mxu0 0.0
        %3778 = vmatpush1.msra.mxu0 %v3720
        %3779 = vmatprep.subr.mxu0 0.0
        %3780 = vmatpush1.msra.mxu0 %v3718
        %3781 = vmatprep.subr.mxu0 0.0
        %3782 = vmatpush1.msra.mxu0 %v3716
        %3783 = vmatprep.subr.mxu0 0.0
        %3784 = vmatpush1.msra.mxu0 %v3714
        %3785 = vmatprep.subr.mxu0 0.0
        %3786 = vmatpush1.msra.mxu0 %v3712
        %3787 = vmatprep.subr.mxu0 0.0
        %3788 = vmatpush1.msra.mxu0 %v3710
        %3789 = vmatprep.subr.mxu0 0.0
        %3790 = vmatpush2.msra.mxu0 0.0
        %3791 = vmatprep.subr.mxu0 0.0
        %3792 = vmatpush2.msra.mxu0 0.0
        %3793 = vmatprep.subr.mxu0 0.0
        %3794 = vmatpush2.msra.mxu0 0.0
        %3795 = vmatprep.subr.mxu0 0.0
        %3796 = vmatpush2.msra.mxu0 0.0
        %3797 = vmatprep.subr.mxu0 0.0
        %3798 = vmatpush2.msra.mxu0 0.0
        %3799 = vmatprep.subr.mxu0 0.0
        %3800 = vmatpush2.msra.mxu0 0.0
        %3801 = vmatprep.subr.mxu0 0.0
        %3802 = vmatpush2.msra.mxu0 0.0
        %3803 = vmatprep.subr.mxu0 0.0
        %3804 = vmatpush2.msra.mxu0 0.0
        %3805 = vmatprep.subr.mxu0 0.0
        %3806 = vmatpush2.msra.mxu0 0.0
        %3807 = vmatprep.subr.mxu0 0.0
        %3808 = vmatpush2.msra.mxu0 0.0
        %3809 = vmatprep.subr.mxu0 0.0
        %3810 = vmatpush2.msra.mxu0 0.0
        %3811 = vmatprep.subr.mxu0 0.0
        %3812 = vmatpush2.msra.mxu0 0.0
        %3813 = vmatprep.subr.mxu0 0.0
        %3814 = vmatpush2.msra.mxu0 0.0
        %3815 = vmatprep.subr.mxu0 0.0
        %3816 = vmatpush2.msra.mxu0 0.0
        %3817 = vmatprep.subr.mxu0 0.0
        %3818 = vmatpush2.msra.mxu0 0.0
        %3819 = vmatprep.subr.mxu0 0.0
        %3820 = vmatpush2.msra.mxu0 0.0
        %3821 = vmatprep.mubr.f32.mxu0 0.0
        %3822 = vmatmul.mubr.f32.gmra.mxu0 %v3646
        %v3823 = vpop.f32.mrf.mxu0
        %v3824 = vadd.f32 0.0, %v3823
        %v3825 = vpop.f32.mrf.mxu0
        %3826 = vmatprep.mubr.f32.mxu0 0.0
        %3827 = vmatmul.mubr.f32.gmra.mxu0 %v3648
        %v3828 = vpop.f32.mrf.mxu0
        %v3829 = vadd.f32 0.0, %v3828
        %v3830 = vpop.f32.mrf.mxu0
        %3831 = vmatprep.mubr.f32.mxu0 0.0
        %3832 = vmatmul.mubr.f32.gmra.mxu0 %v3650
        %v3833 = vpop.f32.mrf.mxu0
        %v3834 = vadd.f32 0.0, %v3833
        %v3835 = vpop.f32.mrf.mxu0
        %3836 = vmatprep.mubr.f32.mxu0 0.0
        %3837 = vmatmul.mubr.f32.gmra.mxu0 %v3652
        %v3838 = vpop.f32.mrf.mxu0
        %v3839 = vadd.f32 0.0, %v3838
        %v3840 = vpop.f32.mrf.mxu0
        %3841 = vmatprep.mubr.f32.mxu0 0.0
        %3842 = vmatmul.mubr.f32.gmra.mxu0 %v3654
        %v3843 = vpop.f32.mrf.mxu0
        %v3844 = vadd.f32 0.0, %v3843
        %v3845 = vpop.f32.mrf.mxu0
        %3846 = vmatprep.mubr.f32.mxu0 0.0
        %3847 = vmatmul.mubr.f32.gmra.mxu0 %v3656
        %v3848 = vpop.f32.mrf.mxu0
        %v3849 = vadd.f32 0.0, %v3848
        %v3850 = vpop.f32.mrf.mxu0
        %3851 = vmatprep.mubr.f32.mxu0 0.0
        %3852 = vmatmul.mubr.f32.gmra.mxu0 %v3658
        %v3853 = vpop.f32.mrf.mxu0
        %v3854 = vadd.f32 0.0, %v3853
        %v3855 = vpop.f32.mrf.mxu0
        %3856 = vmatprep.mubr.f32.mxu0 0.0
        %3857 = vmatmul.mubr.f32.gmra.mxu0 %v3660
        %v3858 = vpop.f32.mrf.mxu0
        %v3859 = vadd.f32 0.0, %v3858
        %v3860 = vpop.f32.mrf.mxu0
        %3861 = vmatprep.mubr.f32.mxu0 0.0
        %3862 = vmatmul.mubr.f32.gmra.mxu0 %v3662
        %v3863 = vpop.f32.mrf.mxu0
        %v3864 = vadd.f32 0.0, %v3863
        %v3865 = vpop.f32.mrf.mxu0
        %3866 = vmatprep.mubr.f32.mxu0 0.0
        %3867 = vmatmul.mubr.f32.gmra.mxu0 %v3664
        %v3868 = vpop.f32.mrf.mxu0
        %v3869 = vadd.f32 0.0, %v3868
        %v3870 = vpop.f32.mrf.mxu0
        %3871 = vmatprep.mubr.f32.mxu0 0.0
        %3872 = vmatmul.mubr.f32.gmra.mxu0 %v3666
        %v3873 = vpop.f32.mrf.mxu0
        %v3874 = vadd.f32 0.0, %v3873
        %v3875 = vpop.f32.mrf.mxu0
        %3876 = vmatprep.mubr.f32.mxu0 0.0
        %3877 = vmatmul.mubr.f32.gmra.mxu0 %v3668
        %v3878 = vpop.f32.mrf.mxu0
        %v3879 = vadd.f32 0.0, %v3878
        %v3880 = vpop.f32.mrf.mxu0
        %3881 = vmatprep.mubr.f32.mxu0 0.0
        %3882 = vmatmul.mubr.f32.gmra.mxu0 %v3670
        %v3883 = vpop.f32.mrf.mxu0
        %v3884 = vadd.f32 0.0, %v3883
        %v3885 = vpop.f32.mrf.mxu0
        %3886 = vmatprep.mubr.f32.mxu0 0.0
        %3887 = vmatmul.mubr.f32.gmra.mxu0 %v3672
        %v3888 = vpop.f32.mrf.mxu0
        %v3889 = vadd.f32 0.0, %v3888
        %v3890 = vpop.f32.mrf.mxu0
        %3891 = vmatprep.mubr.f32.mxu0 0.0
        %3892 = vmatmul.mubr.f32.gmra.mxu0 %v3674
        %v3893 = vpop.f32.mrf.mxu0
        %v3894 = vadd.f32 0.0, %v3893
        %v3895 = vpop.f32.mrf.mxu0
        %3896 = vmatprep.mubr.f32.mxu0 0.0
        %3897 = vmatmul.mubr.f32.gmra.mxu0 %v3676
        %v3898 = vpop.f32.mrf.mxu0
        %v3899 = vadd.f32 0.0, %v3898
        %v3900 = vpop.f32.mrf.mxu0
        %3901 = vdwg.mxu0
        %v3902 = vrcp.pop %v3678
        %v3903 = vrcp.pop %v3680
        %v3904 = vrcp.pop %v3682
        %v3905 = vrcp.pop %v3684
        %v3906 = vrcp.pop %v3686
        %v3907 = vrcp.pop %v3688
        %v3908 = vrcp.pop %v3690
        %v3909 = vrcp.pop %v3692
        %v3910 = vrcp.pop %v3694
        %v3911 = vrcp.pop %v3696
        %v3912 = vrcp.pop %v3698
        %v3913 = vrcp.pop %v3700
        %v3914 = vrcp.pop %v3702
        %v3915 = vrcp.pop %v3704
        %v3916 = vrcp.pop %v3706
        %v3917 = vrcp.pop %v3708
        %v3918 = vmul.f32 %v3824, %v3902
        %v3919 = vmul.f32 %v3829, %v3903
        %v3920 = vmul.f32 %v3834, %v3904
        %v3921 = vmul.f32 %v3839, %v3905
        %v3922 = vmul.f32 %v3844, %v3906
        %v3923 = vmul.f32 %v3849, %v3907
        %v3924 = vmul.f32 %v3854, %v3908
        %v3925 = vmul.f32 %v3859, %v3909
        %v3926 = vmul.f32 %v3864, %v3910
        %v3927 = vmul.f32 %v3869, %v3911
        %v3928 = vmul.f32 %v3874, %v3912
        %v3929 = vmul.f32 %v3879, %v3913
        %v3930 = vmul.f32 %v3884, %v3914
        %v3931 = vmul.f32 %v3889, %v3915
        %v3932 = vmul.f32 %v3894, %v3916
        %v3933 = vmul.f32 %v3899, %v3917
        %v3935 = vsel %vm1298, %v3918, 0
        %v3938 = vsel %vm1298, %v3919, 0
        %v3941 = vsel %vm1298, %v3920, 0
        %v3944 = vsel %vm1298, %v3921, 0
        %v3947 = vsel %vm1298, %v3922, 0
        %v3950 = vsel %vm1298, %v3923, 0
        %v3953 = vsel %vm1298, %v3924, 0
        %v3956 = vsel %vm1298, %v3925, 0
        %v3959 = vsel %vm1298, %v3926, 0
        %v3962 = vsel %vm1298, %v3927, 0
        %v3965 = vsel %vm1298, %v3928, 0
        %v3968 = vsel %vm1298, %v3929, 0
        %v3971 = vsel %vm1298, %v3930, 0
        %v3974 = vsel %vm1298, %v3931, 0
        %v3977 = vsel %vm1298, %v3932, 0
        %v3980 = vsel %vm1298, %v3933, 0
        %3982 = vmatprep.subr.mxu0 0.0
        %3983 = vmatpush1.xpose.msra.mxu0 %v3980
        %3984 = vmatprep.subr.mxu0 0.0
        %3985 = vmatpush1.xpose.msra.mxu0 %v3977
        %3986 = vmatprep.subr.mxu0 0.0
        %3987 = vmatpush1.xpose.msra.mxu0 %v3974
        %3988 = vmatprep.subr.mxu0 0.0
        %3989 = vmatpush1.xpose.msra.mxu0 %v3971
        %3990 = vmatprep.subr.mxu0 0.0
        %3991 = vmatpush1.xpose.msra.mxu0 %v3968
        %3992 = vmatprep.subr.mxu0 0.0
        %3993 = vmatpush1.xpose.msra.mxu0 %v3965
        %3994 = vmatprep.subr.mxu0 0.0
        %3995 = vmatpush1.xpose.msra.mxu0 %v3962
        %3996 = vmatprep.subr.mxu0 0.0
        %3997 = vmatpush1.xpose.msra.mxu0 %v3959
        %3998 = vmatprep.subr.mxu0 0.0
        %3999 = vmatpush1.xpose.msra.mxu0 %v3956
        %4000 = vmatprep.subr.mxu0 0.0
        %4001 = vmatpush1.xpose.msra.mxu0 %v3953
        %4002 = vmatprep.subr.mxu0 0.0
        %4003 = vmatpush1.xpose.msra.mxu0 %v3950
        %4004 = vmatprep.subr.mxu0 0.0
        %4005 = vmatpush1.xpose.msra.mxu0 %v3947
        %4006 = vmatprep.subr.mxu0 0.0
        %4007 = vmatpush1.xpose.msra.mxu0 %v3944
        %4008 = vmatprep.subr.mxu0 0.0
        %4009 = vmatpush1.xpose.msra.mxu0 %v3941
        %4010 = vmatprep.subr.mxu0 0.0
        %4011 = vmatpush1.xpose.msra.mxu0 %v3938
        %4012 = vmatprep.subr.mxu0 0.0
        %4013 = vmatpush1.xpose.msra.mxu0 %v3935
        %4014 = vmatprep.subr.mxu0 0.0
        %4015 = vmatpush2.xpose.msra.mxu0 0.0
        %4016 = vmatprep.subr.mxu0 0.0
        %4017 = vmatpush2.xpose.msra.mxu0 0.0
        %4018 = vmatprep.subr.mxu0 0.0
        %4019 = vmatpush2.xpose.msra.mxu0 0.0
        %4020 = vmatprep.subr.mxu0 0.0
        %4021 = vmatpush2.xpose.msra.mxu0 0.0
        %4022 = vmatprep.subr.mxu0 0.0
        %4023 = vmatpush2.xpose.msra.mxu0 0.0
        %4024 = vmatprep.subr.mxu0 0.0
        %4025 = vmatpush2.xpose.msra.mxu0 0.0
        %4026 = vmatprep.subr.mxu0 0.0
        %4027 = vmatpush2.xpose.msra.mxu0 0.0
        %4028 = vmatprep.subr.mxu0 0.0
        %4029 = vmatpush2.xpose.msra.mxu0 0.0
        %4030 = vmatprep.subr.mxu0 0.0
        %4031 = vmatpush2.xpose.msra.mxu0 0.0
        %4032 = vmatprep.subr.mxu0 0.0
        %4033 = vmatpush2.xpose.msra.mxu0 0.0
        %4034 = vmatprep.subr.mxu0 0.0
        %4035 = vmatpush2.xpose.msra.mxu0 0.0
        %4036 = vmatprep.subr.mxu0 0.0
        %4037 = vmatpush2.xpose.msra.mxu0 0.0
        %4038 = vmatprep.subr.mxu0 0.0
        %4039 = vmatpush2.xpose.msra.mxu0 0.0
        %4040 = vmatprep.subr.mxu0 0.0
        %4041 = vmatpush2.xpose.msra.mxu0 0.0
        %4042 = vmatprep.subr.mxu0 0.0
        %4043 = vmatpush2.xpose.msra.mxu0 0.0
        %4044 = vmatprep.subr.mxu0 0.0
        %4045 = vmatpush2.xpose.msra.mxu0 0.0
        %4046 = vmatprep.mubr.f32.mxu0 0.0
        %4047 = vmatmul.mubr.f32.gmra.mxu0 %v2474
        %v4048 = vpop.f32.mrf.mxu0
        %v4049 = vadd.f32 0.0, %v4048
        %v4050 = vpop.f32.mrf.mxu0
        %4051 = vdwg.mxu0
        %v4053 = vsel %vm1298, %v3308, 0
        %v4056 = vsel %vm1298, %v3309, 0
        %v4059 = vsel %vm1298, %v3310, 0
        %v4062 = vsel %vm1298, %v3311, 0
        %v4065 = vsel %vm1298, %v3312, 0
        %v4068 = vsel %vm1298, %v3313, 0
        %v4071 = vsel %vm1298, %v3314, 0
        %v4074 = vsel %vm1298, %v3315, 0
        %v4077 = vsel %vm1298, %v3316, 0
        %v4080 = vsel %vm1298, %v3317, 0
        %v4083 = vsel %vm1298, %v3318, 0
        %v4086 = vsel %vm1298, %v3319, 0
        %v4089 = vsel %vm1298, %v3320, 0
        %v4092 = vsel %vm1298, %v3321, 0
        %v4095 = vsel %vm1298, %v3322, 0
        %v4098 = vsel %vm1298, %v3323, 0
        %4100 = vmatprep.subr.mxu0 0.0
        %4101 = vmatpush1.xpose.msra.mxu0 %v4098
        %4102 = vmatprep.subr.mxu0 0.0
        %4103 = vmatpush1.xpose.msra.mxu0 %v4095
        %4104 = vmatprep.subr.mxu0 0.0
        %4105 = vmatpush1.xpose.msra.mxu0 %v4092
        %4106 = vmatprep.subr.mxu0 0.0
        %4107 = vmatpush1.xpose.msra.mxu0 %v4089
        %4108 = vmatprep.subr.mxu0 0.0
        %4109 = vmatpush1.xpose.msra.mxu0 %v4086
        %4110 = vmatprep.subr.mxu0 0.0
        %4111 = vmatpush1.xpose.msra.mxu0 %v4083
        %4112 = vmatprep.subr.mxu0 0.0
        %4113 = vmatpush1.xpose.msra.mxu0 %v4080
        %4114 = vmatprep.subr.mxu0 0.0
        %4115 = vmatpush1.xpose.msra.mxu0 %v4077
        %4116 = vmatprep.subr.mxu0 0.0
        %4117 = vmatpush1.xpose.msra.mxu0 %v4074
        %4118 = vmatprep.subr.mxu0 0.0
        %4119 = vmatpush1.xpose.msra.mxu0 %v4071
        %4120 = vmatprep.subr.mxu0 0.0
        %4121 = vmatpush1.xpose.msra.mxu0 %v4068
        %4122 = vmatprep.subr.mxu0 0.0
        %4123 = vmatpush1.xpose.msra.mxu0 %v4065
        %4124 = vmatprep.subr.mxu0 0.0
        %4125 = vmatpush1.xpose.msra.mxu0 %v4062
        %4126 = vmatprep.subr.mxu0 0.0
        %4127 = vmatpush1.xpose.msra.mxu0 %v4059
        %4128 = vmatprep.subr.mxu0 0.0
        %4129 = vmatpush1.xpose.msra.mxu0 %v4056
        %4130 = vmatprep.subr.mxu0 0.0
        %4131 = vmatpush1.xpose.msra.mxu0 %v4053
        %4132 = vmatprep.subr.mxu0 0.0
        %4133 = vmatpush2.xpose.msra.mxu0 0.0
        %4134 = vmatprep.subr.mxu0 0.0
        %4135 = vmatpush2.xpose.msra.mxu0 0.0
        %4136 = vmatprep.subr.mxu0 0.0
        %4137 = vmatpush2.xpose.msra.mxu0 0.0
        %4138 = vmatprep.subr.mxu0 0.0
        %4139 = vmatpush2.xpose.msra.mxu0 0.0
        %4140 = vmatprep.subr.mxu0 0.0
        %4141 = vmatpush2.xpose.msra.mxu0 0.0
        %4142 = vmatprep.subr.mxu0 0.0
        %4143 = vmatpush2.xpose.msra.mxu0 0.0
        %4144 = vmatprep.subr.mxu0 0.0
        %4145 = vmatpush2.xpose.msra.mxu0 0.0
        %4146 = vmatprep.subr.mxu0 0.0
        %4147 = vmatpush2.xpose.msra.mxu0 0.0
        %4148 = vmatprep.subr.mxu0 0.0
        %4149 = vmatpush2.xpose.msra.mxu0 0.0
        %4150 = vmatprep.subr.mxu0 0.0
        %4151 = vmatpush2.xpose.msra.mxu0 0.0
        %4152 = vmatprep.subr.mxu0 0.0
        %4153 = vmatpush2.xpose.msra.mxu0 0.0
        %4154 = vmatprep.subr.mxu0 0.0
        %4155 = vmatpush2.xpose.msra.mxu0 0.0
        %4156 = vmatprep.subr.mxu0 0.0
        %4157 = vmatpush2.xpose.msra.mxu0 0.0
        %4158 = vmatprep.subr.mxu0 0.0
        %4159 = vmatpush2.xpose.msra.mxu0 0.0
        %4160 = vmatprep.subr.mxu0 0.0
        %4161 = vmatpush2.xpose.msra.mxu0 0.0
        %4162 = vmatprep.subr.mxu0 0.0
        %4163 = vmatpush2.xpose.msra.mxu0 0.0
        %4164 = vmatprep.mubr.f32.mxu0 0.0
        %4165 = vmatmul.mubr.f32.gmra.mxu0 %v2594
        %v4166 = vpop.f32.mrf.mxu0
        %v4167 = vadd.f32 %v4049, %v4166
        %v4168 = vpop.f32.mrf.mxu0
        %4169 = vdwg.mxu0
        %4186 = vrot.lane.b32.xlu0 %v836, 124
        %v4187 = vpop.permute.xlu0 %4186
        %4188 = vrot.lane.b32.xlu0 %v841, 124
        %v4189 = vpop.permute.xlu0 %4188
        %4190 = vrot.lane.b32.xlu0 %v846, 124
        %v4191 = vpop.permute.xlu0 %4190
        %4192 = vrot.lane.b32.xlu0 %v851, 124
        %v4193 = vpop.permute.xlu0 %4192
        %4194 = vrot.lane.b32.xlu0 %v856, 124
        %v4195 = vpop.permute.xlu0 %4194
        %4196 = vrot.lane.b32.xlu0 %v861, 124
        %v4197 = vpop.permute.xlu0 %4196
        %4198 = vrot.lane.b32.xlu0 %v866, 124
        %v4199 = vpop.permute.xlu0 %4198
        %4200 = vrot.lane.b32.xlu0 %v871, 124
        %v4201 = vpop.permute.xlu0 %4200
        %4202 = vrot.lane.b32.xlu0 %v876, 124
        %v4203 = vpop.permute.xlu0 %4202
        %4204 = vrot.lane.b32.xlu0 %v881, 124
        %v4205 = vpop.permute.xlu0 %4204
        %4206 = vrot.lane.b32.xlu0 %v886, 124
        %v4207 = vpop.permute.xlu0 %4206
        %4208 = vrot.lane.b32.xlu0 %v891, 124
        %v4209 = vpop.permute.xlu0 %4208
        %4210 = vrot.lane.b32.xlu0 %v896, 124
        %v4211 = vpop.permute.xlu0 %4210
        %4212 = vrot.lane.b32.xlu0 %v901, 124
        %v4213 = vpop.permute.xlu0 %4212
        %4214 = vrot.lane.b32.xlu0 %v906, 124
        %v4215 = vpop.permute.xlu0 %4214
        %4216 = vrot.lane.b32.xlu0 %v911, 124
        %v4217 = vpop.permute.xlu0 %4216
        %v4219 = vsel %vm1298, %v1186, 0
        %v4222 = vsel %vm1298, %v1187, 0
        %v4225 = vsel %vm1298, %v1188, 0
        %v4228 = vsel %vm1298, %v1189, 0
        %v4231 = vsel %vm1298, %v1190, 0
        %v4234 = vsel %vm1298, %v1191, 0
        %v4237 = vsel %vm1298, %v1192, 0
        %v4240 = vsel %vm1298, %v1193, 0
        %v4243 = vsel %vm1298, %v1194, 0
        %v4246 = vsel %vm1298, %v1195, 0
        %v4249 = vsel %vm1298, %v1196, 0
        %v4252 = vsel %vm1298, %v1197, 0
        %v4255 = vsel %vm1298, %v1198, 0
        %v4258 = vsel %vm1298, %v1199, 0
        %v4261 = vsel %vm1298, %v1200, 0
        %v4264 = vsel %vm1298, %v1201, 0
        %v4266 = vsel %vm1298, %v4187, 0
        %v4268 = vsel %vm1298, %v4189, 0
        %v4270 = vsel %vm1298, %v4191, 0
        %v4272 = vsel %vm1298, %v4193, 0
        %v4274 = vsel %vm1298, %v4195, 0
        %v4276 = vsel %vm1298, %v4197, 0
        %v4278 = vsel %vm1298, %v4199, 0
        %v4280 = vsel %vm1298, %v4201, 0
        %v4282 = vsel %vm1298, %v4203, 0
        %v4284 = vsel %vm1298, %v4205, 0
        %v4286 = vsel %vm1298, %v4207, 0
        %v4288 = vsel %vm1298, %v4209, 0
        %v4290 = vsel %vm1298, %v4211, 0
        %v4292 = vsel %vm1298, %v4213, 0
        %v4294 = vsel %vm1298, %v4215, 0
        %v4296 = vsel %vm1298, %v4217, 0
        %4298 = vmatprep.subr.mxu0 0.0
        %4299 = vmatpush1.xpose.msra.mxu0 %v4296
        %4300 = vmatprep.subr.mxu0 0.0
        %4301 = vmatpush1.xpose.msra.mxu0 %v4294
        %4302 = vmatprep.subr.mxu0 0.0
        %4303 = vmatpush1.xpose.msra.mxu0 %v4292
        %4304 = vmatprep.subr.mxu0 0.0
        %4305 = vmatpush1.xpose.msra.mxu0 %v4290
        %4306 = vmatprep.subr.mxu0 0.0
        %4307 = vmatpush1.xpose.msra.mxu0 %v4288
        %4308 = vmatprep.subr.mxu0 0.0
        %4309 = vmatpush1.xpose.msra.mxu0 %v4286
        %4310 = vmatprep.subr.mxu0 0.0
        %4311 = vmatpush1.xpose.msra.mxu0 %v4284
        %4312 = vmatprep.subr.mxu0 0.0
        %4313 = vmatpush1.xpose.msra.mxu0 %v4282
        %4314 = vmatprep.subr.mxu0 0.0
        %4315 = vmatpush1.xpose.msra.mxu0 %v4280
        %4316 = vmatprep.subr.mxu0 0.0
        %4317 = vmatpush1.xpose.msra.mxu0 %v4278
        %4318 = vmatprep.subr.mxu0 0.0
        %4319 = vmatpush1.xpose.msra.mxu0 %v4276
        %4320 = vmatprep.subr.mxu0 0.0
        %4321 = vmatpush1.xpose.msra.mxu0 %v4274
        %4322 = vmatprep.subr.mxu0 0.0
        %4323 = vmatpush1.xpose.msra.mxu0 %v4272
        %4324 = vmatprep.subr.mxu0 0.0
        %4325 = vmatpush1.xpose.msra.mxu0 %v4270
        %4326 = vmatprep.subr.mxu0 0.0
        %4327 = vmatpush1.xpose.msra.mxu0 %v4268
        %4328 = vmatprep.subr.mxu0 0.0
        %4329 = vmatpush1.xpose.msra.mxu0 %v4266
        %4330 = vmatprep.subr.mxu0 0.0
        %4331 = vmatpush2.xpose.msra.mxu0 0.0
        %4332 = vmatprep.subr.mxu0 0.0
        %4333 = vmatpush2.xpose.msra.mxu0 0.0
        %4334 = vmatprep.subr.mxu0 0.0
        %4335 = vmatpush2.xpose.msra.mxu0 0.0
        %4336 = vmatprep.subr.mxu0 0.0
        %4337 = vmatpush2.xpose.msra.mxu0 0.0
        %4338 = vmatprep.subr.mxu0 0.0
        %4339 = vmatpush2.xpose.msra.mxu0 0.0
        %4340 = vmatprep.subr.mxu0 0.0
        %4341 = vmatpush2.xpose.msra.mxu0 0.0
        %4342 = vmatprep.subr.mxu0 0.0
        %4343 = vmatpush2.xpose.msra.mxu0 0.0
        %4344 = vmatprep.subr.mxu0 0.0
        %4345 = vmatpush2.xpose.msra.mxu0 0.0
        %4346 = vmatprep.subr.mxu0 0.0
        %4347 = vmatpush2.xpose.msra.mxu0 0.0
        %4348 = vmatprep.subr.mxu0 0.0
        %4349 = vmatpush2.xpose.msra.mxu0 0.0
        %4350 = vmatprep.subr.mxu0 0.0
        %4351 = vmatpush2.xpose.msra.mxu0 0.0
        %4352 = vmatprep.subr.mxu0 0.0
        %4353 = vmatpush2.xpose.msra.mxu0 0.0
        %4354 = vmatprep.subr.mxu0 0.0
        %4355 = vmatpush2.xpose.msra.mxu0 0.0
        %4356 = vmatprep.subr.mxu0 0.0
        %4357 = vmatpush2.xpose.msra.mxu0 0.0
        %4358 = vmatprep.subr.mxu0 0.0
        %4359 = vmatpush2.xpose.msra.mxu0 0.0
        %4360 = vmatprep.subr.mxu0 0.0
        %4361 = vmatpush2.xpose.msra.mxu0 0.0
        %4362 = vmatprep.mubr.f32.mxu0 0.0
        %4363 = vmatmul.mubr.f32.gmra.mxu0 %v4219
        %v4364 = vpop.f32.mrf.mxu0
        %v4365 = vadd.f32 %v487, %v4364
        %v4366 = vpop.f32.mrf.mxu0
        %4367 = vmatprep.mubr.f32.mxu0 0.0
        %4368 = vmatmul.mubr.f32.gmra.mxu0 %v4222
        %v4369 = vpop.f32.mrf.mxu0
        %v4370 = vadd.f32 %v488, %v4369
        %v4371 = vpop.f32.mrf.mxu0
        %4372 = vmatprep.mubr.f32.mxu0 0.0
        %4373 = vmatmul.mubr.f32.gmra.mxu0 %v4225
        %v4374 = vpop.f32.mrf.mxu0
        %v4375 = vadd.f32 %v489, %v4374
        %v4376 = vpop.f32.mrf.mxu0
        %4377 = vmatprep.mubr.f32.mxu0 0.0
        %4378 = vmatmul.mubr.f32.gmra.mxu0 %v4228
        %v4379 = vpop.f32.mrf.mxu0
        %v4380 = vadd.f32 %v490, %v4379
        %v4381 = vpop.f32.mrf.mxu0
        %4382 = vmatprep.mubr.f32.mxu0 0.0
        %4383 = vmatmul.mubr.f32.gmra.mxu0 %v4231
        %v4384 = vpop.f32.mrf.mxu0
        %v4385 = vadd.f32 %v491, %v4384
        %v4386 = vpop.f32.mrf.mxu0
        %4387 = vmatprep.mubr.f32.mxu0 0.0
        %4388 = vmatmul.mubr.f32.gmra.mxu0 %v4234
        %v4389 = vpop.f32.mrf.mxu0
        %v4390 = vadd.f32 %v492, %v4389
        %v4391 = vpop.f32.mrf.mxu0
        %4392 = vmatprep.mubr.f32.mxu0 0.0
        %4393 = vmatmul.mubr.f32.gmra.mxu0 %v4237
        %v4394 = vpop.f32.mrf.mxu0
        %v4395 = vadd.f32 %v493, %v4394
        %v4396 = vpop.f32.mrf.mxu0
        %4397 = vmatprep.mubr.f32.mxu0 0.0
        %4398 = vmatmul.mubr.f32.gmra.mxu0 %v4240
        %v4399 = vpop.f32.mrf.mxu0
        %v4400 = vadd.f32 %v494, %v4399
        %v4401 = vpop.f32.mrf.mxu0
        %4402 = vmatprep.mubr.f32.mxu0 0.0
        %4403 = vmatmul.mubr.f32.gmra.mxu0 %v4243
        %v4404 = vpop.f32.mrf.mxu0
        %v4405 = vadd.f32 %v495, %v4404
        %v4406 = vpop.f32.mrf.mxu0
        %4407 = vmatprep.mubr.f32.mxu0 0.0
        %4408 = vmatmul.mubr.f32.gmra.mxu0 %v4246
        %v4409 = vpop.f32.mrf.mxu0
        %v4410 = vadd.f32 %v496, %v4409
        %v4411 = vpop.f32.mrf.mxu0
        %4412 = vmatprep.mubr.f32.mxu0 0.0
        %4413 = vmatmul.mubr.f32.gmra.mxu0 %v4249
        %v4414 = vpop.f32.mrf.mxu0
        %v4415 = vadd.f32 %v497, %v4414
        %v4416 = vpop.f32.mrf.mxu0
        %4417 = vmatprep.mubr.f32.mxu0 0.0
        %4418 = vmatmul.mubr.f32.gmra.mxu0 %v4252
        %v4419 = vpop.f32.mrf.mxu0
        %v4420 = vadd.f32 %v498, %v4419
        %v4421 = vpop.f32.mrf.mxu0
        %4422 = vmatprep.mubr.f32.mxu0 0.0
        %4423 = vmatmul.mubr.f32.gmra.mxu0 %v4255
        %v4424 = vpop.f32.mrf.mxu0
        %v4425 = vadd.f32 %v499, %v4424
        %v4426 = vpop.f32.mrf.mxu0
        %4427 = vmatprep.mubr.f32.mxu0 0.0
        %4428 = vmatmul.mubr.f32.gmra.mxu0 %v4258
        %v4429 = vpop.f32.mrf.mxu0
        %v4430 = vadd.f32 %v500, %v4429
        %v4431 = vpop.f32.mrf.mxu0
        %4432 = vmatprep.mubr.f32.mxu0 0.0
        %4433 = vmatmul.mubr.f32.gmra.mxu0 %v4261
        %v4434 = vpop.f32.mrf.mxu0
        %v4435 = vadd.f32 %v501, %v4434
        %v4436 = vpop.f32.mrf.mxu0
        %4437 = vmatprep.mubr.f32.mxu0 0.0
        %4438 = vmatmul.mubr.f32.gmra.mxu0 %v4264
        %v4439 = vpop.f32.mrf.mxu0
        %v4440 = vadd.f32 %v502, %v4439
        %v4441 = vpop.f32.mrf.mxu0
        %4442 = vdwg.mxu0
        %4443 = vmax.xlane.f32.xlu0 %v4365
        %v4444 = vpop.xlane.xlu0 %4443
        %4445 = vmax.xlane.f32.xlu0 %v4370
        %v4446 = vpop.xlane.xlu0 %4445
        %4447 = vmax.xlane.f32.xlu0 %v4375
        %v4448 = vpop.xlane.xlu0 %4447
        %4449 = vmax.xlane.f32.xlu0 %v4380
        %v4450 = vpop.xlane.xlu0 %4449
        %4451 = vmax.xlane.f32.xlu0 %v4385
        %v4452 = vpop.xlane.xlu0 %4451
        %4453 = vmax.xlane.f32.xlu0 %v4390
        %v4454 = vpop.xlane.xlu0 %4453
        %4455 = vmax.xlane.f32.xlu0 %v4395
        %v4456 = vpop.xlane.xlu0 %4455
        %4457 = vmax.xlane.f32.xlu0 %v4400
        %v4458 = vpop.xlane.xlu0 %4457
        %4459 = vmax.xlane.f32.xlu0 %v4405
        %v4460 = vpop.xlane.xlu0 %4459
        %4461 = vmax.xlane.f32.xlu0 %v4410
        %v4462 = vpop.xlane.xlu0 %4461
        %4463 = vmax.xlane.f32.xlu0 %v4415
        %v4464 = vpop.xlane.xlu0 %4463
        %4465 = vmax.xlane.f32.xlu0 %v4420
        %v4466 = vpop.xlane.xlu0 %4465
        %4467 = vmax.xlane.f32.xlu0 %v4425
        %v4468 = vpop.xlane.xlu0 %4467
        %4469 = vmax.xlane.f32.xlu0 %v4430
        %v4470 = vpop.xlane.xlu0 %4469
        %4471 = vmax.xlane.f32.xlu0 %v4435
        %v4472 = vpop.xlane.xlu0 %4471
        %4473 = vmax.xlane.f32.xlu0 %v4440
        %v4474 = vpop.xlane.xlu0 %4473
        %v4475 = vsub.f32 %v4365, %v4444
        %v4476 = vsub.f32 %v4370, %v4446
        %v4477 = vsub.f32 %v4375, %v4448
        %v4478 = vsub.f32 %v4380, %v4450
        %v4479 = vsub.f32 %v4385, %v4452
        %v4480 = vsub.f32 %v4390, %v4454
        %v4481 = vsub.f32 %v4395, %v4456
        %v4482 = vsub.f32 %v4400, %v4458
        %v4483 = vsub.f32 %v4405, %v4460
        %v4484 = vsub.f32 %v4410, %v4462
        %v4485 = vsub.f32 %v4415, %v4464
        %v4486 = vsub.f32 %v4420, %v4466
        %v4487 = vsub.f32 %v4425, %v4468
        %v4488 = vsub.f32 %v4430, %v4470
        %v4489 = vsub.f32 %v4435, %v4472
        %v4490 = vsub.f32 %v4440, %v4474
        %v4491 = vmul.f32 %v4475, 1.442695
        %v4492 = vpow.pop %v4491
        %v4493 = vmul.f32 %v4476, 1.442695
        %v4494 = vpow.pop %v4493
        %v4495 = vmul.f32 %v4477, 1.442695
        %v4496 = vpow.pop %v4495
        %v4497 = vmul.f32 %v4478, 1.442695
        %v4498 = vpow.pop %v4497
        %v4499 = vmul.f32 %v4479, 1.442695
        %v4500 = vpow.pop %v4499
        %v4501 = vmul.f32 %v4480, 1.442695
        %v4502 = vpow.pop %v4501
        %v4503 = vmul.f32 %v4481, 1.442695
        %v4504 = vpow.pop %v4503
        %v4505 = vmul.f32 %v4482, 1.442695
        %v4506 = vpow.pop %v4505
        %v4507 = vmul.f32 %v4483, 1.442695
        %v4508 = vpow.pop %v4507
        %v4509 = vmul.f32 %v4484, 1.442695
        %v4510 = vpow.pop %v4509
        %v4511 = vmul.f32 %v4485, 1.442695
        %v4512 = vpow.pop %v4511
        %v4513 = vmul.f32 %v4486, 1.442695
        %v4514 = vpow.pop %v4513
        %v4515 = vmul.f32 %v4487, 1.442695
        %v4516 = vpow.pop %v4515
        %v4517 = vmul.f32 %v4488, 1.442695
        %v4518 = vpow.pop %v4517
        %v4519 = vmul.f32 %v4489, 1.442695
        %v4520 = vpow.pop %v4519
        %v4521 = vmul.f32 %v4490, 1.442695
        %v4522 = vpow.pop %v4521
        %4523 = vadd.xlane.f32.xlu0 %v4492
        %v4524 = vpop.xlane.xlu0 %4523
        %4525 = vadd.xlane.f32.xlu0 %v4494
        %v4526 = vpop.xlane.xlu0 %4525
        %4527 = vadd.xlane.f32.xlu0 %v4496
        %v4528 = vpop.xlane.xlu0 %4527
        %4529 = vadd.xlane.f32.xlu0 %v4498
        %v4530 = vpop.xlane.xlu0 %4529
        %4531 = vadd.xlane.f32.xlu0 %v4500
        %v4532 = vpop.xlane.xlu0 %4531
        %4533 = vadd.xlane.f32.xlu0 %v4502
        %v4534 = vpop.xlane.xlu0 %4533
        %4535 = vadd.xlane.f32.xlu0 %v4504
        %v4536 = vpop.xlane.xlu0 %4535
        %4537 = vadd.xlane.f32.xlu0 %v4506
        %v4538 = vpop.xlane.xlu0 %4537
        %4539 = vadd.xlane.f32.xlu0 %v4508
        %v4540 = vpop.xlane.xlu0 %4539
        %4541 = vadd.xlane.f32.xlu0 %v4510
        %v4542 = vpop.xlane.xlu0 %4541
        %4543 = vadd.xlane.f32.xlu0 %v4512
        %v4544 = vpop.xlane.xlu0 %4543
        %4545 = vadd.xlane.f32.xlu0 %v4514
        %v4546 = vpop.xlane.xlu0 %4545
        %4547 = vadd.xlane.f32.xlu0 %v4516
        %v4548 = vpop.xlane.xlu0 %4547
        %4549 = vadd.xlane.f32.xlu0 %v4518
        %v4550 = vpop.xlane.xlu0 %4549
        %4551 = vadd.xlane.f32.xlu0 %v4520
        %v4552 = vpop.xlane.xlu0 %4551
        %4553 = vadd.xlane.f32.xlu0 %v4522
        %v4554 = vpop.xlane.xlu0 %4553
        %4555 = vrot.lane.b32.xlu0 %v836, 120
        %v4556 = vpop.permute.xlu0 %4555
        %4557 = vrot.lane.b32.xlu0 %v841, 120
        %v4558 = vpop.permute.xlu0 %4557
        %4559 = vrot.lane.b32.xlu0 %v846, 120
        %v4560 = vpop.permute.xlu0 %4559
        %4561 = vrot.lane.b32.xlu0 %v851, 120
        %v4562 = vpop.permute.xlu0 %4561
        %4563 = vrot.lane.b32.xlu0 %v856, 120
        %v4564 = vpop.permute.xlu0 %4563
        %4565 = vrot.lane.b32.xlu0 %v861, 120
        %v4566 = vpop.permute.xlu0 %4565
        %4567 = vrot.lane.b32.xlu0 %v866, 120
        %v4568 = vpop.permute.xlu0 %4567
        %4569 = vrot.lane.b32.xlu0 %v871, 120
        %v4570 = vpop.permute.xlu0 %4569
        %4571 = vrot.lane.b32.xlu0 %v876, 120
        %v4572 = vpop.permute.xlu0 %4571
        %4573 = vrot.lane.b32.xlu0 %v881, 120
        %v4574 = vpop.permute.xlu0 %4573
        %4575 = vrot.lane.b32.xlu0 %v886, 120
        %v4576 = vpop.permute.xlu0 %4575
        %4577 = vrot.lane.b32.xlu0 %v891, 120
        %v4578 = vpop.permute.xlu0 %4577
        %4579 = vrot.lane.b32.xlu0 %v896, 120
        %v4580 = vpop.permute.xlu0 %4579
        %4581 = vrot.lane.b32.xlu0 %v901, 120
        %v4582 = vpop.permute.xlu0 %4581
        %4583 = vrot.lane.b32.xlu0 %v906, 120
        %v4584 = vpop.permute.xlu0 %4583
        %4585 = vrot.lane.b32.xlu0 %v911, 120
        %v4586 = vpop.permute.xlu0 %4585
        %4603 = vmatprep.subr.mxu0 0.0
        %4604 = vmatpush1.msra.mxu0 %v4586
        %4605 = vmatprep.subr.mxu0 0.0
        %4606 = vmatpush1.msra.mxu0 %v4584
        %4607 = vmatprep.subr.mxu0 0.0
        %4608 = vmatpush1.msra.mxu0 %v4582
        %4609 = vmatprep.subr.mxu0 0.0
        %4610 = vmatpush1.msra.mxu0 %v4580
        %4611 = vmatprep.subr.mxu0 0.0
        %4612 = vmatpush1.msra.mxu0 %v4578
        %4613 = vmatprep.subr.mxu0 0.0
        %4614 = vmatpush1.msra.mxu0 %v4576
        %4615 = vmatprep.subr.mxu0 0.0
        %4616 = vmatpush1.msra.mxu0 %v4574
        %4617 = vmatprep.subr.mxu0 0.0
        %4618 = vmatpush1.msra.mxu0 %v4572
        %4619 = vmatprep.subr.mxu0 0.0
        %4620 = vmatpush1.msra.mxu0 %v4570
        %4621 = vmatprep.subr.mxu0 0.0
        %4622 = vmatpush1.msra.mxu0 %v4568
        %4623 = vmatprep.subr.mxu0 0.0
        %4624 = vmatpush1.msra.mxu0 %v4566
        %4625 = vmatprep.subr.mxu0 0.0
        %4626 = vmatpush1.msra.mxu0 %v4564
        %4627 = vmatprep.subr.mxu0 0.0
        %4628 = vmatpush1.msra.mxu0 %v4562
        %4629 = vmatprep.subr.mxu0 0.0
        %4630 = vmatpush1.msra.mxu0 %v4560
        %4631 = vmatprep.subr.mxu0 0.0
        %4632 = vmatpush1.msra.mxu0 %v4558
        %4633 = vmatprep.subr.mxu0 0.0
        %4634 = vmatpush1.msra.mxu0 %v4556
        %4635 = vmatprep.subr.mxu0 0.0
        %4636 = vmatpush2.msra.mxu0 0.0
        %4637 = vmatprep.subr.mxu0 0.0
        %4638 = vmatpush2.msra.mxu0 0.0
        %4639 = vmatprep.subr.mxu0 0.0
        %4640 = vmatpush2.msra.mxu0 0.0
        %4641 = vmatprep.subr.mxu0 0.0
        %4642 = vmatpush2.msra.mxu0 0.0
        %4643 = vmatprep.subr.mxu0 0.0
        %4644 = vmatpush2.msra.mxu0 0.0
        %4645 = vmatprep.subr.mxu0 0.0
        %4646 = vmatpush2.msra.mxu0 0.0
        %4647 = vmatprep.subr.mxu0 0.0
        %4648 = vmatpush2.msra.mxu0 0.0
        %4649 = vmatprep.subr.mxu0 0.0
        %4650 = vmatpush2.msra.mxu0 0.0
        %4651 = vmatprep.subr.mxu0 0.0
        %4652 = vmatpush2.msra.mxu0 0.0
        %4653 = vmatprep.subr.mxu0 0.0
        %4654 = vmatpush2.msra.mxu0 0.0
        %4655 = vmatprep.subr.mxu0 0.0
        %4656 = vmatpush2.msra.mxu0 0.0
        %4657 = vmatprep.subr.mxu0 0.0
        %4658 = vmatpush2.msra.mxu0 0.0
        %4659 = vmatprep.subr.mxu0 0.0
        %4660 = vmatpush2.msra.mxu0 0.0
        %4661 = vmatprep.subr.mxu0 0.0
        %4662 = vmatpush2.msra.mxu0 0.0
        %4663 = vmatprep.subr.mxu0 0.0
        %4664 = vmatpush2.msra.mxu0 0.0
        %4665 = vmatprep.subr.mxu0 0.0
        %4666 = vmatpush2.msra.mxu0 0.0
        %4667 = vmatprep.mubr.f32.mxu0 0.0
        %4668 = vmatmul.mubr.f32.gmra.mxu0 %v4492
        %v4669 = vpop.f32.mrf.mxu0
        %v4670 = vadd.f32 0.0, %v4669
        %v4671 = vpop.f32.mrf.mxu0
        %4672 = vmatprep.mubr.f32.mxu0 0.0
        %4673 = vmatmul.mubr.f32.gmra.mxu0 %v4494
        %v4674 = vpop.f32.mrf.mxu0
        %v4675 = vadd.f32 0.0, %v4674
        %v4676 = vpop.f32.mrf.mxu0
        %4677 = vmatprep.mubr.f32.mxu0 0.0
        %4678 = vmatmul.mubr.f32.gmra.mxu0 %v4496
        %v4679 = vpop.f32.mrf.mxu0
        %v4680 = vadd.f32 0.0, %v4679
        %v4681 = vpop.f32.mrf.mxu0
        %4682 = vmatprep.mubr.f32.mxu0 0.0
        %4683 = vmatmul.mubr.f32.gmra.mxu0 %v4498
        %v4684 = vpop.f32.mrf.mxu0
        %v4685 = vadd.f32 0.0, %v4684
        %v4686 = vpop.f32.mrf.mxu0
        %4687 = vmatprep.mubr.f32.mxu0 0.0
        %4688 = vmatmul.mubr.f32.gmra.mxu0 %v4500
        %v4689 = vpop.f32.mrf.mxu0
        %v4690 = vadd.f32 0.0, %v4689
        %v4691 = vpop.f32.mrf.mxu0
        %4692 = vmatprep.mubr.f32.mxu0 0.0
        %4693 = vmatmul.mubr.f32.gmra.mxu0 %v4502
        %v4694 = vpop.f32.mrf.mxu0
        %v4695 = vadd.f32 0.0, %v4694
        %v4696 = vpop.f32.mrf.mxu0
        %4697 = vmatprep.mubr.f32.mxu0 0.0
        %4698 = vmatmul.mubr.f32.gmra.mxu0 %v4504
        %v4699 = vpop.f32.mrf.mxu0
        %v4700 = vadd.f32 0.0, %v4699
        %v4701 = vpop.f32.mrf.mxu0
        %4702 = vmatprep.mubr.f32.mxu0 0.0
        %4703 = vmatmul.mubr.f32.gmra.mxu0 %v4506
        %v4704 = vpop.f32.mrf.mxu0
        %v4705 = vadd.f32 0.0, %v4704
        %v4706 = vpop.f32.mrf.mxu0
        %4707 = vmatprep.mubr.f32.mxu0 0.0
        %4708 = vmatmul.mubr.f32.gmra.mxu0 %v4508
        %v4709 = vpop.f32.mrf.mxu0
        %v4710 = vadd.f32 0.0, %v4709
        %v4711 = vpop.f32.mrf.mxu0
        %4712 = vmatprep.mubr.f32.mxu0 0.0
        %4713 = vmatmul.mubr.f32.gmra.mxu0 %v4510
        %v4714 = vpop.f32.mrf.mxu0
        %v4715 = vadd.f32 0.0, %v4714
        %v4716 = vpop.f32.mrf.mxu0
        %4717 = vmatprep.mubr.f32.mxu0 0.0
        %4718 = vmatmul.mubr.f32.gmra.mxu0 %v4512
        %v4719 = vpop.f32.mrf.mxu0
        %v4720 = vadd.f32 0.0, %v4719
        %v4721 = vpop.f32.mrf.mxu0
        %4722 = vmatprep.mubr.f32.mxu0 0.0
        %4723 = vmatmul.mubr.f32.gmra.mxu0 %v4514
        %v4724 = vpop.f32.mrf.mxu0
        %v4725 = vadd.f32 0.0, %v4724
        %v4726 = vpop.f32.mrf.mxu0
        %4727 = vmatprep.mubr.f32.mxu0 0.0
        %4728 = vmatmul.mubr.f32.gmra.mxu0 %v4516
        %v4729 = vpop.f32.mrf.mxu0
        %v4730 = vadd.f32 0.0, %v4729
        %v4731 = vpop.f32.mrf.mxu0
        %4732 = vmatprep.mubr.f32.mxu0 0.0
        %4733 = vmatmul.mubr.f32.gmra.mxu0 %v4518
        %v4734 = vpop.f32.mrf.mxu0
        %v4735 = vadd.f32 0.0, %v4734
        %v4736 = vpop.f32.mrf.mxu0
        %4737 = vmatprep.mubr.f32.mxu0 0.0
        %4738 = vmatmul.mubr.f32.gmra.mxu0 %v4520
        %v4739 = vpop.f32.mrf.mxu0
        %v4740 = vadd.f32 0.0, %v4739
        %v4741 = vpop.f32.mrf.mxu0
        %4742 = vmatprep.mubr.f32.mxu0 0.0
        %4743 = vmatmul.mubr.f32.gmra.mxu0 %v4522
        %v4744 = vpop.f32.mrf.mxu0
        %v4745 = vadd.f32 0.0, %v4744
        %v4746 = vpop.f32.mrf.mxu0
        %4747 = vdwg.mxu0
        %v4748 = vrcp.pop %v4524
        %v4749 = vrcp.pop %v4526
        %v4750 = vrcp.pop %v4528
        %v4751 = vrcp.pop %v4530
        %v4752 = vrcp.pop %v4532
        %v4753 = vrcp.pop %v4534
        %v4754 = vrcp.pop %v4536
        %v4755 = vrcp.pop %v4538
        %v4756 = vrcp.pop %v4540
        %v4757 = vrcp.pop %v4542
        %v4758 = vrcp.pop %v4544
        %v4759 = vrcp.pop %v4546
        %v4760 = vrcp.pop %v4548
        %v4761 = vrcp.pop %v4550
        %v4762 = vrcp.pop %v4552
        %v4763 = vrcp.pop %v4554
        %v4764 = vmul.f32 %v4670, %v4748
        %v4765 = vmul.f32 %v4675, %v4749
        %v4766 = vmul.f32 %v4680, %v4750
        %v4767 = vmul.f32 %v4685, %v4751
        %v4768 = vmul.f32 %v4690, %v4752
        %v4769 = vmul.f32 %v4695, %v4753
        %v4770 = vmul.f32 %v4700, %v4754
        %v4771 = vmul.f32 %v4705, %v4755
        %v4772 = vmul.f32 %v4710, %v4756
        %v4773 = vmul.f32 %v4715, %v4757
        %v4774 = vmul.f32 %v4720, %v4758
        %v4775 = vmul.f32 %v4725, %v4759
        %v4776 = vmul.f32 %v4730, %v4760
        %v4777 = vmul.f32 %v4735, %v4761
        %v4778 = vmul.f32 %v4740, %v4762
        %v4779 = vmul.f32 %v4745, %v4763
        %4780 = vrot.lane.b32.xlu0 %v1186, 126
        %v4781 = vpop.permute.xlu0 %4780
        %4782 = vrot.lane.b32.xlu0 %v1187, 126
        %v4783 = vpop.permute.xlu0 %4782
        %4784 = vrot.lane.b32.xlu0 %v1188, 126
        %v4785 = vpop.permute.xlu0 %4784
        %4786 = vrot.lane.b32.xlu0 %v1189, 126
        %v4787 = vpop.permute.xlu0 %4786
        %4788 = vrot.lane.b32.xlu0 %v1190, 126
        %v4789 = vpop.permute.xlu0 %4788
        %4790 = vrot.lane.b32.xlu0 %v1191, 126
        %v4791 = vpop.permute.xlu0 %4790
        %4792 = vrot.lane.b32.xlu0 %v1192, 126
        %v4793 = vpop.permute.xlu0 %4792
        %4794 = vrot.lane.b32.xlu0 %v1193, 126
        %v4795 = vpop.permute.xlu0 %4794
        %4796 = vrot.lane.b32.xlu0 %v1194, 126
        %v4797 = vpop.permute.xlu0 %4796
        %4798 = vrot.lane.b32.xlu0 %v1195, 126
        %v4799 = vpop.permute.xlu0 %4798
        %4800 = vrot.lane.b32.xlu0 %v1196, 126
        %v4801 = vpop.permute.xlu0 %4800
        %4802 = vrot.lane.b32.xlu0 %v1197, 126
        %v4803 = vpop.permute.xlu0 %4802
        %4804 = vrot.lane.b32.xlu0 %v1198, 126
        %v4805 = vpop.permute.xlu0 %4804
        %4806 = vrot.lane.b32.xlu0 %v1199, 126
        %v4807 = vpop.permute.xlu0 %4806
        %4808 = vrot.lane.b32.xlu0 %v1200, 126
        %v4809 = vpop.permute.xlu0 %4808
        %4810 = vrot.lane.b32.xlu0 %v1201, 126
        %v4811 = vpop.permute.xlu0 %4810
        %4812 = vrot.lane.b32.xlu0 %v836, 122
        %v4813 = vpop.permute.xlu0 %4812
        %4814 = vrot.lane.b32.xlu0 %v841, 122
        %v4815 = vpop.permute.xlu0 %4814
        %4816 = vrot.lane.b32.xlu0 %v846, 122
        %v4817 = vpop.permute.xlu0 %4816
        %4818 = vrot.lane.b32.xlu0 %v851, 122
        %v4819 = vpop.permute.xlu0 %4818
        %4820 = vrot.lane.b32.xlu0 %v856, 122
        %v4821 = vpop.permute.xlu0 %4820
        %4822 = vrot.lane.b32.xlu0 %v861, 122
        %v4823 = vpop.permute.xlu0 %4822
        %4824 = vrot.lane.b32.xlu0 %v866, 122
        %v4825 = vpop.permute.xlu0 %4824
        %4826 = vrot.lane.b32.xlu0 %v871, 122
        %v4827 = vpop.permute.xlu0 %4826
        %4828 = vrot.lane.b32.xlu0 %v876, 122
        %v4829 = vpop.permute.xlu0 %4828
        %4830 = vrot.lane.b32.xlu0 %v881, 122
        %v4831 = vpop.permute.xlu0 %4830
        %4832 = vrot.lane.b32.xlu0 %v886, 122
        %v4833 = vpop.permute.xlu0 %4832
        %4834 = vrot.lane.b32.xlu0 %v891, 122
        %v4835 = vpop.permute.xlu0 %4834
        %4836 = vrot.lane.b32.xlu0 %v896, 122
        %v4837 = vpop.permute.xlu0 %4836
        %4838 = vrot.lane.b32.xlu0 %v901, 122
        %v4839 = vpop.permute.xlu0 %4838
        %4840 = vrot.lane.b32.xlu0 %v906, 122
        %v4841 = vpop.permute.xlu0 %4840
        %4842 = vrot.lane.b32.xlu0 %v911, 122
        %v4843 = vpop.permute.xlu0 %4842
        %v4844 = vsel %vm1298, %v4781, 0
        %v4846 = vsel %vm1298, %v4783, 0
        %v4848 = vsel %vm1298, %v4785, 0
        %v4850 = vsel %vm1298, %v4787, 0
        %v4852 = vsel %vm1298, %v4789, 0
        %v4854 = vsel %vm1298, %v4791, 0
        %v4856 = vsel %vm1298, %v4793, 0
        %v4858 = vsel %vm1298, %v4795, 0
        %v4860 = vsel %vm1298, %v4797, 0
        %v4862 = vsel %vm1298, %v4799, 0
        %v4864 = vsel %vm1298, %v4801, 0
        %v4866 = vsel %vm1298, %v4803, 0
        %v4868 = vsel %vm1298, %v4805, 0
        %v4870 = vsel %vm1298, %v4807, 0
        %v4872 = vsel %vm1298, %v4809, 0
        %v4874 = vsel %vm1298, %v4811, 0
        %v4876 = vsel %vm1298, %v4813, 0
        %v4878 = vsel %vm1298, %v4815, 0
        %v4880 = vsel %vm1298, %v4817, 0
        %v4882 = vsel %vm1298, %v4819, 0
        %v4884 = vsel %vm1298, %v4821, 0
        %v4886 = vsel %vm1298, %v4823, 0
        %v4888 = vsel %vm1298, %v4825, 0
        %v4890 = vsel %vm1298, %v4827, 0
        %v4892 = vsel %vm1298, %v4829, 0
        %v4894 = vsel %vm1298, %v4831, 0
        %v4896 = vsel %vm1298, %v4833, 0
        %v4898 = vsel %vm1298, %v4835, 0
        %v4900 = vsel %vm1298, %v4837, 0
        %v4902 = vsel %vm1298, %v4839, 0
        %v4904 = vsel %vm1298, %v4841, 0
        %v4906 = vsel %vm1298, %v4843, 0
        %4908 = vmatprep.subr.mxu0 0.0
        %4909 = vmatpush1.xpose.msra.mxu0 %v4906
        %4910 = vmatprep.subr.mxu0 0.0
        %4911 = vmatpush1.xpose.msra.mxu0 %v4904
        %4912 = vmatprep.subr.mxu0 0.0
        %4913 = vmatpush1.xpose.msra.mxu0 %v4902
        %4914 = vmatprep.subr.mxu0 0.0
        %4915 = vmatpush1.xpose.msra.mxu0 %v4900
        %4916 = vmatprep.subr.mxu0 0.0
        %4917 = vmatpush1.xpose.msra.mxu0 %v4898
        %4918 = vmatprep.subr.mxu0 0.0
        %4919 = vmatpush1.xpose.msra.mxu0 %v4896
        %4920 = vmatprep.subr.mxu0 0.0
        %4921 = vmatpush1.xpose.msra.mxu0 %v4894
        %4922 = vmatprep.subr.mxu0 0.0
        %4923 = vmatpush1.xpose.msra.mxu0 %v4892
        %4924 = vmatprep.subr.mxu0 0.0
        %4925 = vmatpush1.xpose.msra.mxu0 %v4890
        %4926 = vmatprep.subr.mxu0 0.0
        %4927 = vmatpush1.xpose.msra.mxu0 %v4888
        %4928 = vmatprep.subr.mxu0 0.0
        %4929 = vmatpush1.xpose.msra.mxu0 %v4886
        %4930 = vmatprep.subr.mxu0 0.0
        %4931 = vmatpush1.xpose.msra.mxu0 %v4884
        %4932 = vmatprep.subr.mxu0 0.0
        %4933 = vmatpush1.xpose.msra.mxu0 %v4882
        %4934 = vmatprep.subr.mxu0 0.0
        %4935 = vmatpush1.xpose.msra.mxu0 %v4880
        %4936 = vmatprep.subr.mxu0 0.0
        %4937 = vmatpush1.xpose.msra.mxu0 %v4878
        %4938 = vmatprep.subr.mxu0 0.0
        %4939 = vmatpush1.xpose.msra.mxu0 %v4876
        %4940 = vmatprep.subr.mxu0 0.0
        %4941 = vmatpush2.xpose.msra.mxu0 0.0
        %4942 = vmatprep.subr.mxu0 0.0
        %4943 = vmatpush2.xpose.msra.mxu0 0.0
        %4944 = vmatprep.subr.mxu0 0.0
        %4945 = vmatpush2.xpose.msra.mxu0 0.0
        %4946 = vmatprep.subr.mxu0 0.0
        %4947 = vmatpush2.xpose.msra.mxu0 0.0
        %4948 = vmatprep.subr.mxu0 0.0
        %4949 = vmatpush2.xpose.msra.mxu0 0.0
        %4950 = vmatprep.subr.mxu0 0.0
        %4951 = vmatpush2.xpose.msra.mxu0 0.0
        %4952 = vmatprep.subr.mxu0 0.0
        %4953 = vmatpush2.xpose.msra.mxu0 0.0
        %4954 = vmatprep.subr.mxu0 0.0
        %4955 = vmatpush2.xpose.msra.mxu0 0.0
        %4956 = vmatprep.subr.mxu0 0.0
        %4957 = vmatpush2.xpose.msra.mxu0 0.0
        %4958 = vmatprep.subr.mxu0 0.0
        %4959 = vmatpush2.xpose.msra.mxu0 0.0
        %4960 = vmatprep.subr.mxu0 0.0
        %4961 = vmatpush2.xpose.msra.mxu0 0.0
        %4962 = vmatprep.subr.mxu0 0.0
        %4963 = vmatpush2.xpose.msra.mxu0 0.0
        %4964 = vmatprep.subr.mxu0 0.0
        %4965 = vmatpush2.xpose.msra.mxu0 0.0
        %4966 = vmatprep.subr.mxu0 0.0
        %4967 = vmatpush2.xpose.msra.mxu0 0.0
        %4968 = vmatprep.subr.mxu0 0.0
        %4969 = vmatpush2.xpose.msra.mxu0 0.0
        %4970 = vmatprep.subr.mxu0 0.0
        %4971 = vmatpush2.xpose.msra.mxu0 0.0
        %4972 = vmatprep.mubr.f32.mxu0 0.0
        %4973 = vmatmul.mubr.f32.gmra.mxu0 %v4844
        %v4974 = vpop.f32.mrf.mxu0
        %v4975 = vadd.f32 %v487, %v4974
        %v4976 = vpop.f32.mrf.mxu0
        %4977 = vmatprep.mubr.f32.mxu0 0.0
        %4978 = vmatmul.mubr.f32.gmra.mxu0 %v4846
        %v4979 = vpop.f32.mrf.mxu0
        %v4980 = vadd.f32 %v488, %v4979
        %v4981 = vpop.f32.mrf.mxu0
        %4982 = vmatprep.mubr.f32.mxu0 0.0
        %4983 = vmatmul.mubr.f32.gmra.mxu0 %v4848
        %v4984 = vpop.f32.mrf.mxu0
        %v4985 = vadd.f32 %v489, %v4984
        %v4986 = vpop.f32.mrf.mxu0
        %4987 = vmatprep.mubr.f32.mxu0 0.0
        %4988 = vmatmul.mubr.f32.gmra.mxu0 %v4850
        %v4989 = vpop.f32.mrf.mxu0
        %v4990 = vadd.f32 %v490, %v4989
        %v4991 = vpop.f32.mrf.mxu0
        %4992 = vmatprep.mubr.f32.mxu0 0.0
        %4993 = vmatmul.mubr.f32.gmra.mxu0 %v4852
        %v4994 = vpop.f32.mrf.mxu0
        %v4995 = vadd.f32 %v491, %v4994
        %v4996 = vpop.f32.mrf.mxu0
        %4997 = vmatprep.mubr.f32.mxu0 0.0
        %4998 = vmatmul.mubr.f32.gmra.mxu0 %v4854
        %v4999 = vpop.f32.mrf.mxu0
        %v5000 = vadd.f32 %v492, %v4999
        %v5001 = vpop.f32.mrf.mxu0
        %5002 = vmatprep.mubr.f32.mxu0 0.0
        %5003 = vmatmul.mubr.f32.gmra.mxu0 %v4856
        %v5004 = vpop.f32.mrf.mxu0
        %v5005 = vadd.f32 %v493, %v5004
        %v5006 = vpop.f32.mrf.mxu0
        %5007 = vmatprep.mubr.f32.mxu0 0.0
        %5008 = vmatmul.mubr.f32.gmra.mxu0 %v4858
        %v5009 = vpop.f32.mrf.mxu0
        %v5010 = vadd.f32 %v494, %v5009
        %v5011 = vpop.f32.mrf.mxu0
        %5012 = vmatprep.mubr.f32.mxu0 0.0
        %5013 = vmatmul.mubr.f32.gmra.mxu0 %v4860
        %v5014 = vpop.f32.mrf.mxu0
        %v5015 = vadd.f32 %v495, %v5014
        %v5016 = vpop.f32.mrf.mxu0
        %5017 = vmatprep.mubr.f32.mxu0 0.0
        %5018 = vmatmul.mubr.f32.gmra.mxu0 %v4862
        %v5019 = vpop.f32.mrf.mxu0
        %v5020 = vadd.f32 %v496, %v5019
        %v5021 = vpop.f32.mrf.mxu0
        %5022 = vmatprep.mubr.f32.mxu0 0.0
        %5023 = vmatmul.mubr.f32.gmra.mxu0 %v4864
        %v5024 = vpop.f32.mrf.mxu0
        %v5025 = vadd.f32 %v497, %v5024
        %v5026 = vpop.f32.mrf.mxu0
        %5027 = vmatprep.mubr.f32.mxu0 0.0
        %5028 = vmatmul.mubr.f32.gmra.mxu0 %v4866
        %v5029 = vpop.f32.mrf.mxu0
        %v5030 = vadd.f32 %v498, %v5029
        %v5031 = vpop.f32.mrf.mxu0
        %5032 = vmatprep.mubr.f32.mxu0 0.0
        %5033 = vmatmul.mubr.f32.gmra.mxu0 %v4868
        %v5034 = vpop.f32.mrf.mxu0
        %v5035 = vadd.f32 %v499, %v5034
        %v5036 = vpop.f32.mrf.mxu0
        %5037 = vmatprep.mubr.f32.mxu0 0.0
        %5038 = vmatmul.mubr.f32.gmra.mxu0 %v4870
        %v5039 = vpop.f32.mrf.mxu0
        %v5040 = vadd.f32 %v500, %v5039
        %v5041 = vpop.f32.mrf.mxu0
        %5042 = vmatprep.mubr.f32.mxu0 0.0
        %5043 = vmatmul.mubr.f32.gmra.mxu0 %v4872
        %v5044 = vpop.f32.mrf.mxu0
        %v5045 = vadd.f32 %v501, %v5044
        %v5046 = vpop.f32.mrf.mxu0
        %5047 = vmatprep.mubr.f32.mxu0 0.0
        %5048 = vmatmul.mubr.f32.gmra.mxu0 %v4874
        %v5049 = vpop.f32.mrf.mxu0
        %v5050 = vadd.f32 %v502, %v5049
        %v5051 = vpop.f32.mrf.mxu0
        %5052 = vdwg.mxu0
        %5053 = vmax.xlane.f32.xlu0 %v4975
        %v5054 = vpop.xlane.xlu0 %5053
        %5055 = vmax.xlane.f32.xlu0 %v4980
        %v5056 = vpop.xlane.xlu0 %5055
        %5057 = vmax.xlane.f32.xlu0 %v4985
        %v5058 = vpop.xlane.xlu0 %5057
        %5059 = vmax.xlane.f32.xlu0 %v4990
        %v5060 = vpop.xlane.xlu0 %5059
        %5061 = vmax.xlane.f32.xlu0 %v4995
        %v5062 = vpop.xlane.xlu0 %5061
        %5063 = vmax.xlane.f32.xlu0 %v5000
        %v5064 = vpop.xlane.xlu0 %5063
        %5065 = vmax.xlane.f32.xlu0 %v5005
        %v5066 = vpop.xlane.xlu0 %5065
        %5067 = vmax.xlane.f32.xlu0 %v5010
        %v5068 = vpop.xlane.xlu0 %5067
        %5069 = vmax.xlane.f32.xlu0 %v5015
        %v5070 = vpop.xlane.xlu0 %5069
        %5071 = vmax.xlane.f32.xlu0 %v5020
        %v5072 = vpop.xlane.xlu0 %5071
        %5073 = vmax.xlane.f32.xlu0 %v5025
        %v5074 = vpop.xlane.xlu0 %5073
        %5075 = vmax.xlane.f32.xlu0 %v5030
        %v5076 = vpop.xlane.xlu0 %5075
        %5077 = vmax.xlane.f32.xlu0 %v5035
        %v5078 = vpop.xlane.xlu0 %5077
        %5079 = vmax.xlane.f32.xlu0 %v5040
        %v5080 = vpop.xlane.xlu0 %5079
        %5081 = vmax.xlane.f32.xlu0 %v5045
        %v5082 = vpop.xlane.xlu0 %5081
        %5083 = vmax.xlane.f32.xlu0 %v5050
        %v5084 = vpop.xlane.xlu0 %5083
        %v5085 = vsub.f32 %v4975, %v5054
        %v5086 = vsub.f32 %v4980, %v5056
        %v5087 = vsub.f32 %v4985, %v5058
        %v5088 = vsub.f32 %v4990, %v5060
        %v5089 = vsub.f32 %v4995, %v5062
        %v5090 = vsub.f32 %v5000, %v5064
        %v5091 = vsub.f32 %v5005, %v5066
        %v5092 = vsub.f32 %v5010, %v5068
        %v5093 = vsub.f32 %v5015, %v5070
        %v5094 = vsub.f32 %v5020, %v5072
        %v5095 = vsub.f32 %v5025, %v5074
        %v5096 = vsub.f32 %v5030, %v5076
        %v5097 = vsub.f32 %v5035, %v5078
        %v5098 = vsub.f32 %v5040, %v5080
        %v5099 = vsub.f32 %v5045, %v5082
        %v5100 = vsub.f32 %v5050, %v5084
        %v5101 = vmul.f32 %v5085, 1.442695
        %v5102 = vpow.pop %v5101
        %v5103 = vmul.f32 %v5086, 1.442695
        %v5104 = vpow.pop %v5103
        %v5105 = vmul.f32 %v5087, 1.442695
        %v5106 = vpow.pop %v5105
        %v5107 = vmul.f32 %v5088, 1.442695
        %v5108 = vpow.pop %v5107
        %v5109 = vmul.f32 %v5089, 1.442695
        %v5110 = vpow.pop %v5109
        %v5111 = vmul.f32 %v5090, 1.442695
        %v5112 = vpow.pop %v5111
        %v5113 = vmul.f32 %v5091, 1.442695
        %v5114 = vpow.pop %v5113
        %v5115 = vmul.f32 %v5092, 1.442695
        %v5116 = vpow.pop %v5115
        %v5117 = vmul.f32 %v5093, 1.442695
        %v5118 = vpow.pop %v5117
        %v5119 = vmul.f32 %v5094, 1.442695
        %v5120 = vpow.pop %v5119
        %v5121 = vmul.f32 %v5095, 1.442695
        %v5122 = vpow.pop %v5121
        %v5123 = vmul.f32 %v5096, 1.442695
        %v5124 = vpow.pop %v5123
        %v5125 = vmul.f32 %v5097, 1.442695
        %v5126 = vpow.pop %v5125
        %v5127 = vmul.f32 %v5098, 1.442695
        %v5128 = vpow.pop %v5127
        %v5129 = vmul.f32 %v5099, 1.442695
        %v5130 = vpow.pop %v5129
        %v5131 = vmul.f32 %v5100, 1.442695
        %v5132 = vpow.pop %v5131
        %5133 = vadd.xlane.f32.xlu0 %v5102
        %v5134 = vpop.xlane.xlu0 %5133
        %5135 = vadd.xlane.f32.xlu0 %v5104
        %v5136 = vpop.xlane.xlu0 %5135
        %5137 = vadd.xlane.f32.xlu0 %v5106
        %v5138 = vpop.xlane.xlu0 %5137
        %5139 = vadd.xlane.f32.xlu0 %v5108
        %v5140 = vpop.xlane.xlu0 %5139
        %5141 = vadd.xlane.f32.xlu0 %v5110
        %v5142 = vpop.xlane.xlu0 %5141
        %5143 = vadd.xlane.f32.xlu0 %v5112
        %v5144 = vpop.xlane.xlu0 %5143
        %5145 = vadd.xlane.f32.xlu0 %v5114
        %v5146 = vpop.xlane.xlu0 %5145
        %5147 = vadd.xlane.f32.xlu0 %v5116
        %v5148 = vpop.xlane.xlu0 %5147
        %5149 = vadd.xlane.f32.xlu0 %v5118
        %v5150 = vpop.xlane.xlu0 %5149
        %5151 = vadd.xlane.f32.xlu0 %v5120
        %v5152 = vpop.xlane.xlu0 %5151
        %5153 = vadd.xlane.f32.xlu0 %v5122
        %v5154 = vpop.xlane.xlu0 %5153
        %5155 = vadd.xlane.f32.xlu0 %v5124
        %v5156 = vpop.xlane.xlu0 %5155
        %5157 = vadd.xlane.f32.xlu0 %v5126
        %v5158 = vpop.xlane.xlu0 %5157
        %5159 = vadd.xlane.f32.xlu0 %v5128
        %v5160 = vpop.xlane.xlu0 %5159
        %5161 = vadd.xlane.f32.xlu0 %v5130
        %v5162 = vpop.xlane.xlu0 %5161
        %5163 = vadd.xlane.f32.xlu0 %v5132
        %v5164 = vpop.xlane.xlu0 %5163
        %5165 = vrot.lane.b32.xlu0 %v836, 118
        %v5166 = vpop.permute.xlu0 %5165
        %5167 = vrot.lane.b32.xlu0 %v841, 118
        %v5168 = vpop.permute.xlu0 %5167
        %5169 = vrot.lane.b32.xlu0 %v846, 118
        %v5170 = vpop.permute.xlu0 %5169
        %5171 = vrot.lane.b32.xlu0 %v851, 118
        %v5172 = vpop.permute.xlu0 %5171
        %5173 = vrot.lane.b32.xlu0 %v856, 118
        %v5174 = vpop.permute.xlu0 %5173
        %5175 = vrot.lane.b32.xlu0 %v861, 118
        %v5176 = vpop.permute.xlu0 %5175
        %5177 = vrot.lane.b32.xlu0 %v866, 118
        %v5178 = vpop.permute.xlu0 %5177
        %5179 = vrot.lane.b32.xlu0 %v871, 118
        %v5180 = vpop.permute.xlu0 %5179
        %5181 = vrot.lane.b32.xlu0 %v876, 118
        %v5182 = vpop.permute.xlu0 %5181
        %5183 = vrot.lane.b32.xlu0 %v881, 118
        %v5184 = vpop.permute.xlu0 %5183
        %5185 = vrot.lane.b32.xlu0 %v886, 118
        %v5186 = vpop.permute.xlu0 %5185
        %5187 = vrot.lane.b32.xlu0 %v891, 118
        %v5188 = vpop.permute.xlu0 %5187
        %5189 = vrot.lane.b32.xlu0 %v896, 118
        %v5190 = vpop.permute.xlu0 %5189
        %5191 = vrot.lane.b32.xlu0 %v901, 118
        %v5192 = vpop.permute.xlu0 %5191
        %5193 = vrot.lane.b32.xlu0 %v906, 118
        %v5194 = vpop.permute.xlu0 %5193
        %5195 = vrot.lane.b32.xlu0 %v911, 118
        %v5196 = vpop.permute.xlu0 %5195
        %5213 = vmatprep.subr.mxu0 0.0
        %5214 = vmatpush1.msra.mxu0 %v5196
        %5215 = vmatprep.subr.mxu0 0.0
        %5216 = vmatpush1.msra.mxu0 %v5194
        %5217 = vmatprep.subr.mxu0 0.0
        %5218 = vmatpush1.msra.mxu0 %v5192
        %5219 = vmatprep.subr.mxu0 0.0
        %5220 = vmatpush1.msra.mxu0 %v5190
        %5221 = vmatprep.subr.mxu0 0.0
        %5222 = vmatpush1.msra.mxu0 %v5188
        %5223 = vmatprep.subr.mxu0 0.0
        %5224 = vmatpush1.msra.mxu0 %v5186
        %5225 = vmatprep.subr.mxu0 0.0
        %5226 = vmatpush1.msra.mxu0 %v5184
        %5227 = vmatprep.subr.mxu0 0.0
        %5228 = vmatpush1.msra.mxu0 %v5182
        %5229 = vmatprep.subr.mxu0 0.0
        %5230 = vmatpush1.msra.mxu0 %v5180
        %5231 = vmatprep.subr.mxu0 0.0
        %5232 = vmatpush1.msra.mxu0 %v5178
        %5233 = vmatprep.subr.mxu0 0.0
        %5234 = vmatpush1.msra.mxu0 %v5176
        %5235 = vmatprep.subr.mxu0 0.0
        %5236 = vmatpush1.msra.mxu0 %v5174
        %5237 = vmatprep.subr.mxu0 0.0
        %5238 = vmatpush1.msra.mxu0 %v5172
        %5239 = vmatprep.subr.mxu0 0.0
        %5240 = vmatpush1.msra.mxu0 %v5170
        %5241 = vmatprep.subr.mxu0 0.0
        %5242 = vmatpush1.msra.mxu0 %v5168
        %5243 = vmatprep.subr.mxu0 0.0
        %5244 = vmatpush1.msra.mxu0 %v5166
        %5245 = vmatprep.subr.mxu0 0.0
        %5246 = vmatpush2.msra.mxu0 0.0
        %5247 = vmatprep.subr.mxu0 0.0
        %5248 = vmatpush2.msra.mxu0 0.0
        %5249 = vmatprep.subr.mxu0 0.0
        %5250 = vmatpush2.msra.mxu0 0.0
        %5251 = vmatprep.subr.mxu0 0.0
        %5252 = vmatpush2.msra.mxu0 0.0
        %5253 = vmatprep.subr.mxu0 0.0
        %5254 = vmatpush2.msra.mxu0 0.0
        %5255 = vmatprep.subr.mxu0 0.0
        %5256 = vmatpush2.msra.mxu0 0.0
        %5257 = vmatprep.subr.mxu0 0.0
        %5258 = vmatpush2.msra.mxu0 0.0
        %5259 = vmatprep.subr.mxu0 0.0
        %5260 = vmatpush2.msra.mxu0 0.0
        %5261 = vmatprep.subr.mxu0 0.0
        %5262 = vmatpush2.msra.mxu0 0.0
        %5263 = vmatprep.subr.mxu0 0.0
        %5264 = vmatpush2.msra.mxu0 0.0
        %5265 = vmatprep.subr.mxu0 0.0
        %5266 = vmatpush2.msra.mxu0 0.0
        %5267 = vmatprep.subr.mxu0 0.0
        %5268 = vmatpush2.msra.mxu0 0.0
        %5269 = vmatprep.subr.mxu0 0.0
        %5270 = vmatpush2.msra.mxu0 0.0
        %5271 = vmatprep.subr.mxu0 0.0
        %5272 = vmatpush2.msra.mxu0 0.0
        %5273 = vmatprep.subr.mxu0 0.0
        %5274 = vmatpush2.msra.mxu0 0.0
        %5275 = vmatprep.subr.mxu0 0.0
        %5276 = vmatpush2.msra.mxu0 0.0
        %5277 = vmatprep.mubr.f32.mxu0 0.0
        %5278 = vmatmul.mubr.f32.gmra.mxu0 %v5102
        %v5279 = vpop.f32.mrf.mxu0
        %v5280 = vadd.f32 0.0, %v5279
        %v5281 = vpop.f32.mrf.mxu0
        %5282 = vmatprep.mubr.f32.mxu0 0.0
        %5283 = vmatmul.mubr.f32.gmra.mxu0 %v5104
        %v5284 = vpop.f32.mrf.mxu0
        %v5285 = vadd.f32 0.0, %v5284
        %v5286 = vpop.f32.mrf.mxu0
        %5287 = vmatprep.mubr.f32.mxu0 0.0
        %5288 = vmatmul.mubr.f32.gmra.mxu0 %v5106
        %v5289 = vpop.f32.mrf.mxu0
        %v5290 = vadd.f32 0.0, %v5289
        %v5291 = vpop.f32.mrf.mxu0
        %5292 = vmatprep.mubr.f32.mxu0 0.0
        %5293 = vmatmul.mubr.f32.gmra.mxu0 %v5108
        %v5294 = vpop.f32.mrf.mxu0
        %v5295 = vadd.f32 0.0, %v5294
        %v5296 = vpop.f32.mrf.mxu0
        %5297 = vmatprep.mubr.f32.mxu0 0.0
        %5298 = vmatmul.mubr.f32.gmra.mxu0 %v5110
        %v5299 = vpop.f32.mrf.mxu0
        %v5300 = vadd.f32 0.0, %v5299
        %v5301 = vpop.f32.mrf.mxu0
        %5302 = vmatprep.mubr.f32.mxu0 0.0
        %5303 = vmatmul.mubr.f32.gmra.mxu0 %v5112
        %v5304 = vpop.f32.mrf.mxu0
        %v5305 = vadd.f32 0.0, %v5304
        %v5306 = vpop.f32.mrf.mxu0
        %5307 = vmatprep.mubr.f32.mxu0 0.0
        %5308 = vmatmul.mubr.f32.gmra.mxu0 %v5114
        %v5309 = vpop.f32.mrf.mxu0
        %v5310 = vadd.f32 0.0, %v5309
        %v5311 = vpop.f32.mrf.mxu0
        %5312 = vmatprep.mubr.f32.mxu0 0.0
        %5313 = vmatmul.mubr.f32.gmra.mxu0 %v5116
        %v5314 = vpop.f32.mrf.mxu0
        %v5315 = vadd.f32 0.0, %v5314
        %v5316 = vpop.f32.mrf.mxu0
        %5317 = vmatprep.mubr.f32.mxu0 0.0
        %5318 = vmatmul.mubr.f32.gmra.mxu0 %v5118
        %v5319 = vpop.f32.mrf.mxu0
        %v5320 = vadd.f32 0.0, %v5319
        %v5321 = vpop.f32.mrf.mxu0
        %5322 = vmatprep.mubr.f32.mxu0 0.0
        %5323 = vmatmul.mubr.f32.gmra.mxu0 %v5120
        %v5324 = vpop.f32.mrf.mxu0
        %v5325 = vadd.f32 0.0, %v5324
        %v5326 = vpop.f32.mrf.mxu0
        %5327 = vmatprep.mubr.f32.mxu0 0.0
        %5328 = vmatmul.mubr.f32.gmra.mxu0 %v5122
        %v5329 = vpop.f32.mrf.mxu0
        %v5330 = vadd.f32 0.0, %v5329
        %v5331 = vpop.f32.mrf.mxu0
        %5332 = vmatprep.mubr.f32.mxu0 0.0
        %5333 = vmatmul.mubr.f32.gmra.mxu0 %v5124
        %v5334 = vpop.f32.mrf.mxu0
        %v5335 = vadd.f32 0.0, %v5334
        %v5336 = vpop.f32.mrf.mxu0
        %5337 = vmatprep.mubr.f32.mxu0 0.0
        %5338 = vmatmul.mubr.f32.gmra.mxu0 %v5126
        %v5339 = vpop.f32.mrf.mxu0
        %v5340 = vadd.f32 0.0, %v5339
        %v5341 = vpop.f32.mrf.mxu0
        %5342 = vmatprep.mubr.f32.mxu0 0.0
        %5343 = vmatmul.mubr.f32.gmra.mxu0 %v5128
        %v5344 = vpop.f32.mrf.mxu0
        %v5345 = vadd.f32 0.0, %v5344
        %v5346 = vpop.f32.mrf.mxu0
        %5347 = vmatprep.mubr.f32.mxu0 0.0
        %5348 = vmatmul.mubr.f32.gmra.mxu0 %v5130
        %v5349 = vpop.f32.mrf.mxu0
        %v5350 = vadd.f32 0.0, %v5349
        %v5351 = vpop.f32.mrf.mxu0
        %5352 = vmatprep.mubr.f32.mxu0 0.0
        %5353 = vmatmul.mubr.f32.gmra.mxu0 %v5132
        %v5354 = vpop.f32.mrf.mxu0
        %v5355 = vadd.f32 0.0, %v5354
        %v5356 = vpop.f32.mrf.mxu0
        %5357 = vdwg.mxu0
        %v5358 = vrcp.pop %v5134
        %v5359 = vrcp.pop %v5136
        %v5360 = vrcp.pop %v5138
        %v5361 = vrcp.pop %v5140
        %v5362 = vrcp.pop %v5142
        %v5363 = vrcp.pop %v5144
        %v5364 = vrcp.pop %v5146
        %v5365 = vrcp.pop %v5148
        %v5366 = vrcp.pop %v5150
        %v5367 = vrcp.pop %v5152
        %v5368 = vrcp.pop %v5154
        %v5369 = vrcp.pop %v5156
        %v5370 = vrcp.pop %v5158
        %v5371 = vrcp.pop %v5160
        %v5372 = vrcp.pop %v5162
        %v5373 = vrcp.pop %v5164
        %v5374 = vmul.f32 %v5280, %v5358
        %v5375 = vmul.f32 %v5285, %v5359
        %v5376 = vmul.f32 %v5290, %v5360
        %v5377 = vmul.f32 %v5295, %v5361
        %v5378 = vmul.f32 %v5300, %v5362
        %v5379 = vmul.f32 %v5305, %v5363
        %v5380 = vmul.f32 %v5310, %v5364
        %v5381 = vmul.f32 %v5315, %v5365
        %v5382 = vmul.f32 %v5320, %v5366
        %v5383 = vmul.f32 %v5325, %v5367
        %v5384 = vmul.f32 %v5330, %v5368
        %v5385 = vmul.f32 %v5335, %v5369
        %v5386 = vmul.f32 %v5340, %v5370
        %v5387 = vmul.f32 %v5345, %v5371
        %v5388 = vmul.f32 %v5350, %v5372
        %v5389 = vmul.f32 %v5355, %v5373
        %v5391 = vsel %vm1298, %v5374, 0
        %v5394 = vsel %vm1298, %v5375, 0
        %v5397 = vsel %vm1298, %v5376, 0
        %v5400 = vsel %vm1298, %v5377, 0
        %v5403 = vsel %vm1298, %v5378, 0
        %v5406 = vsel %vm1298, %v5379, 0
        %v5409 = vsel %vm1298, %v5380, 0
        %v5412 = vsel %vm1298, %v5381, 0
        %v5415 = vsel %vm1298, %v5382, 0
        %v5418 = vsel %vm1298, %v5383, 0
        %v5421 = vsel %vm1298, %v5384, 0
        %v5424 = vsel %vm1298, %v5385, 0
        %v5427 = vsel %vm1298, %v5386, 0
        %v5430 = vsel %vm1298, %v5387, 0
        %v5433 = vsel %vm1298, %v5388, 0
        %v5436 = vsel %vm1298, %v5389, 0
        %5438 = vmatprep.subr.mxu0 0.0
        %5439 = vmatpush1.xpose.msra.mxu0 %v5436
        %5440 = vmatprep.subr.mxu0 0.0
        %5441 = vmatpush1.xpose.msra.mxu0 %v5433
        %5442 = vmatprep.subr.mxu0 0.0
        %5443 = vmatpush1.xpose.msra.mxu0 %v5430
        %5444 = vmatprep.subr.mxu0 0.0
        %5445 = vmatpush1.xpose.msra.mxu0 %v5427
        %5446 = vmatprep.subr.mxu0 0.0
        %5447 = vmatpush1.xpose.msra.mxu0 %v5424
        %5448 = vmatprep.subr.mxu0 0.0
        %5449 = vmatpush1.xpose.msra.mxu0 %v5421
        %5450 = vmatprep.subr.mxu0 0.0
        %5451 = vmatpush1.xpose.msra.mxu0 %v5418
        %5452 = vmatprep.subr.mxu0 0.0
        %5453 = vmatpush1.xpose.msra.mxu0 %v5415
        %5454 = vmatprep.subr.mxu0 0.0
        %5455 = vmatpush1.xpose.msra.mxu0 %v5412
        %5456 = vmatprep.subr.mxu0 0.0
        %5457 = vmatpush1.xpose.msra.mxu0 %v5409
        %5458 = vmatprep.subr.mxu0 0.0
        %5459 = vmatpush1.xpose.msra.mxu0 %v5406
        %5460 = vmatprep.subr.mxu0 0.0
        %5461 = vmatpush1.xpose.msra.mxu0 %v5403
        %5462 = vmatprep.subr.mxu0 0.0
        %5463 = vmatpush1.xpose.msra.mxu0 %v5400
        %5464 = vmatprep.subr.mxu0 0.0
        %5465 = vmatpush1.xpose.msra.mxu0 %v5397
        %5466 = vmatprep.subr.mxu0 0.0
        %5467 = vmatpush1.xpose.msra.mxu0 %v5394
        %5468 = vmatprep.subr.mxu0 0.0
        %5469 = vmatpush1.xpose.msra.mxu0 %v5391
        %5470 = vmatprep.subr.mxu0 0.0
        %5471 = vmatpush2.xpose.msra.mxu0 0.0
        %5472 = vmatprep.subr.mxu0 0.0
        %5473 = vmatpush2.xpose.msra.mxu0 0.0
        %5474 = vmatprep.subr.mxu0 0.0
        %5475 = vmatpush2.xpose.msra.mxu0 0.0
        %5476 = vmatprep.subr.mxu0 0.0
        %5477 = vmatpush2.xpose.msra.mxu0 0.0
        %5478 = vmatprep.subr.mxu0 0.0
        %5479 = vmatpush2.xpose.msra.mxu0 0.0
        %5480 = vmatprep.subr.mxu0 0.0
        %5481 = vmatpush2.xpose.msra.mxu0 0.0
        %5482 = vmatprep.subr.mxu0 0.0
        %5483 = vmatpush2.xpose.msra.mxu0 0.0
        %5484 = vmatprep.subr.mxu0 0.0
        %5485 = vmatpush2.xpose.msra.mxu0 0.0
        %5486 = vmatprep.subr.mxu0 0.0
        %5487 = vmatpush2.xpose.msra.mxu0 0.0
        %5488 = vmatprep.subr.mxu0 0.0
        %5489 = vmatpush2.xpose.msra.mxu0 0.0
        %5490 = vmatprep.subr.mxu0 0.0
        %5491 = vmatpush2.xpose.msra.mxu0 0.0
        %5492 = vmatprep.subr.mxu0 0.0
        %5493 = vmatpush2.xpose.msra.mxu0 0.0
        %5494 = vmatprep.subr.mxu0 0.0
        %5495 = vmatpush2.xpose.msra.mxu0 0.0
        %5496 = vmatprep.subr.mxu0 0.0
        %5497 = vmatpush2.xpose.msra.mxu0 0.0
        %5498 = vmatprep.subr.mxu0 0.0
        %5499 = vmatpush2.xpose.msra.mxu0 0.0
        %5500 = vmatprep.subr.mxu0 0.0
        %5501 = vmatpush2.xpose.msra.mxu0 0.0
        %5502 = vmatprep.mubr.f32.mxu0 0.0
        %5503 = vmatmul.mubr.f32.gmra.mxu0 %v2474
        %v5504 = vpop.f32.mrf.mxu0
        %v5505 = vadd.f32 0.0, %v5504
        %v5506 = vpop.f32.mrf.mxu0
        %5507 = vdwg.mxu0
        %v5509 = vsel %vm1298, %v4764, 0
        %v5512 = vsel %vm1298, %v4765, 0
        %v5515 = vsel %vm1298, %v4766, 0
        %v5518 = vsel %vm1298, %v4767, 0
        %v5521 = vsel %vm1298, %v4768, 0
        %v5524 = vsel %vm1298, %v4769, 0
        %v5527 = vsel %vm1298, %v4770, 0
        %v5530 = vsel %vm1298, %v4771, 0
        %v5533 = vsel %vm1298, %v4772, 0
        %v5536 = vsel %vm1298, %v4773, 0
        %v5539 = vsel %vm1298, %v4774, 0
        %v5542 = vsel %vm1298, %v4775, 0
        %v5545 = vsel %vm1298, %v4776, 0
        %v5548 = vsel %vm1298, %v4777, 0
        %v5551 = vsel %vm1298, %v4778, 0
        %v5554 = vsel %vm1298, %v4779, 0
        %5556 = vmatprep.subr.mxu0 0.0
        %5557 = vmatpush1.xpose.msra.mxu0 %v5554
        %5558 = vmatprep.subr.mxu0 0.0
        %5559 = vmatpush1.xpose.msra.mxu0 %v5551
        %5560 = vmatprep.subr.mxu0 0.0
        %5561 = vmatpush1.xpose.msra.mxu0 %v5548
        %5562 = vmatprep.subr.mxu0 0.0
        %5563 = vmatpush1.xpose.msra.mxu0 %v5545
        %5564 = vmatprep.subr.mxu0 0.0
        %5565 = vmatpush1.xpose.msra.mxu0 %v5542
        %5566 = vmatprep.subr.mxu0 0.0
        %5567 = vmatpush1.xpose.msra.mxu0 %v5539
        %5568 = vmatprep.subr.mxu0 0.0
        %5569 = vmatpush1.xpose.msra.mxu0 %v5536
        %5570 = vmatprep.subr.mxu0 0.0
        %5571 = vmatpush1.xpose.msra.mxu0 %v5533
        %5572 = vmatprep.subr.mxu0 0.0
        %5573 = vmatpush1.xpose.msra.mxu0 %v5530
        %5574 = vmatprep.subr.mxu0 0.0
        %5575 = vmatpush1.xpose.msra.mxu0 %v5527
        %5576 = vmatprep.subr.mxu0 0.0
        %5577 = vmatpush1.xpose.msra.mxu0 %v5524
        %5578 = vmatprep.subr.mxu0 0.0
        %5579 = vmatpush1.xpose.msra.mxu0 %v5521
        %5580 = vmatprep.subr.mxu0 0.0
        %5581 = vmatpush1.xpose.msra.mxu0 %v5518
        %5582 = vmatprep.subr.mxu0 0.0
        %5583 = vmatpush1.xpose.msra.mxu0 %v5515
        %5584 = vmatprep.subr.mxu0 0.0
        %5585 = vmatpush1.xpose.msra.mxu0 %v5512
        %5586 = vmatprep.subr.mxu0 0.0
        %5587 = vmatpush1.xpose.msra.mxu0 %v5509
        %5588 = vmatprep.subr.mxu0 0.0
        %5589 = vmatpush2.xpose.msra.mxu0 0.0
        %5590 = vmatprep.subr.mxu0 0.0
        %5591 = vmatpush2.xpose.msra.mxu0 0.0
        %5592 = vmatprep.subr.mxu0 0.0
        %5593 = vmatpush2.xpose.msra.mxu0 0.0
        %5594 = vmatprep.subr.mxu0 0.0
        %5595 = vmatpush2.xpose.msra.mxu0 0.0
        %5596 = vmatprep.subr.mxu0 0.0
        %5597 = vmatpush2.xpose.msra.mxu0 0.0
        %5598 = vmatprep.subr.mxu0 0.0
        %5599 = vmatpush2.xpose.msra.mxu0 0.0
        %5600 = vmatprep.subr.mxu0 0.0
        %5601 = vmatpush2.xpose.msra.mxu0 0.0
        %5602 = vmatprep.subr.mxu0 0.0
        %5603 = vmatpush2.xpose.msra.mxu0 0.0
        %5604 = vmatprep.subr.mxu0 0.0
        %5605 = vmatpush2.xpose.msra.mxu0 0.0
        %5606 = vmatprep.subr.mxu0 0.0
        %5607 = vmatpush2.xpose.msra.mxu0 0.0
        %5608 = vmatprep.subr.mxu0 0.0
        %5609 = vmatpush2.xpose.msra.mxu0 0.0
        %5610 = vmatprep.subr.mxu0 0.0
        %5611 = vmatpush2.xpose.msra.mxu0 0.0
        %5612 = vmatprep.subr.mxu0 0.0
        %5613 = vmatpush2.xpose.msra.mxu0 0.0
        %5614 = vmatprep.subr.mxu0 0.0
        %5615 = vmatpush2.xpose.msra.mxu0 0.0
        %5616 = vmatprep.subr.mxu0 0.0
        %5617 = vmatpush2.xpose.msra.mxu0 0.0
        %5618 = vmatprep.subr.mxu0 0.0
        %5619 = vmatpush2.xpose.msra.mxu0 0.0
        %5620 = vmatprep.mubr.f32.mxu0 0.0
        %5621 = vmatmul.mubr.f32.gmra.mxu0 %v2594
        %v5622 = vpop.f32.mrf.mxu0
        %v5623 = vadd.f32 %v5505, %v5622
        %v5624 = vpop.f32.mrf.mxu0
        %5625 = vdwg.mxu0
        %5642 = vrot.lane.b32.xlu0 %v916, 124
        %v5643 = vpop.permute.xlu0 %5642
        %5644 = vrot.lane.b32.xlu0 %v921, 124
        %v5645 = vpop.permute.xlu0 %5644
        %5646 = vrot.lane.b32.xlu0 %v926, 124
        %v5647 = vpop.permute.xlu0 %5646
        %5648 = vrot.lane.b32.xlu0 %v931, 124
        %v5649 = vpop.permute.xlu0 %5648
        %5650 = vrot.lane.b32.xlu0 %v936, 124
        %v5651 = vpop.permute.xlu0 %5650
        %5652 = vrot.lane.b32.xlu0 %v941, 124
        %v5653 = vpop.permute.xlu0 %5652
        %5654 = vrot.lane.b32.xlu0 %v946, 124
        %v5655 = vpop.permute.xlu0 %5654
        %5656 = vrot.lane.b32.xlu0 %v951, 124
        %v5657 = vpop.permute.xlu0 %5656
        %5658 = vrot.lane.b32.xlu0 %v956, 124
        %v5659 = vpop.permute.xlu0 %5658
        %5660 = vrot.lane.b32.xlu0 %v961, 124
        %v5661 = vpop.permute.xlu0 %5660
        %5662 = vrot.lane.b32.xlu0 %v966, 124
        %v5663 = vpop.permute.xlu0 %5662
        %5664 = vrot.lane.b32.xlu0 %v971, 124
        %v5665 = vpop.permute.xlu0 %5664
        %5666 = vrot.lane.b32.xlu0 %v976, 124
        %v5667 = vpop.permute.xlu0 %5666
        %5668 = vrot.lane.b32.xlu0 %v981, 124
        %v5669 = vpop.permute.xlu0 %5668
        %5670 = vrot.lane.b32.xlu0 %v986, 124
        %v5671 = vpop.permute.xlu0 %5670
        %5672 = vrot.lane.b32.xlu0 %v991, 124
        %v5673 = vpop.permute.xlu0 %5672
        %v5675 = vsel %vm1298, %v1202, 0
        %v5678 = vsel %vm1298, %v1203, 0
        %v5681 = vsel %vm1298, %v1204, 0
        %v5684 = vsel %vm1298, %v1205, 0
        %v5687 = vsel %vm1298, %v1206, 0
        %v5690 = vsel %vm1298, %v1207, 0
        %v5693 = vsel %vm1298, %v1208, 0
        %v5696 = vsel %vm1298, %v1209, 0
        %v5699 = vsel %vm1298, %v1210, 0
        %v5702 = vsel %vm1298, %v1211, 0
        %v5705 = vsel %vm1298, %v1212, 0
        %v5708 = vsel %vm1298, %v1213, 0
        %v5711 = vsel %vm1298, %v1214, 0
        %v5714 = vsel %vm1298, %v1215, 0
        %v5717 = vsel %vm1298, %v1216, 0
        %v5720 = vsel %vm1298, %v1217, 0
        %v5722 = vsel %vm1298, %v5643, 0
        %v5724 = vsel %vm1298, %v5645, 0
        %v5726 = vsel %vm1298, %v5647, 0
        %v5728 = vsel %vm1298, %v5649, 0
        %v5730 = vsel %vm1298, %v5651, 0
        %v5732 = vsel %vm1298, %v5653, 0
        %v5734 = vsel %vm1298, %v5655, 0
        %v5736 = vsel %vm1298, %v5657, 0
        %v5738 = vsel %vm1298, %v5659, 0
        %v5740 = vsel %vm1298, %v5661, 0
        %v5742 = vsel %vm1298, %v5663, 0
        %v5744 = vsel %vm1298, %v5665, 0
        %v5746 = vsel %vm1298, %v5667, 0
        %v5748 = vsel %vm1298, %v5669, 0
        %v5750 = vsel %vm1298, %v5671, 0
        %v5752 = vsel %vm1298, %v5673, 0
        %5754 = vmatprep.subr.mxu0 0.0
        %5755 = vmatpush1.xpose.msra.mxu0 %v5752
        %5756 = vmatprep.subr.mxu0 0.0
        %5757 = vmatpush1.xpose.msra.mxu0 %v5750
        %5758 = vmatprep.subr.mxu0 0.0
        %5759 = vmatpush1.xpose.msra.mxu0 %v5748
        %5760 = vmatprep.subr.mxu0 0.0
        %5761 = vmatpush1.xpose.msra.mxu0 %v5746
        %5762 = vmatprep.subr.mxu0 0.0
        %5763 = vmatpush1.xpose.msra.mxu0 %v5744
        %5764 = vmatprep.subr.mxu0 0.0
        %5765 = vmatpush1.xpose.msra.mxu0 %v5742
        %5766 = vmatprep.subr.mxu0 0.0
        %5767 = vmatpush1.xpose.msra.mxu0 %v5740
        %5768 = vmatprep.subr.mxu0 0.0
        %5769 = vmatpush1.xpose.msra.mxu0 %v5738
        %5770 = vmatprep.subr.mxu0 0.0
        %5771 = vmatpush1.xpose.msra.mxu0 %v5736
        %5772 = vmatprep.subr.mxu0 0.0
        %5773 = vmatpush1.xpose.msra.mxu0 %v5734
        %5774 = vmatprep.subr.mxu0 0.0
        %5775 = vmatpush1.xpose.msra.mxu0 %v5732
        %5776 = vmatprep.subr.mxu0 0.0
        %5777 = vmatpush1.xpose.msra.mxu0 %v5730
        %5778 = vmatprep.subr.mxu0 0.0
        %5779 = vmatpush1.xpose.msra.mxu0 %v5728
        %5780 = vmatprep.subr.mxu0 0.0
        %5781 = vmatpush1.xpose.msra.mxu0 %v5726
        %5782 = vmatprep.subr.mxu0 0.0
        %5783 = vmatpush1.xpose.msra.mxu0 %v5724
        %5784 = vmatprep.subr.mxu0 0.0
        %5785 = vmatpush1.xpose.msra.mxu0 %v5722
        %5786 = vmatprep.subr.mxu0 0.0
        %5787 = vmatpush2.xpose.msra.mxu0 0.0
        %5788 = vmatprep.subr.mxu0 0.0
        %5789 = vmatpush2.xpose.msra.mxu0 0.0
        %5790 = vmatprep.subr.mxu0 0.0
        %5791 = vmatpush2.xpose.msra.mxu0 0.0
        %5792 = vmatprep.subr.mxu0 0.0
        %5793 = vmatpush2.xpose.msra.mxu0 0.0
        %5794 = vmatprep.subr.mxu0 0.0
        %5795 = vmatpush2.xpose.msra.mxu0 0.0
        %5796 = vmatprep.subr.mxu0 0.0
        %5797 = vmatpush2.xpose.msra.mxu0 0.0
        %5798 = vmatprep.subr.mxu0 0.0
        %5799 = vmatpush2.xpose.msra.mxu0 0.0
        %5800 = vmatprep.subr.mxu0 0.0
        %5801 = vmatpush2.xpose.msra.mxu0 0.0
        %5802 = vmatprep.subr.mxu0 0.0
        %5803 = vmatpush2.xpose.msra.mxu0 0.0
        %5804 = vmatprep.subr.mxu0 0.0
        %5805 = vmatpush2.xpose.msra.mxu0 0.0
        %5806 = vmatprep.subr.mxu0 0.0
        %5807 = vmatpush2.xpose.msra.mxu0 0.0
        %5808 = vmatprep.subr.mxu0 0.0
        %5809 = vmatpush2.xpose.msra.mxu0 0.0
        %5810 = vmatprep.subr.mxu0 0.0
        %5811 = vmatpush2.xpose.msra.mxu0 0.0
        %5812 = vmatprep.subr.mxu0 0.0
        %5813 = vmatpush2.xpose.msra.mxu0 0.0
        %5814 = vmatprep.subr.mxu0 0.0
        %5815 = vmatpush2.xpose.msra.mxu0 0.0
        %5816 = vmatprep.subr.mxu0 0.0
        %5817 = vmatpush2.xpose.msra.mxu0 0.0
        %5818 = vmatprep.mubr.f32.mxu0 0.0
        %5819 = vmatmul.mubr.f32.gmra.mxu0 %v5675
        %v5820 = vpop.f32.mrf.mxu0
        %v5821 = vadd.f32 %v487, %v5820
        %v5822 = vpop.f32.mrf.mxu0
        %5823 = vmatprep.mubr.f32.mxu0 0.0
        %5824 = vmatmul.mubr.f32.gmra.mxu0 %v5678
        %v5825 = vpop.f32.mrf.mxu0
        %v5826 = vadd.f32 %v488, %v5825
        %v5827 = vpop.f32.mrf.mxu0
        %5828 = vmatprep.mubr.f32.mxu0 0.0
        %5829 = vmatmul.mubr.f32.gmra.mxu0 %v5681
        %v5830 = vpop.f32.mrf.mxu0
        %v5831 = vadd.f32 %v489, %v5830
        %v5832 = vpop.f32.mrf.mxu0
        %5833 = vmatprep.mubr.f32.mxu0 0.0
        %5834 = vmatmul.mubr.f32.gmra.mxu0 %v5684
        %v5835 = vpop.f32.mrf.mxu0
        %v5836 = vadd.f32 %v490, %v5835
        %v5837 = vpop.f32.mrf.mxu0
        %5838 = vmatprep.mubr.f32.mxu0 0.0
        %5839 = vmatmul.mubr.f32.gmra.mxu0 %v5687
        %v5840 = vpop.f32.mrf.mxu0
        %v5841 = vadd.f32 %v491, %v5840
        %v5842 = vpop.f32.mrf.mxu0
        %5843 = vmatprep.mubr.f32.mxu0 0.0
        %5844 = vmatmul.mubr.f32.gmra.mxu0 %v5690
        %v5845 = vpop.f32.mrf.mxu0
        %v5846 = vadd.f32 %v492, %v5845
        %v5847 = vpop.f32.mrf.mxu0
        %5848 = vmatprep.mubr.f32.mxu0 0.0
        %5849 = vmatmul.mubr.f32.gmra.mxu0 %v5693
        %v5850 = vpop.f32.mrf.mxu0
        %v5851 = vadd.f32 %v493, %v5850
        %v5852 = vpop.f32.mrf.mxu0
        %5853 = vmatprep.mubr.f32.mxu0 0.0
        %5854 = vmatmul.mubr.f32.gmra.mxu0 %v5696
        %v5855 = vpop.f32.mrf.mxu0
        %v5856 = vadd.f32 %v494, %v5855
        %v5857 = vpop.f32.mrf.mxu0
        %5858 = vmatprep.mubr.f32.mxu0 0.0
        %5859 = vmatmul.mubr.f32.gmra.mxu0 %v5699
        %v5860 = vpop.f32.mrf.mxu0
        %v5861 = vadd.f32 %v495, %v5860
        %v5862 = vpop.f32.mrf.mxu0
        %5863 = vmatprep.mubr.f32.mxu0 0.0
        %5864 = vmatmul.mubr.f32.gmra.mxu0 %v5702
        %v5865 = vpop.f32.mrf.mxu0
        %v5866 = vadd.f32 %v496, %v5865
        %v5867 = vpop.f32.mrf.mxu0
        %5868 = vmatprep.mubr.f32.mxu0 0.0
        %5869 = vmatmul.mubr.f32.gmra.mxu0 %v5705
        %v5870 = vpop.f32.mrf.mxu0
        %v5871 = vadd.f32 %v497, %v5870
        %v5872 = vpop.f32.mrf.mxu0
        %5873 = vmatprep.mubr.f32.mxu0 0.0
        %5874 = vmatmul.mubr.f32.gmra.mxu0 %v5708
        %v5875 = vpop.f32.mrf.mxu0
        %v5876 = vadd.f32 %v498, %v5875
        %v5877 = vpop.f32.mrf.mxu0
        %5878 = vmatprep.mubr.f32.mxu0 0.0
        %5879 = vmatmul.mubr.f32.gmra.mxu0 %v5711
        %v5880 = vpop.f32.mrf.mxu0
        %v5881 = vadd.f32 %v499, %v5880
        %v5882 = vpop.f32.mrf.mxu0
        %5883 = vmatprep.mubr.f32.mxu0 0.0
        %5884 = vmatmul.mubr.f32.gmra.mxu0 %v5714
        %v5885 = vpop.f32.mrf.mxu0
        %v5886 = vadd.f32 %v500, %v5885
        %v5887 = vpop.f32.mrf.mxu0
        %5888 = vmatprep.mubr.f32.mxu0 0.0
        %5889 = vmatmul.mubr.f32.gmra.mxu0 %v5717
        %v5890 = vpop.f32.mrf.mxu0
        %v5891 = vadd.f32 %v501, %v5890
        %v5892 = vpop.f32.mrf.mxu0
        %5893 = vmatprep.mubr.f32.mxu0 0.0
        %5894 = vmatmul.mubr.f32.gmra.mxu0 %v5720
        %v5895 = vpop.f32.mrf.mxu0
        %v5896 = vadd.f32 %v502, %v5895
        %v5897 = vpop.f32.mrf.mxu0
        %5898 = vdwg.mxu0
        %5899 = vmax.xlane.f32.xlu0 %v5821
        %v5900 = vpop.xlane.xlu0 %5899
        %5901 = vmax.xlane.f32.xlu0 %v5826
        %v5902 = vpop.xlane.xlu0 %5901
        %5903 = vmax.xlane.f32.xlu0 %v5831
        %v5904 = vpop.xlane.xlu0 %5903
        %5905 = vmax.xlane.f32.xlu0 %v5836
        %v5906 = vpop.xlane.xlu0 %5905
        %5907 = vmax.xlane.f32.xlu0 %v5841
        %v5908 = vpop.xlane.xlu0 %5907
        %5909 = vmax.xlane.f32.xlu0 %v5846
        %v5910 = vpop.xlane.xlu0 %5909
        %5911 = vmax.xlane.f32.xlu0 %v5851
        %v5912 = vpop.xlane.xlu0 %5911
        %5913 = vmax.xlane.f32.xlu0 %v5856
        %v5914 = vpop.xlane.xlu0 %5913
        %5915 = vmax.xlane.f32.xlu0 %v5861
        %v5916 = vpop.xlane.xlu0 %5915
        %5917 = vmax.xlane.f32.xlu0 %v5866
        %v5918 = vpop.xlane.xlu0 %5917
        %5919 = vmax.xlane.f32.xlu0 %v5871
        %v5920 = vpop.xlane.xlu0 %5919
        %5921 = vmax.xlane.f32.xlu0 %v5876
        %v5922 = vpop.xlane.xlu0 %5921
        %5923 = vmax.xlane.f32.xlu0 %v5881
        %v5924 = vpop.xlane.xlu0 %5923
        %5925 = vmax.xlane.f32.xlu0 %v5886
        %v5926 = vpop.xlane.xlu0 %5925
        %5927 = vmax.xlane.f32.xlu0 %v5891
        %v5928 = vpop.xlane.xlu0 %5927
        %5929 = vmax.xlane.f32.xlu0 %v5896
        %v5930 = vpop.xlane.xlu0 %5929
        %v5931 = vsub.f32 %v5821, %v5900
        %v5932 = vsub.f32 %v5826, %v5902
        %v5933 = vsub.f32 %v5831, %v5904
        %v5934 = vsub.f32 %v5836, %v5906
        %v5935 = vsub.f32 %v5841, %v5908
        %v5936 = vsub.f32 %v5846, %v5910
        %v5937 = vsub.f32 %v5851, %v5912
        %v5938 = vsub.f32 %v5856, %v5914
        %v5939 = vsub.f32 %v5861, %v5916
        %v5940 = vsub.f32 %v5866, %v5918
        %v5941 = vsub.f32 %v5871, %v5920
        %v5942 = vsub.f32 %v5876, %v5922
        %v5943 = vsub.f32 %v5881, %v5924
        %v5944 = vsub.f32 %v5886, %v5926
        %v5945 = vsub.f32 %v5891, %v5928
        %v5946 = vsub.f32 %v5896, %v5930
        %v5947 = vmul.f32 %v5931, 1.442695
        %v5948 = vpow.pop %v5947
        %v5949 = vmul.f32 %v5932, 1.442695
        %v5950 = vpow.pop %v5949
        %v5951 = vmul.f32 %v5933, 1.442695
        %v5952 = vpow.pop %v5951
        %v5953 = vmul.f32 %v5934, 1.442695
        %v5954 = vpow.pop %v5953
        %v5955 = vmul.f32 %v5935, 1.442695
        %v5956 = vpow.pop %v5955
        %v5957 = vmul.f32 %v5936, 1.442695
        %v5958 = vpow.pop %v5957
        %v5959 = vmul.f32 %v5937, 1.442695
        %v5960 = vpow.pop %v5959
        %v5961 = vmul.f32 %v5938, 1.442695
        %v5962 = vpow.pop %v5961
        %v5963 = vmul.f32 %v5939, 1.442695
        %v5964 = vpow.pop %v5963
        %v5965 = vmul.f32 %v5940, 1.442695
        %v5966 = vpow.pop %v5965
        %v5967 = vmul.f32 %v5941, 1.442695
        %v5968 = vpow.pop %v5967
        %v5969 = vmul.f32 %v5942, 1.442695
        %v5970 = vpow.pop %v5969
        %v5971 = vmul.f32 %v5943, 1.442695
        %v5972 = vpow.pop %v5971
        %v5973 = vmul.f32 %v5944, 1.442695
        %v5974 = vpow.pop %v5973
        %v5975 = vmul.f32 %v5945, 1.442695
        %v5976 = vpow.pop %v5975
        %v5977 = vmul.f32 %v5946, 1.442695
        %v5978 = vpow.pop %v5977
        %5979 = vadd.xlane.f32.xlu0 %v5948
        %v5980 = vpop.xlane.xlu0 %5979
        %5981 = vadd.xlane.f32.xlu0 %v5950
        %v5982 = vpop.xlane.xlu0 %5981
        %5983 = vadd.xlane.f32.xlu0 %v5952
        %v5984 = vpop.xlane.xlu0 %5983
        %5985 = vadd.xlane.f32.xlu0 %v5954
        %v5986 = vpop.xlane.xlu0 %5985
        %5987 = vadd.xlane.f32.xlu0 %v5956
        %v5988 = vpop.xlane.xlu0 %5987
        %5989 = vadd.xlane.f32.xlu0 %v5958
        %v5990 = vpop.xlane.xlu0 %5989
        %5991 = vadd.xlane.f32.xlu0 %v5960
        %v5992 = vpop.xlane.xlu0 %5991
        %5993 = vadd.xlane.f32.xlu0 %v5962
        %v5994 = vpop.xlane.xlu0 %5993
        %5995 = vadd.xlane.f32.xlu0 %v5964
        %v5996 = vpop.xlane.xlu0 %5995
        %5997 = vadd.xlane.f32.xlu0 %v5966
        %v5998 = vpop.xlane.xlu0 %5997
        %5999 = vadd.xlane.f32.xlu0 %v5968
        %v6000 = vpop.xlane.xlu0 %5999
        %6001 = vadd.xlane.f32.xlu0 %v5970
        %v6002 = vpop.xlane.xlu0 %6001
        %6003 = vadd.xlane.f32.xlu0 %v5972
        %v6004 = vpop.xlane.xlu0 %6003
        %6005 = vadd.xlane.f32.xlu0 %v5974
        %v6006 = vpop.xlane.xlu0 %6005
        %6007 = vadd.xlane.f32.xlu0 %v5976
        %v6008 = vpop.xlane.xlu0 %6007
        %6009 = vadd.xlane.f32.xlu0 %v5978
        %v6010 = vpop.xlane.xlu0 %6009
        %6011 = vrot.lane.b32.xlu0 %v916, 120
        %v6012 = vpop.permute.xlu0 %6011
        %6013 = vrot.lane.b32.xlu0 %v921, 120
        %v6014 = vpop.permute.xlu0 %6013
        %6015 = vrot.lane.b32.xlu0 %v926, 120
        %v6016 = vpop.permute.xlu0 %6015
        %6017 = vrot.lane.b32.xlu0 %v931, 120
        %v6018 = vpop.permute.xlu0 %6017
        %6019 = vrot.lane.b32.xlu0 %v936, 120
        %v6020 = vpop.permute.xlu0 %6019
        %6021 = vrot.lane.b32.xlu0 %v941, 120
        %v6022 = vpop.permute.xlu0 %6021
        %6023 = vrot.lane.b32.xlu0 %v946, 120
        %v6024 = vpop.permute.xlu0 %6023
        %6025 = vrot.lane.b32.xlu0 %v951, 120
        %v6026 = vpop.permute.xlu0 %6025
        %6027 = vrot.lane.b32.xlu0 %v956, 120
        %v6028 = vpop.permute.xlu0 %6027
        %6029 = vrot.lane.b32.xlu0 %v961, 120
        %v6030 = vpop.permute.xlu0 %6029
        %6031 = vrot.lane.b32.xlu0 %v966, 120
        %v6032 = vpop.permute.xlu0 %6031
        %6033 = vrot.lane.b32.xlu0 %v971, 120
        %v6034 = vpop.permute.xlu0 %6033
        %6035 = vrot.lane.b32.xlu0 %v976, 120
        %v6036 = vpop.permute.xlu0 %6035
        %6037 = vrot.lane.b32.xlu0 %v981, 120
        %v6038 = vpop.permute.xlu0 %6037
        %6039 = vrot.lane.b32.xlu0 %v986, 120
        %v6040 = vpop.permute.xlu0 %6039
        %6041 = vrot.lane.b32.xlu0 %v991, 120
        %v6042 = vpop.permute.xlu0 %6041
        %6059 = vmatprep.subr.mxu0 0.0
        %6060 = vmatpush1.msra.mxu0 %v6042
        %6061 = vmatprep.subr.mxu0 0.0
        %6062 = vmatpush1.msra.mxu0 %v6040
        %6063 = vmatprep.subr.mxu0 0.0
        %6064 = vmatpush1.msra.mxu0 %v6038
        %6065 = vmatprep.subr.mxu0 0.0
        %6066 = vmatpush1.msra.mxu0 %v6036
        %6067 = vmatprep.subr.mxu0 0.0
        %6068 = vmatpush1.msra.mxu0 %v6034
        %6069 = vmatprep.subr.mxu0 0.0
        %6070 = vmatpush1.msra.mxu0 %v6032
        %6071 = vmatprep.subr.mxu0 0.0
        %6072 = vmatpush1.msra.mxu0 %v6030
        %6073 = vmatprep.subr.mxu0 0.0
        %6074 = vmatpush1.msra.mxu0 %v6028
        %6075 = vmatprep.subr.mxu0 0.0
        %6076 = vmatpush1.msra.mxu0 %v6026
        %6077 = vmatprep.subr.mxu0 0.0
        %6078 = vmatpush1.msra.mxu0 %v6024
        %6079 = vmatprep.subr.mxu0 0.0
        %6080 = vmatpush1.msra.mxu0 %v6022
        %6081 = vmatprep.subr.mxu0 0.0
        %6082 = vmatpush1.msra.mxu0 %v6020
        %6083 = vmatprep.subr.mxu0 0.0
        %6084 = vmatpush1.msra.mxu0 %v6018
        %6085 = vmatprep.subr.mxu0 0.0
        %6086 = vmatpush1.msra.mxu0 %v6016
        %6087 = vmatprep.subr.mxu0 0.0
        %6088 = vmatpush1.msra.mxu0 %v6014
        %6089 = vmatprep.subr.mxu0 0.0
        %6090 = vmatpush1.msra.mxu0 %v6012
        %6091 = vmatprep.subr.mxu0 0.0
        %6092 = vmatpush2.msra.mxu0 0.0
        %6093 = vmatprep.subr.mxu0 0.0
        %6094 = vmatpush2.msra.mxu0 0.0
        %6095 = vmatprep.subr.mxu0 0.0
        %6096 = vmatpush2.msra.mxu0 0.0
        %6097 = vmatprep.subr.mxu0 0.0
        %6098 = vmatpush2.msra.mxu0 0.0
        %6099 = vmatprep.subr.mxu0 0.0
        %6100 = vmatpush2.msra.mxu0 0.0
        %6101 = vmatprep.subr.mxu0 0.0
        %6102 = vmatpush2.msra.mxu0 0.0
        %6103 = vmatprep.subr.mxu0 0.0
        %6104 = vmatpush2.msra.mxu0 0.0
        %6105 = vmatprep.subr.mxu0 0.0
        %6106 = vmatpush2.msra.mxu0 0.0
        %6107 = vmatprep.subr.mxu0 0.0
        %6108 = vmatpush2.msra.mxu0 0.0
        %6109 = vmatprep.subr.mxu0 0.0
        %6110 = vmatpush2.msra.mxu0 0.0
        %6111 = vmatprep.subr.mxu0 0.0
        %6112 = vmatpush2.msra.mxu0 0.0
        %6113 = vmatprep.subr.mxu0 0.0
        %6114 = vmatpush2.msra.mxu0 0.0
        %6115 = vmatprep.subr.mxu0 0.0
        %6116 = vmatpush2.msra.mxu0 0.0
        %6117 = vmatprep.subr.mxu0 0.0
        %6118 = vmatpush2.msra.mxu0 0.0
        %6119 = vmatprep.subr.mxu0 0.0
        %6120 = vmatpush2.msra.mxu0 0.0
        %6121 = vmatprep.subr.mxu0 0.0
        %6122 = vmatpush2.msra.mxu0 0.0
        %6123 = vmatprep.mubr.f32.mxu0 0.0
        %6124 = vmatmul.mubr.f32.gmra.mxu0 %v5948
        %v6125 = vpop.f32.mrf.mxu0
        %v6126 = vadd.f32 0.0, %v6125
        %v6127 = vpop.f32.mrf.mxu0
        %6128 = vmatprep.mubr.f32.mxu0 0.0
        %6129 = vmatmul.mubr.f32.gmra.mxu0 %v5950
        %v6130 = vpop.f32.mrf.mxu0
        %v6131 = vadd.f32 0.0, %v6130
        %v6132 = vpop.f32.mrf.mxu0
        %6133 = vmatprep.mubr.f32.mxu0 0.0
        %6134 = vmatmul.mubr.f32.gmra.mxu0 %v5952
        %v6135 = vpop.f32.mrf.mxu0
        %v6136 = vadd.f32 0.0, %v6135
        %v6137 = vpop.f32.mrf.mxu0
        %6138 = vmatprep.mubr.f32.mxu0 0.0
        %6139 = vmatmul.mubr.f32.gmra.mxu0 %v5954
        %v6140 = vpop.f32.mrf.mxu0
        %v6141 = vadd.f32 0.0, %v6140
        %v6142 = vpop.f32.mrf.mxu0
        %6143 = vmatprep.mubr.f32.mxu0 0.0
        %6144 = vmatmul.mubr.f32.gmra.mxu0 %v5956
        %v6145 = vpop.f32.mrf.mxu0
        %v6146 = vadd.f32 0.0, %v6145
        %v6147 = vpop.f32.mrf.mxu0
        %6148 = vmatprep.mubr.f32.mxu0 0.0
        %6149 = vmatmul.mubr.f32.gmra.mxu0 %v5958
        %v6150 = vpop.f32.mrf.mxu0
        %v6151 = vadd.f32 0.0, %v6150
        %v6152 = vpop.f32.mrf.mxu0
        %6153 = vmatprep.mubr.f32.mxu0 0.0
        %6154 = vmatmul.mubr.f32.gmra.mxu0 %v5960
        %v6155 = vpop.f32.mrf.mxu0
        %v6156 = vadd.f32 0.0, %v6155
        %v6157 = vpop.f32.mrf.mxu0
        %6158 = vmatprep.mubr.f32.mxu0 0.0
        %6159 = vmatmul.mubr.f32.gmra.mxu0 %v5962
        %v6160 = vpop.f32.mrf.mxu0
        %v6161 = vadd.f32 0.0, %v6160
        %v6162 = vpop.f32.mrf.mxu0
        %6163 = vmatprep.mubr.f32.mxu0 0.0
        %6164 = vmatmul.mubr.f32.gmra.mxu0 %v5964
        %v6165 = vpop.f32.mrf.mxu0
        %v6166 = vadd.f32 0.0, %v6165
        %v6167 = vpop.f32.mrf.mxu0
        %6168 = vmatprep.mubr.f32.mxu0 0.0
        %6169 = vmatmul.mubr.f32.gmra.mxu0 %v5966
        %v6170 = vpop.f32.mrf.mxu0
        %v6171 = vadd.f32 0.0, %v6170
        %v6172 = vpop.f32.mrf.mxu0
        %6173 = vmatprep.mubr.f32.mxu0 0.0
        %6174 = vmatmul.mubr.f32.gmra.mxu0 %v5968
        %v6175 = vpop.f32.mrf.mxu0
        %v6176 = vadd.f32 0.0, %v6175
        %v6177 = vpop.f32.mrf.mxu0
        %6178 = vmatprep.mubr.f32.mxu0 0.0
        %6179 = vmatmul.mubr.f32.gmra.mxu0 %v5970
        %v6180 = vpop.f32.mrf.mxu0
        %v6181 = vadd.f32 0.0, %v6180
        %v6182 = vpop.f32.mrf.mxu0
        %6183 = vmatprep.mubr.f32.mxu0 0.0
        %6184 = vmatmul.mubr.f32.gmra.mxu0 %v5972
        %v6185 = vpop.f32.mrf.mxu0
        %v6186 = vadd.f32 0.0, %v6185
        %v6187 = vpop.f32.mrf.mxu0
        %6188 = vmatprep.mubr.f32.mxu0 0.0
        %6189 = vmatmul.mubr.f32.gmra.mxu0 %v5974
        %v6190 = vpop.f32.mrf.mxu0
        %v6191 = vadd.f32 0.0, %v6190
        %v6192 = vpop.f32.mrf.mxu0
        %6193 = vmatprep.mubr.f32.mxu0 0.0
        %6194 = vmatmul.mubr.f32.gmra.mxu0 %v5976
        %v6195 = vpop.f32.mrf.mxu0
        %v6196 = vadd.f32 0.0, %v6195
        %v6197 = vpop.f32.mrf.mxu0
        %6198 = vmatprep.mubr.f32.mxu0 0.0
        %6199 = vmatmul.mubr.f32.gmra.mxu0 %v5978
        %v6200 = vpop.f32.mrf.mxu0
        %v6201 = vadd.f32 0.0, %v6200
        %v6202 = vpop.f32.mrf.mxu0
        %6203 = vdwg.mxu0
        %v6204 = vrcp.pop %v5980
        %v6205 = vrcp.pop %v5982
        %v6206 = vrcp.pop %v5984
        %v6207 = vrcp.pop %v5986
        %v6208 = vrcp.pop %v5988
        %v6209 = vrcp.pop %v5990
        %v6210 = vrcp.pop %v5992
        %v6211 = vrcp.pop %v5994
        %v6212 = vrcp.pop %v5996
        %v6213 = vrcp.pop %v5998
        %v6214 = vrcp.pop %v6000
        %v6215 = vrcp.pop %v6002
        %v6216 = vrcp.pop %v6004
        %v6217 = vrcp.pop %v6006
        %v6218 = vrcp.pop %v6008
        %v6219 = vrcp.pop %v6010
        %v6220 = vmul.f32 %v6126, %v6204
        %v6221 = vmul.f32 %v6131, %v6205
        %v6222 = vmul.f32 %v6136, %v6206
        %v6223 = vmul.f32 %v6141, %v6207
        %v6224 = vmul.f32 %v6146, %v6208
        %v6225 = vmul.f32 %v6151, %v6209
        %v6226 = vmul.f32 %v6156, %v6210
        %v6227 = vmul.f32 %v6161, %v6211
        %v6228 = vmul.f32 %v6166, %v6212
        %v6229 = vmul.f32 %v6171, %v6213
        %v6230 = vmul.f32 %v6176, %v6214
        %v6231 = vmul.f32 %v6181, %v6215
        %v6232 = vmul.f32 %v6186, %v6216
        %v6233 = vmul.f32 %v6191, %v6217
        %v6234 = vmul.f32 %v6196, %v6218
        %v6235 = vmul.f32 %v6201, %v6219
        %6236 = vrot.lane.b32.xlu0 %v1202, 126
        %v6237 = vpop.permute.xlu0 %6236
        %6238 = vrot.lane.b32.xlu0 %v1203, 126
        %v6239 = vpop.permute.xlu0 %6238
        %6240 = vrot.lane.b32.xlu0 %v1204, 126
        %v6241 = vpop.permute.xlu0 %6240
        %6242 = vrot.lane.b32.xlu0 %v1205, 126
        %v6243 = vpop.permute.xlu0 %6242
        %6244 = vrot.lane.b32.xlu0 %v1206, 126
        %v6245 = vpop.permute.xlu0 %6244
        %6246 = vrot.lane.b32.xlu0 %v1207, 126
        %v6247 = vpop.permute.xlu0 %6246
        %6248 = vrot.lane.b32.xlu0 %v1208, 126
        %v6249 = vpop.permute.xlu0 %6248
        %6250 = vrot.lane.b32.xlu0 %v1209, 126
        %v6251 = vpop.permute.xlu0 %6250
        %6252 = vrot.lane.b32.xlu0 %v1210, 126
        %v6253 = vpop.permute.xlu0 %6252
        %6254 = vrot.lane.b32.xlu0 %v1211, 126
        %v6255 = vpop.permute.xlu0 %6254
        %6256 = vrot.lane.b32.xlu0 %v1212, 126
        %v6257 = vpop.permute.xlu0 %6256
        %6258 = vrot.lane.b32.xlu0 %v1213, 126
        %v6259 = vpop.permute.xlu0 %6258
        %6260 = vrot.lane.b32.xlu0 %v1214, 126
        %v6261 = vpop.permute.xlu0 %6260
        %6262 = vrot.lane.b32.xlu0 %v1215, 126
        %v6263 = vpop.permute.xlu0 %6262
        %6264 = vrot.lane.b32.xlu0 %v1216, 126
        %v6265 = vpop.permute.xlu0 %6264
        %6266 = vrot.lane.b32.xlu0 %v1217, 126
        %v6267 = vpop.permute.xlu0 %6266
        %6268 = vrot.lane.b32.xlu0 %v916, 122
        %v6269 = vpop.permute.xlu0 %6268
        %6270 = vrot.lane.b32.xlu0 %v921, 122
        %v6271 = vpop.permute.xlu0 %6270
        %6272 = vrot.lane.b32.xlu0 %v926, 122
        %v6273 = vpop.permute.xlu0 %6272
        %6274 = vrot.lane.b32.xlu0 %v931, 122
        %v6275 = vpop.permute.xlu0 %6274
        %6276 = vrot.lane.b32.xlu0 %v936, 122
        %v6277 = vpop.permute.xlu0 %6276
        %6278 = vrot.lane.b32.xlu0 %v941, 122
        %v6279 = vpop.permute.xlu0 %6278
        %6280 = vrot.lane.b32.xlu0 %v946, 122
        %v6281 = vpop.permute.xlu0 %6280
        %6282 = vrot.lane.b32.xlu0 %v951, 122
        %v6283 = vpop.permute.xlu0 %6282
        %6284 = vrot.lane.b32.xlu0 %v956, 122
        %v6285 = vpop.permute.xlu0 %6284
        %6286 = vrot.lane.b32.xlu0 %v961, 122
        %v6287 = vpop.permute.xlu0 %6286
        %6288 = vrot.lane.b32.xlu0 %v966, 122
        %v6289 = vpop.permute.xlu0 %6288
        %6290 = vrot.lane.b32.xlu0 %v971, 122
        %v6291 = vpop.permute.xlu0 %6290
        %6292 = vrot.lane.b32.xlu0 %v976, 122
        %v6293 = vpop.permute.xlu0 %6292
        %6294 = vrot.lane.b32.xlu0 %v981, 122
        %v6295 = vpop.permute.xlu0 %6294
        %6296 = vrot.lane.b32.xlu0 %v986, 122
        %v6297 = vpop.permute.xlu0 %6296
        %6298 = vrot.lane.b32.xlu0 %v991, 122
        %v6299 = vpop.permute.xlu0 %6298
        %v6300 = vsel %vm1298, %v6237, 0
        %v6302 = vsel %vm1298, %v6239, 0
        %v6304 = vsel %vm1298, %v6241, 0
        %v6306 = vsel %vm1298, %v6243, 0
        %v6308 = vsel %vm1298, %v6245, 0
        %v6310 = vsel %vm1298, %v6247, 0
        %v6312 = vsel %vm1298, %v6249, 0
        %v6314 = vsel %vm1298, %v6251, 0
        %v6316 = vsel %vm1298, %v6253, 0
        %v6318 = vsel %vm1298, %v6255, 0
        %v6320 = vsel %vm1298, %v6257, 0
        %v6322 = vsel %vm1298, %v6259, 0
        %v6324 = vsel %vm1298, %v6261, 0
        %v6326 = vsel %vm1298, %v6263, 0
        %v6328 = vsel %vm1298, %v6265, 0
        %v6330 = vsel %vm1298, %v6267, 0
        %v6332 = vsel %vm1298, %v6269, 0
        %v6334 = vsel %vm1298, %v6271, 0
        %v6336 = vsel %vm1298, %v6273, 0
        %v6338 = vsel %vm1298, %v6275, 0
        %v6340 = vsel %vm1298, %v6277, 0
        %v6342 = vsel %vm1298, %v6279, 0
        %v6344 = vsel %vm1298, %v6281, 0
        %v6346 = vsel %vm1298, %v6283, 0
        %v6348 = vsel %vm1298, %v6285, 0
        %v6350 = vsel %vm1298, %v6287, 0
        %v6352 = vsel %vm1298, %v6289, 0
        %v6354 = vsel %vm1298, %v6291, 0
        %v6356 = vsel %vm1298, %v6293, 0
        %v6358 = vsel %vm1298, %v6295, 0
        %v6360 = vsel %vm1298, %v6297, 0
        %v6362 = vsel %vm1298, %v6299, 0
        %6364 = vmatprep.subr.mxu0 0.0
        %6365 = vmatpush1.xpose.msra.mxu0 %v6362
        %6366 = vmatprep.subr.mxu0 0.0
        %6367 = vmatpush1.xpose.msra.mxu0 %v6360
        %6368 = vmatprep.subr.mxu0 0.0
        %6369 = vmatpush1.xpose.msra.mxu0 %v6358
        %6370 = vmatprep.subr.mxu0 0.0
        %6371 = vmatpush1.xpose.msra.mxu0 %v6356
        %6372 = vmatprep.subr.mxu0 0.0
        %6373 = vmatpush1.xpose.msra.mxu0 %v6354
        %6374 = vmatprep.subr.mxu0 0.0
        %6375 = vmatpush1.xpose.msra.mxu0 %v6352
        %6376 = vmatprep.subr.mxu0 0.0
        %6377 = vmatpush1.xpose.msra.mxu0 %v6350
        %6378 = vmatprep.subr.mxu0 0.0
        %6379 = vmatpush1.xpose.msra.mxu0 %v6348
        %6380 = vmatprep.subr.mxu0 0.0
        %6381 = vmatpush1.xpose.msra.mxu0 %v6346
        %6382 = vmatprep.subr.mxu0 0.0
        %6383 = vmatpush1.xpose.msra.mxu0 %v6344
        %6384 = vmatprep.subr.mxu0 0.0
        %6385 = vmatpush1.xpose.msra.mxu0 %v6342
        %6386 = vmatprep.subr.mxu0 0.0
        %6387 = vmatpush1.xpose.msra.mxu0 %v6340
        %6388 = vmatprep.subr.mxu0 0.0
        %6389 = vmatpush1.xpose.msra.mxu0 %v6338
        %6390 = vmatprep.subr.mxu0 0.0
        %6391 = vmatpush1.xpose.msra.mxu0 %v6336
        %6392 = vmatprep.subr.mxu0 0.0
        %6393 = vmatpush1.xpose.msra.mxu0 %v6334
        %6394 = vmatprep.subr.mxu0 0.0
        %6395 = vmatpush1.xpose.msra.mxu0 %v6332
        %6396 = vmatprep.subr.mxu0 0.0
        %6397 = vmatpush2.xpose.msra.mxu0 0.0
        %6398 = vmatprep.subr.mxu0 0.0
        %6399 = vmatpush2.xpose.msra.mxu0 0.0
        %6400 = vmatprep.subr.mxu0 0.0
        %6401 = vmatpush2.xpose.msra.mxu0 0.0
        %6402 = vmatprep.subr.mxu0 0.0
        %6403 = vmatpush2.xpose.msra.mxu0 0.0
        %6404 = vmatprep.subr.mxu0 0.0
        %6405 = vmatpush2.xpose.msra.mxu0 0.0
        %6406 = vmatprep.subr.mxu0 0.0
        %6407 = vmatpush2.xpose.msra.mxu0 0.0
        %6408 = vmatprep.subr.mxu0 0.0
        %6409 = vmatpush2.xpose.msra.mxu0 0.0
        %6410 = vmatprep.subr.mxu0 0.0
        %6411 = vmatpush2.xpose.msra.mxu0 0.0
        %6412 = vmatprep.subr.mxu0 0.0
        %6413 = vmatpush2.xpose.msra.mxu0 0.0
        %6414 = vmatprep.subr.mxu0 0.0
        %6415 = vmatpush2.xpose.msra.mxu0 0.0
        %6416 = vmatprep.subr.mxu0 0.0
        %6417 = vmatpush2.xpose.msra.mxu0 0.0
        %6418 = vmatprep.subr.mxu0 0.0
        %6419 = vmatpush2.xpose.msra.mxu0 0.0
        %6420 = vmatprep.subr.mxu0 0.0
        %6421 = vmatpush2.xpose.msra.mxu0 0.0
        %6422 = vmatprep.subr.mxu0 0.0
        %6423 = vmatpush2.xpose.msra.mxu0 0.0
        %6424 = vmatprep.subr.mxu0 0.0
        %6425 = vmatpush2.xpose.msra.mxu0 0.0
        %6426 = vmatprep.subr.mxu0 0.0
        %6427 = vmatpush2.xpose.msra.mxu0 0.0
        %6428 = vmatprep.mubr.f32.mxu0 0.0
        %6429 = vmatmul.mubr.f32.gmra.mxu0 %v6300
        %v6430 = vpop.f32.mrf.mxu0
        %v6431 = vadd.f32 %v487, %v6430
        %v6432 = vpop.f32.mrf.mxu0
        %6433 = vmatprep.mubr.f32.mxu0 0.0
        %6434 = vmatmul.mubr.f32.gmra.mxu0 %v6302
        %v6435 = vpop.f32.mrf.mxu0
        %v6436 = vadd.f32 %v488, %v6435
        %v6437 = vpop.f32.mrf.mxu0
        %6438 = vmatprep.mubr.f32.mxu0 0.0
        %6439 = vmatmul.mubr.f32.gmra.mxu0 %v6304
        %v6440 = vpop.f32.mrf.mxu0
        %v6441 = vadd.f32 %v489, %v6440
        %v6442 = vpop.f32.mrf.mxu0
        %6443 = vmatprep.mubr.f32.mxu0 0.0
        %6444 = vmatmul.mubr.f32.gmra.mxu0 %v6306
        %v6445 = vpop.f32.mrf.mxu0
        %v6446 = vadd.f32 %v490, %v6445
        %v6447 = vpop.f32.mrf.mxu0
        %6448 = vmatprep.mubr.f32.mxu0 0.0
        %6449 = vmatmul.mubr.f32.gmra.mxu0 %v6308
        %v6450 = vpop.f32.mrf.mxu0
        %v6451 = vadd.f32 %v491, %v6450
        %v6452 = vpop.f32.mrf.mxu0
        %6453 = vmatprep.mubr.f32.mxu0 0.0
        %6454 = vmatmul.mubr.f32.gmra.mxu0 %v6310
        %v6455 = vpop.f32.mrf.mxu0
        %v6456 = vadd.f32 %v492, %v6455
        %v6457 = vpop.f32.mrf.mxu0
        %6458 = vmatprep.mubr.f32.mxu0 0.0
        %6459 = vmatmul.mubr.f32.gmra.mxu0 %v6312
        %v6460 = vpop.f32.mrf.mxu0
        %v6461 = vadd.f32 %v493, %v6460
        %v6462 = vpop.f32.mrf.mxu0
        %6463 = vmatprep.mubr.f32.mxu0 0.0
        %6464 = vmatmul.mubr.f32.gmra.mxu0 %v6314
        %v6465 = vpop.f32.mrf.mxu0
        %v6466 = vadd.f32 %v494, %v6465
        %v6467 = vpop.f32.mrf.mxu0
        %6468 = vmatprep.mubr.f32.mxu0 0.0
        %6469 = vmatmul.mubr.f32.gmra.mxu0 %v6316
        %v6470 = vpop.f32.mrf.mxu0
        %v6471 = vadd.f32 %v495, %v6470
        %v6472 = vpop.f32.mrf.mxu0
        %6473 = vmatprep.mubr.f32.mxu0 0.0
        %6474 = vmatmul.mubr.f32.gmra.mxu0 %v6318
        %v6475 = vpop.f32.mrf.mxu0
        %v6476 = vadd.f32 %v496, %v6475
        %v6477 = vpop.f32.mrf.mxu0
        %6478 = vmatprep.mubr.f32.mxu0 0.0
        %6479 = vmatmul.mubr.f32.gmra.mxu0 %v6320
        %v6480 = vpop.f32.mrf.mxu0
        %v6481 = vadd.f32 %v497, %v6480
        %v6482 = vpop.f32.mrf.mxu0
        %6483 = vmatprep.mubr.f32.mxu0 0.0
        %6484 = vmatmul.mubr.f32.gmra.mxu0 %v6322
        %v6485 = vpop.f32.mrf.mxu0
        %v6486 = vadd.f32 %v498, %v6485
        %v6487 = vpop.f32.mrf.mxu0
        %6488 = vmatprep.mubr.f32.mxu0 0.0
        %6489 = vmatmul.mubr.f32.gmra.mxu0 %v6324
        %v6490 = vpop.f32.mrf.mxu0
        %v6491 = vadd.f32 %v499, %v6490
        %v6492 = vpop.f32.mrf.mxu0
        %6493 = vmatprep.mubr.f32.mxu0 0.0
        %6494 = vmatmul.mubr.f32.gmra.mxu0 %v6326
        %v6495 = vpop.f32.mrf.mxu0
        %v6496 = vadd.f32 %v500, %v6495
        %v6497 = vpop.f32.mrf.mxu0
        %6498 = vmatprep.mubr.f32.mxu0 0.0
        %6499 = vmatmul.mubr.f32.gmra.mxu0 %v6328
        %v6500 = vpop.f32.mrf.mxu0
        %v6501 = vadd.f32 %v501, %v6500
        %v6502 = vpop.f32.mrf.mxu0
        %6503 = vmatprep.mubr.f32.mxu0 0.0
        %6504 = vmatmul.mubr.f32.gmra.mxu0 %v6330
        %v6505 = vpop.f32.mrf.mxu0
        %v6506 = vadd.f32 %v502, %v6505
        %v6507 = vpop.f32.mrf.mxu0
        %6508 = vdwg.mxu0
        %6509 = vmax.xlane.f32.xlu0 %v6431
        %v6510 = vpop.xlane.xlu0 %6509
        %6511 = vmax.xlane.f32.xlu0 %v6436
        %v6512 = vpop.xlane.xlu0 %6511
        %6513 = vmax.xlane.f32.xlu0 %v6441
        %v6514 = vpop.xlane.xlu0 %6513
        %6515 = vmax.xlane.f32.xlu0 %v6446
        %v6516 = vpop.xlane.xlu0 %6515
        %6517 = vmax.xlane.f32.xlu0 %v6451
        %v6518 = vpop.xlane.xlu0 %6517
        %6519 = vmax.xlane.f32.xlu0 %v6456
        %v6520 = vpop.xlane.xlu0 %6519
        %6521 = vmax.xlane.f32.xlu0 %v6461
        %v6522 = vpop.xlane.xlu0 %6521
        %6523 = vmax.xlane.f32.xlu0 %v6466
        %v6524 = vpop.xlane.xlu0 %6523
        %6525 = vmax.xlane.f32.xlu0 %v6471
        %v6526 = vpop.xlane.xlu0 %6525
        %6527 = vmax.xlane.f32.xlu0 %v6476
        %v6528 = vpop.xlane.xlu0 %6527
        %6529 = vmax.xlane.f32.xlu0 %v6481
        %v6530 = vpop.xlane.xlu0 %6529
        %6531 = vmax.xlane.f32.xlu0 %v6486
        %v6532 = vpop.xlane.xlu0 %6531
        %6533 = vmax.xlane.f32.xlu0 %v6491
        %v6534 = vpop.xlane.xlu0 %6533
        %6535 = vmax.xlane.f32.xlu0 %v6496
        %v6536 = vpop.xlane.xlu0 %6535
        %6537 = vmax.xlane.f32.xlu0 %v6501
        %v6538 = vpop.xlane.xlu0 %6537
        %6539 = vmax.xlane.f32.xlu0 %v6506
        %v6540 = vpop.xlane.xlu0 %6539
        %v6541 = vsub.f32 %v6431, %v6510
        %v6542 = vsub.f32 %v6436, %v6512
        %v6543 = vsub.f32 %v6441, %v6514
        %v6544 = vsub.f32 %v6446, %v6516
        %v6545 = vsub.f32 %v6451, %v6518
        %v6546 = vsub.f32 %v6456, %v6520
        %v6547 = vsub.f32 %v6461, %v6522
        %v6548 = vsub.f32 %v6466, %v6524
        %v6549 = vsub.f32 %v6471, %v6526
        %v6550 = vsub.f32 %v6476, %v6528
        %v6551 = vsub.f32 %v6481, %v6530
        %v6552 = vsub.f32 %v6486, %v6532
        %v6553 = vsub.f32 %v6491, %v6534
        %v6554 = vsub.f32 %v6496, %v6536
        %v6555 = vsub.f32 %v6501, %v6538
        %v6556 = vsub.f32 %v6506, %v6540
        %v6557 = vmul.f32 %v6541, 1.442695
        %v6558 = vpow.pop %v6557
        %v6559 = vmul.f32 %v6542, 1.442695
        %v6560 = vpow.pop %v6559
        %v6561 = vmul.f32 %v6543, 1.442695
        %v6562 = vpow.pop %v6561
        %v6563 = vmul.f32 %v6544, 1.442695
        %v6564 = vpow.pop %v6563
        %v6565 = vmul.f32 %v6545, 1.442695
        %v6566 = vpow.pop %v6565
        %v6567 = vmul.f32 %v6546, 1.442695
        %v6568 = vpow.pop %v6567
        %v6569 = vmul.f32 %v6547, 1.442695
        %v6570 = vpow.pop %v6569
        %v6571 = vmul.f32 %v6548, 1.442695
        %v6572 = vpow.pop %v6571
        %v6573 = vmul.f32 %v6549, 1.442695
        %v6574 = vpow.pop %v6573
        %v6575 = vmul.f32 %v6550, 1.442695
        %v6576 = vpow.pop %v6575
        %v6577 = vmul.f32 %v6551, 1.442695
        %v6578 = vpow.pop %v6577
        %v6579 = vmul.f32 %v6552, 1.442695
        %v6580 = vpow.pop %v6579
        %v6581 = vmul.f32 %v6553, 1.442695
        %v6582 = vpow.pop %v6581
        %v6583 = vmul.f32 %v6554, 1.442695
        %v6584 = vpow.pop %v6583
        %v6585 = vmul.f32 %v6555, 1.442695
        %v6586 = vpow.pop %v6585
        %v6587 = vmul.f32 %v6556, 1.442695
        %v6588 = vpow.pop %v6587
        %6589 = vadd.xlane.f32.xlu0 %v6558
        %v6590 = vpop.xlane.xlu0 %6589
        %6591 = vadd.xlane.f32.xlu0 %v6560
        %v6592 = vpop.xlane.xlu0 %6591
        %6593 = vadd.xlane.f32.xlu0 %v6562
        %v6594 = vpop.xlane.xlu0 %6593
        %6595 = vadd.xlane.f32.xlu0 %v6564
        %v6596 = vpop.xlane.xlu0 %6595
        %6597 = vadd.xlane.f32.xlu0 %v6566
        %v6598 = vpop.xlane.xlu0 %6597
        %6599 = vadd.xlane.f32.xlu0 %v6568
        %v6600 = vpop.xlane.xlu0 %6599
        %6601 = vadd.xlane.f32.xlu0 %v6570
        %v6602 = vpop.xlane.xlu0 %6601
        %6603 = vadd.xlane.f32.xlu0 %v6572
        %v6604 = vpop.xlane.xlu0 %6603
        %6605 = vadd.xlane.f32.xlu0 %v6574
        %v6606 = vpop.xlane.xlu0 %6605
        %6607 = vadd.xlane.f32.xlu0 %v6576
        %v6608 = vpop.xlane.xlu0 %6607
        %6609 = vadd.xlane.f32.xlu0 %v6578
        %v6610 = vpop.xlane.xlu0 %6609
        %6611 = vadd.xlane.f32.xlu0 %v6580
        %v6612 = vpop.xlane.xlu0 %6611
        %6613 = vadd.xlane.f32.xlu0 %v6582
        %v6614 = vpop.xlane.xlu0 %6613
        %6615 = vadd.xlane.f32.xlu0 %v6584
        %v6616 = vpop.xlane.xlu0 %6615
        %6617 = vadd.xlane.f32.xlu0 %v6586
        %v6618 = vpop.xlane.xlu0 %6617
        %6619 = vadd.xlane.f32.xlu0 %v6588
        %v6620 = vpop.xlane.xlu0 %6619
        %6621 = vrot.lane.b32.xlu0 %v916, 118
        %v6622 = vpop.permute.xlu0 %6621
        %6623 = vrot.lane.b32.xlu0 %v921, 118
        %v6624 = vpop.permute.xlu0 %6623
        %6625 = vrot.lane.b32.xlu0 %v926, 118
        %v6626 = vpop.permute.xlu0 %6625
        %6627 = vrot.lane.b32.xlu0 %v931, 118
        %v6628 = vpop.permute.xlu0 %6627
        %6629 = vrot.lane.b32.xlu0 %v936, 118
        %v6630 = vpop.permute.xlu0 %6629
        %6631 = vrot.lane.b32.xlu0 %v941, 118
        %v6632 = vpop.permute.xlu0 %6631
        %6633 = vrot.lane.b32.xlu0 %v946, 118
        %v6634 = vpop.permute.xlu0 %6633
        %6635 = vrot.lane.b32.xlu0 %v951, 118
        %v6636 = vpop.permute.xlu0 %6635
        %6637 = vrot.lane.b32.xlu0 %v956, 118
        %v6638 = vpop.permute.xlu0 %6637
        %6639 = vrot.lane.b32.xlu0 %v961, 118
        %v6640 = vpop.permute.xlu0 %6639
        %6641 = vrot.lane.b32.xlu0 %v966, 118
        %v6642 = vpop.permute.xlu0 %6641
        %6643 = vrot.lane.b32.xlu0 %v971, 118
        %v6644 = vpop.permute.xlu0 %6643
        %6645 = vrot.lane.b32.xlu0 %v976, 118
        %v6646 = vpop.permute.xlu0 %6645
        %6647 = vrot.lane.b32.xlu0 %v981, 118
        %v6648 = vpop.permute.xlu0 %6647
        %6649 = vrot.lane.b32.xlu0 %v986, 118
        %v6650 = vpop.permute.xlu0 %6649
        %6651 = vrot.lane.b32.xlu0 %v991, 118
        %v6652 = vpop.permute.xlu0 %6651
        %6669 = vmatprep.subr.mxu0 0.0
        %6670 = vmatpush1.msra.mxu0 %v6652
        %6671 = vmatprep.subr.mxu0 0.0
        %6672 = vmatpush1.msra.mxu0 %v6650
        %6673 = vmatprep.subr.mxu0 0.0
        %6674 = vmatpush1.msra.mxu0 %v6648
        %6675 = vmatprep.subr.mxu0 0.0
        %6676 = vmatpush1.msra.mxu0 %v6646
        %6677 = vmatprep.subr.mxu0 0.0
        %6678 = vmatpush1.msra.mxu0 %v6644
        %6679 = vmatprep.subr.mxu0 0.0
        %6680 = vmatpush1.msra.mxu0 %v6642
        %6681 = vmatprep.subr.mxu0 0.0
        %6682 = vmatpush1.msra.mxu0 %v6640
        %6683 = vmatprep.subr.mxu0 0.0
        %6684 = vmatpush1.msra.mxu0 %v6638
        %6685 = vmatprep.subr.mxu0 0.0
        %6686 = vmatpush1.msra.mxu0 %v6636
        %6687 = vmatprep.subr.mxu0 0.0
        %6688 = vmatpush1.msra.mxu0 %v6634
        %6689 = vmatprep.subr.mxu0 0.0
        %6690 = vmatpush1.msra.mxu0 %v6632
        %6691 = vmatprep.subr.mxu0 0.0
        %6692 = vmatpush1.msra.mxu0 %v6630
        %6693 = vmatprep.subr.mxu0 0.0
        %6694 = vmatpush1.msra.mxu0 %v6628
        %6695 = vmatprep.subr.mxu0 0.0
        %6696 = vmatpush1.msra.mxu0 %v6626
        %6697 = vmatprep.subr.mxu0 0.0
        %6698 = vmatpush1.msra.mxu0 %v6624
        %6699 = vmatprep.subr.mxu0 0.0
        %6700 = vmatpush1.msra.mxu0 %v6622
        %6701 = vmatprep.subr.mxu0 0.0
        %6702 = vmatpush2.msra.mxu0 0.0
        %6703 = vmatprep.subr.mxu0 0.0
        %6704 = vmatpush2.msra.mxu0 0.0
        %6705 = vmatprep.subr.mxu0 0.0
        %6706 = vmatpush2.msra.mxu0 0.0
        %6707 = vmatprep.subr.mxu0 0.0
        %6708 = vmatpush2.msra.mxu0 0.0
        %6709 = vmatprep.subr.mxu0 0.0
        %6710 = vmatpush2.msra.mxu0 0.0
        %6711 = vmatprep.subr.mxu0 0.0
        %6712 = vmatpush2.msra.mxu0 0.0
        %6713 = vmatprep.subr.mxu0 0.0
        %6714 = vmatpush2.msra.mxu0 0.0
        %6715 = vmatprep.subr.mxu0 0.0
        %6716 = vmatpush2.msra.mxu0 0.0
        %6717 = vmatprep.subr.mxu0 0.0
        %6718 = vmatpush2.msra.mxu0 0.0
        %6719 = vmatprep.subr.mxu0 0.0
        %6720 = vmatpush2.msra.mxu0 0.0
        %6721 = vmatprep.subr.mxu0 0.0
        %6722 = vmatpush2.msra.mxu0 0.0
        %6723 = vmatprep.subr.mxu0 0.0
        %6724 = vmatpush2.msra.mxu0 0.0
        %6725 = vmatprep.subr.mxu0 0.0
        %6726 = vmatpush2.msra.mxu0 0.0
        %6727 = vmatprep.subr.mxu0 0.0
        %6728 = vmatpush2.msra.mxu0 0.0
        %6729 = vmatprep.subr.mxu0 0.0
        %6730 = vmatpush2.msra.mxu0 0.0
        %6731 = vmatprep.subr.mxu0 0.0
        %6732 = vmatpush2.msra.mxu0 0.0
        %6733 = vmatprep.mubr.f32.mxu0 0.0
        %6734 = vmatmul.mubr.f32.gmra.mxu0 %v6558
        %v6735 = vpop.f32.mrf.mxu0
        %v6736 = vadd.f32 0.0, %v6735
        %v6737 = vpop.f32.mrf.mxu0
        %6738 = vmatprep.mubr.f32.mxu0 0.0
        %6739 = vmatmul.mubr.f32.gmra.mxu0 %v6560
        %v6740 = vpop.f32.mrf.mxu0
        %v6741 = vadd.f32 0.0, %v6740
        %v6742 = vpop.f32.mrf.mxu0
        %6743 = vmatprep.mubr.f32.mxu0 0.0
        %6744 = vmatmul.mubr.f32.gmra.mxu0 %v6562
        %v6745 = vpop.f32.mrf.mxu0
        %v6746 = vadd.f32 0.0, %v6745
        %v6747 = vpop.f32.mrf.mxu0
        %6748 = vmatprep.mubr.f32.mxu0 0.0
        %6749 = vmatmul.mubr.f32.gmra.mxu0 %v6564
        %v6750 = vpop.f32.mrf.mxu0
        %v6751 = vadd.f32 0.0, %v6750
        %v6752 = vpop.f32.mrf.mxu0
        %6753 = vmatprep.mubr.f32.mxu0 0.0
        %6754 = vmatmul.mubr.f32.gmra.mxu0 %v6566
        %v6755 = vpop.f32.mrf.mxu0
        %v6756 = vadd.f32 0.0, %v6755
        %v6757 = vpop.f32.mrf.mxu0
        %6758 = vmatprep.mubr.f32.mxu0 0.0
        %6759 = vmatmul.mubr.f32.gmra.mxu0 %v6568
        %v6760 = vpop.f32.mrf.mxu0
        %v6761 = vadd.f32 0.0, %v6760
        %v6762 = vpop.f32.mrf.mxu0
        %6763 = vmatprep.mubr.f32.mxu0 0.0
        %6764 = vmatmul.mubr.f32.gmra.mxu0 %v6570
        %v6765 = vpop.f32.mrf.mxu0
        %v6766 = vadd.f32 0.0, %v6765
        %v6767 = vpop.f32.mrf.mxu0
        %6768 = vmatprep.mubr.f32.mxu0 0.0
        %6769 = vmatmul.mubr.f32.gmra.mxu0 %v6572
        %v6770 = vpop.f32.mrf.mxu0
        %v6771 = vadd.f32 0.0, %v6770
        %v6772 = vpop.f32.mrf.mxu0
        %6773 = vmatprep.mubr.f32.mxu0 0.0
        %6774 = vmatmul.mubr.f32.gmra.mxu0 %v6574
        %v6775 = vpop.f32.mrf.mxu0
        %v6776 = vadd.f32 0.0, %v6775
        %v6777 = vpop.f32.mrf.mxu0
        %6778 = vmatprep.mubr.f32.mxu0 0.0
        %6779 = vmatmul.mubr.f32.gmra.mxu0 %v6576
        %v6780 = vpop.f32.mrf.mxu0
        %v6781 = vadd.f32 0.0, %v6780
        %v6782 = vpop.f32.mrf.mxu0
        %6783 = vmatprep.mubr.f32.mxu0 0.0
        %6784 = vmatmul.mubr.f32.gmra.mxu0 %v6578
        %v6785 = vpop.f32.mrf.mxu0
        %v6786 = vadd.f32 0.0, %v6785
        %v6787 = vpop.f32.mrf.mxu0
        %6788 = vmatprep.mubr.f32.mxu0 0.0
        %6789 = vmatmul.mubr.f32.gmra.mxu0 %v6580
        %v6790 = vpop.f32.mrf.mxu0
        %v6791 = vadd.f32 0.0, %v6790
        %v6792 = vpop.f32.mrf.mxu0
        %6793 = vmatprep.mubr.f32.mxu0 0.0
        %6794 = vmatmul.mubr.f32.gmra.mxu0 %v6582
        %v6795 = vpop.f32.mrf.mxu0
        %v6796 = vadd.f32 0.0, %v6795
        %v6797 = vpop.f32.mrf.mxu0
        %6798 = vmatprep.mubr.f32.mxu0 0.0
        %6799 = vmatmul.mubr.f32.gmra.mxu0 %v6584
        %v6800 = vpop.f32.mrf.mxu0
        %v6801 = vadd.f32 0.0, %v6800
        %v6802 = vpop.f32.mrf.mxu0
        %6803 = vmatprep.mubr.f32.mxu0 0.0
        %6804 = vmatmul.mubr.f32.gmra.mxu0 %v6586
        %v6805 = vpop.f32.mrf.mxu0
        %v6806 = vadd.f32 0.0, %v6805
        %v6807 = vpop.f32.mrf.mxu0
        %6808 = vmatprep.mubr.f32.mxu0 0.0
        %6809 = vmatmul.mubr.f32.gmra.mxu0 %v6588
        %v6810 = vpop.f32.mrf.mxu0
        %v6811 = vadd.f32 0.0, %v6810
        %v6812 = vpop.f32.mrf.mxu0
        %6813 = vdwg.mxu0
        %v6814 = vrcp.pop %v6590
        %v6815 = vrcp.pop %v6592
        %v6816 = vrcp.pop %v6594
        %v6817 = vrcp.pop %v6596
        %v6818 = vrcp.pop %v6598
        %v6819 = vrcp.pop %v6600
        %v6820 = vrcp.pop %v6602
        %v6821 = vrcp.pop %v6604
        %v6822 = vrcp.pop %v6606
        %v6823 = vrcp.pop %v6608
        %v6824 = vrcp.pop %v6610
        %v6825 = vrcp.pop %v6612
        %v6826 = vrcp.pop %v6614
        %v6827 = vrcp.pop %v6616
        %v6828 = vrcp.pop %v6618
        %v6829 = vrcp.pop %v6620
        %v6830 = vmul.f32 %v6736, %v6814
        %v6831 = vmul.f32 %v6741, %v6815
        %v6832 = vmul.f32 %v6746, %v6816
        %v6833 = vmul.f32 %v6751, %v6817
        %v6834 = vmul.f32 %v6756, %v6818
        %v6835 = vmul.f32 %v6761, %v6819
        %v6836 = vmul.f32 %v6766, %v6820
        %v6837 = vmul.f32 %v6771, %v6821
        %v6838 = vmul.f32 %v6776, %v6822
        %v6839 = vmul.f32 %v6781, %v6823
        %v6840 = vmul.f32 %v6786, %v6824
        %v6841 = vmul.f32 %v6791, %v6825
        %v6842 = vmul.f32 %v6796, %v6826
        %v6843 = vmul.f32 %v6801, %v6827
        %v6844 = vmul.f32 %v6806, %v6828
        %v6845 = vmul.f32 %v6811, %v6829
        %v6847 = vsel %vm1298, %v6830, 0
        %v6850 = vsel %vm1298, %v6831, 0
        %v6853 = vsel %vm1298, %v6832, 0
        %v6856 = vsel %vm1298, %v6833, 0
        %v6859 = vsel %vm1298, %v6834, 0
        %v6862 = vsel %vm1298, %v6835, 0
        %v6865 = vsel %vm1298, %v6836, 0
        %v6868 = vsel %vm1298, %v6837, 0
        %v6871 = vsel %vm1298, %v6838, 0
        %v6874 = vsel %vm1298, %v6839, 0
        %v6877 = vsel %vm1298, %v6840, 0
        %v6880 = vsel %vm1298, %v6841, 0
        %v6883 = vsel %vm1298, %v6842, 0
        %v6886 = vsel %vm1298, %v6843, 0
        %v6889 = vsel %vm1298, %v6844, 0
        %v6892 = vsel %vm1298, %v6845, 0
        %6894 = vmatprep.subr.mxu0 0.0
        %6895 = vmatpush1.xpose.msra.mxu0 %v6892
        %6896 = vmatprep.subr.mxu0 0.0
        %6897 = vmatpush1.xpose.msra.mxu0 %v6889
        %6898 = vmatprep.subr.mxu0 0.0
        %6899 = vmatpush1.xpose.msra.mxu0 %v6886
        %6900 = vmatprep.subr.mxu0 0.0
        %6901 = vmatpush1.xpose.msra.mxu0 %v6883
        %6902 = vmatprep.subr.mxu0 0.0
        %6903 = vmatpush1.xpose.msra.mxu0 %v6880
        %6904 = vmatprep.subr.mxu0 0.0
        %6905 = vmatpush1.xpose.msra.mxu0 %v6877
        %6906 = vmatprep.subr.mxu0 0.0
        %6907 = vmatpush1.xpose.msra.mxu0 %v6874
        %6908 = vmatprep.subr.mxu0 0.0
        %6909 = vmatpush1.xpose.msra.mxu0 %v6871
        %6910 = vmatprep.subr.mxu0 0.0
        %6911 = vmatpush1.xpose.msra.mxu0 %v6868
        %6912 = vmatprep.subr.mxu0 0.0
        %6913 = vmatpush1.xpose.msra.mxu0 %v6865
        %6914 = vmatprep.subr.mxu0 0.0
        %6915 = vmatpush1.xpose.msra.mxu0 %v6862
        %6916 = vmatprep.subr.mxu0 0.0
        %6917 = vmatpush1.xpose.msra.mxu0 %v6859
        %6918 = vmatprep.subr.mxu0 0.0
        %6919 = vmatpush1.xpose.msra.mxu0 %v6856
        %6920 = vmatprep.subr.mxu0 0.0
        %6921 = vmatpush1.xpose.msra.mxu0 %v6853
        %6922 = vmatprep.subr.mxu0 0.0
        %6923 = vmatpush1.xpose.msra.mxu0 %v6850
        %6924 = vmatprep.subr.mxu0 0.0
        %6925 = vmatpush1.xpose.msra.mxu0 %v6847
        %6926 = vmatprep.subr.mxu0 0.0
        %6927 = vmatpush2.xpose.msra.mxu0 0.0
        %6928 = vmatprep.subr.mxu0 0.0
        %6929 = vmatpush2.xpose.msra.mxu0 0.0
        %6930 = vmatprep.subr.mxu0 0.0
        %6931 = vmatpush2.xpose.msra.mxu0 0.0
        %6932 = vmatprep.subr.mxu0 0.0
        %6933 = vmatpush2.xpose.msra.mxu0 0.0
        %6934 = vmatprep.subr.mxu0 0.0
        %6935 = vmatpush2.xpose.msra.mxu0 0.0
        %6936 = vmatprep.subr.mxu0 0.0
        %6937 = vmatpush2.xpose.msra.mxu0 0.0
        %6938 = vmatprep.subr.mxu0 0.0
        %6939 = vmatpush2.xpose.msra.mxu0 0.0
        %6940 = vmatprep.subr.mxu0 0.0
        %6941 = vmatpush2.xpose.msra.mxu0 0.0
        %6942 = vmatprep.subr.mxu0 0.0
        %6943 = vmatpush2.xpose.msra.mxu0 0.0
        %6944 = vmatprep.subr.mxu0 0.0
        %6945 = vmatpush2.xpose.msra.mxu0 0.0
        %6946 = vmatprep.subr.mxu0 0.0
        %6947 = vmatpush2.xpose.msra.mxu0 0.0
        %6948 = vmatprep.subr.mxu0 0.0
        %6949 = vmatpush2.xpose.msra.mxu0 0.0
        %6950 = vmatprep.subr.mxu0 0.0
        %6951 = vmatpush2.xpose.msra.mxu0 0.0
        %6952 = vmatprep.subr.mxu0 0.0
        %6953 = vmatpush2.xpose.msra.mxu0 0.0
        %6954 = vmatprep.subr.mxu0 0.0
        %6955 = vmatpush2.xpose.msra.mxu0 0.0
        %6956 = vmatprep.subr.mxu0 0.0
        %6957 = vmatpush2.xpose.msra.mxu0 0.0
        %6958 = vmatprep.mubr.f32.mxu0 0.0
        %6959 = vmatmul.mubr.f32.gmra.mxu0 %v2474
        %v6960 = vpop.f32.mrf.mxu0
        %v6961 = vadd.f32 0.0, %v6960
        %v6962 = vpop.f32.mrf.mxu0
        %6963 = vdwg.mxu0
        %v6965 = vsel %vm1298, %v6220, 0
        %v6968 = vsel %vm1298, %v6221, 0
        %v6971 = vsel %vm1298, %v6222, 0
        %v6974 = vsel %vm1298, %v6223, 0
        %v6977 = vsel %vm1298, %v6224, 0
        %v6980 = vsel %vm1298, %v6225, 0
        %v6983 = vsel %vm1298, %v6226, 0
        %v6986 = vsel %vm1298, %v6227, 0
        %v6989 = vsel %vm1298, %v6228, 0
        %v6992 = vsel %vm1298, %v6229, 0
        %v6995 = vsel %vm1298, %v6230, 0
        %v6998 = vsel %vm1298, %v6231, 0
        %v7001 = vsel %vm1298, %v6232, 0
        %v7004 = vsel %vm1298, %v6233, 0
        %v7007 = vsel %vm1298, %v6234, 0
        %v7010 = vsel %vm1298, %v6235, 0
        %7012 = vmatprep.subr.mxu0 0.0
        %7013 = vmatpush1.xpose.msra.mxu0 %v7010
        %7014 = vmatprep.subr.mxu0 0.0
        %7015 = vmatpush1.xpose.msra.mxu0 %v7007
        %7016 = vmatprep.subr.mxu0 0.0
        %7017 = vmatpush1.xpose.msra.mxu0 %v7004
        %7018 = vmatprep.subr.mxu0 0.0
        %7019 = vmatpush1.xpose.msra.mxu0 %v7001
        %7020 = vmatprep.subr.mxu0 0.0
        %7021 = vmatpush1.xpose.msra.mxu0 %v6998
        %7022 = vmatprep.subr.mxu0 0.0
        %7023 = vmatpush1.xpose.msra.mxu0 %v6995
        %7024 = vmatprep.subr.mxu0 0.0
        %7025 = vmatpush1.xpose.msra.mxu0 %v6992
        %7026 = vmatprep.subr.mxu0 0.0
        %7027 = vmatpush1.xpose.msra.mxu0 %v6989
        %7028 = vmatprep.subr.mxu0 0.0
        %7029 = vmatpush1.xpose.msra.mxu0 %v6986
        %7030 = vmatprep.subr.mxu0 0.0
        %7031 = vmatpush1.xpose.msra.mxu0 %v6983
        %7032 = vmatprep.subr.mxu0 0.0
        %7033 = vmatpush1.xpose.msra.mxu0 %v6980
        %7034 = vmatprep.subr.mxu0 0.0
        %7035 = vmatpush1.xpose.msra.mxu0 %v6977
        %7036 = vmatprep.subr.mxu0 0.0
        %7037 = vmatpush1.xpose.msra.mxu0 %v6974
        %7038 = vmatprep.subr.mxu0 0.0
        %7039 = vmatpush1.xpose.msra.mxu0 %v6971
        %7040 = vmatprep.subr.mxu0 0.0
        %7041 = vmatpush1.xpose.msra.mxu0 %v6968
        %7042 = vmatprep.subr.mxu0 0.0
        %7043 = vmatpush1.xpose.msra.mxu0 %v6965
        %7044 = vmatprep.subr.mxu0 0.0
        %7045 = vmatpush2.xpose.msra.mxu0 0.0
        %7046 = vmatprep.subr.mxu0 0.0
        %7047 = vmatpush2.xpose.msra.mxu0 0.0
        %7048 = vmatprep.subr.mxu0 0.0
        %7049 = vmatpush2.xpose.msra.mxu0 0.0
        %7050 = vmatprep.subr.mxu0 0.0
        %7051 = vmatpush2.xpose.msra.mxu0 0.0
        %7052 = vmatprep.subr.mxu0 0.0
        %7053 = vmatpush2.xpose.msra.mxu0 0.0
        %7054 = vmatprep.subr.mxu0 0.0
        %7055 = vmatpush2.xpose.msra.mxu0 0.0
        %7056 = vmatprep.subr.mxu0 0.0
        %7057 = vmatpush2.xpose.msra.mxu0 0.0
        %7058 = vmatprep.subr.mxu0 0.0
        %7059 = vmatpush2.xpose.msra.mxu0 0.0
        %7060 = vmatprep.subr.mxu0 0.0
        %7061 = vmatpush2.xpose.msra.mxu0 0.0
        %7062 = vmatprep.subr.mxu0 0.0
        %7063 = vmatpush2.xpose.msra.mxu0 0.0
        %7064 = vmatprep.subr.mxu0 0.0
        %7065 = vmatpush2.xpose.msra.mxu0 0.0
        %7066 = vmatprep.subr.mxu0 0.0
        %7067 = vmatpush2.xpose.msra.mxu0 0.0
        %7068 = vmatprep.subr.mxu0 0.0
        %7069 = vmatpush2.xpose.msra.mxu0 0.0
        %7070 = vmatprep.subr.mxu0 0.0
        %7071 = vmatpush2.xpose.msra.mxu0 0.0
        %7072 = vmatprep.subr.mxu0 0.0
        %7073 = vmatpush2.xpose.msra.mxu0 0.0
        %7074 = vmatprep.subr.mxu0 0.0
        %7075 = vmatpush2.xpose.msra.mxu0 0.0
        %7076 = vmatprep.mubr.f32.mxu0 0.0
        %7077 = vmatmul.mubr.f32.gmra.mxu0 %v2594
        %v7078 = vpop.f32.mrf.mxu0
        %v7079 = vadd.f32 %v6961, %v7078
        %v7080 = vpop.f32.mrf.mxu0
        %7081 = vdwg.mxu0
        %7098 = vrot.lane.b32.xlu0 %v996, 124
        %v7099 = vpop.permute.xlu0 %7098
        %7100 = vrot.lane.b32.xlu0 %v1001, 124
        %v7101 = vpop.permute.xlu0 %7100
        %7102 = vrot.lane.b32.xlu0 %v1006, 124
        %v7103 = vpop.permute.xlu0 %7102
        %7104 = vrot.lane.b32.xlu0 %v1011, 124
        %v7105 = vpop.permute.xlu0 %7104
        %7106 = vrot.lane.b32.xlu0 %v1016, 124
        %v7107 = vpop.permute.xlu0 %7106
        %7108 = vrot.lane.b32.xlu0 %v1021, 124
        %v7109 = vpop.permute.xlu0 %7108
        %7110 = vrot.lane.b32.xlu0 %v1026, 124
        %v7111 = vpop.permute.xlu0 %7110
        %7112 = vrot.lane.b32.xlu0 %v1031, 124
        %v7113 = vpop.permute.xlu0 %7112
        %7114 = vrot.lane.b32.xlu0 %v1036, 124
        %v7115 = vpop.permute.xlu0 %7114
        %7116 = vrot.lane.b32.xlu0 %v1041, 124
        %v7117 = vpop.permute.xlu0 %7116
        %7118 = vrot.lane.b32.xlu0 %v1046, 124
        %v7119 = vpop.permute.xlu0 %7118
        %7120 = vrot.lane.b32.xlu0 %v1051, 124
        %v7121 = vpop.permute.xlu0 %7120
        %7122 = vrot.lane.b32.xlu0 %v1056, 124
        %v7123 = vpop.permute.xlu0 %7122
        %7124 = vrot.lane.b32.xlu0 %v1061, 124
        %v7125 = vpop.permute.xlu0 %7124
        %7126 = vrot.lane.b32.xlu0 %v1066, 124
        %v7127 = vpop.permute.xlu0 %7126
        %7128 = vrot.lane.b32.xlu0 %v1071, 124
        %v7129 = vpop.permute.xlu0 %7128
        %v7131 = vsel %vm1298, %v1218, 0
        %v7134 = vsel %vm1298, %v1219, 0
        %v7137 = vsel %vm1298, %v1220, 0
        %v7140 = vsel %vm1298, %v1221, 0
        %v7143 = vsel %vm1298, %v1222, 0
        %v7146 = vsel %vm1298, %v1223, 0
        %v7149 = vsel %vm1298, %v1224, 0
        %v7152 = vsel %vm1298, %v1225, 0
        %v7155 = vsel %vm1298, %v1226, 0
        %v7158 = vsel %vm1298, %v1227, 0
        %v7161 = vsel %vm1298, %v1228, 0
        %v7164 = vsel %vm1298, %v1229, 0
        %v7167 = vsel %vm1298, %v1230, 0
        %v7170 = vsel %vm1298, %v1231, 0
        %v7173 = vsel %vm1298, %v1232, 0
        %v7176 = vsel %vm1298, %v1233, 0
        %v7178 = vsel %vm1298, %v7099, 0
        %v7180 = vsel %vm1298, %v7101, 0
        %v7182 = vsel %vm1298, %v7103, 0
        %v7184 = vsel %vm1298, %v7105, 0
        %v7186 = vsel %vm1298, %v7107, 0
        %v7188 = vsel %vm1298, %v7109, 0
        %v7190 = vsel %vm1298, %v7111, 0
        %v7192 = vsel %vm1298, %v7113, 0
        %v7194 = vsel %vm1298, %v7115, 0
        %v7196 = vsel %vm1298, %v7117, 0
        %v7198 = vsel %vm1298, %v7119, 0
        %v7200 = vsel %vm1298, %v7121, 0
        %v7202 = vsel %vm1298, %v7123, 0
        %v7204 = vsel %vm1298, %v7125, 0
        %v7206 = vsel %vm1298, %v7127, 0
        %v7208 = vsel %vm1298, %v7129, 0
        %7210 = vmatprep.subr.mxu0 0.0
        %7211 = vmatpush1.xpose.msra.mxu0 %v7208
        %7212 = vmatprep.subr.mxu0 0.0
        %7213 = vmatpush1.xpose.msra.mxu0 %v7206
        %7214 = vmatprep.subr.mxu0 0.0
        %7215 = vmatpush1.xpose.msra.mxu0 %v7204
        %7216 = vmatprep.subr.mxu0 0.0
        %7217 = vmatpush1.xpose.msra.mxu0 %v7202
        %7218 = vmatprep.subr.mxu0 0.0
        %7219 = vmatpush1.xpose.msra.mxu0 %v7200
        %7220 = vmatprep.subr.mxu0 0.0
        %7221 = vmatpush1.xpose.msra.mxu0 %v7198
        %7222 = vmatprep.subr.mxu0 0.0
        %7223 = vmatpush1.xpose.msra.mxu0 %v7196
        %7224 = vmatprep.subr.mxu0 0.0
        %7225 = vmatpush1.xpose.msra.mxu0 %v7194
        %7226 = vmatprep.subr.mxu0 0.0
        %7227 = vmatpush1.xpose.msra.mxu0 %v7192
        %7228 = vmatprep.subr.mxu0 0.0
        %7229 = vmatpush1.xpose.msra.mxu0 %v7190
        %7230 = vmatprep.subr.mxu0 0.0
        %7231 = vmatpush1.xpose.msra.mxu0 %v7188
        %7232 = vmatprep.subr.mxu0 0.0
        %7233 = vmatpush1.xpose.msra.mxu0 %v7186
        %7234 = vmatprep.subr.mxu0 0.0
        %7235 = vmatpush1.xpose.msra.mxu0 %v7184
        %7236 = vmatprep.subr.mxu0 0.0
        %7237 = vmatpush1.xpose.msra.mxu0 %v7182
        %7238 = vmatprep.subr.mxu0 0.0
        %7239 = vmatpush1.xpose.msra.mxu0 %v7180
        %7240 = vmatprep.subr.mxu0 0.0
        %7241 = vmatpush1.xpose.msra.mxu0 %v7178
        %7242 = vmatprep.subr.mxu0 0.0
        %7243 = vmatpush2.xpose.msra.mxu0 0.0
        %7244 = vmatprep.subr.mxu0 0.0
        %7245 = vmatpush2.xpose.msra.mxu0 0.0
        %7246 = vmatprep.subr.mxu0 0.0
        %7247 = vmatpush2.xpose.msra.mxu0 0.0
        %7248 = vmatprep.subr.mxu0 0.0
        %7249 = vmatpush2.xpose.msra.mxu0 0.0
        %7250 = vmatprep.subr.mxu0 0.0
        %7251 = vmatpush2.xpose.msra.mxu0 0.0
        %7252 = vmatprep.subr.mxu0 0.0
        %7253 = vmatpush2.xpose.msra.mxu0 0.0
        %7254 = vmatprep.subr.mxu0 0.0
        %7255 = vmatpush2.xpose.msra.mxu0 0.0
        %7256 = vmatprep.subr.mxu0 0.0
        %7257 = vmatpush2.xpose.msra.mxu0 0.0
        %7258 = vmatprep.subr.mxu0 0.0
        %7259 = vmatpush2.xpose.msra.mxu0 0.0
        %7260 = vmatprep.subr.mxu0 0.0
        %7261 = vmatpush2.xpose.msra.mxu0 0.0
        %7262 = vmatprep.subr.mxu0 0.0
        %7263 = vmatpush2.xpose.msra.mxu0 0.0
        %7264 = vmatprep.subr.mxu0 0.0
        %7265 = vmatpush2.xpose.msra.mxu0 0.0
        %7266 = vmatprep.subr.mxu0 0.0
        %7267 = vmatpush2.xpose.msra.mxu0 0.0
        %7268 = vmatprep.subr.mxu0 0.0
        %7269 = vmatpush2.xpose.msra.mxu0 0.0
        %7270 = vmatprep.subr.mxu0 0.0
        %7271 = vmatpush2.xpose.msra.mxu0 0.0
        %7272 = vmatprep.subr.mxu0 0.0
        %7273 = vmatpush2.xpose.msra.mxu0 0.0
        %7274 = vmatprep.mubr.f32.mxu0 0.0
        %7275 = vmatmul.mubr.f32.gmra.mxu0 %v7131
        %v7276 = vpop.f32.mrf.mxu0
        %v7277 = vadd.f32 %v487, %v7276
        %v7278 = vpop.f32.mrf.mxu0
        %7279 = vmatprep.mubr.f32.mxu0 0.0
        %7280 = vmatmul.mubr.f32.gmra.mxu0 %v7134
        %v7281 = vpop.f32.mrf.mxu0
        %v7282 = vadd.f32 %v488, %v7281
        %v7283 = vpop.f32.mrf.mxu0
        %7284 = vmatprep.mubr.f32.mxu0 0.0
        %7285 = vmatmul.mubr.f32.gmra.mxu0 %v7137
        %v7286 = vpop.f32.mrf.mxu0
        %v7287 = vadd.f32 %v489, %v7286
        %v7288 = vpop.f32.mrf.mxu0
        %7289 = vmatprep.mubr.f32.mxu0 0.0
        %7290 = vmatmul.mubr.f32.gmra.mxu0 %v7140
        %v7291 = vpop.f32.mrf.mxu0
        %v7292 = vadd.f32 %v490, %v7291
        %v7293 = vpop.f32.mrf.mxu0
        %7294 = vmatprep.mubr.f32.mxu0 0.0
        %7295 = vmatmul.mubr.f32.gmra.mxu0 %v7143
        %v7296 = vpop.f32.mrf.mxu0
        %v7297 = vadd.f32 %v491, %v7296
        %v7298 = vpop.f32.mrf.mxu0
        %7299 = vmatprep.mubr.f32.mxu0 0.0
        %7300 = vmatmul.mubr.f32.gmra.mxu0 %v7146
        %v7301 = vpop.f32.mrf.mxu0
        %v7302 = vadd.f32 %v492, %v7301
        %v7303 = vpop.f32.mrf.mxu0
        %7304 = vmatprep.mubr.f32.mxu0 0.0
        %7305 = vmatmul.mubr.f32.gmra.mxu0 %v7149
        %v7306 = vpop.f32.mrf.mxu0
        %v7307 = vadd.f32 %v493, %v7306
        %v7308 = vpop.f32.mrf.mxu0
        %7309 = vmatprep.mubr.f32.mxu0 0.0
        %7310 = vmatmul.mubr.f32.gmra.mxu0 %v7152
        %v7311 = vpop.f32.mrf.mxu0
        %v7312 = vadd.f32 %v494, %v7311
        %v7313 = vpop.f32.mrf.mxu0
        %7314 = vmatprep.mubr.f32.mxu0 0.0
        %7315 = vmatmul.mubr.f32.gmra.mxu0 %v7155
        %v7316 = vpop.f32.mrf.mxu0
        %v7317 = vadd.f32 %v495, %v7316
        %v7318 = vpop.f32.mrf.mxu0
        %7319 = vmatprep.mubr.f32.mxu0 0.0
        %7320 = vmatmul.mubr.f32.gmra.mxu0 %v7158
        %v7321 = vpop.f32.mrf.mxu0
        %v7322 = vadd.f32 %v496, %v7321
        %v7323 = vpop.f32.mrf.mxu0
        %7324 = vmatprep.mubr.f32.mxu0 0.0
        %7325 = vmatmul.mubr.f32.gmra.mxu0 %v7161
        %v7326 = vpop.f32.mrf.mxu0
        %v7327 = vadd.f32 %v497, %v7326
        %v7328 = vpop.f32.mrf.mxu0
        %7329 = vmatprep.mubr.f32.mxu0 0.0
        %7330 = vmatmul.mubr.f32.gmra.mxu0 %v7164
        %v7331 = vpop.f32.mrf.mxu0
        %v7332 = vadd.f32 %v498, %v7331
        %v7333 = vpop.f32.mrf.mxu0
        %7334 = vmatprep.mubr.f32.mxu0 0.0
        %7335 = vmatmul.mubr.f32.gmra.mxu0 %v7167
        %v7336 = vpop.f32.mrf.mxu0
        %v7337 = vadd.f32 %v499, %v7336
        %v7338 = vpop.f32.mrf.mxu0
        %7339 = vmatprep.mubr.f32.mxu0 0.0
        %7340 = vmatmul.mubr.f32.gmra.mxu0 %v7170
        %v7341 = vpop.f32.mrf.mxu0
        %v7342 = vadd.f32 %v500, %v7341
        %v7343 = vpop.f32.mrf.mxu0
        %7344 = vmatprep.mubr.f32.mxu0 0.0
        %7345 = vmatmul.mubr.f32.gmra.mxu0 %v7173
        %v7346 = vpop.f32.mrf.mxu0
        %v7347 = vadd.f32 %v501, %v7346
        %v7348 = vpop.f32.mrf.mxu0
        %7349 = vmatprep.mubr.f32.mxu0 0.0
        %7350 = vmatmul.mubr.f32.gmra.mxu0 %v7176
        %v7351 = vpop.f32.mrf.mxu0
        %v7352 = vadd.f32 %v502, %v7351
        %v7353 = vpop.f32.mrf.mxu0
        %7354 = vdwg.mxu0
        %7355 = vmax.xlane.f32.xlu0 %v7277
        %v7356 = vpop.xlane.xlu0 %7355
        %7357 = vmax.xlane.f32.xlu0 %v7282
        %v7358 = vpop.xlane.xlu0 %7357
        %7359 = vmax.xlane.f32.xlu0 %v7287
        %v7360 = vpop.xlane.xlu0 %7359
        %7361 = vmax.xlane.f32.xlu0 %v7292
        %v7362 = vpop.xlane.xlu0 %7361
        %7363 = vmax.xlane.f32.xlu0 %v7297
        %v7364 = vpop.xlane.xlu0 %7363
        %7365 = vmax.xlane.f32.xlu0 %v7302
        %v7366 = vpop.xlane.xlu0 %7365
        %7367 = vmax.xlane.f32.xlu0 %v7307
        %v7368 = vpop.xlane.xlu0 %7367
        %7369 = vmax.xlane.f32.xlu0 %v7312
        %v7370 = vpop.xlane.xlu0 %7369
        %7371 = vmax.xlane.f32.xlu0 %v7317
        %v7372 = vpop.xlane.xlu0 %7371
        %7373 = vmax.xlane.f32.xlu0 %v7322
        %v7374 = vpop.xlane.xlu0 %7373
        %7375 = vmax.xlane.f32.xlu0 %v7327
        %v7376 = vpop.xlane.xlu0 %7375
        %7377 = vmax.xlane.f32.xlu0 %v7332
        %v7378 = vpop.xlane.xlu0 %7377
        %7379 = vmax.xlane.f32.xlu0 %v7337
        %v7380 = vpop.xlane.xlu0 %7379
        %7381 = vmax.xlane.f32.xlu0 %v7342
        %v7382 = vpop.xlane.xlu0 %7381
        %7383 = vmax.xlane.f32.xlu0 %v7347
        %v7384 = vpop.xlane.xlu0 %7383
        %7385 = vmax.xlane.f32.xlu0 %v7352
        %v7386 = vpop.xlane.xlu0 %7385
        %v7387 = vsub.f32 %v7277, %v7356
        %v7388 = vsub.f32 %v7282, %v7358
        %v7389 = vsub.f32 %v7287, %v7360
        %v7390 = vsub.f32 %v7292, %v7362
        %v7391 = vsub.f32 %v7297, %v7364
        %v7392 = vsub.f32 %v7302, %v7366
        %v7393 = vsub.f32 %v7307, %v7368
        %v7394 = vsub.f32 %v7312, %v7370
        %v7395 = vsub.f32 %v7317, %v7372
        %v7396 = vsub.f32 %v7322, %v7374
        %v7397 = vsub.f32 %v7327, %v7376
        %v7398 = vsub.f32 %v7332, %v7378
        %v7399 = vsub.f32 %v7337, %v7380
        %v7400 = vsub.f32 %v7342, %v7382
        %v7401 = vsub.f32 %v7347, %v7384
        %v7402 = vsub.f32 %v7352, %v7386
        %v7403 = vmul.f32 %v7387, 1.442695
        %v7404 = vpow.pop %v7403
        %v7405 = vmul.f32 %v7388, 1.442695
        %v7406 = vpow.pop %v7405
        %v7407 = vmul.f32 %v7389, 1.442695
        %v7408 = vpow.pop %v7407
        %v7409 = vmul.f32 %v7390, 1.442695
        %v7410 = vpow.pop %v7409
        %v7411 = vmul.f32 %v7391, 1.442695
        %v7412 = vpow.pop %v7411
        %v7413 = vmul.f32 %v7392, 1.442695
        %v7414 = vpow.pop %v7413
        %v7415 = vmul.f32 %v7393, 1.442695
        %v7416 = vpow.pop %v7415
        %v7417 = vmul.f32 %v7394, 1.442695
        %v7418 = vpow.pop %v7417
        %v7419 = vmul.f32 %v7395, 1.442695
        %v7420 = vpow.pop %v7419
        %v7421 = vmul.f32 %v7396, 1.442695
        %v7422 = vpow.pop %v7421
        %v7423 = vmul.f32 %v7397, 1.442695
        %v7424 = vpow.pop %v7423
        %v7425 = vmul.f32 %v7398, 1.442695
        %v7426 = vpow.pop %v7425
        %v7427 = vmul.f32 %v7399, 1.442695
        %v7428 = vpow.pop %v7427
        %v7429 = vmul.f32 %v7400, 1.442695
        %v7430 = vpow.pop %v7429
        %v7431 = vmul.f32 %v7401, 1.442695
        %v7432 = vpow.pop %v7431
        %v7433 = vmul.f32 %v7402, 1.442695
        %v7434 = vpow.pop %v7433
        %7435 = vadd.xlane.f32.xlu0 %v7404
        %v7436 = vpop.xlane.xlu0 %7435
        %7437 = vadd.xlane.f32.xlu0 %v7406
        %v7438 = vpop.xlane.xlu0 %7437
        %7439 = vadd.xlane.f32.xlu0 %v7408
        %v7440 = vpop.xlane.xlu0 %7439
        %7441 = vadd.xlane.f32.xlu0 %v7410
        %v7442 = vpop.xlane.xlu0 %7441
        %7443 = vadd.xlane.f32.xlu0 %v7412
        %v7444 = vpop.xlane.xlu0 %7443
        %7445 = vadd.xlane.f32.xlu0 %v7414
        %v7446 = vpop.xlane.xlu0 %7445
        %7447 = vadd.xlane.f32.xlu0 %v7416
        %v7448 = vpop.xlane.xlu0 %7447
        %7449 = vadd.xlane.f32.xlu0 %v7418
        %v7450 = vpop.xlane.xlu0 %7449
        %7451 = vadd.xlane.f32.xlu0 %v7420
        %v7452 = vpop.xlane.xlu0 %7451
        %7453 = vadd.xlane.f32.xlu0 %v7422
        %v7454 = vpop.xlane.xlu0 %7453
        %7455 = vadd.xlane.f32.xlu0 %v7424
        %v7456 = vpop.xlane.xlu0 %7455
        %7457 = vadd.xlane.f32.xlu0 %v7426
        %v7458 = vpop.xlane.xlu0 %7457
        %7459 = vadd.xlane.f32.xlu0 %v7428
        %v7460 = vpop.xlane.xlu0 %7459
        %7461 = vadd.xlane.f32.xlu0 %v7430
        %v7462 = vpop.xlane.xlu0 %7461
        %7463 = vadd.xlane.f32.xlu0 %v7432
        %v7464 = vpop.xlane.xlu0 %7463
        %7465 = vadd.xlane.f32.xlu0 %v7434
        %v7466 = vpop.xlane.xlu0 %7465
        %7467 = vrot.lane.b32.xlu0 %v996, 120
        %v7468 = vpop.permute.xlu0 %7467
        %7469 = vrot.lane.b32.xlu0 %v1001, 120
        %v7470 = vpop.permute.xlu0 %7469
        %7471 = vrot.lane.b32.xlu0 %v1006, 120
        %v7472 = vpop.permute.xlu0 %7471
        %7473 = vrot.lane.b32.xlu0 %v1011, 120
        %v7474 = vpop.permute.xlu0 %7473
        %7475 = vrot.lane.b32.xlu0 %v1016, 120
        %v7476 = vpop.permute.xlu0 %7475
        %7477 = vrot.lane.b32.xlu0 %v1021, 120
        %v7478 = vpop.permute.xlu0 %7477
        %7479 = vrot.lane.b32.xlu0 %v1026, 120
        %v7480 = vpop.permute.xlu0 %7479
        %7481 = vrot.lane.b32.xlu0 %v1031, 120
        %v7482 = vpop.permute.xlu0 %7481
        %7483 = vrot.lane.b32.xlu0 %v1036, 120
        %v7484 = vpop.permute.xlu0 %7483
        %7485 = vrot.lane.b32.xlu0 %v1041, 120
        %v7486 = vpop.permute.xlu0 %7485
        %7487 = vrot.lane.b32.xlu0 %v1046, 120
        %v7488 = vpop.permute.xlu0 %7487
        %7489 = vrot.lane.b32.xlu0 %v1051, 120
        %v7490 = vpop.permute.xlu0 %7489
        %7491 = vrot.lane.b32.xlu0 %v1056, 120
        %v7492 = vpop.permute.xlu0 %7491
        %7493 = vrot.lane.b32.xlu0 %v1061, 120
        %v7494 = vpop.permute.xlu0 %7493
        %7495 = vrot.lane.b32.xlu0 %v1066, 120
        %v7496 = vpop.permute.xlu0 %7495
        %7497 = vrot.lane.b32.xlu0 %v1071, 120
        %v7498 = vpop.permute.xlu0 %7497
        %7515 = vmatprep.subr.mxu0 0.0
        %7516 = vmatpush1.msra.mxu0 %v7498
        %7517 = vmatprep.subr.mxu0 0.0
        %7518 = vmatpush1.msra.mxu0 %v7496
        %7519 = vmatprep.subr.mxu0 0.0
        %7520 = vmatpush1.msra.mxu0 %v7494
        %7521 = vmatprep.subr.mxu0 0.0
        %7522 = vmatpush1.msra.mxu0 %v7492
        %7523 = vmatprep.subr.mxu0 0.0
        %7524 = vmatpush1.msra.mxu0 %v7490
        %7525 = vmatprep.subr.mxu0 0.0
        %7526 = vmatpush1.msra.mxu0 %v7488
        %7527 = vmatprep.subr.mxu0 0.0
        %7528 = vmatpush1.msra.mxu0 %v7486
        %7529 = vmatprep.subr.mxu0 0.0
        %7530 = vmatpush1.msra.mxu0 %v7484
        %7531 = vmatprep.subr.mxu0 0.0
        %7532 = vmatpush1.msra.mxu0 %v7482
        %7533 = vmatprep.subr.mxu0 0.0
        %7534 = vmatpush1.msra.mxu0 %v7480
        %7535 = vmatprep.subr.mxu0 0.0
        %7536 = vmatpush1.msra.mxu0 %v7478
        %7537 = vmatprep.subr.mxu0 0.0
        %7538 = vmatpush1.msra.mxu0 %v7476
        %7539 = vmatprep.subr.mxu0 0.0
        %7540 = vmatpush1.msra.mxu0 %v7474
        %7541 = vmatprep.subr.mxu0 0.0
        %7542 = vmatpush1.msra.mxu0 %v7472
        %7543 = vmatprep.subr.mxu0 0.0
        %7544 = vmatpush1.msra.mxu0 %v7470
        %7545 = vmatprep.subr.mxu0 0.0
        %7546 = vmatpush1.msra.mxu0 %v7468
        %7547 = vmatprep.subr.mxu0 0.0
        %7548 = vmatpush2.msra.mxu0 0.0
        %7549 = vmatprep.subr.mxu0 0.0
        %7550 = vmatpush2.msra.mxu0 0.0
        %7551 = vmatprep.subr.mxu0 0.0
        %7552 = vmatpush2.msra.mxu0 0.0
        %7553 = vmatprep.subr.mxu0 0.0
        %7554 = vmatpush2.msra.mxu0 0.0
        %7555 = vmatprep.subr.mxu0 0.0
        %7556 = vmatpush2.msra.mxu0 0.0
        %7557 = vmatprep.subr.mxu0 0.0
        %7558 = vmatpush2.msra.mxu0 0.0
        %7559 = vmatprep.subr.mxu0 0.0
        %7560 = vmatpush2.msra.mxu0 0.0
        %7561 = vmatprep.subr.mxu0 0.0
        %7562 = vmatpush2.msra.mxu0 0.0
        %7563 = vmatprep.subr.mxu0 0.0
        %7564 = vmatpush2.msra.mxu0 0.0
        %7565 = vmatprep.subr.mxu0 0.0
        %7566 = vmatpush2.msra.mxu0 0.0
        %7567 = vmatprep.subr.mxu0 0.0
        %7568 = vmatpush2.msra.mxu0 0.0
        %7569 = vmatprep.subr.mxu0 0.0
        %7570 = vmatpush2.msra.mxu0 0.0
        %7571 = vmatprep.subr.mxu0 0.0
        %7572 = vmatpush2.msra.mxu0 0.0
        %7573 = vmatprep.subr.mxu0 0.0
        %7574 = vmatpush2.msra.mxu0 0.0
        %7575 = vmatprep.subr.mxu0 0.0
        %7576 = vmatpush2.msra.mxu0 0.0
        %7577 = vmatprep.subr.mxu0 0.0
        %7578 = vmatpush2.msra.mxu0 0.0
        %7579 = vmatprep.mubr.f32.mxu0 0.0
        %7580 = vmatmul.mubr.f32.gmra.mxu0 %v7404
        %v7581 = vpop.f32.mrf.mxu0
        %v7582 = vadd.f32 0.0, %v7581
        %v7583 = vpop.f32.mrf.mxu0
        %7584 = vmatprep.mubr.f32.mxu0 0.0
        %7585 = vmatmul.mubr.f32.gmra.mxu0 %v7406
        %v7586 = vpop.f32.mrf.mxu0
        %v7587 = vadd.f32 0.0, %v7586
        %v7588 = vpop.f32.mrf.mxu0
        %7589 = vmatprep.mubr.f32.mxu0 0.0
        %7590 = vmatmul.mubr.f32.gmra.mxu0 %v7408
        %v7591 = vpop.f32.mrf.mxu0
        %v7592 = vadd.f32 0.0, %v7591
        %v7593 = vpop.f32.mrf.mxu0
        %7594 = vmatprep.mubr.f32.mxu0 0.0
        %7595 = vmatmul.mubr.f32.gmra.mxu0 %v7410
        %v7596 = vpop.f32.mrf.mxu0
        %v7597 = vadd.f32 0.0, %v7596
        %v7598 = vpop.f32.mrf.mxu0
        %7599 = vmatprep.mubr.f32.mxu0 0.0
        %7600 = vmatmul.mubr.f32.gmra.mxu0 %v7412
        %v7601 = vpop.f32.mrf.mxu0
        %v7602 = vadd.f32 0.0, %v7601
        %v7603 = vpop.f32.mrf.mxu0
        %7604 = vmatprep.mubr.f32.mxu0 0.0
        %7605 = vmatmul.mubr.f32.gmra.mxu0 %v7414
        %v7606 = vpop.f32.mrf.mxu0
        %v7607 = vadd.f32 0.0, %v7606
        %v7608 = vpop.f32.mrf.mxu0
        %7609 = vmatprep.mubr.f32.mxu0 0.0
        %7610 = vmatmul.mubr.f32.gmra.mxu0 %v7416
        %v7611 = vpop.f32.mrf.mxu0
        %v7612 = vadd.f32 0.0, %v7611
        %v7613 = vpop.f32.mrf.mxu0
        %7614 = vmatprep.mubr.f32.mxu0 0.0
        %7615 = vmatmul.mubr.f32.gmra.mxu0 %v7418
        %v7616 = vpop.f32.mrf.mxu0
        %v7617 = vadd.f32 0.0, %v7616
        %v7618 = vpop.f32.mrf.mxu0
        %7619 = vmatprep.mubr.f32.mxu0 0.0
        %7620 = vmatmul.mubr.f32.gmra.mxu0 %v7420
        %v7621 = vpop.f32.mrf.mxu0
        %v7622 = vadd.f32 0.0, %v7621
        %v7623 = vpop.f32.mrf.mxu0
        %7624 = vmatprep.mubr.f32.mxu0 0.0
        %7625 = vmatmul.mubr.f32.gmra.mxu0 %v7422
        %v7626 = vpop.f32.mrf.mxu0
        %v7627 = vadd.f32 0.0, %v7626
        %v7628 = vpop.f32.mrf.mxu0
        %7629 = vmatprep.mubr.f32.mxu0 0.0
        %7630 = vmatmul.mubr.f32.gmra.mxu0 %v7424
        %v7631 = vpop.f32.mrf.mxu0
        %v7632 = vadd.f32 0.0, %v7631
        %v7633 = vpop.f32.mrf.mxu0
        %7634 = vmatprep.mubr.f32.mxu0 0.0
        %7635 = vmatmul.mubr.f32.gmra.mxu0 %v7426
        %v7636 = vpop.f32.mrf.mxu0
        %v7637 = vadd.f32 0.0, %v7636
        %v7638 = vpop.f32.mrf.mxu0
        %7639 = vmatprep.mubr.f32.mxu0 0.0
        %7640 = vmatmul.mubr.f32.gmra.mxu0 %v7428
        %v7641 = vpop.f32.mrf.mxu0
        %v7642 = vadd.f32 0.0, %v7641
        %v7643 = vpop.f32.mrf.mxu0
        %7644 = vmatprep.mubr.f32.mxu0 0.0
        %7645 = vmatmul.mubr.f32.gmra.mxu0 %v7430
        %v7646 = vpop.f32.mrf.mxu0
        %v7647 = vadd.f32 0.0, %v7646
        %v7648 = vpop.f32.mrf.mxu0
        %7649 = vmatprep.mubr.f32.mxu0 0.0
        %7650 = vmatmul.mubr.f32.gmra.mxu0 %v7432
        %v7651 = vpop.f32.mrf.mxu0
        %v7652 = vadd.f32 0.0, %v7651
        %v7653 = vpop.f32.mrf.mxu0
        %7654 = vmatprep.mubr.f32.mxu0 0.0
        %7655 = vmatmul.mubr.f32.gmra.mxu0 %v7434
        %v7656 = vpop.f32.mrf.mxu0
        %v7657 = vadd.f32 0.0, %v7656
        %v7658 = vpop.f32.mrf.mxu0
        %7659 = vdwg.mxu0
        %v7660 = vrcp.pop %v7436
        %v7661 = vrcp.pop %v7438
        %v7662 = vrcp.pop %v7440
        %v7663 = vrcp.pop %v7442
        %v7664 = vrcp.pop %v7444
        %v7665 = vrcp.pop %v7446
        %v7666 = vrcp.pop %v7448
        %v7667 = vrcp.pop %v7450
        %v7668 = vrcp.pop %v7452
        %v7669 = vrcp.pop %v7454
        %v7670 = vrcp.pop %v7456
        %v7671 = vrcp.pop %v7458
        %v7672 = vrcp.pop %v7460
        %v7673 = vrcp.pop %v7462
        %v7674 = vrcp.pop %v7464
        %v7675 = vrcp.pop %v7466
        %v7676 = vmul.f32 %v7582, %v7660
        %v7677 = vmul.f32 %v7587, %v7661
        %v7678 = vmul.f32 %v7592, %v7662
        %v7679 = vmul.f32 %v7597, %v7663
        %v7680 = vmul.f32 %v7602, %v7664
        %v7681 = vmul.f32 %v7607, %v7665
        %v7682 = vmul.f32 %v7612, %v7666
        %v7683 = vmul.f32 %v7617, %v7667
        %v7684 = vmul.f32 %v7622, %v7668
        %v7685 = vmul.f32 %v7627, %v7669
        %v7686 = vmul.f32 %v7632, %v7670
        %v7687 = vmul.f32 %v7637, %v7671
        %v7688 = vmul.f32 %v7642, %v7672
        %v7689 = vmul.f32 %v7647, %v7673
        %v7690 = vmul.f32 %v7652, %v7674
        %v7691 = vmul.f32 %v7657, %v7675
        %7692 = vrot.lane.b32.xlu0 %v1218, 126
        %v7693 = vpop.permute.xlu0 %7692
        %7694 = vrot.lane.b32.xlu0 %v1219, 126
        %v7695 = vpop.permute.xlu0 %7694
        %7696 = vrot.lane.b32.xlu0 %v1220, 126
        %v7697 = vpop.permute.xlu0 %7696
        %7698 = vrot.lane.b32.xlu0 %v1221, 126
        %v7699 = vpop.permute.xlu0 %7698
        %7700 = vrot.lane.b32.xlu0 %v1222, 126
        %v7701 = vpop.permute.xlu0 %7700
        %7702 = vrot.lane.b32.xlu0 %v1223, 126
        %v7703 = vpop.permute.xlu0 %7702
        %7704 = vrot.lane.b32.xlu0 %v1224, 126
        %v7705 = vpop.permute.xlu0 %7704
        %7706 = vrot.lane.b32.xlu0 %v1225, 126
        %v7707 = vpop.permute.xlu0 %7706
        %7708 = vrot.lane.b32.xlu0 %v1226, 126
        %v7709 = vpop.permute.xlu0 %7708
        %7710 = vrot.lane.b32.xlu0 %v1227, 126
        %v7711 = vpop.permute.xlu0 %7710
        %7712 = vrot.lane.b32.xlu0 %v1228, 126
        %v7713 = vpop.permute.xlu0 %7712
        %7714 = vrot.lane.b32.xlu0 %v1229, 126
        %v7715 = vpop.permute.xlu0 %7714
        %7716 = vrot.lane.b32.xlu0 %v1230, 126
        %v7717 = vpop.permute.xlu0 %7716
        %7718 = vrot.lane.b32.xlu0 %v1231, 126
        %v7719 = vpop.permute.xlu0 %7718
        %7720 = vrot.lane.b32.xlu0 %v1232, 126
        %v7721 = vpop.permute.xlu0 %7720
        %7722 = vrot.lane.b32.xlu0 %v1233, 126
        %v7723 = vpop.permute.xlu0 %7722
        %7724 = vrot.lane.b32.xlu0 %v996, 122
        %v7725 = vpop.permute.xlu0 %7724
        %7726 = vrot.lane.b32.xlu0 %v1001, 122
        %v7727 = vpop.permute.xlu0 %7726
        %7728 = vrot.lane.b32.xlu0 %v1006, 122
        %v7729 = vpop.permute.xlu0 %7728
        %7730 = vrot.lane.b32.xlu0 %v1011, 122
        %v7731 = vpop.permute.xlu0 %7730
        %7732 = vrot.lane.b32.xlu0 %v1016, 122
        %v7733 = vpop.permute.xlu0 %7732
        %7734 = vrot.lane.b32.xlu0 %v1021, 122
        %v7735 = vpop.permute.xlu0 %7734
        %7736 = vrot.lane.b32.xlu0 %v1026, 122
        %v7737 = vpop.permute.xlu0 %7736
        %7738 = vrot.lane.b32.xlu0 %v1031, 122
        %v7739 = vpop.permute.xlu0 %7738
        %7740 = vrot.lane.b32.xlu0 %v1036, 122
        %v7741 = vpop.permute.xlu0 %7740
        %7742 = vrot.lane.b32.xlu0 %v1041, 122
        %v7743 = vpop.permute.xlu0 %7742
        %7744 = vrot.lane.b32.xlu0 %v1046, 122
        %v7745 = vpop.permute.xlu0 %7744
        %7746 = vrot.lane.b32.xlu0 %v1051, 122
        %v7747 = vpop.permute.xlu0 %7746
        %7748 = vrot.lane.b32.xlu0 %v1056, 122
        %v7749 = vpop.permute.xlu0 %7748
        %7750 = vrot.lane.b32.xlu0 %v1061, 122
        %v7751 = vpop.permute.xlu0 %7750
        %7752 = vrot.lane.b32.xlu0 %v1066, 122
        %v7753 = vpop.permute.xlu0 %7752
        %7754 = vrot.lane.b32.xlu0 %v1071, 122
        %v7755 = vpop.permute.xlu0 %7754
        %v7756 = vsel %vm1298, %v7693, 0
        %v7758 = vsel %vm1298, %v7695, 0
        %v7760 = vsel %vm1298, %v7697, 0
        %v7762 = vsel %vm1298, %v7699, 0
        %v7764 = vsel %vm1298, %v7701, 0
        %v7766 = vsel %vm1298, %v7703, 0
        %v7768 = vsel %vm1298, %v7705, 0
        %v7770 = vsel %vm1298, %v7707, 0
        %v7772 = vsel %vm1298, %v7709, 0
        %v7774 = vsel %vm1298, %v7711, 0
        %v7776 = vsel %vm1298, %v7713, 0
        %v7778 = vsel %vm1298, %v7715, 0
        %v7780 = vsel %vm1298, %v7717, 0
        %v7782 = vsel %vm1298, %v7719, 0
        %v7784 = vsel %vm1298, %v7721, 0
        %v7786 = vsel %vm1298, %v7723, 0
        %v7788 = vsel %vm1298, %v7725, 0
        %v7790 = vsel %vm1298, %v7727, 0
        %v7792 = vsel %vm1298, %v7729, 0
        %v7794 = vsel %vm1298, %v7731, 0
        %v7796 = vsel %vm1298, %v7733, 0
        %v7798 = vsel %vm1298, %v7735, 0
        %v7800 = vsel %vm1298, %v7737, 0
        %v7802 = vsel %vm1298, %v7739, 0
        %v7804 = vsel %vm1298, %v7741, 0
        %v7806 = vsel %vm1298, %v7743, 0
        %v7808 = vsel %vm1298, %v7745, 0
        %v7810 = vsel %vm1298, %v7747, 0
        %v7812 = vsel %vm1298, %v7749, 0
        %v7814 = vsel %vm1298, %v7751, 0
        %v7816 = vsel %vm1298, %v7753, 0
        %v7818 = vsel %vm1298, %v7755, 0
        %7820 = vmatprep.subr.mxu0 0.0
        %7821 = vmatpush1.xpose.msra.mxu0 %v7818
        %7822 = vmatprep.subr.mxu0 0.0
        %7823 = vmatpush1.xpose.msra.mxu0 %v7816
        %7824 = vmatprep.subr.mxu0 0.0
        %7825 = vmatpush1.xpose.msra.mxu0 %v7814
        %7826 = vmatprep.subr.mxu0 0.0
        %7827 = vmatpush1.xpose.msra.mxu0 %v7812
        %7828 = vmatprep.subr.mxu0 0.0
        %7829 = vmatpush1.xpose.msra.mxu0 %v7810
        %7830 = vmatprep.subr.mxu0 0.0
        %7831 = vmatpush1.xpose.msra.mxu0 %v7808
        %7832 = vmatprep.subr.mxu0 0.0
        %7833 = vmatpush1.xpose.msra.mxu0 %v7806
        %7834 = vmatprep.subr.mxu0 0.0
        %7835 = vmatpush1.xpose.msra.mxu0 %v7804
        %7836 = vmatprep.subr.mxu0 0.0
        %7837 = vmatpush1.xpose.msra.mxu0 %v7802
        %7838 = vmatprep.subr.mxu0 0.0
        %7839 = vmatpush1.xpose.msra.mxu0 %v7800
        %7840 = vmatprep.subr.mxu0 0.0
        %7841 = vmatpush1.xpose.msra.mxu0 %v7798
        %7842 = vmatprep.subr.mxu0 0.0
        %7843 = vmatpush1.xpose.msra.mxu0 %v7796
        %7844 = vmatprep.subr.mxu0 0.0
        %7845 = vmatpush1.xpose.msra.mxu0 %v7794
        %7846 = vmatprep.subr.mxu0 0.0
        %7847 = vmatpush1.xpose.msra.mxu0 %v7792
        %7848 = vmatprep.subr.mxu0 0.0
        %7849 = vmatpush1.xpose.msra.mxu0 %v7790
        %7850 = vmatprep.subr.mxu0 0.0
        %7851 = vmatpush1.xpose.msra.mxu0 %v7788
        %7852 = vmatprep.subr.mxu0 0.0
        %7853 = vmatpush2.xpose.msra.mxu0 0.0
        %7854 = vmatprep.subr.mxu0 0.0
        %7855 = vmatpush2.xpose.msra.mxu0 0.0
        %7856 = vmatprep.subr.mxu0 0.0
        %7857 = vmatpush2.xpose.msra.mxu0 0.0
        %7858 = vmatprep.subr.mxu0 0.0
        %7859 = vmatpush2.xpose.msra.mxu0 0.0
        %7860 = vmatprep.subr.mxu0 0.0
        %7861 = vmatpush2.xpose.msra.mxu0 0.0
        %7862 = vmatprep.subr.mxu0 0.0
        %7863 = vmatpush2.xpose.msra.mxu0 0.0
        %7864 = vmatprep.subr.mxu0 0.0
        %7865 = vmatpush2.xpose.msra.mxu0 0.0
        %7866 = vmatprep.subr.mxu0 0.0
        %7867 = vmatpush2.xpose.msra.mxu0 0.0
        %7868 = vmatprep.subr.mxu0 0.0
        %7869 = vmatpush2.xpose.msra.mxu0 0.0
        %7870 = vmatprep.subr.mxu0 0.0
        %7871 = vmatpush2.xpose.msra.mxu0 0.0
        %7872 = vmatprep.subr.mxu0 0.0
        %7873 = vmatpush2.xpose.msra.mxu0 0.0
        %7874 = vmatprep.subr.mxu0 0.0
        %7875 = vmatpush2.xpose.msra.mxu0 0.0
        %7876 = vmatprep.subr.mxu0 0.0
        %7877 = vmatpush2.xpose.msra.mxu0 0.0
        %7878 = vmatprep.subr.mxu0 0.0
        %7879 = vmatpush2.xpose.msra.mxu0 0.0
        %7880 = vmatprep.subr.mxu0 0.0
        %7881 = vmatpush2.xpose.msra.mxu0 0.0
        %7882 = vmatprep.subr.mxu0 0.0
        %7883 = vmatpush2.xpose.msra.mxu0 0.0
        %7884 = vmatprep.mubr.f32.mxu0 0.0
        %7885 = vmatmul.mubr.f32.gmra.mxu0 %v7756
        %v7886 = vpop.f32.mrf.mxu0
        %v7887 = vadd.f32 %v487, %v7886
        %v7888 = vpop.f32.mrf.mxu0
        %7889 = vmatprep.mubr.f32.mxu0 0.0
        %7890 = vmatmul.mubr.f32.gmra.mxu0 %v7758
        %v7891 = vpop.f32.mrf.mxu0
        %v7892 = vadd.f32 %v488, %v7891
        %v7893 = vpop.f32.mrf.mxu0
        %7894 = vmatprep.mubr.f32.mxu0 0.0
        %7895 = vmatmul.mubr.f32.gmra.mxu0 %v7760
        %v7896 = vpop.f32.mrf.mxu0
        %v7897 = vadd.f32 %v489, %v7896
        %v7898 = vpop.f32.mrf.mxu0
        %7899 = vmatprep.mubr.f32.mxu0 0.0
        %7900 = vmatmul.mubr.f32.gmra.mxu0 %v7762
        %v7901 = vpop.f32.mrf.mxu0
        %v7902 = vadd.f32 %v490, %v7901
        %v7903 = vpop.f32.mrf.mxu0
        %7904 = vmatprep.mubr.f32.mxu0 0.0
        %7905 = vmatmul.mubr.f32.gmra.mxu0 %v7764
        %v7906 = vpop.f32.mrf.mxu0
        %v7907 = vadd.f32 %v491, %v7906
        %v7908 = vpop.f32.mrf.mxu0
        %7909 = vmatprep.mubr.f32.mxu0 0.0
        %7910 = vmatmul.mubr.f32.gmra.mxu0 %v7766
        %v7911 = vpop.f32.mrf.mxu0
        %v7912 = vadd.f32 %v492, %v7911
        %v7913 = vpop.f32.mrf.mxu0
        %7914 = vmatprep.mubr.f32.mxu0 0.0
        %7915 = vmatmul.mubr.f32.gmra.mxu0 %v7768
        %v7916 = vpop.f32.mrf.mxu0
        %v7917 = vadd.f32 %v493, %v7916
        %v7918 = vpop.f32.mrf.mxu0
        %7919 = vmatprep.mubr.f32.mxu0 0.0
        %7920 = vmatmul.mubr.f32.gmra.mxu0 %v7770
        %v7921 = vpop.f32.mrf.mxu0
        %v7922 = vadd.f32 %v494, %v7921
        %v7923 = vpop.f32.mrf.mxu0
        %7924 = vmatprep.mubr.f32.mxu0 0.0
        %7925 = vmatmul.mubr.f32.gmra.mxu0 %v7772
        %v7926 = vpop.f32.mrf.mxu0
        %v7927 = vadd.f32 %v495, %v7926
        %v7928 = vpop.f32.mrf.mxu0
        %7929 = vmatprep.mubr.f32.mxu0 0.0
        %7930 = vmatmul.mubr.f32.gmra.mxu0 %v7774
        %v7931 = vpop.f32.mrf.mxu0
        %v7932 = vadd.f32 %v496, %v7931
        %v7933 = vpop.f32.mrf.mxu0
        %7934 = vmatprep.mubr.f32.mxu0 0.0
        %7935 = vmatmul.mubr.f32.gmra.mxu0 %v7776
        %v7936 = vpop.f32.mrf.mxu0
        %v7937 = vadd.f32 %v497, %v7936
        %v7938 = vpop.f32.mrf.mxu0
        %7939 = vmatprep.mubr.f32.mxu0 0.0
        %7940 = vmatmul.mubr.f32.gmra.mxu0 %v7778
        %v7941 = vpop.f32.mrf.mxu0
        %v7942 = vadd.f32 %v498, %v7941
        %v7943 = vpop.f32.mrf.mxu0
        %7944 = vmatprep.mubr.f32.mxu0 0.0
        %7945 = vmatmul.mubr.f32.gmra.mxu0 %v7780
        %v7946 = vpop.f32.mrf.mxu0
        %v7947 = vadd.f32 %v499, %v7946
        %v7948 = vpop.f32.mrf.mxu0
        %7949 = vmatprep.mubr.f32.mxu0 0.0
        %7950 = vmatmul.mubr.f32.gmra.mxu0 %v7782
        %v7951 = vpop.f32.mrf.mxu0
        %v7952 = vadd.f32 %v500, %v7951
        %v7953 = vpop.f32.mrf.mxu0
        %7954 = vmatprep.mubr.f32.mxu0 0.0
        %7955 = vmatmul.mubr.f32.gmra.mxu0 %v7784
        %v7956 = vpop.f32.mrf.mxu0
        %v7957 = vadd.f32 %v501, %v7956
        %v7958 = vpop.f32.mrf.mxu0
        %7959 = vmatprep.mubr.f32.mxu0 0.0
        %7960 = vmatmul.mubr.f32.gmra.mxu0 %v7786
        %v7961 = vpop.f32.mrf.mxu0
        %v7962 = vadd.f32 %v502, %v7961
        %v7963 = vpop.f32.mrf.mxu0
        %7964 = vdwg.mxu0
        %7965 = vmax.xlane.f32.xlu0 %v7887
        %v7966 = vpop.xlane.xlu0 %7965
        %7967 = vmax.xlane.f32.xlu0 %v7892
        %v7968 = vpop.xlane.xlu0 %7967
        %7969 = vmax.xlane.f32.xlu0 %v7897
        %v7970 = vpop.xlane.xlu0 %7969
        %7971 = vmax.xlane.f32.xlu0 %v7902
        %v7972 = vpop.xlane.xlu0 %7971
        %7973 = vmax.xlane.f32.xlu0 %v7907
        %v7974 = vpop.xlane.xlu0 %7973
        %7975 = vmax.xlane.f32.xlu0 %v7912
        %v7976 = vpop.xlane.xlu0 %7975
        %7977 = vmax.xlane.f32.xlu0 %v7917
        %v7978 = vpop.xlane.xlu0 %7977
        %7979 = vmax.xlane.f32.xlu0 %v7922
        %v7980 = vpop.xlane.xlu0 %7979
        %7981 = vmax.xlane.f32.xlu0 %v7927
        %v7982 = vpop.xlane.xlu0 %7981
        %7983 = vmax.xlane.f32.xlu0 %v7932
        %v7984 = vpop.xlane.xlu0 %7983
        %7985 = vmax.xlane.f32.xlu0 %v7937
        %v7986 = vpop.xlane.xlu0 %7985
        %7987 = vmax.xlane.f32.xlu0 %v7942
        %v7988 = vpop.xlane.xlu0 %7987
        %7989 = vmax.xlane.f32.xlu0 %v7947
        %v7990 = vpop.xlane.xlu0 %7989
        %7991 = vmax.xlane.f32.xlu0 %v7952
        %v7992 = vpop.xlane.xlu0 %7991
        %7993 = vmax.xlane.f32.xlu0 %v7957
        %v7994 = vpop.xlane.xlu0 %7993
        %7995 = vmax.xlane.f32.xlu0 %v7962
        %v7996 = vpop.xlane.xlu0 %7995
        %v7997 = vsub.f32 %v7887, %v7966
        %v7998 = vsub.f32 %v7892, %v7968
        %v7999 = vsub.f32 %v7897, %v7970
        %v8000 = vsub.f32 %v7902, %v7972
        %v8001 = vsub.f32 %v7907, %v7974
        %v8002 = vsub.f32 %v7912, %v7976
        %v8003 = vsub.f32 %v7917, %v7978
        %v8004 = vsub.f32 %v7922, %v7980
        %v8005 = vsub.f32 %v7927, %v7982
        %v8006 = vsub.f32 %v7932, %v7984
        %v8007 = vsub.f32 %v7937, %v7986
        %v8008 = vsub.f32 %v7942, %v7988
        %v8009 = vsub.f32 %v7947, %v7990
        %v8010 = vsub.f32 %v7952, %v7992
        %v8011 = vsub.f32 %v7957, %v7994
        %v8012 = vsub.f32 %v7962, %v7996
        %v8013 = vmul.f32 %v7997, 1.442695
        %v8014 = vpow.pop %v8013
        %v8015 = vmul.f32 %v7998, 1.442695
        %v8016 = vpow.pop %v8015
        %v8017 = vmul.f32 %v7999, 1.442695
        %v8018 = vpow.pop %v8017
        %v8019 = vmul.f32 %v8000, 1.442695
        %v8020 = vpow.pop %v8019
        %v8021 = vmul.f32 %v8001, 1.442695
        %v8022 = vpow.pop %v8021
        %v8023 = vmul.f32 %v8002, 1.442695
        %v8024 = vpow.pop %v8023
        %v8025 = vmul.f32 %v8003, 1.442695
        %v8026 = vpow.pop %v8025
        %v8027 = vmul.f32 %v8004, 1.442695
        %v8028 = vpow.pop %v8027
        %v8029 = vmul.f32 %v8005, 1.442695
        %v8030 = vpow.pop %v8029
        %v8031 = vmul.f32 %v8006, 1.442695
        %v8032 = vpow.pop %v8031
        %v8033 = vmul.f32 %v8007, 1.442695
        %v8034 = vpow.pop %v8033
        %v8035 = vmul.f32 %v8008, 1.442695
        %v8036 = vpow.pop %v8035
        %v8037 = vmul.f32 %v8009, 1.442695
        %v8038 = vpow.pop %v8037
        %v8039 = vmul.f32 %v8010, 1.442695
        %v8040 = vpow.pop %v8039
        %v8041 = vmul.f32 %v8011, 1.442695
        %v8042 = vpow.pop %v8041
        %v8043 = vmul.f32 %v8012, 1.442695
        %v8044 = vpow.pop %v8043
        %8045 = vadd.xlane.f32.xlu0 %v8014
        %v8046 = vpop.xlane.xlu0 %8045
        %8047 = vadd.xlane.f32.xlu0 %v8016
        %v8048 = vpop.xlane.xlu0 %8047
        %8049 = vadd.xlane.f32.xlu0 %v8018
        %v8050 = vpop.xlane.xlu0 %8049
        %8051 = vadd.xlane.f32.xlu0 %v8020
        %v8052 = vpop.xlane.xlu0 %8051
        %8053 = vadd.xlane.f32.xlu0 %v8022
        %v8054 = vpop.xlane.xlu0 %8053
        %8055 = vadd.xlane.f32.xlu0 %v8024
        %v8056 = vpop.xlane.xlu0 %8055
        %8057 = vadd.xlane.f32.xlu0 %v8026
        %v8058 = vpop.xlane.xlu0 %8057
        %8059 = vadd.xlane.f32.xlu0 %v8028
        %v8060 = vpop.xlane.xlu0 %8059
        %8061 = vadd.xlane.f32.xlu0 %v8030
        %v8062 = vpop.xlane.xlu0 %8061
        %8063 = vadd.xlane.f32.xlu0 %v8032
        %v8064 = vpop.xlane.xlu0 %8063
        %8065 = vadd.xlane.f32.xlu0 %v8034
        %v8066 = vpop.xlane.xlu0 %8065
        %8067 = vadd.xlane.f32.xlu0 %v8036
        %v8068 = vpop.xlane.xlu0 %8067
        %8069 = vadd.xlane.f32.xlu0 %v8038
        %v8070 = vpop.xlane.xlu0 %8069
        %8071 = vadd.xlane.f32.xlu0 %v8040
        %v8072 = vpop.xlane.xlu0 %8071
        %8073 = vadd.xlane.f32.xlu0 %v8042
        %v8074 = vpop.xlane.xlu0 %8073
        %8075 = vadd.xlane.f32.xlu0 %v8044
        %v8076 = vpop.xlane.xlu0 %8075
        %8077 = vrot.lane.b32.xlu0 %v996, 118
        %v8078 = vpop.permute.xlu0 %8077
        %8079 = vrot.lane.b32.xlu0 %v1001, 118
        %v8080 = vpop.permute.xlu0 %8079
        %8081 = vrot.lane.b32.xlu0 %v1006, 118
        %v8082 = vpop.permute.xlu0 %8081
        %8083 = vrot.lane.b32.xlu0 %v1011, 118
        %v8084 = vpop.permute.xlu0 %8083
        %8085 = vrot.lane.b32.xlu0 %v1016, 118
        %v8086 = vpop.permute.xlu0 %8085
        %8087 = vrot.lane.b32.xlu0 %v1021, 118
        %v8088 = vpop.permute.xlu0 %8087
        %8089 = vrot.lane.b32.xlu0 %v1026, 118
        %v8090 = vpop.permute.xlu0 %8089
        %8091 = vrot.lane.b32.xlu0 %v1031, 118
        %v8092 = vpop.permute.xlu0 %8091
        %8093 = vrot.lane.b32.xlu0 %v1036, 118
        %v8094 = vpop.permute.xlu0 %8093
        %8095 = vrot.lane.b32.xlu0 %v1041, 118
        %v8096 = vpop.permute.xlu0 %8095
        %8097 = vrot.lane.b32.xlu0 %v1046, 118
        %v8098 = vpop.permute.xlu0 %8097
        %8099 = vrot.lane.b32.xlu0 %v1051, 118
        %v8100 = vpop.permute.xlu0 %8099
        %8101 = vrot.lane.b32.xlu0 %v1056, 118
        %v8102 = vpop.permute.xlu0 %8101
        %8103 = vrot.lane.b32.xlu0 %v1061, 118
        %v8104 = vpop.permute.xlu0 %8103
        %8105 = vrot.lane.b32.xlu0 %v1066, 118
        %v8106 = vpop.permute.xlu0 %8105
        %8107 = vrot.lane.b32.xlu0 %v1071, 118
        %v8108 = vpop.permute.xlu0 %8107
        %8125 = vmatprep.subr.mxu0 0.0
        %8126 = vmatpush1.msra.mxu0 %v8108
        %8127 = vmatprep.subr.mxu0 0.0
        %8128 = vmatpush1.msra.mxu0 %v8106
        %8129 = vmatprep.subr.mxu0 0.0
        %8130 = vmatpush1.msra.mxu0 %v8104
        %8131 = vmatprep.subr.mxu0 0.0
        %8132 = vmatpush1.msra.mxu0 %v8102
        %8133 = vmatprep.subr.mxu0 0.0
        %8134 = vmatpush1.msra.mxu0 %v8100
        %8135 = vmatprep.subr.mxu0 0.0
        %8136 = vmatpush1.msra.mxu0 %v8098
        %8137 = vmatprep.subr.mxu0 0.0
        %8138 = vmatpush1.msra.mxu0 %v8096
        %8139 = vmatprep.subr.mxu0 0.0
        %8140 = vmatpush1.msra.mxu0 %v8094
        %8141 = vmatprep.subr.mxu0 0.0
        %8142 = vmatpush1.msra.mxu0 %v8092
        %8143 = vmatprep.subr.mxu0 0.0
        %8144 = vmatpush1.msra.mxu0 %v8090
        %8145 = vmatprep.subr.mxu0 0.0
        %8146 = vmatpush1.msra.mxu0 %v8088
        %8147 = vmatprep.subr.mxu0 0.0
        %8148 = vmatpush1.msra.mxu0 %v8086
        %8149 = vmatprep.subr.mxu0 0.0
        %8150 = vmatpush1.msra.mxu0 %v8084
        %8151 = vmatprep.subr.mxu0 0.0
        %8152 = vmatpush1.msra.mxu0 %v8082
        %8153 = vmatprep.subr.mxu0 0.0
        %8154 = vmatpush1.msra.mxu0 %v8080
        %8155 = vmatprep.subr.mxu0 0.0
        %8156 = vmatpush1.msra.mxu0 %v8078
        %8157 = vmatprep.subr.mxu0 0.0
        %8158 = vmatpush2.msra.mxu0 0.0
        %8159 = vmatprep.subr.mxu0 0.0
        %8160 = vmatpush2.msra.mxu0 0.0
        %8161 = vmatprep.subr.mxu0 0.0
        %8162 = vmatpush2.msra.mxu0 0.0
        %8163 = vmatprep.subr.mxu0 0.0
        %8164 = vmatpush2.msra.mxu0 0.0
        %8165 = vmatprep.subr.mxu0 0.0
        %8166 = vmatpush2.msra.mxu0 0.0
        %8167 = vmatprep.subr.mxu0 0.0
        %8168 = vmatpush2.msra.mxu0 0.0
        %8169 = vmatprep.subr.mxu0 0.0
        %8170 = vmatpush2.msra.mxu0 0.0
        %8171 = vmatprep.subr.mxu0 0.0
        %8172 = vmatpush2.msra.mxu0 0.0
        %8173 = vmatprep.subr.mxu0 0.0
        %8174 = vmatpush2.msra.mxu0 0.0
        %8175 = vmatprep.subr.mxu0 0.0
        %8176 = vmatpush2.msra.mxu0 0.0
        %8177 = vmatprep.subr.mxu0 0.0
        %8178 = vmatpush2.msra.mxu0 0.0
        %8179 = vmatprep.subr.mxu0 0.0
        %8180 = vmatpush2.msra.mxu0 0.0
        %8181 = vmatprep.subr.mxu0 0.0
        %8182 = vmatpush2.msra.mxu0 0.0
        %8183 = vmatprep.subr.mxu0 0.0
        %8184 = vmatpush2.msra.mxu0 0.0
        %8185 = vmatprep.subr.mxu0 0.0
        %8186 = vmatpush2.msra.mxu0 0.0
        %8187 = vmatprep.subr.mxu0 0.0
        %8188 = vmatpush2.msra.mxu0 0.0
        %8189 = vmatprep.mubr.f32.mxu0 0.0
        %8190 = vmatmul.mubr.f32.gmra.mxu0 %v8014
        %v8191 = vpop.f32.mrf.mxu0
        %v8192 = vadd.f32 0.0, %v8191
        %v8193 = vpop.f32.mrf.mxu0
        %8194 = vmatprep.mubr.f32.mxu0 0.0
        %8195 = vmatmul.mubr.f32.gmra.mxu0 %v8016
        %v8196 = vpop.f32.mrf.mxu0
        %v8197 = vadd.f32 0.0, %v8196
        %v8198 = vpop.f32.mrf.mxu0
        %8199 = vmatprep.mubr.f32.mxu0 0.0
        %8200 = vmatmul.mubr.f32.gmra.mxu0 %v8018
        %v8201 = vpop.f32.mrf.mxu0
        %v8202 = vadd.f32 0.0, %v8201
        %v8203 = vpop.f32.mrf.mxu0
        %8204 = vmatprep.mubr.f32.mxu0 0.0
        %8205 = vmatmul.mubr.f32.gmra.mxu0 %v8020
        %v8206 = vpop.f32.mrf.mxu0
        %v8207 = vadd.f32 0.0, %v8206
        %v8208 = vpop.f32.mrf.mxu0
        %8209 = vmatprep.mubr.f32.mxu0 0.0
        %8210 = vmatmul.mubr.f32.gmra.mxu0 %v8022
        %v8211 = vpop.f32.mrf.mxu0
        %v8212 = vadd.f32 0.0, %v8211
        %v8213 = vpop.f32.mrf.mxu0
        %8214 = vmatprep.mubr.f32.mxu0 0.0
        %8215 = vmatmul.mubr.f32.gmra.mxu0 %v8024
        %v8216 = vpop.f32.mrf.mxu0
        %v8217 = vadd.f32 0.0, %v8216
        %v8218 = vpop.f32.mrf.mxu0
        %8219 = vmatprep.mubr.f32.mxu0 0.0
        %8220 = vmatmul.mubr.f32.gmra.mxu0 %v8026
        %v8221 = vpop.f32.mrf.mxu0
        %v8222 = vadd.f32 0.0, %v8221
        %v8223 = vpop.f32.mrf.mxu0
        %8224 = vmatprep.mubr.f32.mxu0 0.0
        %8225 = vmatmul.mubr.f32.gmra.mxu0 %v8028
        %v8226 = vpop.f32.mrf.mxu0
        %v8227 = vadd.f32 0.0, %v8226
        %v8228 = vpop.f32.mrf.mxu0
        %8229 = vmatprep.mubr.f32.mxu0 0.0
        %8230 = vmatmul.mubr.f32.gmra.mxu0 %v8030
        %v8231 = vpop.f32.mrf.mxu0
        %v8232 = vadd.f32 0.0, %v8231
        %v8233 = vpop.f32.mrf.mxu0
        %8234 = vmatprep.mubr.f32.mxu0 0.0
        %8235 = vmatmul.mubr.f32.gmra.mxu0 %v8032
        %v8236 = vpop.f32.mrf.mxu0
        %v8237 = vadd.f32 0.0, %v8236
        %v8238 = vpop.f32.mrf.mxu0
        %8239 = vmatprep.mubr.f32.mxu0 0.0
        %8240 = vmatmul.mubr.f32.gmra.mxu0 %v8034
        %v8241 = vpop.f32.mrf.mxu0
        %v8242 = vadd.f32 0.0, %v8241
        %v8243 = vpop.f32.mrf.mxu0
        %8244 = vmatprep.mubr.f32.mxu0 0.0
        %8245 = vmatmul.mubr.f32.gmra.mxu0 %v8036
        %v8246 = vpop.f32.mrf.mxu0
        %v8247 = vadd.f32 0.0, %v8246
        %v8248 = vpop.f32.mrf.mxu0
        %8249 = vmatprep.mubr.f32.mxu0 0.0
        %8250 = vmatmul.mubr.f32.gmra.mxu0 %v8038
        %v8251 = vpop.f32.mrf.mxu0
        %v8252 = vadd.f32 0.0, %v8251
        %v8253 = vpop.f32.mrf.mxu0
        %8254 = vmatprep.mubr.f32.mxu0 0.0
        %8255 = vmatmul.mubr.f32.gmra.mxu0 %v8040
        %v8256 = vpop.f32.mrf.mxu0
        %v8257 = vadd.f32 0.0, %v8256
        %v8258 = vpop.f32.mrf.mxu0
        %8259 = vmatprep.mubr.f32.mxu0 0.0
        %8260 = vmatmul.mubr.f32.gmra.mxu0 %v8042
        %v8261 = vpop.f32.mrf.mxu0
        %v8262 = vadd.f32 0.0, %v8261
        %v8263 = vpop.f32.mrf.mxu0
        %8264 = vmatprep.mubr.f32.mxu0 0.0
        %8265 = vmatmul.mubr.f32.gmra.mxu0 %v8044
        %v8266 = vpop.f32.mrf.mxu0
        %v8267 = vadd.f32 0.0, %v8266
        %v8268 = vpop.f32.mrf.mxu0
        %8269 = vdwg.mxu0
        %v8270 = vrcp.pop %v8046
        %v8271 = vrcp.pop %v8048
        %v8272 = vrcp.pop %v8050
        %v8273 = vrcp.pop %v8052
        %v8274 = vrcp.pop %v8054
        %v8275 = vrcp.pop %v8056
        %v8276 = vrcp.pop %v8058
        %v8277 = vrcp.pop %v8060
        %v8278 = vrcp.pop %v8062
        %v8279 = vrcp.pop %v8064
        %v8280 = vrcp.pop %v8066
        %v8281 = vrcp.pop %v8068
        %v8282 = vrcp.pop %v8070
        %v8283 = vrcp.pop %v8072
        %v8284 = vrcp.pop %v8074
        %v8285 = vrcp.pop %v8076
        %v8286 = vmul.f32 %v8192, %v8270
        %v8287 = vmul.f32 %v8197, %v8271
        %v8288 = vmul.f32 %v8202, %v8272
        %v8289 = vmul.f32 %v8207, %v8273
        %v8290 = vmul.f32 %v8212, %v8274
        %v8291 = vmul.f32 %v8217, %v8275
        %v8292 = vmul.f32 %v8222, %v8276
        %v8293 = vmul.f32 %v8227, %v8277
        %v8294 = vmul.f32 %v8232, %v8278
        %v8295 = vmul.f32 %v8237, %v8279
        %v8296 = vmul.f32 %v8242, %v8280
        %v8297 = vmul.f32 %v8247, %v8281
        %v8298 = vmul.f32 %v8252, %v8282
        %v8299 = vmul.f32 %v8257, %v8283
        %v8300 = vmul.f32 %v8262, %v8284
        %v8301 = vmul.f32 %v8267, %v8285
        %v8303 = vsel %vm1298, %v8286, 0
        %v8306 = vsel %vm1298, %v8287, 0
        %v8309 = vsel %vm1298, %v8288, 0
        %v8312 = vsel %vm1298, %v8289, 0
        %v8315 = vsel %vm1298, %v8290, 0
        %v8318 = vsel %vm1298, %v8291, 0
        %v8321 = vsel %vm1298, %v8292, 0
        %v8324 = vsel %vm1298, %v8293, 0
        %v8327 = vsel %vm1298, %v8294, 0
        %v8330 = vsel %vm1298, %v8295, 0
        %v8333 = vsel %vm1298, %v8296, 0
        %v8336 = vsel %vm1298, %v8297, 0
        %v8339 = vsel %vm1298, %v8298, 0
        %v8342 = vsel %vm1298, %v8299, 0
        %v8345 = vsel %vm1298, %v8300, 0
        %v8348 = vsel %vm1298, %v8301, 0
        %8350 = vmatprep.subr.mxu0 0.0
        %8351 = vmatpush1.xpose.msra.mxu0 %v8348
        %8352 = vmatprep.subr.mxu0 0.0
        %8353 = vmatpush1.xpose.msra.mxu0 %v8345
        %8354 = vmatprep.subr.mxu0 0.0
        %8355 = vmatpush1.xpose.msra.mxu0 %v8342
        %8356 = vmatprep.subr.mxu0 0.0
        %8357 = vmatpush1.xpose.msra.mxu0 %v8339
        %8358 = vmatprep.subr.mxu0 0.0
        %8359 = vmatpush1.xpose.msra.mxu0 %v8336
        %8360 = vmatprep.subr.mxu0 0.0
        %8361 = vmatpush1.xpose.msra.mxu0 %v8333
        %8362 = vmatprep.subr.mxu0 0.0
        %8363 = vmatpush1.xpose.msra.mxu0 %v8330
        %8364 = vmatprep.subr.mxu0 0.0
        %8365 = vmatpush1.xpose.msra.mxu0 %v8327
        %8366 = vmatprep.subr.mxu0 0.0
        %8367 = vmatpush1.xpose.msra.mxu0 %v8324
        %8368 = vmatprep.subr.mxu0 0.0
        %8369 = vmatpush1.xpose.msra.mxu0 %v8321
        %8370 = vmatprep.subr.mxu0 0.0
        %8371 = vmatpush1.xpose.msra.mxu0 %v8318
        %8372 = vmatprep.subr.mxu0 0.0
        %8373 = vmatpush1.xpose.msra.mxu0 %v8315
        %8374 = vmatprep.subr.mxu0 0.0
        %8375 = vmatpush1.xpose.msra.mxu0 %v8312
        %8376 = vmatprep.subr.mxu0 0.0
        %8377 = vmatpush1.xpose.msra.mxu0 %v8309
        %8378 = vmatprep.subr.mxu0 0.0
        %8379 = vmatpush1.xpose.msra.mxu0 %v8306
        %8380 = vmatprep.subr.mxu0 0.0
        %8381 = vmatpush1.xpose.msra.mxu0 %v8303
        %8382 = vmatprep.subr.mxu0 0.0
        %8383 = vmatpush2.xpose.msra.mxu0 0.0
        %8384 = vmatprep.subr.mxu0 0.0
        %8385 = vmatpush2.xpose.msra.mxu0 0.0
        %8386 = vmatprep.subr.mxu0 0.0
        %8387 = vmatpush2.xpose.msra.mxu0 0.0
        %8388 = vmatprep.subr.mxu0 0.0
        %8389 = vmatpush2.xpose.msra.mxu0 0.0
        %8390 = vmatprep.subr.mxu0 0.0
        %8391 = vmatpush2.xpose.msra.mxu0 0.0
        %8392 = vmatprep.subr.mxu0 0.0
        %8393 = vmatpush2.xpose.msra.mxu0 0.0
        %8394 = vmatprep.subr.mxu0 0.0
        %8395 = vmatpush2.xpose.msra.mxu0 0.0
        %8396 = vmatprep.subr.mxu0 0.0
        %8397 = vmatpush2.xpose.msra.mxu0 0.0
        %8398 = vmatprep.subr.mxu0 0.0
        %8399 = vmatpush2.xpose.msra.mxu0 0.0
        %8400 = vmatprep.subr.mxu0 0.0
        %8401 = vmatpush2.xpose.msra.mxu0 0.0
        %8402 = vmatprep.subr.mxu0 0.0
        %8403 = vmatpush2.xpose.msra.mxu0 0.0
        %8404 = vmatprep.subr.mxu0 0.0
        %8405 = vmatpush2.xpose.msra.mxu0 0.0
        %8406 = vmatprep.subr.mxu0 0.0
        %8407 = vmatpush2.xpose.msra.mxu0 0.0
        %8408 = vmatprep.subr.mxu0 0.0
        %8409 = vmatpush2.xpose.msra.mxu0 0.0
        %8410 = vmatprep.subr.mxu0 0.0
        %8411 = vmatpush2.xpose.msra.mxu0 0.0
        %8412 = vmatprep.subr.mxu0 0.0
        %8413 = vmatpush2.xpose.msra.mxu0 0.0
        %8414 = vmatprep.mubr.f32.mxu0 0.0
        %8415 = vmatmul.mubr.f32.gmra.mxu0 %v2474
        %v8416 = vpop.f32.mrf.mxu0
        %v8417 = vadd.f32 0.0, %v8416
        %v8418 = vpop.f32.mrf.mxu0
        %8419 = vdwg.mxu0
        %v8421 = vsel %vm1298, %v7676, 0
        %v8424 = vsel %vm1298, %v7677, 0
        %v8427 = vsel %vm1298, %v7678, 0
        %v8430 = vsel %vm1298, %v7679, 0
        %v8433 = vsel %vm1298, %v7680, 0
        %v8436 = vsel %vm1298, %v7681, 0
        %v8439 = vsel %vm1298, %v7682, 0
        %v8442 = vsel %vm1298, %v7683, 0
        %v8445 = vsel %vm1298, %v7684, 0
        %v8448 = vsel %vm1298, %v7685, 0
        %v8451 = vsel %vm1298, %v7686, 0
        %v8454 = vsel %vm1298, %v7687, 0
        %v8457 = vsel %vm1298, %v7688, 0
        %v8460 = vsel %vm1298, %v7689, 0
        %v8463 = vsel %vm1298, %v7690, 0
        %v8466 = vsel %vm1298, %v7691, 0
        %8468 = vmatprep.subr.mxu0 0.0
        %8469 = vmatpush1.xpose.msra.mxu0 %v8466
        %8470 = vmatprep.subr.mxu0 0.0
        %8471 = vmatpush1.xpose.msra.mxu0 %v8463
        %8472 = vmatprep.subr.mxu0 0.0
        %8473 = vmatpush1.xpose.msra.mxu0 %v8460
        %8474 = vmatprep.subr.mxu0 0.0
        %8475 = vmatpush1.xpose.msra.mxu0 %v8457
        %8476 = vmatprep.subr.mxu0 0.0
        %8477 = vmatpush1.xpose.msra.mxu0 %v8454
        %8478 = vmatprep.subr.mxu0 0.0
        %8479 = vmatpush1.xpose.msra.mxu0 %v8451
        %8480 = vmatprep.subr.mxu0 0.0
        %8481 = vmatpush1.xpose.msra.mxu0 %v8448
        %8482 = vmatprep.subr.mxu0 0.0
        %8483 = vmatpush1.xpose.msra.mxu0 %v8445
        %8484 = vmatprep.subr.mxu0 0.0
        %8485 = vmatpush1.xpose.msra.mxu0 %v8442
        %8486 = vmatprep.subr.mxu0 0.0
        %8487 = vmatpush1.xpose.msra.mxu0 %v8439
        %8488 = vmatprep.subr.mxu0 0.0
        %8489 = vmatpush1.xpose.msra.mxu0 %v8436
        %8490 = vmatprep.subr.mxu0 0.0
        %8491 = vmatpush1.xpose.msra.mxu0 %v8433
        %8492 = vmatprep.subr.mxu0 0.0
        %8493 = vmatpush1.xpose.msra.mxu0 %v8430
        %8494 = vmatprep.subr.mxu0 0.0
        %8495 = vmatpush1.xpose.msra.mxu0 %v8427
        %8496 = vmatprep.subr.mxu0 0.0
        %8497 = vmatpush1.xpose.msra.mxu0 %v8424
        %8498 = vmatprep.subr.mxu0 0.0
        %8499 = vmatpush1.xpose.msra.mxu0 %v8421
        %8500 = vmatprep.subr.mxu0 0.0
        %8501 = vmatpush2.xpose.msra.mxu0 0.0
        %8502 = vmatprep.subr.mxu0 0.0
        %8503 = vmatpush2.xpose.msra.mxu0 0.0
        %8504 = vmatprep.subr.mxu0 0.0
        %8505 = vmatpush2.xpose.msra.mxu0 0.0
        %8506 = vmatprep.subr.mxu0 0.0
        %8507 = vmatpush2.xpose.msra.mxu0 0.0
        %8508 = vmatprep.subr.mxu0 0.0
        %8509 = vmatpush2.xpose.msra.mxu0 0.0
        %8510 = vmatprep.subr.mxu0 0.0
        %8511 = vmatpush2.xpose.msra.mxu0 0.0
        %8512 = vmatprep.subr.mxu0 0.0
        %8513 = vmatpush2.xpose.msra.mxu0 0.0
        %8514 = vmatprep.subr.mxu0 0.0
        %8515 = vmatpush2.xpose.msra.mxu0 0.0
        %8516 = vmatprep.subr.mxu0 0.0
        %8517 = vmatpush2.xpose.msra.mxu0 0.0
        %8518 = vmatprep.subr.mxu0 0.0
        %8519 = vmatpush2.xpose.msra.mxu0 0.0
        %8520 = vmatprep.subr.mxu0 0.0
        %8521 = vmatpush2.xpose.msra.mxu0 0.0
        %8522 = vmatprep.subr.mxu0 0.0
        %8523 = vmatpush2.xpose.msra.mxu0 0.0
        %8524 = vmatprep.subr.mxu0 0.0
        %8525 = vmatpush2.xpose.msra.mxu0 0.0
        %8526 = vmatprep.subr.mxu0 0.0
        %8527 = vmatpush2.xpose.msra.mxu0 0.0
        %8528 = vmatprep.subr.mxu0 0.0
        %8529 = vmatpush2.xpose.msra.mxu0 0.0
        %8530 = vmatprep.subr.mxu0 0.0
        %8531 = vmatpush2.xpose.msra.mxu0 0.0
        %8532 = vmatprep.mubr.f32.mxu0 0.0
        %8533 = vmatmul.mubr.f32.gmra.mxu0 %v2594
        %v8534 = vpop.f32.mrf.mxu0
        %v8535 = vadd.f32 %v8417, %v8534
        %v8536 = vpop.f32.mrf.mxu0
        %8537 = vdwg.mxu0
        %8554 = vrot.lane.b32.xlu0 %v1076, 124
        %v8555 = vpop.permute.xlu0 %8554
        %8556 = vrot.lane.b32.xlu0 %v1081, 124
        %v8557 = vpop.permute.xlu0 %8556
        %8558 = vrot.lane.b32.xlu0 %v1086, 124
        %v8559 = vpop.permute.xlu0 %8558
        %8560 = vrot.lane.b32.xlu0 %v1091, 124
        %v8561 = vpop.permute.xlu0 %8560
        %8562 = vrot.lane.b32.xlu0 %v1096, 124
        %v8563 = vpop.permute.xlu0 %8562
        %8564 = vrot.lane.b32.xlu0 %v1101, 124
        %v8565 = vpop.permute.xlu0 %8564
        %8566 = vrot.lane.b32.xlu0 %v1106, 124
        %v8567 = vpop.permute.xlu0 %8566
        %8568 = vrot.lane.b32.xlu0 %v1111, 124
        %v8569 = vpop.permute.xlu0 %8568
        %8570 = vrot.lane.b32.xlu0 %v1116, 124
        %v8571 = vpop.permute.xlu0 %8570
        %8572 = vrot.lane.b32.xlu0 %v1121, 124
        %v8573 = vpop.permute.xlu0 %8572
        %8574 = vrot.lane.b32.xlu0 %v1126, 124
        %v8575 = vpop.permute.xlu0 %8574
        %8576 = vrot.lane.b32.xlu0 %v1131, 124
        %v8577 = vpop.permute.xlu0 %8576
        %8578 = vrot.lane.b32.xlu0 %v1136, 124
        %v8579 = vpop.permute.xlu0 %8578
        %8580 = vrot.lane.b32.xlu0 %v1141, 124
        %v8581 = vpop.permute.xlu0 %8580
        %8582 = vrot.lane.b32.xlu0 %v1146, 124
        %v8583 = vpop.permute.xlu0 %8582
        %8584 = vrot.lane.b32.xlu0 %v1151, 124
        %v8585 = vpop.permute.xlu0 %8584
        %v8587 = vsel %vm1298, %v1234, 0
        %v8590 = vsel %vm1298, %v1235, 0
        %v8593 = vsel %vm1298, %v1236, 0
        %v8596 = vsel %vm1298, %v1237, 0
        %v8599 = vsel %vm1298, %v1238, 0
        %v8602 = vsel %vm1298, %v1239, 0
        %v8605 = vsel %vm1298, %v1240, 0
        %v8608 = vsel %vm1298, %v1241, 0
        %v8611 = vsel %vm1298, %v1242, 0
        %v8614 = vsel %vm1298, %v1243, 0
        %v8617 = vsel %vm1298, %v1244, 0
        %v8620 = vsel %vm1298, %v1245, 0
        %v8623 = vsel %vm1298, %v1246, 0
        %v8626 = vsel %vm1298, %v1247, 0
        %v8629 = vsel %vm1298, %v1248, 0
        %v8632 = vsel %vm1298, %v1249, 0
        %v8634 = vsel %vm1298, %v8555, 0
        %v8636 = vsel %vm1298, %v8557, 0
        %v8638 = vsel %vm1298, %v8559, 0
        %v8640 = vsel %vm1298, %v8561, 0
        %v8642 = vsel %vm1298, %v8563, 0
        %v8644 = vsel %vm1298, %v8565, 0
        %v8646 = vsel %vm1298, %v8567, 0
        %v8648 = vsel %vm1298, %v8569, 0
        %v8650 = vsel %vm1298, %v8571, 0
        %v8652 = vsel %vm1298, %v8573, 0
        %v8654 = vsel %vm1298, %v8575, 0
        %v8656 = vsel %vm1298, %v8577, 0
        %v8658 = vsel %vm1298, %v8579, 0
        %v8660 = vsel %vm1298, %v8581, 0
        %v8662 = vsel %vm1298, %v8583, 0
        %v8664 = vsel %vm1298, %v8585, 0
        %8666 = vmatprep.subr.mxu0 0.0
        %8667 = vmatpush1.xpose.msra.mxu0 %v8664
        %8668 = vmatprep.subr.mxu0 0.0
        %8669 = vmatpush1.xpose.msra.mxu0 %v8662
        %8670 = vmatprep.subr.mxu0 0.0
        %8671 = vmatpush1.xpose.msra.mxu0 %v8660
        %8672 = vmatprep.subr.mxu0 0.0
        %8673 = vmatpush1.xpose.msra.mxu0 %v8658
        %8674 = vmatprep.subr.mxu0 0.0
        %8675 = vmatpush1.xpose.msra.mxu0 %v8656
        %8676 = vmatprep.subr.mxu0 0.0
        %8677 = vmatpush1.xpose.msra.mxu0 %v8654
        %8678 = vmatprep.subr.mxu0 0.0
        %8679 = vmatpush1.xpose.msra.mxu0 %v8652
        %8680 = vmatprep.subr.mxu0 0.0
        %8681 = vmatpush1.xpose.msra.mxu0 %v8650
        %8682 = vmatprep.subr.mxu0 0.0
        %8683 = vmatpush1.xpose.msra.mxu0 %v8648
        %8684 = vmatprep.subr.mxu0 0.0
        %8685 = vmatpush1.xpose.msra.mxu0 %v8646
        %8686 = vmatprep.subr.mxu0 0.0
        %8687 = vmatpush1.xpose.msra.mxu0 %v8644
        %8688 = vmatprep.subr.mxu0 0.0
        %8689 = vmatpush1.xpose.msra.mxu0 %v8642
        %8690 = vmatprep.subr.mxu0 0.0
        %8691 = vmatpush1.xpose.msra.mxu0 %v8640
        %8692 = vmatprep.subr.mxu0 0.0
        %8693 = vmatpush1.xpose.msra.mxu0 %v8638
        %8694 = vmatprep.subr.mxu0 0.0
        %8695 = vmatpush1.xpose.msra.mxu0 %v8636
        %8696 = vmatprep.subr.mxu0 0.0
        %8697 = vmatpush1.xpose.msra.mxu0 %v8634
        %8698 = vmatprep.subr.mxu0 0.0
        %8699 = vmatpush2.xpose.msra.mxu0 0.0
        %8700 = vmatprep.subr.mxu0 0.0
        %8701 = vmatpush2.xpose.msra.mxu0 0.0
        %8702 = vmatprep.subr.mxu0 0.0
        %8703 = vmatpush2.xpose.msra.mxu0 0.0
        %8704 = vmatprep.subr.mxu0 0.0
        %8705 = vmatpush2.xpose.msra.mxu0 0.0
        %8706 = vmatprep.subr.mxu0 0.0
        %8707 = vmatpush2.xpose.msra.mxu0 0.0
        %8708 = vmatprep.subr.mxu0 0.0
        %8709 = vmatpush2.xpose.msra.mxu0 0.0
        %8710 = vmatprep.subr.mxu0 0.0
        %8711 = vmatpush2.xpose.msra.mxu0 0.0
        %8712 = vmatprep.subr.mxu0 0.0
        %8713 = vmatpush2.xpose.msra.mxu0 0.0
        %8714 = vmatprep.subr.mxu0 0.0
        %8715 = vmatpush2.xpose.msra.mxu0 0.0
        %8716 = vmatprep.subr.mxu0 0.0
        %8717 = vmatpush2.xpose.msra.mxu0 0.0
        %8718 = vmatprep.subr.mxu0 0.0
        %8719 = vmatpush2.xpose.msra.mxu0 0.0
        %8720 = vmatprep.subr.mxu0 0.0
        %8721 = vmatpush2.xpose.msra.mxu0 0.0
        %8722 = vmatprep.subr.mxu0 0.0
        %8723 = vmatpush2.xpose.msra.mxu0 0.0
        %8724 = vmatprep.subr.mxu0 0.0
        %8725 = vmatpush2.xpose.msra.mxu0 0.0
        %8726 = vmatprep.subr.mxu0 0.0
        %8727 = vmatpush2.xpose.msra.mxu0 0.0
        %8728 = vmatprep.subr.mxu0 0.0
        %8729 = vmatpush2.xpose.msra.mxu0 0.0
        %8730 = vmatprep.mubr.f32.mxu0 0.0
        %8731 = vmatmul.mubr.f32.gmra.mxu0 %v8587
        %v8732 = vpop.f32.mrf.mxu0
        %v8733 = vadd.f32 %v487, %v8732
        %v8734 = vpop.f32.mrf.mxu0
        %8735 = vmatprep.mubr.f32.mxu0 0.0
        %8736 = vmatmul.mubr.f32.gmra.mxu0 %v8590
        %v8737 = vpop.f32.mrf.mxu0
        %v8738 = vadd.f32 %v488, %v8737
        %v8739 = vpop.f32.mrf.mxu0
        %8740 = vmatprep.mubr.f32.mxu0 0.0
        %8741 = vmatmul.mubr.f32.gmra.mxu0 %v8593
        %v8742 = vpop.f32.mrf.mxu0
        %v8743 = vadd.f32 %v489, %v8742
        %v8744 = vpop.f32.mrf.mxu0
        %8745 = vmatprep.mubr.f32.mxu0 0.0
        %8746 = vmatmul.mubr.f32.gmra.mxu0 %v8596
        %v8747 = vpop.f32.mrf.mxu0
        %v8748 = vadd.f32 %v490, %v8747
        %v8749 = vpop.f32.mrf.mxu0
        %8750 = vmatprep.mubr.f32.mxu0 0.0
        %8751 = vmatmul.mubr.f32.gmra.mxu0 %v8599
        %v8752 = vpop.f32.mrf.mxu0
        %v8753 = vadd.f32 %v491, %v8752
        %v8754 = vpop.f32.mrf.mxu0
        %8755 = vmatprep.mubr.f32.mxu0 0.0
        %8756 = vmatmul.mubr.f32.gmra.mxu0 %v8602
        %v8757 = vpop.f32.mrf.mxu0
        %v8758 = vadd.f32 %v492, %v8757
        %v8759 = vpop.f32.mrf.mxu0
        %8760 = vmatprep.mubr.f32.mxu0 0.0
        %8761 = vmatmul.mubr.f32.gmra.mxu0 %v8605
        %v8762 = vpop.f32.mrf.mxu0
        %v8763 = vadd.f32 %v493, %v8762
        %v8764 = vpop.f32.mrf.mxu0
        %8765 = vmatprep.mubr.f32.mxu0 0.0
        %8766 = vmatmul.mubr.f32.gmra.mxu0 %v8608
        %v8767 = vpop.f32.mrf.mxu0
        %v8768 = vadd.f32 %v494, %v8767
        %v8769 = vpop.f32.mrf.mxu0
        %8770 = vmatprep.mubr.f32.mxu0 0.0
        %8771 = vmatmul.mubr.f32.gmra.mxu0 %v8611
        %v8772 = vpop.f32.mrf.mxu0
        %v8773 = vadd.f32 %v495, %v8772
        %v8774 = vpop.f32.mrf.mxu0
        %8775 = vmatprep.mubr.f32.mxu0 0.0
        %8776 = vmatmul.mubr.f32.gmra.mxu0 %v8614
        %v8777 = vpop.f32.mrf.mxu0
        %v8778 = vadd.f32 %v496, %v8777
        %v8779 = vpop.f32.mrf.mxu0
        %8780 = vmatprep.mubr.f32.mxu0 0.0
        %8781 = vmatmul.mubr.f32.gmra.mxu0 %v8617
        %v8782 = vpop.f32.mrf.mxu0
        %v8783 = vadd.f32 %v497, %v8782
        %v8784 = vpop.f32.mrf.mxu0
        %8785 = vmatprep.mubr.f32.mxu0 0.0
        %8786 = vmatmul.mubr.f32.gmra.mxu0 %v8620
        %v8787 = vpop.f32.mrf.mxu0
        %v8788 = vadd.f32 %v498, %v8787
        %v8789 = vpop.f32.mrf.mxu0
        %8790 = vmatprep.mubr.f32.mxu0 0.0
        %8791 = vmatmul.mubr.f32.gmra.mxu0 %v8623
        %v8792 = vpop.f32.mrf.mxu0
        %v8793 = vadd.f32 %v499, %v8792
        %v8794 = vpop.f32.mrf.mxu0
        %8795 = vmatprep.mubr.f32.mxu0 0.0
        %8796 = vmatmul.mubr.f32.gmra.mxu0 %v8626
        %v8797 = vpop.f32.mrf.mxu0
        %v8798 = vadd.f32 %v500, %v8797
        %v8799 = vpop.f32.mrf.mxu0
        %8800 = vmatprep.mubr.f32.mxu0 0.0
        %8801 = vmatmul.mubr.f32.gmra.mxu0 %v8629
        %v8802 = vpop.f32.mrf.mxu0
        %v8803 = vadd.f32 %v501, %v8802
        %v8804 = vpop.f32.mrf.mxu0
        %8805 = vmatprep.mubr.f32.mxu0 0.0
        %8806 = vmatmul.mubr.f32.gmra.mxu0 %v8632
        %v8807 = vpop.f32.mrf.mxu0
        %v8808 = vadd.f32 %v502, %v8807
        %v8809 = vpop.f32.mrf.mxu0
        %8810 = vdwg.mxu0
        %8811 = vmax.xlane.f32.xlu0 %v8733
        %v8812 = vpop.xlane.xlu0 %8811
        %8813 = vmax.xlane.f32.xlu0 %v8738
        %v8814 = vpop.xlane.xlu0 %8813
        %8815 = vmax.xlane.f32.xlu0 %v8743
        %v8816 = vpop.xlane.xlu0 %8815
        %8817 = vmax.xlane.f32.xlu0 %v8748
        %v8818 = vpop.xlane.xlu0 %8817
        %8819 = vmax.xlane.f32.xlu0 %v8753
        %v8820 = vpop.xlane.xlu0 %8819
        %8821 = vmax.xlane.f32.xlu0 %v8758
        %v8822 = vpop.xlane.xlu0 %8821
        %8823 = vmax.xlane.f32.xlu0 %v8763
        %v8824 = vpop.xlane.xlu0 %8823
        %8825 = vmax.xlane.f32.xlu0 %v8768
        %v8826 = vpop.xlane.xlu0 %8825
        %8827 = vmax.xlane.f32.xlu0 %v8773
        %v8828 = vpop.xlane.xlu0 %8827
        %8829 = vmax.xlane.f32.xlu0 %v8778
        %v8830 = vpop.xlane.xlu0 %8829
        %8831 = vmax.xlane.f32.xlu0 %v8783
        %v8832 = vpop.xlane.xlu0 %8831
        %8833 = vmax.xlane.f32.xlu0 %v8788
        %v8834 = vpop.xlane.xlu0 %8833
        %8835 = vmax.xlane.f32.xlu0 %v8793
        %v8836 = vpop.xlane.xlu0 %8835
        %8837 = vmax.xlane.f32.xlu0 %v8798
        %v8838 = vpop.xlane.xlu0 %8837
        %8839 = vmax.xlane.f32.xlu0 %v8803
        %v8840 = vpop.xlane.xlu0 %8839
        %8841 = vmax.xlane.f32.xlu0 %v8808
        %v8842 = vpop.xlane.xlu0 %8841
        %v8843 = vsub.f32 %v8733, %v8812
        %v8844 = vsub.f32 %v8738, %v8814
        %v8845 = vsub.f32 %v8743, %v8816
        %v8846 = vsub.f32 %v8748, %v8818
        %v8847 = vsub.f32 %v8753, %v8820
        %v8848 = vsub.f32 %v8758, %v8822
        %v8849 = vsub.f32 %v8763, %v8824
        %v8850 = vsub.f32 %v8768, %v8826
        %v8851 = vsub.f32 %v8773, %v8828
        %v8852 = vsub.f32 %v8778, %v8830
        %v8853 = vsub.f32 %v8783, %v8832
        %v8854 = vsub.f32 %v8788, %v8834
        %v8855 = vsub.f32 %v8793, %v8836
        %v8856 = vsub.f32 %v8798, %v8838
        %v8857 = vsub.f32 %v8803, %v8840
        %v8858 = vsub.f32 %v8808, %v8842
        %v8859 = vmul.f32 %v8843, 1.442695
        %v8860 = vpow.pop %v8859
        %v8861 = vmul.f32 %v8844, 1.442695
        %v8862 = vpow.pop %v8861
        %v8863 = vmul.f32 %v8845, 1.442695
        %v8864 = vpow.pop %v8863
        %v8865 = vmul.f32 %v8846, 1.442695
        %v8866 = vpow.pop %v8865
        %v8867 = vmul.f32 %v8847, 1.442695
        %v8868 = vpow.pop %v8867
        %v8869 = vmul.f32 %v8848, 1.442695
        %v8870 = vpow.pop %v8869
        %v8871 = vmul.f32 %v8849, 1.442695
        %v8872 = vpow.pop %v8871
        %v8873 = vmul.f32 %v8850, 1.442695
        %v8874 = vpow.pop %v8873
        %v8875 = vmul.f32 %v8851, 1.442695
        %v8876 = vpow.pop %v8875
        %v8877 = vmul.f32 %v8852, 1.442695
        %v8878 = vpow.pop %v8877
        %v8879 = vmul.f32 %v8853, 1.442695
        %v8880 = vpow.pop %v8879
        %v8881 = vmul.f32 %v8854, 1.442695
        %v8882 = vpow.pop %v8881
        %v8883 = vmul.f32 %v8855, 1.442695
        %v8884 = vpow.pop %v8883
        %v8885 = vmul.f32 %v8856, 1.442695
        %v8886 = vpow.pop %v8885
        %v8887 = vmul.f32 %v8857, 1.442695
        %v8888 = vpow.pop %v8887
        %v8889 = vmul.f32 %v8858, 1.442695
        %v8890 = vpow.pop %v8889
        %8891 = vadd.xlane.f32.xlu0 %v8860
        %v8892 = vpop.xlane.xlu0 %8891
        %8893 = vadd.xlane.f32.xlu0 %v8862
        %v8894 = vpop.xlane.xlu0 %8893
        %8895 = vadd.xlane.f32.xlu0 %v8864
        %v8896 = vpop.xlane.xlu0 %8895
        %8897 = vadd.xlane.f32.xlu0 %v8866
        %v8898 = vpop.xlane.xlu0 %8897
        %8899 = vadd.xlane.f32.xlu0 %v8868
        %v8900 = vpop.xlane.xlu0 %8899
        %8901 = vadd.xlane.f32.xlu0 %v8870
        %v8902 = vpop.xlane.xlu0 %8901
        %8903 = vadd.xlane.f32.xlu0 %v8872
        %v8904 = vpop.xlane.xlu0 %8903
        %8905 = vadd.xlane.f32.xlu0 %v8874
        %v8906 = vpop.xlane.xlu0 %8905
        %8907 = vadd.xlane.f32.xlu0 %v8876
        %v8908 = vpop.xlane.xlu0 %8907
        %8909 = vadd.xlane.f32.xlu0 %v8878
        %v8910 = vpop.xlane.xlu0 %8909
        %8911 = vadd.xlane.f32.xlu0 %v8880
        %v8912 = vpop.xlane.xlu0 %8911
        %8913 = vadd.xlane.f32.xlu0 %v8882
        %v8914 = vpop.xlane.xlu0 %8913
        %8915 = vadd.xlane.f32.xlu0 %v8884
        %v8916 = vpop.xlane.xlu0 %8915
        %8917 = vadd.xlane.f32.xlu0 %v8886
        %v8918 = vpop.xlane.xlu0 %8917
        %8919 = vadd.xlane.f32.xlu0 %v8888
        %v8920 = vpop.xlane.xlu0 %8919
        %8921 = vadd.xlane.f32.xlu0 %v8890
        %v8922 = vpop.xlane.xlu0 %8921
        %8923 = vrot.lane.b32.xlu0 %v1076, 120
        %v8924 = vpop.permute.xlu0 %8923
        %8925 = vrot.lane.b32.xlu0 %v1081, 120
        %v8926 = vpop.permute.xlu0 %8925
        %8927 = vrot.lane.b32.xlu0 %v1086, 120
        %v8928 = vpop.permute.xlu0 %8927
        %8929 = vrot.lane.b32.xlu0 %v1091, 120
        %v8930 = vpop.permute.xlu0 %8929
        %8931 = vrot.lane.b32.xlu0 %v1096, 120
        %v8932 = vpop.permute.xlu0 %8931
        %8933 = vrot.lane.b32.xlu0 %v1101, 120
        %v8934 = vpop.permute.xlu0 %8933
        %8935 = vrot.lane.b32.xlu0 %v1106, 120
        %v8936 = vpop.permute.xlu0 %8935
        %8937 = vrot.lane.b32.xlu0 %v1111, 120
        %v8938 = vpop.permute.xlu0 %8937
        %8939 = vrot.lane.b32.xlu0 %v1116, 120
        %v8940 = vpop.permute.xlu0 %8939
        %8941 = vrot.lane.b32.xlu0 %v1121, 120
        %v8942 = vpop.permute.xlu0 %8941
        %8943 = vrot.lane.b32.xlu0 %v1126, 120
        %v8944 = vpop.permute.xlu0 %8943
        %8945 = vrot.lane.b32.xlu0 %v1131, 120
        %v8946 = vpop.permute.xlu0 %8945
        %8947 = vrot.lane.b32.xlu0 %v1136, 120
        %v8948 = vpop.permute.xlu0 %8947
        %8949 = vrot.lane.b32.xlu0 %v1141, 120
        %v8950 = vpop.permute.xlu0 %8949
        %8951 = vrot.lane.b32.xlu0 %v1146, 120
        %v8952 = vpop.permute.xlu0 %8951
        %8953 = vrot.lane.b32.xlu0 %v1151, 120
        %v8954 = vpop.permute.xlu0 %8953
        %8971 = vmatprep.subr.mxu0 0.0
        %8972 = vmatpush1.msra.mxu0 %v8954
        %8973 = vmatprep.subr.mxu0 0.0
        %8974 = vmatpush1.msra.mxu0 %v8952
        %8975 = vmatprep.subr.mxu0 0.0
        %8976 = vmatpush1.msra.mxu0 %v8950
        %8977 = vmatprep.subr.mxu0 0.0
        %8978 = vmatpush1.msra.mxu0 %v8948
        %8979 = vmatprep.subr.mxu0 0.0
        %8980 = vmatpush1.msra.mxu0 %v8946
        %8981 = vmatprep.subr.mxu0 0.0
        %8982 = vmatpush1.msra.mxu0 %v8944
        %8983 = vmatprep.subr.mxu0 0.0
        %8984 = vmatpush1.msra.mxu0 %v8942
        %8985 = vmatprep.subr.mxu0 0.0
        %8986 = vmatpush1.msra.mxu0 %v8940
        %8987 = vmatprep.subr.mxu0 0.0
        %8988 = vmatpush1.msra.mxu0 %v8938
        %8989 = vmatprep.subr.mxu0 0.0
        %8990 = vmatpush1.msra.mxu0 %v8936
        %8991 = vmatprep.subr.mxu0 0.0
        %8992 = vmatpush1.msra.mxu0 %v8934
        %8993 = vmatprep.subr.mxu0 0.0
        %8994 = vmatpush1.msra.mxu0 %v8932
        %8995 = vmatprep.subr.mxu0 0.0
        %8996 = vmatpush1.msra.mxu0 %v8930
        %8997 = vmatprep.subr.mxu0 0.0
        %8998 = vmatpush1.msra.mxu0 %v8928
        %8999 = vmatprep.subr.mxu0 0.0
        %9000 = vmatpush1.msra.mxu0 %v8926
        %9001 = vmatprep.subr.mxu0 0.0
        %9002 = vmatpush1.msra.mxu0 %v8924
        %9003 = vmatprep.subr.mxu0 0.0
        %9004 = vmatpush2.msra.mxu0 0.0
        %9005 = vmatprep.subr.mxu0 0.0
        %9006 = vmatpush2.msra.mxu0 0.0
        %9007 = vmatprep.subr.mxu0 0.0
        %9008 = vmatpush2.msra.mxu0 0.0
        %9009 = vmatprep.subr.mxu0 0.0
        %9010 = vmatpush2.msra.mxu0 0.0
        %9011 = vmatprep.subr.mxu0 0.0
        %9012 = vmatpush2.msra.mxu0 0.0
        %9013 = vmatprep.subr.mxu0 0.0
        %9014 = vmatpush2.msra.mxu0 0.0
        %9015 = vmatprep.subr.mxu0 0.0
        %9016 = vmatpush2.msra.mxu0 0.0
        %9017 = vmatprep.subr.mxu0 0.0
        %9018 = vmatpush2.msra.mxu0 0.0
        %9019 = vmatprep.subr.mxu0 0.0
        %9020 = vmatpush2.msra.mxu0 0.0
        %9021 = vmatprep.subr.mxu0 0.0
        %9022 = vmatpush2.msra.mxu0 0.0
        %9023 = vmatprep.subr.mxu0 0.0
        %9024 = vmatpush2.msra.mxu0 0.0
        %9025 = vmatprep.subr.mxu0 0.0
        %9026 = vmatpush2.msra.mxu0 0.0
        %9027 = vmatprep.subr.mxu0 0.0
        %9028 = vmatpush2.msra.mxu0 0.0
        %9029 = vmatprep.subr.mxu0 0.0
        %9030 = vmatpush2.msra.mxu0 0.0
        %9031 = vmatprep.subr.mxu0 0.0
        %9032 = vmatpush2.msra.mxu0 0.0
        %9033 = vmatprep.subr.mxu0 0.0
        %9034 = vmatpush2.msra.mxu0 0.0
        %9035 = vmatprep.mubr.f32.mxu0 0.0
        %9036 = vmatmul.mubr.f32.gmra.mxu0 %v8860
        %v9037 = vpop.f32.mrf.mxu0
        %v9038 = vadd.f32 0.0, %v9037
        %v9039 = vpop.f32.mrf.mxu0
        %9040 = vmatprep.mubr.f32.mxu0 0.0
        %9041 = vmatmul.mubr.f32.gmra.mxu0 %v8862
        %v9042 = vpop.f32.mrf.mxu0
        %v9043 = vadd.f32 0.0, %v9042
        %v9044 = vpop.f32.mrf.mxu0
        %9045 = vmatprep.mubr.f32.mxu0 0.0
        %9046 = vmatmul.mubr.f32.gmra.mxu0 %v8864
        %v9047 = vpop.f32.mrf.mxu0
        %v9048 = vadd.f32 0.0, %v9047
        %v9049 = vpop.f32.mrf.mxu0
        %9050 = vmatprep.mubr.f32.mxu0 0.0
        %9051 = vmatmul.mubr.f32.gmra.mxu0 %v8866
        %v9052 = vpop.f32.mrf.mxu0
        %v9053 = vadd.f32 0.0, %v9052
        %v9054 = vpop.f32.mrf.mxu0
        %9055 = vmatprep.mubr.f32.mxu0 0.0
        %9056 = vmatmul.mubr.f32.gmra.mxu0 %v8868
        %v9057 = vpop.f32.mrf.mxu0
        %v9058 = vadd.f32 0.0, %v9057
        %v9059 = vpop.f32.mrf.mxu0
        %9060 = vmatprep.mubr.f32.mxu0 0.0
        %9061 = vmatmul.mubr.f32.gmra.mxu0 %v8870
        %v9062 = vpop.f32.mrf.mxu0
        %v9063 = vadd.f32 0.0, %v9062
        %v9064 = vpop.f32.mrf.mxu0
        %9065 = vmatprep.mubr.f32.mxu0 0.0
        %9066 = vmatmul.mubr.f32.gmra.mxu0 %v8872
        %v9067 = vpop.f32.mrf.mxu0
        %v9068 = vadd.f32 0.0, %v9067
        %v9069 = vpop.f32.mrf.mxu0
        %9070 = vmatprep.mubr.f32.mxu0 0.0
        %9071 = vmatmul.mubr.f32.gmra.mxu0 %v8874
        %v9072 = vpop.f32.mrf.mxu0
        %v9073 = vadd.f32 0.0, %v9072
        %v9074 = vpop.f32.mrf.mxu0
        %9075 = vmatprep.mubr.f32.mxu0 0.0
        %9076 = vmatmul.mubr.f32.gmra.mxu0 %v8876
        %v9077 = vpop.f32.mrf.mxu0
        %v9078 = vadd.f32 0.0, %v9077
        %v9079 = vpop.f32.mrf.mxu0
        %9080 = vmatprep.mubr.f32.mxu0 0.0
        %9081 = vmatmul.mubr.f32.gmra.mxu0 %v8878
        %v9082 = vpop.f32.mrf.mxu0
        %v9083 = vadd.f32 0.0, %v9082
        %v9084 = vpop.f32.mrf.mxu0
        %9085 = vmatprep.mubr.f32.mxu0 0.0
        %9086 = vmatmul.mubr.f32.gmra.mxu0 %v8880
        %v9087 = vpop.f32.mrf.mxu0
        %v9088 = vadd.f32 0.0, %v9087
        %v9089 = vpop.f32.mrf.mxu0
        %9090 = vmatprep.mubr.f32.mxu0 0.0
        %9091 = vmatmul.mubr.f32.gmra.mxu0 %v8882
        %v9092 = vpop.f32.mrf.mxu0
        %v9093 = vadd.f32 0.0, %v9092
        %v9094 = vpop.f32.mrf.mxu0
        %9095 = vmatprep.mubr.f32.mxu0 0.0
        %9096 = vmatmul.mubr.f32.gmra.mxu0 %v8884
        %v9097 = vpop.f32.mrf.mxu0
        %v9098 = vadd.f32 0.0, %v9097
        %v9099 = vpop.f32.mrf.mxu0
        %9100 = vmatprep.mubr.f32.mxu0 0.0
        %9101 = vmatmul.mubr.f32.gmra.mxu0 %v8886
        %v9102 = vpop.f32.mrf.mxu0
        %v9103 = vadd.f32 0.0, %v9102
        %v9104 = vpop.f32.mrf.mxu0
        %9105 = vmatprep.mubr.f32.mxu0 0.0
        %9106 = vmatmul.mubr.f32.gmra.mxu0 %v8888
        %v9107 = vpop.f32.mrf.mxu0
        %v9108 = vadd.f32 0.0, %v9107
        %v9109 = vpop.f32.mrf.mxu0
        %9110 = vmatprep.mubr.f32.mxu0 0.0
        %9111 = vmatmul.mubr.f32.gmra.mxu0 %v8890
        %v9112 = vpop.f32.mrf.mxu0
        %v9113 = vadd.f32 0.0, %v9112
        %v9114 = vpop.f32.mrf.mxu0
        %9115 = vdwg.mxu0
        %v9116 = vrcp.pop %v8892
        %v9117 = vrcp.pop %v8894
        %v9118 = vrcp.pop %v8896
        %v9119 = vrcp.pop %v8898
        %v9120 = vrcp.pop %v8900
        %v9121 = vrcp.pop %v8902
        %v9122 = vrcp.pop %v8904
        %v9123 = vrcp.pop %v8906
        %v9124 = vrcp.pop %v8908
        %v9125 = vrcp.pop %v8910
        %v9126 = vrcp.pop %v8912
        %v9127 = vrcp.pop %v8914
        %v9128 = vrcp.pop %v8916
        %v9129 = vrcp.pop %v8918
        %v9130 = vrcp.pop %v8920
        %v9131 = vrcp.pop %v8922
        %v9132 = vmul.f32 %v9038, %v9116
        %v9133 = vmul.f32 %v9043, %v9117
        %v9134 = vmul.f32 %v9048, %v9118
        %v9135 = vmul.f32 %v9053, %v9119
        %v9136 = vmul.f32 %v9058, %v9120
        %v9137 = vmul.f32 %v9063, %v9121
        %v9138 = vmul.f32 %v9068, %v9122
        %v9139 = vmul.f32 %v9073, %v9123
        %v9140 = vmul.f32 %v9078, %v9124
        %v9141 = vmul.f32 %v9083, %v9125
        %v9142 = vmul.f32 %v9088, %v9126
        %v9143 = vmul.f32 %v9093, %v9127
        %v9144 = vmul.f32 %v9098, %v9128
        %v9145 = vmul.f32 %v9103, %v9129
        %v9146 = vmul.f32 %v9108, %v9130
        %v9147 = vmul.f32 %v9113, %v9131
        %9148 = vrot.lane.b32.xlu0 %v1234, 126
        %v9149 = vpop.permute.xlu0 %9148
        %9150 = vrot.lane.b32.xlu0 %v1235, 126
        %v9151 = vpop.permute.xlu0 %9150
        %9152 = vrot.lane.b32.xlu0 %v1236, 126
        %v9153 = vpop.permute.xlu0 %9152
        %9154 = vrot.lane.b32.xlu0 %v1237, 126
        %v9155 = vpop.permute.xlu0 %9154
        %9156 = vrot.lane.b32.xlu0 %v1238, 126
        %v9157 = vpop.permute.xlu0 %9156
        %9158 = vrot.lane.b32.xlu0 %v1239, 126
        %v9159 = vpop.permute.xlu0 %9158
        %9160 = vrot.lane.b32.xlu0 %v1240, 126
        %v9161 = vpop.permute.xlu0 %9160
        %9162 = vrot.lane.b32.xlu0 %v1241, 126
        %v9163 = vpop.permute.xlu0 %9162
        %9164 = vrot.lane.b32.xlu0 %v1242, 126
        %v9165 = vpop.permute.xlu0 %9164
        %9166 = vrot.lane.b32.xlu0 %v1243, 126
        %v9167 = vpop.permute.xlu0 %9166
        %9168 = vrot.lane.b32.xlu0 %v1244, 126
        %v9169 = vpop.permute.xlu0 %9168
        %9170 = vrot.lane.b32.xlu0 %v1245, 126
        %v9171 = vpop.permute.xlu0 %9170
        %9172 = vrot.lane.b32.xlu0 %v1246, 126
        %v9173 = vpop.permute.xlu0 %9172
        %9174 = vrot.lane.b32.xlu0 %v1247, 126
        %v9175 = vpop.permute.xlu0 %9174
        %9176 = vrot.lane.b32.xlu0 %v1248, 126
        %v9177 = vpop.permute.xlu0 %9176
        %9178 = vrot.lane.b32.xlu0 %v1249, 126
        %v9179 = vpop.permute.xlu0 %9178
        %9180 = vrot.lane.b32.xlu0 %v1076, 122
        %v9181 = vpop.permute.xlu0 %9180
        %9182 = vrot.lane.b32.xlu0 %v1081, 122
        %v9183 = vpop.permute.xlu0 %9182
        %9184 = vrot.lane.b32.xlu0 %v1086, 122
        %v9185 = vpop.permute.xlu0 %9184
        %9186 = vrot.lane.b32.xlu0 %v1091, 122
        %v9187 = vpop.permute.xlu0 %9186
        %9188 = vrot.lane.b32.xlu0 %v1096, 122
        %v9189 = vpop.permute.xlu0 %9188
        %9190 = vrot.lane.b32.xlu0 %v1101, 122
        %v9191 = vpop.permute.xlu0 %9190
        %9192 = vrot.lane.b32.xlu0 %v1106, 122
        %v9193 = vpop.permute.xlu0 %9192
        %9194 = vrot.lane.b32.xlu0 %v1111, 122
        %v9195 = vpop.permute.xlu0 %9194
        %9196 = vrot.lane.b32.xlu0 %v1116, 122
        %v9197 = vpop.permute.xlu0 %9196
        %9198 = vrot.lane.b32.xlu0 %v1121, 122
        %v9199 = vpop.permute.xlu0 %9198
        %9200 = vrot.lane.b32.xlu0 %v1126, 122
        %v9201 = vpop.permute.xlu0 %9200
        %9202 = vrot.lane.b32.xlu0 %v1131, 122
        %v9203 = vpop.permute.xlu0 %9202
        %9204 = vrot.lane.b32.xlu0 %v1136, 122
        %v9205 = vpop.permute.xlu0 %9204
        %9206 = vrot.lane.b32.xlu0 %v1141, 122
        %v9207 = vpop.permute.xlu0 %9206
        %9208 = vrot.lane.b32.xlu0 %v1146, 122
        %v9209 = vpop.permute.xlu0 %9208
        %9210 = vrot.lane.b32.xlu0 %v1151, 122
        %v9211 = vpop.permute.xlu0 %9210
        %v9212 = vsel %vm1298, %v9149, 0
        %v9214 = vsel %vm1298, %v9151, 0
        %v9216 = vsel %vm1298, %v9153, 0
        %v9218 = vsel %vm1298, %v9155, 0
        %v9220 = vsel %vm1298, %v9157, 0
        %v9222 = vsel %vm1298, %v9159, 0
        %v9224 = vsel %vm1298, %v9161, 0
        %v9226 = vsel %vm1298, %v9163, 0
        %v9228 = vsel %vm1298, %v9165, 0
        %v9230 = vsel %vm1298, %v9167, 0
        %v9232 = vsel %vm1298, %v9169, 0
        %v9234 = vsel %vm1298, %v9171, 0
        %v9236 = vsel %vm1298, %v9173, 0
        %v9238 = vsel %vm1298, %v9175, 0
        %v9240 = vsel %vm1298, %v9177, 0
        %v9242 = vsel %vm1298, %v9179, 0
        %v9244 = vsel %vm1298, %v9181, 0
        %v9246 = vsel %vm1298, %v9183, 0
        %v9248 = vsel %vm1298, %v9185, 0
        %v9250 = vsel %vm1298, %v9187, 0
        %v9252 = vsel %vm1298, %v9189, 0
        %v9254 = vsel %vm1298, %v9191, 0
        %v9256 = vsel %vm1298, %v9193, 0
        %v9258 = vsel %vm1298, %v9195, 0
        %v9260 = vsel %vm1298, %v9197, 0
        %v9262 = vsel %vm1298, %v9199, 0
        %v9264 = vsel %vm1298, %v9201, 0
        %v9266 = vsel %vm1298, %v9203, 0
        %v9268 = vsel %vm1298, %v9205, 0
        %v9270 = vsel %vm1298, %v9207, 0
        %v9272 = vsel %vm1298, %v9209, 0
        %v9274 = vsel %vm1298, %v9211, 0
        %9276 = vmatprep.subr.mxu0 0.0
        %9277 = vmatpush1.xpose.msra.mxu0 %v9274
        %9278 = vmatprep.subr.mxu0 0.0
        %9279 = vmatpush1.xpose.msra.mxu0 %v9272
        %9280 = vmatprep.subr.mxu0 0.0
        %9281 = vmatpush1.xpose.msra.mxu0 %v9270
        %9282 = vmatprep.subr.mxu0 0.0
        %9283 = vmatpush1.xpose.msra.mxu0 %v9268
        %9284 = vmatprep.subr.mxu0 0.0
        %9285 = vmatpush1.xpose.msra.mxu0 %v9266
        %9286 = vmatprep.subr.mxu0 0.0
        %9287 = vmatpush1.xpose.msra.mxu0 %v9264
        %9288 = vmatprep.subr.mxu0 0.0
        %9289 = vmatpush1.xpose.msra.mxu0 %v9262
        %9290 = vmatprep.subr.mxu0 0.0
        %9291 = vmatpush1.xpose.msra.mxu0 %v9260
        %9292 = vmatprep.subr.mxu0 0.0
        %9293 = vmatpush1.xpose.msra.mxu0 %v9258
        %9294 = vmatprep.subr.mxu0 0.0
        %9295 = vmatpush1.xpose.msra.mxu0 %v9256
        %9296 = vmatprep.subr.mxu0 0.0
        %9297 = vmatpush1.xpose.msra.mxu0 %v9254
        %9298 = vmatprep.subr.mxu0 0.0
        %9299 = vmatpush1.xpose.msra.mxu0 %v9252
        %9300 = vmatprep.subr.mxu0 0.0
        %9301 = vmatpush1.xpose.msra.mxu0 %v9250
        %9302 = vmatprep.subr.mxu0 0.0
        %9303 = vmatpush1.xpose.msra.mxu0 %v9248
        %9304 = vmatprep.subr.mxu0 0.0
        %9305 = vmatpush1.xpose.msra.mxu0 %v9246
        %9306 = vmatprep.subr.mxu0 0.0
        %9307 = vmatpush1.xpose.msra.mxu0 %v9244
        %9308 = vmatprep.subr.mxu0 0.0
        %9309 = vmatpush2.xpose.msra.mxu0 0.0
        %9310 = vmatprep.subr.mxu0 0.0
        %9311 = vmatpush2.xpose.msra.mxu0 0.0
        %9312 = vmatprep.subr.mxu0 0.0
        %9313 = vmatpush2.xpose.msra.mxu0 0.0
        %9314 = vmatprep.subr.mxu0 0.0
        %9315 = vmatpush2.xpose.msra.mxu0 0.0
        %9316 = vmatprep.subr.mxu0 0.0
        %9317 = vmatpush2.xpose.msra.mxu0 0.0
        %9318 = vmatprep.subr.mxu0 0.0
        %9319 = vmatpush2.xpose.msra.mxu0 0.0
        %9320 = vmatprep.subr.mxu0 0.0
        %9321 = vmatpush2.xpose.msra.mxu0 0.0
        %9322 = vmatprep.subr.mxu0 0.0
        %9323 = vmatpush2.xpose.msra.mxu0 0.0
        %9324 = vmatprep.subr.mxu0 0.0
        %9325 = vmatpush2.xpose.msra.mxu0 0.0
        %9326 = vmatprep.subr.mxu0 0.0
        %9327 = vmatpush2.xpose.msra.mxu0 0.0
        %9328 = vmatprep.subr.mxu0 0.0
        %9329 = vmatpush2.xpose.msra.mxu0 0.0
        %9330 = vmatprep.subr.mxu0 0.0
        %9331 = vmatpush2.xpose.msra.mxu0 0.0
        %9332 = vmatprep.subr.mxu0 0.0
        %9333 = vmatpush2.xpose.msra.mxu0 0.0
        %9334 = vmatprep.subr.mxu0 0.0
        %9335 = vmatpush2.xpose.msra.mxu0 0.0
        %9336 = vmatprep.subr.mxu0 0.0
        %9337 = vmatpush2.xpose.msra.mxu0 0.0
        %9338 = vmatprep.subr.mxu0 0.0
        %9339 = vmatpush2.xpose.msra.mxu0 0.0
        %9340 = vmatprep.mubr.f32.mxu0 0.0
        %9341 = vmatmul.mubr.f32.gmra.mxu0 %v9212
        %v9342 = vpop.f32.mrf.mxu0
        %v9343 = vadd.f32 %v487, %v9342
        %v9344 = vpop.f32.mrf.mxu0
        %9345 = vmatprep.mubr.f32.mxu0 0.0
        %9346 = vmatmul.mubr.f32.gmra.mxu0 %v9214
        %v9347 = vpop.f32.mrf.mxu0
        %v9348 = vadd.f32 %v488, %v9347
        %v9349 = vpop.f32.mrf.mxu0
        %9350 = vmatprep.mubr.f32.mxu0 0.0
        %9351 = vmatmul.mubr.f32.gmra.mxu0 %v9216
        %v9352 = vpop.f32.mrf.mxu0
        %v9353 = vadd.f32 %v489, %v9352
        %v9354 = vpop.f32.mrf.mxu0
        %9355 = vmatprep.mubr.f32.mxu0 0.0
        %9356 = vmatmul.mubr.f32.gmra.mxu0 %v9218
        %v9357 = vpop.f32.mrf.mxu0
        %v9358 = vadd.f32 %v490, %v9357
        %v9359 = vpop.f32.mrf.mxu0
        %9360 = vmatprep.mubr.f32.mxu0 0.0
        %9361 = vmatmul.mubr.f32.gmra.mxu0 %v9220
        %v9362 = vpop.f32.mrf.mxu0
        %v9363 = vadd.f32 %v491, %v9362
        %v9364 = vpop.f32.mrf.mxu0
        %9365 = vmatprep.mubr.f32.mxu0 0.0
        %9366 = vmatmul.mubr.f32.gmra.mxu0 %v9222
        %v9367 = vpop.f32.mrf.mxu0
        %v9368 = vadd.f32 %v492, %v9367
        %v9369 = vpop.f32.mrf.mxu0
        %9370 = vmatprep.mubr.f32.mxu0 0.0
        %9371 = vmatmul.mubr.f32.gmra.mxu0 %v9224
        %v9372 = vpop.f32.mrf.mxu0
        %v9373 = vadd.f32 %v493, %v9372
        %v9374 = vpop.f32.mrf.mxu0
        %9375 = vmatprep.mubr.f32.mxu0 0.0
        %9376 = vmatmul.mubr.f32.gmra.mxu0 %v9226
        %v9377 = vpop.f32.mrf.mxu0
        %v9378 = vadd.f32 %v494, %v9377
        %v9379 = vpop.f32.mrf.mxu0
        %9380 = vmatprep.mubr.f32.mxu0 0.0
        %9381 = vmatmul.mubr.f32.gmra.mxu0 %v9228
        %v9382 = vpop.f32.mrf.mxu0
        %v9383 = vadd.f32 %v495, %v9382
        %v9384 = vpop.f32.mrf.mxu0
        %9385 = vmatprep.mubr.f32.mxu0 0.0
        %9386 = vmatmul.mubr.f32.gmra.mxu0 %v9230
        %v9387 = vpop.f32.mrf.mxu0
        %v9388 = vadd.f32 %v496, %v9387
        %v9389 = vpop.f32.mrf.mxu0
        %9390 = vmatprep.mubr.f32.mxu0 0.0
        %9391 = vmatmul.mubr.f32.gmra.mxu0 %v9232
        %v9392 = vpop.f32.mrf.mxu0
        %v9393 = vadd.f32 %v497, %v9392
        %v9394 = vpop.f32.mrf.mxu0
        %9395 = vmatprep.mubr.f32.mxu0 0.0
        %9396 = vmatmul.mubr.f32.gmra.mxu0 %v9234
        %v9397 = vpop.f32.mrf.mxu0
        %v9398 = vadd.f32 %v498, %v9397
        %v9399 = vpop.f32.mrf.mxu0
        %9400 = vmatprep.mubr.f32.mxu0 0.0
        %9401 = vmatmul.mubr.f32.gmra.mxu0 %v9236
        %v9402 = vpop.f32.mrf.mxu0
        %v9403 = vadd.f32 %v499, %v9402
        %v9404 = vpop.f32.mrf.mxu0
        %9405 = vmatprep.mubr.f32.mxu0 0.0
        %9406 = vmatmul.mubr.f32.gmra.mxu0 %v9238
        %v9407 = vpop.f32.mrf.mxu0
        %v9408 = vadd.f32 %v500, %v9407
        %v9409 = vpop.f32.mrf.mxu0
        %9410 = vmatprep.mubr.f32.mxu0 0.0
        %9411 = vmatmul.mubr.f32.gmra.mxu0 %v9240
        %v9412 = vpop.f32.mrf.mxu0
        %v9413 = vadd.f32 %v501, %v9412
        %v9414 = vpop.f32.mrf.mxu0
        %9415 = vmatprep.mubr.f32.mxu0 0.0
        %9416 = vmatmul.mubr.f32.gmra.mxu0 %v9242
        %v9417 = vpop.f32.mrf.mxu0
        %v9418 = vadd.f32 %v502, %v9417
        %v9419 = vpop.f32.mrf.mxu0
        %9420 = vdwg.mxu0
        %9421 = vmax.xlane.f32.xlu0 %v9343
        %v9422 = vpop.xlane.xlu0 %9421
        %9423 = vmax.xlane.f32.xlu0 %v9348
        %v9424 = vpop.xlane.xlu0 %9423
        %9425 = vmax.xlane.f32.xlu0 %v9353
        %v9426 = vpop.xlane.xlu0 %9425
        %9427 = vmax.xlane.f32.xlu0 %v9358
        %v9428 = vpop.xlane.xlu0 %9427
        %9429 = vmax.xlane.f32.xlu0 %v9363
        %v9430 = vpop.xlane.xlu0 %9429
        %9431 = vmax.xlane.f32.xlu0 %v9368
        %v9432 = vpop.xlane.xlu0 %9431
        %9433 = vmax.xlane.f32.xlu0 %v9373
        %v9434 = vpop.xlane.xlu0 %9433
        %9435 = vmax.xlane.f32.xlu0 %v9378
        %v9436 = vpop.xlane.xlu0 %9435
        %9437 = vmax.xlane.f32.xlu0 %v9383
        %v9438 = vpop.xlane.xlu0 %9437
        %9439 = vmax.xlane.f32.xlu0 %v9388
        %v9440 = vpop.xlane.xlu0 %9439
        %9441 = vmax.xlane.f32.xlu0 %v9393
        %v9442 = vpop.xlane.xlu0 %9441
        %9443 = vmax.xlane.f32.xlu0 %v9398
        %v9444 = vpop.xlane.xlu0 %9443
        %9445 = vmax.xlane.f32.xlu0 %v9403
        %v9446 = vpop.xlane.xlu0 %9445
        %9447 = vmax.xlane.f32.xlu0 %v9408
        %v9448 = vpop.xlane.xlu0 %9447
        %9449 = vmax.xlane.f32.xlu0 %v9413
        %v9450 = vpop.xlane.xlu0 %9449
        %9451 = vmax.xlane.f32.xlu0 %v9418
        %v9452 = vpop.xlane.xlu0 %9451
        %v9453 = vsub.f32 %v9343, %v9422
        %v9454 = vsub.f32 %v9348, %v9424
        %v9455 = vsub.f32 %v9353, %v9426
        %v9456 = vsub.f32 %v9358, %v9428
        %v9457 = vsub.f32 %v9363, %v9430
        %v9458 = vsub.f32 %v9368, %v9432
        %v9459 = vsub.f32 %v9373, %v9434
        %v9460 = vsub.f32 %v9378, %v9436
        %v9461 = vsub.f32 %v9383, %v9438
        %v9462 = vsub.f32 %v9388, %v9440
        %v9463 = vsub.f32 %v9393, %v9442
        %v9464 = vsub.f32 %v9398, %v9444
        %v9465 = vsub.f32 %v9403, %v9446
        %v9466 = vsub.f32 %v9408, %v9448
        %v9467 = vsub.f32 %v9413, %v9450
        %v9468 = vsub.f32 %v9418, %v9452
        %v9469 = vmul.f32 %v9453, 1.442695
        %v9470 = vpow.pop %v9469
        %v9471 = vmul.f32 %v9454, 1.442695
        %v9472 = vpow.pop %v9471
        %v9473 = vmul.f32 %v9455, 1.442695
        %v9474 = vpow.pop %v9473
        %v9475 = vmul.f32 %v9456, 1.442695
        %v9476 = vpow.pop %v9475
        %v9477 = vmul.f32 %v9457, 1.442695
        %v9478 = vpow.pop %v9477
        %v9479 = vmul.f32 %v9458, 1.442695
        %v9480 = vpow.pop %v9479
        %v9481 = vmul.f32 %v9459, 1.442695
        %v9482 = vpow.pop %v9481
        %v9483 = vmul.f32 %v9460, 1.442695
        %v9484 = vpow.pop %v9483
        %v9485 = vmul.f32 %v9461, 1.442695
        %v9486 = vpow.pop %v9485
        %v9487 = vmul.f32 %v9462, 1.442695
        %v9488 = vpow.pop %v9487
        %v9489 = vmul.f32 %v9463, 1.442695
        %v9490 = vpow.pop %v9489
        %v9491 = vmul.f32 %v9464, 1.442695
        %v9492 = vpow.pop %v9491
        %v9493 = vmul.f32 %v9465, 1.442695
        %v9494 = vpow.pop %v9493
        %v9495 = vmul.f32 %v9466, 1.442695
        %v9496 = vpow.pop %v9495
        %v9497 = vmul.f32 %v9467, 1.442695
        %v9498 = vpow.pop %v9497
        %v9499 = vmul.f32 %v9468, 1.442695
        %v9500 = vpow.pop %v9499
        %9501 = vadd.xlane.f32.xlu0 %v9470
        %v9502 = vpop.xlane.xlu0 %9501
        %9503 = vadd.xlane.f32.xlu0 %v9472
        %v9504 = vpop.xlane.xlu0 %9503
        %9505 = vadd.xlane.f32.xlu0 %v9474
        %v9506 = vpop.xlane.xlu0 %9505
        %9507 = vadd.xlane.f32.xlu0 %v9476
        %v9508 = vpop.xlane.xlu0 %9507
        %9509 = vadd.xlane.f32.xlu0 %v9478
        %v9510 = vpop.xlane.xlu0 %9509
        %9511 = vadd.xlane.f32.xlu0 %v9480
        %v9512 = vpop.xlane.xlu0 %9511
        %9513 = vadd.xlane.f32.xlu0 %v9482
        %v9514 = vpop.xlane.xlu0 %9513
        %9515 = vadd.xlane.f32.xlu0 %v9484
        %v9516 = vpop.xlane.xlu0 %9515
        %9517 = vadd.xlane.f32.xlu0 %v9486
        %v9518 = vpop.xlane.xlu0 %9517
        %9519 = vadd.xlane.f32.xlu0 %v9488
        %v9520 = vpop.xlane.xlu0 %9519
        %9521 = vadd.xlane.f32.xlu0 %v9490
        %v9522 = vpop.xlane.xlu0 %9521
        %9523 = vadd.xlane.f32.xlu0 %v9492
        %v9524 = vpop.xlane.xlu0 %9523
        %9525 = vadd.xlane.f32.xlu0 %v9494
        %v9526 = vpop.xlane.xlu0 %9525
        %9527 = vadd.xlane.f32.xlu0 %v9496
        %v9528 = vpop.xlane.xlu0 %9527
        %9529 = vadd.xlane.f32.xlu0 %v9498
        %v9530 = vpop.xlane.xlu0 %9529
        %9531 = vadd.xlane.f32.xlu0 %v9500
        %v9532 = vpop.xlane.xlu0 %9531
        %9533 = vrot.lane.b32.xlu0 %v1076, 118
        %v9534 = vpop.permute.xlu0 %9533
        %9535 = vrot.lane.b32.xlu0 %v1081, 118
        %v9536 = vpop.permute.xlu0 %9535
        %9537 = vrot.lane.b32.xlu0 %v1086, 118
        %v9538 = vpop.permute.xlu0 %9537
        %9539 = vrot.lane.b32.xlu0 %v1091, 118
        %v9540 = vpop.permute.xlu0 %9539
        %9541 = vrot.lane.b32.xlu0 %v1096, 118
        %v9542 = vpop.permute.xlu0 %9541
        %9543 = vrot.lane.b32.xlu0 %v1101, 118
        %v9544 = vpop.permute.xlu0 %9543
        %9545 = vrot.lane.b32.xlu0 %v1106, 118
        %v9546 = vpop.permute.xlu0 %9545
        %9547 = vrot.lane.b32.xlu0 %v1111, 118
        %v9548 = vpop.permute.xlu0 %9547
        %9549 = vrot.lane.b32.xlu0 %v1116, 118
        %v9550 = vpop.permute.xlu0 %9549
        %9551 = vrot.lane.b32.xlu0 %v1121, 118
        %v9552 = vpop.permute.xlu0 %9551
        %9553 = vrot.lane.b32.xlu0 %v1126, 118
        %v9554 = vpop.permute.xlu0 %9553
        %9555 = vrot.lane.b32.xlu0 %v1131, 118
        %v9556 = vpop.permute.xlu0 %9555
        %9557 = vrot.lane.b32.xlu0 %v1136, 118
        %v9558 = vpop.permute.xlu0 %9557
        %9559 = vrot.lane.b32.xlu0 %v1141, 118
        %v9560 = vpop.permute.xlu0 %9559
        %9561 = vrot.lane.b32.xlu0 %v1146, 118
        %v9562 = vpop.permute.xlu0 %9561
        %9563 = vrot.lane.b32.xlu0 %v1151, 118
        %v9564 = vpop.permute.xlu0 %9563
        %9581 = vmatprep.subr.mxu0 0.0
        %9582 = vmatpush1.msra.mxu0 %v9564
        %9583 = vmatprep.subr.mxu0 0.0
        %9584 = vmatpush1.msra.mxu0 %v9562
        %9585 = vmatprep.subr.mxu0 0.0
        %9586 = vmatpush1.msra.mxu0 %v9560
        %9587 = vmatprep.subr.mxu0 0.0
        %9588 = vmatpush1.msra.mxu0 %v9558
        %9589 = vmatprep.subr.mxu0 0.0
        %9590 = vmatpush1.msra.mxu0 %v9556
        %9591 = vmatprep.subr.mxu0 0.0
        %9592 = vmatpush1.msra.mxu0 %v9554
        %9593 = vmatprep.subr.mxu0 0.0
        %9594 = vmatpush1.msra.mxu0 %v9552
        %9595 = vmatprep.subr.mxu0 0.0
        %9596 = vmatpush1.msra.mxu0 %v9550
        %9597 = vmatprep.subr.mxu0 0.0
        %9598 = vmatpush1.msra.mxu0 %v9548
        %9599 = vmatprep.subr.mxu0 0.0
        %9600 = vmatpush1.msra.mxu0 %v9546
        %9601 = vmatprep.subr.mxu0 0.0
        %9602 = vmatpush1.msra.mxu0 %v9544
        %9603 = vmatprep.subr.mxu0 0.0
        %9604 = vmatpush1.msra.mxu0 %v9542
        %9605 = vmatprep.subr.mxu0 0.0
        %9606 = vmatpush1.msra.mxu0 %v9540
        %9607 = vmatprep.subr.mxu0 0.0
        %9608 = vmatpush1.msra.mxu0 %v9538
        %9609 = vmatprep.subr.mxu0 0.0
        %9610 = vmatpush1.msra.mxu0 %v9536
        %9611 = vmatprep.subr.mxu0 0.0
        %9612 = vmatpush1.msra.mxu0 %v9534
        %9613 = vmatprep.subr.mxu0 0.0
        %9614 = vmatpush2.msra.mxu0 0.0
        %9615 = vmatprep.subr.mxu0 0.0
        %9616 = vmatpush2.msra.mxu0 0.0
        %9617 = vmatprep.subr.mxu0 0.0
        %9618 = vmatpush2.msra.mxu0 0.0
        %9619 = vmatprep.subr.mxu0 0.0
        %9620 = vmatpush2.msra.mxu0 0.0
        %9621 = vmatprep.subr.mxu0 0.0
        %9622 = vmatpush2.msra.mxu0 0.0
        %9623 = vmatprep.subr.mxu0 0.0
        %9624 = vmatpush2.msra.mxu0 0.0
        %9625 = vmatprep.subr.mxu0 0.0
        %9626 = vmatpush2.msra.mxu0 0.0
        %9627 = vmatprep.subr.mxu0 0.0
        %9628 = vmatpush2.msra.mxu0 0.0
        %9629 = vmatprep.subr.mxu0 0.0
        %9630 = vmatpush2.msra.mxu0 0.0
        %9631 = vmatprep.subr.mxu0 0.0
        %9632 = vmatpush2.msra.mxu0 0.0
        %9633 = vmatprep.subr.mxu0 0.0
        %9634 = vmatpush2.msra.mxu0 0.0
        %9635 = vmatprep.subr.mxu0 0.0
        %9636 = vmatpush2.msra.mxu0 0.0
        %9637 = vmatprep.subr.mxu0 0.0
        %9638 = vmatpush2.msra.mxu0 0.0
        %9639 = vmatprep.subr.mxu0 0.0
        %9640 = vmatpush2.msra.mxu0 0.0
        %9641 = vmatprep.subr.mxu0 0.0
        %9642 = vmatpush2.msra.mxu0 0.0
        %9643 = vmatprep.subr.mxu0 0.0
        %9644 = vmatpush2.msra.mxu0 0.0
        %9645 = vmatprep.mubr.f32.mxu0 0.0
        %9646 = vmatmul.mubr.f32.gmra.mxu0 %v9470
        %v9647 = vpop.f32.mrf.mxu0
        %v9648 = vadd.f32 0.0, %v9647
        %v9649 = vpop.f32.mrf.mxu0
        %9650 = vmatprep.mubr.f32.mxu0 0.0
        %9651 = vmatmul.mubr.f32.gmra.mxu0 %v9472
        %v9652 = vpop.f32.mrf.mxu0
        %v9653 = vadd.f32 0.0, %v9652
        %v9654 = vpop.f32.mrf.mxu0
        %9655 = vmatprep.mubr.f32.mxu0 0.0
        %9656 = vmatmul.mubr.f32.gmra.mxu0 %v9474
        %v9657 = vpop.f32.mrf.mxu0
        %v9658 = vadd.f32 0.0, %v9657
        %v9659 = vpop.f32.mrf.mxu0
        %9660 = vmatprep.mubr.f32.mxu0 0.0
        %9661 = vmatmul.mubr.f32.gmra.mxu0 %v9476
        %v9662 = vpop.f32.mrf.mxu0
        %v9663 = vadd.f32 0.0, %v9662
        %v9664 = vpop.f32.mrf.mxu0
        %9665 = vmatprep.mubr.f32.mxu0 0.0
        %9666 = vmatmul.mubr.f32.gmra.mxu0 %v9478
        %v9667 = vpop.f32.mrf.mxu0
        %v9668 = vadd.f32 0.0, %v9667
        %v9669 = vpop.f32.mrf.mxu0
        %9670 = vmatprep.mubr.f32.mxu0 0.0
        %9671 = vmatmul.mubr.f32.gmra.mxu0 %v9480
        %v9672 = vpop.f32.mrf.mxu0
        %v9673 = vadd.f32 0.0, %v9672
        %v9674 = vpop.f32.mrf.mxu0
        %9675 = vmatprep.mubr.f32.mxu0 0.0
        %9676 = vmatmul.mubr.f32.gmra.mxu0 %v9482
        %v9677 = vpop.f32.mrf.mxu0
        %v9678 = vadd.f32 0.0, %v9677
        %v9679 = vpop.f32.mrf.mxu0
        %9680 = vmatprep.mubr.f32.mxu0 0.0
        %9681 = vmatmul.mubr.f32.gmra.mxu0 %v9484
        %v9682 = vpop.f32.mrf.mxu0
        %v9683 = vadd.f32 0.0, %v9682
        %v9684 = vpop.f32.mrf.mxu0
        %9685 = vmatprep.mubr.f32.mxu0 0.0
        %9686 = vmatmul.mubr.f32.gmra.mxu0 %v9486
        %v9687 = vpop.f32.mrf.mxu0
        %v9688 = vadd.f32 0.0, %v9687
        %v9689 = vpop.f32.mrf.mxu0
        %9690 = vmatprep.mubr.f32.mxu0 0.0
        %9691 = vmatmul.mubr.f32.gmra.mxu0 %v9488
        %v9692 = vpop.f32.mrf.mxu0
        %v9693 = vadd.f32 0.0, %v9692
        %v9694 = vpop.f32.mrf.mxu0
        %9695 = vmatprep.mubr.f32.mxu0 0.0
        %9696 = vmatmul.mubr.f32.gmra.mxu0 %v9490
        %v9697 = vpop.f32.mrf.mxu0
        %v9698 = vadd.f32 0.0, %v9697
        %v9699 = vpop.f32.mrf.mxu0
        %9700 = vmatprep.mubr.f32.mxu0 0.0
        %9701 = vmatmul.mubr.f32.gmra.mxu0 %v9492
        %v9702 = vpop.f32.mrf.mxu0
        %v9703 = vadd.f32 0.0, %v9702
        %v9704 = vpop.f32.mrf.mxu0
        %9705 = vmatprep.mubr.f32.mxu0 0.0
        %9706 = vmatmul.mubr.f32.gmra.mxu0 %v9494
        %v9707 = vpop.f32.mrf.mxu0
        %v9708 = vadd.f32 0.0, %v9707
        %v9709 = vpop.f32.mrf.mxu0
        %9710 = vmatprep.mubr.f32.mxu0 0.0
        %9711 = vmatmul.mubr.f32.gmra.mxu0 %v9496
        %v9712 = vpop.f32.mrf.mxu0
        %v9713 = vadd.f32 0.0, %v9712
        %v9714 = vpop.f32.mrf.mxu0
        %9715 = vmatprep.mubr.f32.mxu0 0.0
        %9716 = vmatmul.mubr.f32.gmra.mxu0 %v9498
        %v9717 = vpop.f32.mrf.mxu0
        %v9718 = vadd.f32 0.0, %v9717
        %v9719 = vpop.f32.mrf.mxu0
        %9720 = vmatprep.mubr.f32.mxu0 0.0
        %9721 = vmatmul.mubr.f32.gmra.mxu0 %v9500
        %v9722 = vpop.f32.mrf.mxu0
        %v9723 = vadd.f32 0.0, %v9722
        %v9724 = vpop.f32.mrf.mxu0
        %9725 = vdwg.mxu0
        %v9726 = vrcp.pop %v9502
        %v9727 = vrcp.pop %v9504
        %v9728 = vrcp.pop %v9506
        %v9729 = vrcp.pop %v9508
        %v9730 = vrcp.pop %v9510
        %v9731 = vrcp.pop %v9512
        %v9732 = vrcp.pop %v9514
        %v9733 = vrcp.pop %v9516
        %v9734 = vrcp.pop %v9518
        %v9735 = vrcp.pop %v9520
        %v9736 = vrcp.pop %v9522
        %v9737 = vrcp.pop %v9524
        %v9738 = vrcp.pop %v9526
        %v9739 = vrcp.pop %v9528
        %v9740 = vrcp.pop %v9530
        %v9741 = vrcp.pop %v9532
        %v9742 = vmul.f32 %v9648, %v9726
        %v9743 = vmul.f32 %v9653, %v9727
        %v9744 = vmul.f32 %v9658, %v9728
        %v9745 = vmul.f32 %v9663, %v9729
        %v9746 = vmul.f32 %v9668, %v9730
        %v9747 = vmul.f32 %v9673, %v9731
        %v9748 = vmul.f32 %v9678, %v9732
        %v9749 = vmul.f32 %v9683, %v9733
        %v9750 = vmul.f32 %v9688, %v9734
        %v9751 = vmul.f32 %v9693, %v9735
        %v9752 = vmul.f32 %v9698, %v9736
        %v9753 = vmul.f32 %v9703, %v9737
        %v9754 = vmul.f32 %v9708, %v9738
        %v9755 = vmul.f32 %v9713, %v9739
        %v9756 = vmul.f32 %v9718, %v9740
        %v9757 = vmul.f32 %v9723, %v9741
        %v9759 = vsel %vm1298, %v9742, 0
        %v9762 = vsel %vm1298, %v9743, 0
        %v9765 = vsel %vm1298, %v9744, 0
        %v9768 = vsel %vm1298, %v9745, 0
        %v9771 = vsel %vm1298, %v9746, 0
        %v9774 = vsel %vm1298, %v9747, 0
        %v9777 = vsel %vm1298, %v9748, 0
        %v9780 = vsel %vm1298, %v9749, 0
        %v9783 = vsel %vm1298, %v9750, 0
        %v9786 = vsel %vm1298, %v9751, 0
        %v9789 = vsel %vm1298, %v9752, 0
        %v9792 = vsel %vm1298, %v9753, 0
        %v9795 = vsel %vm1298, %v9754, 0
        %v9798 = vsel %vm1298, %v9755, 0
        %v9801 = vsel %vm1298, %v9756, 0
        %v9804 = vsel %vm1298, %v9757, 0
        %9806 = vmatprep.subr.mxu0 0.0
        %9807 = vmatpush1.xpose.msra.mxu0 %v9804
        %9808 = vmatprep.subr.mxu0 0.0
        %9809 = vmatpush1.xpose.msra.mxu0 %v9801
        %9810 = vmatprep.subr.mxu0 0.0
        %9811 = vmatpush1.xpose.msra.mxu0 %v9798
        %9812 = vmatprep.subr.mxu0 0.0
        %9813 = vmatpush1.xpose.msra.mxu0 %v9795
        %9814 = vmatprep.subr.mxu0 0.0
        %9815 = vmatpush1.xpose.msra.mxu0 %v9792
        %9816 = vmatprep.subr.mxu0 0.0
        %9817 = vmatpush1.xpose.msra.mxu0 %v9789
        %9818 = vmatprep.subr.mxu0 0.0
        %9819 = vmatpush1.xpose.msra.mxu0 %v9786
        %9820 = vmatprep.subr.mxu0 0.0
        %9821 = vmatpush1.xpose.msra.mxu0 %v9783
        %9822 = vmatprep.subr.mxu0 0.0
        %9823 = vmatpush1.xpose.msra.mxu0 %v9780
        %9824 = vmatprep.subr.mxu0 0.0
        %9825 = vmatpush1.xpose.msra.mxu0 %v9777
        %9826 = vmatprep.subr.mxu0 0.0
        %9827 = vmatpush1.xpose.msra.mxu0 %v9774
        %9828 = vmatprep.subr.mxu0 0.0
        %9829 = vmatpush1.xpose.msra.mxu0 %v9771
        %9830 = vmatprep.subr.mxu0 0.0
        %9831 = vmatpush1.xpose.msra.mxu0 %v9768
        %9832 = vmatprep.subr.mxu0 0.0
        %9833 = vmatpush1.xpose.msra.mxu0 %v9765
        %9834 = vmatprep.subr.mxu0 0.0
        %9835 = vmatpush1.xpose.msra.mxu0 %v9762
        %9836 = vmatprep.subr.mxu0 0.0
        %9837 = vmatpush1.xpose.msra.mxu0 %v9759
        %9838 = vmatprep.subr.mxu0 0.0
        %9839 = vmatpush2.xpose.msra.mxu0 0.0
        %9840 = vmatprep.subr.mxu0 0.0
        %9841 = vmatpush2.xpose.msra.mxu0 0.0
        %9842 = vmatprep.subr.mxu0 0.0
        %9843 = vmatpush2.xpose.msra.mxu0 0.0
        %9844 = vmatprep.subr.mxu0 0.0
        %9845 = vmatpush2.xpose.msra.mxu0 0.0
        %9846 = vmatprep.subr.mxu0 0.0
        %9847 = vmatpush2.xpose.msra.mxu0 0.0
        %9848 = vmatprep.subr.mxu0 0.0
        %9849 = vmatpush2.xpose.msra.mxu0 0.0
        %9850 = vmatprep.subr.mxu0 0.0
        %9851 = vmatpush2.xpose.msra.mxu0 0.0
        %9852 = vmatprep.subr.mxu0 0.0
        %9853 = vmatpush2.xpose.msra.mxu0 0.0
        %9854 = vmatprep.subr.mxu0 0.0
        %9855 = vmatpush2.xpose.msra.mxu0 0.0
        %9856 = vmatprep.subr.mxu0 0.0
        %9857 = vmatpush2.xpose.msra.mxu0 0.0
        %9858 = vmatprep.subr.mxu0 0.0
        %9859 = vmatpush2.xpose.msra.mxu0 0.0
        %9860 = vmatprep.subr.mxu0 0.0
        %9861 = vmatpush2.xpose.msra.mxu0 0.0
        %9862 = vmatprep.subr.mxu0 0.0
        %9863 = vmatpush2.xpose.msra.mxu0 0.0
        %9864 = vmatprep.subr.mxu0 0.0
        %9865 = vmatpush2.xpose.msra.mxu0 0.0
        %9866 = vmatprep.subr.mxu0 0.0
        %9867 = vmatpush2.xpose.msra.mxu0 0.0
        %9868 = vmatprep.subr.mxu0 0.0
        %9869 = vmatpush2.xpose.msra.mxu0 0.0
        %9870 = vmatprep.mubr.f32.mxu0 0.0
        %9871 = vmatmul.mubr.f32.gmra.mxu0 %v2474
        %v9872 = vpop.f32.mrf.mxu0
        %v9873 = vadd.f32 0.0, %v9872
        %v9874 = vpop.f32.mrf.mxu0
        %9875 = vdwg.mxu0
        %v9877 = vsel %vm1298, %v9132, 0
        %v9880 = vsel %vm1298, %v9133, 0
        %v9883 = vsel %vm1298, %v9134, 0
        %v9886 = vsel %vm1298, %v9135, 0
        %v9889 = vsel %vm1298, %v9136, 0
        %v9892 = vsel %vm1298, %v9137, 0
        %v9895 = vsel %vm1298, %v9138, 0
        %v9898 = vsel %vm1298, %v9139, 0
        %v9901 = vsel %vm1298, %v9140, 0
        %v9904 = vsel %vm1298, %v9141, 0
        %v9907 = vsel %vm1298, %v9142, 0
        %v9910 = vsel %vm1298, %v9143, 0
        %v9913 = vsel %vm1298, %v9144, 0
        %v9916 = vsel %vm1298, %v9145, 0
        %v9919 = vsel %vm1298, %v9146, 0
        %v9922 = vsel %vm1298, %v9147, 0
        %9924 = vmatprep.subr.mxu0 0.0
        %9925 = vmatpush1.xpose.msra.mxu0 %v9922
        %9926 = vmatprep.subr.mxu0 0.0
        %9927 = vmatpush1.xpose.msra.mxu0 %v9919
        %9928 = vmatprep.subr.mxu0 0.0
        %9929 = vmatpush1.xpose.msra.mxu0 %v9916
        %9930 = vmatprep.subr.mxu0 0.0
        %9931 = vmatpush1.xpose.msra.mxu0 %v9913
        %9932 = vmatprep.subr.mxu0 0.0
        %9933 = vmatpush1.xpose.msra.mxu0 %v9910
        %9934 = vmatprep.subr.mxu0 0.0
        %9935 = vmatpush1.xpose.msra.mxu0 %v9907
        %9936 = vmatprep.subr.mxu0 0.0
        %9937 = vmatpush1.xpose.msra.mxu0 %v9904
        %9938 = vmatprep.subr.mxu0 0.0
        %9939 = vmatpush1.xpose.msra.mxu0 %v9901
        %9940 = vmatprep.subr.mxu0 0.0
        %9941 = vmatpush1.xpose.msra.mxu0 %v9898
        %9942 = vmatprep.subr.mxu0 0.0
        %9943 = vmatpush1.xpose.msra.mxu0 %v9895
        %9944 = vmatprep.subr.mxu0 0.0
        %9945 = vmatpush1.xpose.msra.mxu0 %v9892
        %9946 = vmatprep.subr.mxu0 0.0
        %9947 = vmatpush1.xpose.msra.mxu0 %v9889
        %9948 = vmatprep.subr.mxu0 0.0
        %9949 = vmatpush1.xpose.msra.mxu0 %v9886
        %9950 = vmatprep.subr.mxu0 0.0
        %9951 = vmatpush1.xpose.msra.mxu0 %v9883
        %9952 = vmatprep.subr.mxu0 0.0
        %9953 = vmatpush1.xpose.msra.mxu0 %v9880
        %9954 = vmatprep.subr.mxu0 0.0
        %9955 = vmatpush1.xpose.msra.mxu0 %v9877
        %9956 = vmatprep.subr.mxu0 0.0
        %9957 = vmatpush2.xpose.msra.mxu0 0.0
        %9958 = vmatprep.subr.mxu0 0.0
        %9959 = vmatpush2.xpose.msra.mxu0 0.0
        %9960 = vmatprep.subr.mxu0 0.0
        %9961 = vmatpush2.xpose.msra.mxu0 0.0
        %9962 = vmatprep.subr.mxu0 0.0
        %9963 = vmatpush2.xpose.msra.mxu0 0.0
        %9964 = vmatprep.subr.mxu0 0.0
        %9965 = vmatpush2.xpose.msra.mxu0 0.0
        %9966 = vmatprep.subr.mxu0 0.0
        %9967 = vmatpush2.xpose.msra.mxu0 0.0
        %9968 = vmatprep.subr.mxu0 0.0
        %9969 = vmatpush2.xpose.msra.mxu0 0.0
        %9970 = vmatprep.subr.mxu0 0.0
        %9971 = vmatpush2.xpose.msra.mxu0 0.0
        %9972 = vmatprep.subr.mxu0 0.0
        %9973 = vmatpush2.xpose.msra.mxu0 0.0
        %9974 = vmatprep.subr.mxu0 0.0
        %9975 = vmatpush2.xpose.msra.mxu0 0.0
        %9976 = vmatprep.subr.mxu0 0.0
        %9977 = vmatpush2.xpose.msra.mxu0 0.0
        %9978 = vmatprep.subr.mxu0 0.0
        %9979 = vmatpush2.xpose.msra.mxu0 0.0
        %9980 = vmatprep.subr.mxu0 0.0
        %9981 = vmatpush2.xpose.msra.mxu0 0.0
        %9982 = vmatprep.subr.mxu0 0.0
        %9983 = vmatpush2.xpose.msra.mxu0 0.0
        %9984 = vmatprep.subr.mxu0 0.0
        %9985 = vmatpush2.xpose.msra.mxu0 0.0
        %9986 = vmatprep.subr.mxu0 0.0
        %9987 = vmatpush2.xpose.msra.mxu0 0.0
        %9988 = vmatprep.mubr.f32.mxu0 0.0
        %9989 = vmatmul.mubr.f32.gmra.mxu0 %v2594
        %v9990 = vpop.f32.mrf.mxu0
        %v9991 = vadd.f32 %v9873, %v9990
        %v9992 = vpop.f32.mrf.mxu0
        %9993 = vdwg.mxu0
        %v9994 = vld [vmem:[%s6] sm:$0xf]
        %9996 = vset.pattern.permute.xlu0 0
        %9997 = vperm.xlu0 %9996, %v9994
        %v9998 = vpop.permute.xlu0 %9997
        %10000 = vmatprep.subr.mxu0 %v326
        %10001 = vmatpush1.msra.mxu0 %v325
        %10002 = vmatprep.subr.mxu0 %v324
        %10003 = vmatpush1.msra.mxu0 %v323
        %10004 = vmatprep.subr.mxu0 %v322
        %10005 = vmatpush1.msra.mxu0 %v321
        %10006 = vmatprep.subr.mxu0 %v320
        %10007 = vmatpush1.msra.mxu0 %v319
        %10008 = vmatprep.subr.mxu0 %v318
        %10009 = vmatpush1.msra.mxu0 %v317
        %10010 = vmatprep.subr.mxu0 %v316
        %10011 = vmatpush1.msra.mxu0 %v315
        %10012 = vmatprep.subr.mxu0 %v314
        %10013 = vmatpush1.msra.mxu0 %v313
        %10014 = vmatprep.subr.mxu0 %v312
        %10015 = vmatpush1.msra.mxu0 %v311
        %10016 = vmatprep.subr.mxu0 %v310
        %10017 = vmatpush1.msra.mxu0 %v309
        %10018 = vmatprep.subr.mxu0 %v308
        %10019 = vmatpush1.msra.mxu0 %v307
        %10020 = vmatprep.subr.mxu0 %v306
        %10021 = vmatpush1.msra.mxu0 %v305
        %10022 = vmatprep.subr.mxu0 %v304
        %10023 = vmatpush1.msra.mxu0 %v303
        %10024 = vmatprep.subr.mxu0 %v302
        %10025 = vmatpush1.msra.mxu0 %v301
        %10026 = vmatprep.subr.mxu0 %v300
        %10027 = vmatpush1.msra.mxu0 %v299
        %10028 = vmatprep.subr.mxu0 %v298
        %10029 = vmatpush1.msra.mxu0 %v297
        %10030 = vmatprep.subr.mxu0 %v296
        %10031 = vmatpush1.msra.mxu0 %v295
        %10032 = vmatprep.subr.mxu0 %v358
        %10033 = vmatpush2.msra.mxu0 %v357
        %10034 = vmatprep.subr.mxu0 %v356
        %10035 = vmatpush2.msra.mxu0 %v355
        %10036 = vmatprep.subr.mxu0 %v354
        %10037 = vmatpush2.msra.mxu0 %v353
        %10038 = vmatprep.subr.mxu0 %v352
        %10039 = vmatpush2.msra.mxu0 %v351
        %10040 = vmatprep.subr.mxu0 %v350
        %10041 = vmatpush2.msra.mxu0 %v349
        %10042 = vmatprep.subr.mxu0 %v348
        %10043 = vmatpush2.msra.mxu0 %v347
        %10044 = vmatprep.subr.mxu0 %v346
        %10045 = vmatpush2.msra.mxu0 %v345
        %10046 = vmatprep.subr.mxu0 %v344
        %10047 = vmatpush2.msra.mxu0 %v343
        %10048 = vmatprep.subr.mxu0 %v342
        %10049 = vmatpush2.msra.mxu0 %v341
        %10050 = vmatprep.subr.mxu0 %v340
        %10051 = vmatpush2.msra.mxu0 %v339
        %10052 = vmatprep.subr.mxu0 %v338
        %10053 = vmatpush2.msra.mxu0 %v337
        %10054 = vmatprep.subr.mxu0 %v336
        %10055 = vmatpush2.msra.mxu0 %v335
        %10056 = vmatprep.subr.mxu0 %v334
        %10057 = vmatpush2.msra.mxu0 %v333
        %10058 = vmatprep.subr.mxu0 %v332
        %10059 = vmatpush2.msra.mxu0 %v331
        %10060 = vmatprep.subr.mxu0 %v330
        %10061 = vmatpush2.msra.mxu0 %v329
        %10062 = vmatprep.subr.mxu0 %v328
        %10063 = vmatpush2.msra.mxu0 %v327
        %10064 = vmatprep.mubr.f32.mxu0 %v4167
        %10065 = vmatmul.mubr.f32.gmra.mxu0 %v2711
        %v10066 = vpop.f32.mrf.mxu0
        %v10067 = vadd.f32 %v9998, %v10066
        %v10068 = vpop.f32.mrf.mxu0
        %v10069 = vadd.f32 %v9998, %v10068
        %10070 = vdwg.mxu0
        %10071 = vmatprep.subr.mxu0 %v390
        %10072 = vmatpush1.msra.mxu0 %v389
        %10073 = vmatprep.subr.mxu0 %v388
        %10074 = vmatpush1.msra.mxu0 %v387
        %10075 = vmatprep.subr.mxu0 %v386
        %10076 = vmatpush1.msra.mxu0 %v385
        %10077 = vmatprep.subr.mxu0 %v384
        %10078 = vmatpush1.msra.mxu0 %v383
        %10079 = vmatprep.subr.mxu0 %v382
        %10080 = vmatpush1.msra.mxu0 %v381
        %10081 = vmatprep.subr.mxu0 %v380
        %10082 = vmatpush1.msra.mxu0 %v379
        %10083 = vmatprep.subr.mxu0 %v378
        %10084 = vmatpush1.msra.mxu0 %v377
        %10085 = vmatprep.subr.mxu0 %v376
        %10086 = vmatpush1.msra.mxu0 %v375
        %10087 = vmatprep.subr.mxu0 %v374
        %10088 = vmatpush1.msra.mxu0 %v373
        %10089 = vmatprep.subr.mxu0 %v372
        %10090 = vmatpush1.msra.mxu0 %v371
        %10091 = vmatprep.subr.mxu0 %v370
        %10092 = vmatpush1.msra.mxu0 %v369
        %10093 = vmatprep.subr.mxu0 %v368
        %10094 = vmatpush1.msra.mxu0 %v367
        %10095 = vmatprep.subr.mxu0 %v366
        %10096 = vmatpush1.msra.mxu0 %v365
        %10097 = vmatprep.subr.mxu0 %v364
        %10098 = vmatpush1.msra.mxu0 %v363
        %10099 = vmatprep.subr.mxu0 %v362
        %10100 = vmatpush1.msra.mxu0 %v361
        %10101 = vmatprep.subr.mxu0 %v360
        %10102 = vmatpush1.msra.mxu0 %v359
        %10103 = vmatprep.subr.mxu0 %v422
        %10104 = vmatpush2.msra.mxu0 %v421
        %10105 = vmatprep.subr.mxu0 %v420
        %10106 = vmatpush2.msra.mxu0 %v419
        %10107 = vmatprep.subr.mxu0 %v418
        %10108 = vmatpush2.msra.mxu0 %v417
        %10109 = vmatprep.subr.mxu0 %v416
        %10110 = vmatpush2.msra.mxu0 %v415
        %10111 = vmatprep.subr.mxu0 %v414
        %10112 = vmatpush2.msra.mxu0 %v413
        %10113 = vmatprep.subr.mxu0 %v412
        %10114 = vmatpush2.msra.mxu0 %v411
        %10115 = vmatprep.subr.mxu0 %v410
        %10116 = vmatpush2.msra.mxu0 %v409
        %10117 = vmatprep.subr.mxu0 %v408
        %10118 = vmatpush2.msra.mxu0 %v407
        %10119 = vmatprep.subr.mxu0 %v406
        %10120 = vmatpush2.msra.mxu0 %v405
        %10121 = vmatprep.subr.mxu0 %v404
        %10122 = vmatpush2.msra.mxu0 %v403
        %10123 = vmatprep.subr.mxu0 %v402
        %10124 = vmatpush2.msra.mxu0 %v401
        %10125 = vmatprep.subr.mxu0 %v400
        %10126 = vmatpush2.msra.mxu0 %v399
        %10127 = vmatprep.subr.mxu0 %v398
        %10128 = vmatpush2.msra.mxu0 %v397
        %10129 = vmatprep.subr.mxu0 %v396
        %10130 = vmatpush2.msra.mxu0 %v395
        %10131 = vmatprep.subr.mxu0 %v394
        %10132 = vmatpush2.msra.mxu0 %v393
        %10133 = vmatprep.subr.mxu0 %v392
        %10134 = vmatpush2.msra.mxu0 %v391
        %10135 = vmatprep.mubr.f32.mxu0 %v7079
        %10136 = vmatmul.mubr.f32.gmra.mxu0 %v5623
        %v10137 = vpop.f32.mrf.mxu0
        %v10138 = vadd.f32 %v10067, %v10137
        %v10139 = vpop.f32.mrf.mxu0
        %v10140 = vadd.f32 %v10069, %v10139
        %10141 = vdwg.mxu0
        %10142 = vmatprep.subr.mxu0 %v454
        %10143 = vmatpush1.msra.mxu0 %v453
        %10144 = vmatprep.subr.mxu0 %v452
        %10145 = vmatpush1.msra.mxu0 %v451
        %10146 = vmatprep.subr.mxu0 %v450
        %10147 = vmatpush1.msra.mxu0 %v449
        %10148 = vmatprep.subr.mxu0 %v448
        %10149 = vmatpush1.msra.mxu0 %v447
        %10150 = vmatprep.subr.mxu0 %v446
        %10151 = vmatpush1.msra.mxu0 %v445
        %10152 = vmatprep.subr.mxu0 %v444
        %10153 = vmatpush1.msra.mxu0 %v443
        %10154 = vmatprep.subr.mxu0 %v442
        %10155 = vmatpush1.msra.mxu0 %v441
        %10156 = vmatprep.subr.mxu0 %v440
        %10157 = vmatpush1.msra.mxu0 %v439
        %10158 = vmatprep.subr.mxu0 %v438
        %10159 = vmatpush1.msra.mxu0 %v437
        %10160 = vmatprep.subr.mxu0 %v436
        %10161 = vmatpush1.msra.mxu0 %v435
        %10162 = vmatprep.subr.mxu0 %v434
        %10163 = vmatpush1.msra.mxu0 %v433
        %10164 = vmatprep.subr.mxu0 %v432
        %10165 = vmatpush1.msra.mxu0 %v431
        %10166 = vmatprep.subr.mxu0 %v430
        %10167 = vmatpush1.msra.mxu0 %v429
        %10168 = vmatprep.subr.mxu0 %v428
        %10169 = vmatpush1.msra.mxu0 %v427
        %10170 = vmatprep.subr.mxu0 %v426
        %10171 = vmatpush1.msra.mxu0 %v425
        %10172 = vmatprep.subr.mxu0 %v424
        %10173 = vmatpush1.msra.mxu0 %v423
        %10174 = vmatprep.subr.mxu0 %v486
        %10175 = vmatpush2.msra.mxu0 %v485
        %10176 = vmatprep.subr.mxu0 %v484
        %10177 = vmatpush2.msra.mxu0 %v483
        %10178 = vmatprep.subr.mxu0 %v482
        %10179 = vmatpush2.msra.mxu0 %v481
        %10180 = vmatprep.subr.mxu0 %v480
        %10181 = vmatpush2.msra.mxu0 %v479
        %10182 = vmatprep.subr.mxu0 %v478
        %10183 = vmatpush2.msra.mxu0 %v477
        %10184 = vmatprep.subr.mxu0 %v476
        %10185 = vmatpush2.msra.mxu0 %v475
        %10186 = vmatprep.subr.mxu0 %v474
        %10187 = vmatpush2.msra.mxu0 %v473
        %10188 = vmatprep.subr.mxu0 %v472
        %10189 = vmatpush2.msra.mxu0 %v471
        %10190 = vmatprep.subr.mxu0 %v470
        %10191 = vmatpush2.msra.mxu0 %v469
        %10192 = vmatprep.subr.mxu0 %v468
        %10193 = vmatpush2.msra.mxu0 %v467
        %10194 = vmatprep.subr.mxu0 %v466
        %10195 = vmatpush2.msra.mxu0 %v465
        %10196 = vmatprep.subr.mxu0 %v464
        %10197 = vmatpush2.msra.mxu0 %v463
        %10198 = vmatprep.subr.mxu0 %v462
        %10199 = vmatpush2.msra.mxu0 %v461
        %10200 = vmatprep.subr.mxu0 %v460
        %10201 = vmatpush2.msra.mxu0 %v459
        %10202 = vmatprep.subr.mxu0 %v458
        %10203 = vmatpush2.msra.mxu0 %v457
        %10204 = vmatprep.subr.mxu0 %v456
        %10205 = vmatpush2.msra.mxu0 %v455
        %10206 = vmatprep.mubr.f32.mxu0 %v9991
        %10207 = vmatmul.mubr.f32.gmra.mxu0 %v8535
        %v10208 = vpop.f32.mrf.mxu0
        %v10209 = vadd.f32 %v10138, %v10208
        %v10210 = vpop.f32.mrf.mxu0
        %v10211 = vadd.f32 %v10140, %v10210
        %10212 = vdwg.mxu0
        %v10215 = vcombine.low %v10209, %v10211
        %10217 = vst [vmem:[%s293] sm:$0xff] %v10215
        %p10218 = scmp.lt.s32.totalorder %s19, 1
        %s10219 = scalar_select %p10218, %s19, 1
        %s10220 = smul.addr %s10219, 2
        %s10221 = smul.addr %s10220, 4
        %s10222 = scalar_lea.vmem %s7, %s10221
        // Predicated region
        $region53: #{overlap_window_mha2d.1} parent=47 // pred_check
          %p10223 = pneg %p189
        $region54: #{overlap_window_mha2d.1} parent=47 // pred_check_branch
          %10225 = sbr.rel (%p10223) target = $region56
        $region55: #{overlap_window_mha2d.1} parent=47 // pred_region
          _
        $region56: #{overlap_window_mha2d.1} parent=47 // pred_fallthru
          _
      $region48: #{overlap_window_mha2d.1} parent=5 // pred_fallthru
        _
      %p10226 = scmp.le.s32.totalorder 2, %s14
      // Predicated region
      $region57: #{overlap_window_mha2d.1} parent=5 // pred_check
        %p10227 = pneg %p10226
      $region58: #{overlap_window_mha2d.1} parent=5 // pred_check_branch
        %10229 = sbr.rel (%p10227) target = $region60
      $region59: #{overlap_window_mha2d.1} parent=5 // pred_region
        %s10230 = ssub.s32 %s14, 2
        // Predicated region
        $region61: #{overlap_window_mha2d.1} parent=59 // pred_check
          %p10231 = pneg %p195
        $region62: #{overlap_window_mha2d.1} parent=59 // pred_check_branch
          %10233 = sbr.rel (%p10231) target = $region64
        $region63: #{overlap_window_mha2d.1} parent=59 // pred_region
          %p10234 = scmp.lt.s32.totalorder %s20, 1
          %s10235 = scalar_select %p10234, %s20, 1
          %s10236 = smul.addr %s10235, 2
          %s10237 = smul.addr %s10236, 4
          %s10238 = scalar_lea.vmem %s7, %s10237
        $region64: #{overlap_window_mha2d.1} parent=59 // pred_fallthru
          _
      $region60: #{overlap_window_mha2d.1} parent=5 // pred_fallthru
        _
    $region6: #{overlap_window_mha2d.1} parent=1 // loop_footer
      %s18 = sadd.s32 1, %s14
    $region7: #{overlap_window_mha2d.1} parent=1 // loop_footer_branch
      %13 = sbr.rel target = $region3
    $region8: #{overlap_window_mha2d.1} parent=1 // loop_exit
      _
    %10239 = vsyncpa [#allocation3], 1
    %s10240 = scalar_lea.sflag [#allocation3], 1
    %10241 = vsyncpa %s10240, 1

</llo_original>
